<compile_context>
chip_gen: v7x
topology: tpu7x:2x2x1
jax: 0.10.0
libtpu: 0.0.40
codegen_flags: <defaults>
</compile_context>

<pallas_src>
import math

import jax
import jax.numpy as jnp
from jax.experimental import pallas as pl
from jax.experimental.pallas import tpu as pltpu

MATMUL_DTYPE = jnp.bfloat16   # MXU-native path; set to jnp.float32 for bit-closer math
BN_EPS = 1e-5


def _round_up(x, m):
    return (x + m - 1) // m * m


# ------------------------------ fused Pallas kernel ------------------------------

def make_fused_kernel(*, n_layers, B, W, D, H, P, CP):
    S = W * D * H
    BS = B * S
    DH = D * H
    ww, wd, wh = W // P, D // P, H // P
    # Conv tap order -- must match the weight / mask packing in pack_params().
    offsets = [dw * DH + dd * H + dh
               for dw in (-1, 0, 1) for dd in (-1, 0, 1) for dh in (-1, 0, 1)]

    def shift_read(a, k):
        # out[:, s] = a[:, (s + k) mod BS]; wraparound lanes are zeroed/ignored by
        # the conv validity masks / the scattered linear-weight map.
        if k % BS == 0:
            return a
        return pltpu.roll(a, shift=(-k) % BS, axis=1)

    def kernel(x_ref, mask_ref, w_ref, g_ref, be_ref, wmap_ref,
               act_ref, wact_ref, b_ref, o_ref):
        # x_ref: [CP, B*S] f32, channels on sublanes, flat (b, w, d, h) on lanes.
        x = x_ref[...]

        # --- x[:, [8, 9, 10]] *= x[:, [7]] (rows 8..10 scaled by row 7) ---
        ch = jax.lax.broadcasted_iota(jnp.int32, (CP, 1), 0)
        x = jnp.where((ch >= 8) & (ch <= 10), x * x[7:8, :], x)

        # --- neck: n_layers x (Conv3d(k3, p1, bias cancels) + BN(train) + ReLU) ---
        for layer in range(n_layers):
            slabs = []
            for t, off in enumerate(offsets):
                s = shift_read(x, off)
                if off != 0:
                    s = s * mask_ref[t:t + 1, :]        # zero-padding halo as a mask
                slabs.append(s.astype(MATMUL_DTYPE))
            patches = jnp.concatenate(slabs, axis=0)     # [27*CP, B*S] im2col
            y = jnp.dot(w_ref[layer], patches,
                        preferred_element_type=jnp.float32)   # [CP, B*S] f32
            mean = jnp.mean(y, axis=1, keepdims=True)
            var = jnp.mean(jnp.square(y - mean), axis=1, keepdims=True)  # biased var
            scale = g_ref[layer] * jax.lax.rsqrt(var + BN_EPS)
            shift = be_ref[layer] - mean * scale
            x = jnp.maximum(y * scale + shift, 0.0)

        # --- AdaptiveMaxPool3d((P,P,P)) via hierarchical rolled maxes ---
        m1 = x
        for k in range(1, wh):
            m1 = jnp.maximum(m1, shift_read(x, k))           # reduce along H windows
        m2 = m1
        for k in range(1, wd):
            m2 = jnp.maximum(m2, shift_read(m1, k * H))      # reduce along D windows
        m3 = m2
        for k in range(1, ww):
            m3 = jnp.maximum(m3, shift_read(m2, k * DH))     # reduce along W windows

        # --- flatten + concat(action) + Linear ---
        # wmap holds the pooled-feature Linear weights scattered onto the pooling
        # anchor lanes (zero elsewhere), so the dot is a masked multiply + reduce.
        prod = m3 * wmap_ref[...]                            # [CP, B*S]
        pooled = []
        for b in range(B):
            blk = prod[:, b * S:(b + 1) * S]
            pooled.append(jnp.sum(jnp.sum(blk, axis=1, keepdims=True),
                                  axis=0, keepdims=True))    # [1, 1]
        pooled = jnp.concatenate(pooled, axis=0)             # [B, 1]
        act_term = jnp.sum(act_ref[...] * wact_ref[...], axis=1, keepdims=True)  # [B,1]
        o_ref[...] = pooled + act_term + b_ref[0]

    return kernel


def _fused_forward(x, mask, w_all, g_all, be_all, wmap, action, wact, b_lin,
                   *, n_layers, B, W, D, H, P, CP):
    kernel = make_fused_kernel(n_layers=n_layers, B=B, W=W, D=D, H=H, P=P, CP=CP)
    vmem = pltpu.MemorySpace.VMEM
    smem = pltpu.MemorySpace.SMEM
    return pl.pallas_call(
        kernel,
        out_shape=jax.ShapeDtypeStruct((B, 1), jnp.float32),
        in_specs=[pl.BlockSpec(memory_space=vmem)] * 8
                 + [pl.BlockSpec(memory_space=smem)],
        out_specs=pl.BlockSpec(memory_space=vmem),
    )(x, mask, w_all, g_all, be_all, wmap, action, wact, b_lin)


# ------------------------------ parameters & packing ------------------------------

def init_params(key, state_dim, neck_hidden_dim, adaptive_pooling_dim, neck_layers=3):
    """Synthetic init matching the PyTorch module (kaiming fan_out conv, zero conv
    bias, default BatchNorm affine, default Linear init)."""
    keys = jax.random.split(key, neck_layers + 2)
    conv = []
    in_ch = state_dim
    for layer in range(neck_layers):
        out_ch = neck_hidden_dim // (2 ** layer)
        std = math.sqrt(2.0 / (out_ch * 27))           # kaiming_normal_ fan_out, relu
        w = std * jax.random.normal(keys[layer], (out_ch, in_ch, 3, 3, 3), jnp.float32)
        conv.append({
            "w": w,
            "b": jnp.zeros((out_ch,), jnp.float32),    # unused: cancels in train-mode BN
            "gamma": jnp.ones((out_ch,), jnp.float32),
            "beta": jnp.zeros((out_ch,), jnp.float32),
        })
        in_ch = out_ch
    Cf = in_ch
    P = adaptive_pooling_dim
    F = Cf * P ** 3 + 7
    bound = 1.0 / math.sqrt(F)                         # PyTorch Linear default init
    w_lin = jax.random.uniform(keys[-2], (1, F), jnp.float32, -bound, bound)
    b_lin = jax.random.uniform(keys[-1], (1,), jnp.float32, -bound, bound)
    return {"conv": conv, "w_lin": w_lin, "b_lin": b_lin,
            "state_dim": state_dim, "P": P, "Cf": Cf}


def pack_params(params, *, batch, W, D, H):
    """Repack PyTorch-layout parameters into the lane-dense kernel operands."""
    P, Cf = params["P"], params["Cf"]
    # TODO(synk): adaptive max pooling for spatial dims not divisible by P is not implemented.
    assert W % P == 0 and D % P == 0 and H % P == 0
    S = W * D * H
    chans = [params["state_dim"]] + [c["w"].shape[0] for c in params["conv"]]
    CP = _round_up(max(chans), 16)     # one padded channel width for all layers (bf16 tiles)

    w_all, g_all, be_all = [], [], []
    for c in params["conv"]:
        w = c["w"]                                     # [Cout, Cin, 3, 3, 3]
        cout, cin = w.shape[0], w.shape[1]
        wt = jnp.transpose(w, (0, 2, 3, 4, 1))         # [Cout, kw, kd, kh, Cin]
        wt = jnp.pad(wt, ((0, CP - cout), (0, 0), (0, 0), (0, 0), (0, CP - cin)))
        w_all.append(wt.reshape(CP, 27 * CP))          # K index = tap*CP + cin
        g_all.append(jnp.pad(c["gamma"], (0, CP - cout),
                             constant_values=1.0).reshape(CP, 1))
        be_all.append(jnp.pad(c["beta"], (0, CP - cout)).reshape(CP, 1))
    w_all = jnp.stack(w_all).astype(MATMUL_DTYPE)      # [L, CP, 27*CP]
    g_all = jnp.stack(g_all)                           # [L, CP, 1]
    be_all = jnp.stack(be_all)                         # [L, CP, 1]

    # Conv zero-padding halo as per-tap validity masks over the flat spatial axis.
    wi, di, hi = jnp.meshgrid(jnp.arange(W), jnp.arange(D), jnp.arange(H), indexing="ij")
    rows = []
    for dw in (-1, 0, 1):
        for dd in (-1, 0, 1):
            for dh in (-1, 0, 1):
                ok = ((wi + dw >= 0) & (wi + dw < W) & (di + dd >= 0) & (di + dd < D)
                      & (hi + dh >= 0) & (hi + dh < H))
                rows.append(ok.reshape(-1))
    mask = jnp.tile(jnp.stack(rows).astype(jnp.float32), (1, batch))    # [27, B*S]

    # Linear weights of the pooled features scattered onto the pooling anchor lanes;
    # PyTorch flattens the pooled activations in (c, pw, pd, ph) order.
    ww, wd, wh = W // P, D // P, H // P
    anchors = (jnp.arange(P)[:, None, None] * ww * D * H
               + jnp.arange(P)[None, :, None] * wd * H
               + jnp.arange(P)[None, None, :] * wh).reshape(-1)         # [P**3]
    wpool = params["w_lin"][0, :Cf * P ** 3].reshape(Cf, P ** 3)
    wmap = jnp.zeros((CP, S), jnp.float32).at[
        jnp.arange(Cf)[:, None], anchors[None, :]].set(wpool)
    wmap = jnp.tile(wmap, (1, batch))                                   # [CP, B*S]
    wact = params["w_lin"][0, Cf * P ** 3:].reshape(1, 7)

    return {"CP": CP, "P": P, "n_layers": len(params["conv"]),
            "batch": batch, "W": W, "D": D, "H": H,
            "w_all": w_all, "gamma_all": g_all, "beta_all": be_all,
            "mask": mask, "wmap": wmap, "wact": wact, "b_lin": params["b_lin"]}


# ------------------------------------ forward ------------------------------------

def ocp_ddpg_value_net_forward(obs, action, packed):
    # obs: [B, C, W, D, H] f32 (PyTorch layout); action: [B, 7] f32.
    assert obs.ndim == 5, "observation must be [B, C, W, D, H]"
    assert action.ndim == 2 and action.shape[1] == 7, "action must be [B, 7]"
    B, C, W, D, H = obs.shape
    CP = packed["CP"]
    assert 11 <= C <= CP, "forward indexes channels 7..10"
    assert (B, W, D, H) == (packed["batch"], packed["W"], packed["D"], packed["H"])
    S = W * D * H
    # Layout plumbing (tiny, one-time): [B,C,W,D,H] -> channel-major flat [CP, B*S].
    x = jnp.transpose(obs, (1, 0, 2, 3, 4)).reshape(C, B * S)
    x = jnp.pad(x, ((0, CP - C), (0, 0)))
    return _fused_forward(
        x, packed["mask"], packed["w_all"], packed["gamma_all"], packed["beta_all"],
        packed["wmap"], action.astype(jnp.float32), packed["wact"], packed["b_lin"],
        n_layers=packed["n_layers"], B=B, W=W, D=D, H=H, P=packed["P"], CP=CP)


# ------------------------------------- main --------------------------------------

if __name__ == "__main__":
    key = jax.random.PRNGKey(0)
    k_obs, k_act, k_par = jax.random.split(key, 3)

    B = 2
    state_dim = 12            # must be >= 11 (channels 7..10 indexed in forward)
    W = D = H = 8             # S = 512
    neck_hidden_dim = 16      # neck channels: 16 -> 8 -> 4
    adaptive_pooling_dim = 2  # pooled features: 4 * 2**3 = 32, linear in = 39
    hidden_dim = 32           # unused by forward (as in the PyTorch module)

    obs = jax.random.normal(k_obs, (B, state_dim, W, D, H), jnp.float32)
    action = jax.random.normal(k_act, (B, 7), jnp.float32)

    params = init_params(k_par, state_dim, neck_hidden_dim, adaptive_pooling_dim)
    packed = pack_params(params, batch=B, W=W, D=D, H=H)

    out = ocp_ddpg_value_net_forward(obs, action, packed)
    out = jax.block_until_ready(out)
    assert out.shape == (B, 1) and out.dtype == jnp.float32
    assert bool(jnp.all(jnp.isfinite(out)))
    print("KERNEL_OK")
</pallas_src>

<mosaic_0001>
module attributes {stable_mosaic.version = 11 : i64} {
  func.func @kernel(%arg0: memref<16x1024xf32, #tpu.memory_space<vmem>>, %arg1: memref<27x1024xf32, #tpu.memory_space<vmem>>, %arg2: memref<3x16x432xbf16, #tpu.memory_space<vmem>>, %arg3: memref<3x16x1xf32, #tpu.memory_space<vmem>>, %arg4: memref<3x16x1xf32, #tpu.memory_space<vmem>>, %arg5: memref<16x1024xf32, #tpu.memory_space<vmem>>, %arg6: memref<2x7xf32, #tpu.memory_space<vmem>>, %arg7: memref<1x7xf32, #tpu.memory_space<vmem>>, %arg8: memref<1xf32, #tpu.memory_space<smem>>, %arg9: memref<2x1xf32, #tpu.memory_space<vmem>>) attributes {dimension_semantics = [], scalar_prefetch = 0 : i64, scratch_operands = 0 : i64, tpu.core_type = #tpu.core_type<tc>} {
    %c0 = arith.constant 0 : index
    %c0_0 = arith.constant 0 : index
    %0 = vector.load %arg0[%c0, %c0_0] : memref<16x1024xf32, #tpu.memory_space<vmem>>, vector<16x1024xf32>
    %1 = tpu.iota {dimensions = array<i32: 0>} : vector<16x1xi32>
    %c8_i32 = arith.constant 8 : i32
    %2 = vector.broadcast %c8_i32 : i32 to vector<16x1xi32>
    %3 = arith.cmpi sge, %1, %2 : vector<16x1xi32>
    %c10_i32 = arith.constant 10 : i32
    %4 = vector.broadcast %c10_i32 : i32 to vector<16x1xi32>
    %5 = arith.cmpi sle, %1, %4 : vector<16x1xi32>
    %6 = arith.andi %3, %5 : vector<16x1xi1>
    %7 = vector.extract_strided_slice %0 {offsets = [7, 0], sizes = [1, 1024], strides = [1, 1]} : vector<16x1024xf32> to vector<1x1024xf32>
    %8 = vector.broadcast %7 : vector<1x1024xf32> to vector<16x1024xf32>
    %9 = arith.mulf %0, %8 : vector<16x1024xf32>
    %10 = vector.shape_cast %6 : vector<16x1xi1> to vector<16x1xi1>
    %11 = vector.broadcast %10 : vector<16x1xi1> to vector<16x1024xi1>
    %12 = arith.select %11, %9, %0 : vector<16x1024xi1>, vector<16x1024xf32>
    %c73_i32 = arith.constant 73 : i32
    %13 = tpu.dynamic_rotate %12 by %c73_i32 dim 1 : vector<16x1024xf32>, i32 -> vector<16x1024xf32>
    %c0_1 = arith.constant 0 : index
    %c0_2 = arith.constant 0 : index
    %14 = vector.load %arg1[%c0_1, %c0_2] : memref<27x1024xf32, #tpu.memory_space<vmem>>, vector<1x1024xf32>
    %15 = vector.broadcast %14 : vector<1x1024xf32> to vector<16x1024xf32>
    %16 = arith.mulf %13, %15 : vector<16x1024xf32>
    %17 = arith.truncf %16 : vector<16x1024xf32> to vector<16x1024xbf16>
    %c72_i32 = arith.constant 72 : i32
    %18 = tpu.dynamic_rotate %12 by %c72_i32 dim 1 : vector<16x1024xf32>, i32 -> vector<16x1024xf32>
    %c1 = arith.constant 1 : index
    %c0_3 = arith.constant 0 : index
    %19 = vector.load %arg1[%c1, %c0_3] : memref<27x1024xf32, #tpu.memory_space<vmem>>, vector<1x1024xf32>
    %20 = vector.broadcast %19 : vector<1x1024xf32> to vector<16x1024xf32>
    %21 = arith.mulf %18, %20 : vector<16x1024xf32>
    %22 = arith.truncf %21 : vector<16x1024xf32> to vector<16x1024xbf16>
    %c71_i32 = arith.constant 71 : i32
    %23 = tpu.dynamic_rotate %12 by %c71_i32 dim 1 : vector<16x1024xf32>, i32 -> vector<16x1024xf32>
    %c2 = arith.constant 2 : index
    %c0_4 = arith.constant 0 : index
    %24 = vector.load %arg1[%c2, %c0_4] : memref<27x1024xf32, #tpu.memory_space<vmem>>, vector<1x1024xf32>
    %25 = vector.broadcast %24 : vector<1x1024xf32> to vector<16x1024xf32>
    %26 = arith.mulf %23, %25 : vector<16x1024xf32>
    %27 = arith.truncf %26 : vector<16x1024xf32> to vector<16x1024xbf16>
    %c65_i32 = arith.constant 65 : i32
    %28 = tpu.dynamic_rotate %12 by %c65_i32 dim 1 : vector<16x1024xf32>, i32 -> vector<16x1024xf32>
    %c3 = arith.constant 3 : index
    %c0_5 = arith.constant 0 : index
    %29 = vector.load %arg1[%c3, %c0_5] : memref<27x1024xf32, #tpu.memory_space<vmem>>, vector<1x1024xf32>
    %30 = vector.broadcast %29 : vector<1x1024xf32> to vector<16x1024xf32>
    %31 = arith.mulf %28, %30 : vector<16x1024xf32>
    %32 = arith.truncf %31 : vector<16x1024xf32> to vector<16x1024xbf16>
    %c64_i32 = arith.constant 64 : i32
    %33 = tpu.dynamic_rotate %12 by %c64_i32 dim 1 : vector<16x1024xf32>, i32 -> vector<16x1024xf32>
    %c4 = arith.constant 4 : index
    %c0_6 = arith.constant 0 : index
    %34 = vector.load %arg1[%c4, %c0_6] : memref<27x1024xf32, #tpu.memory_space<vmem>>, vector<1x1024xf32>
    %35 = vector.broadcast %34 : vector<1x1024xf32> to vector<16x1024xf32>
    %36 = arith.mulf %33, %35 : vector<16x1024xf32>
    %37 = arith.truncf %36 : vector<16x1024xf32> to vector<16x1024xbf16>
    %c63_i32 = arith.constant 63 : i32
    %38 = tpu.dynamic_rotate %12 by %c63_i32 dim 1 : vector<16x1024xf32>, i32 -> vector<16x1024xf32>
    %c5 = arith.constant 5 : index
    %c0_7 = arith.constant 0 : index
    %39 = vector.load %arg1[%c5, %c0_7] : memref<27x1024xf32, #tpu.memory_space<vmem>>, vector<1x1024xf32>
    %40 = vector.broadcast %39 : vector<1x1024xf32> to vector<16x1024xf32>
    %41 = arith.mulf %38, %40 : vector<16x1024xf32>
    %42 = arith.truncf %41 : vector<16x1024xf32> to vector<16x1024xbf16>
    %c57_i32 = arith.constant 57 : i32
    %43 = tpu.dynamic_rotate %12 by %c57_i32 dim 1 : vector<16x1024xf32>, i32 -> vector<16x1024xf32>
    %c6 = arith.constant 6 : index
    %c0_8 = arith.constant 0 : index
    %44 = vector.load %arg1[%c6, %c0_8] : memref<27x1024xf32, #tpu.memory_space<vmem>>, vector<1x1024xf32>
    %45 = vector.broadcast %44 : vector<1x1024xf32> to vector<16x1024xf32>
    %46 = arith.mulf %43, %45 : vector<16x1024xf32>
    %47 = arith.truncf %46 : vector<16x1024xf32> to vector<16x1024xbf16>
    %c56_i32 = arith.constant 56 : i32
    %48 = tpu.dynamic_rotate %12 by %c56_i32 dim 1 : vector<16x1024xf32>, i32 -> vector<16x1024xf32>
    %c7 = arith.constant 7 : index
    %c0_9 = arith.constant 0 : index
    %49 = vector.load %arg1[%c7, %c0_9] : memref<27x1024xf32, #tpu.memory_space<vmem>>, vector<1x1024xf32>
    %50 = vector.broadcast %49 : vector<1x1024xf32> to vector<16x1024xf32>
    %51 = arith.mulf %48, %50 : vector<16x1024xf32>
    %52 = arith.truncf %51 : vector<16x1024xf32> to vector<16x1024xbf16>
    %c55_i32 = arith.constant 55 : i32
    %53 = tpu.dynamic_rotate %12 by %c55_i32 dim 1 : vector<16x1024xf32>, i32 -> vector<16x1024xf32>
    %c8 = arith.constant 8 : index
    %c0_10 = arith.constant 0 : index
    %54 = vector.load %arg1[%c8, %c0_10] : memref<27x1024xf32, #tpu.memory_space<vmem>>, vector<1x1024xf32>
    %55 = vector.broadcast %54 : vector<1x1024xf32> to vector<16x1024xf32>
    %56 = arith.mulf %53, %55 : vector<16x1024xf32>
    %57 = arith.truncf %56 : vector<16x1024xf32> to vector<16x1024xbf16>
    %c9_i32 = arith.constant 9 : i32
    %58 = tpu.dynamic_rotate %12 by %c9_i32 dim 1 : vector<16x1024xf32>, i32 -> vector<16x1024xf32>
    %c9 = arith.constant 9 : index
    %c0_11 = arith.constant 0 : index
    %59 = vector.load %arg1[%c9, %c0_11] : memref<27x1024xf32, #tpu.memory_space<vmem>>, vector<1x1024xf32>
    %60 = vector.broadcast %59 : vector<1x1024xf32> to vector<16x1024xf32>
    %61 = arith.mulf %58, %60 : vector<16x1024xf32>
    %62 = arith.truncf %61 : vector<16x1024xf32> to vector<16x1024xbf16>
    %c8_i32_12 = arith.constant 8 : i32
    %63 = tpu.dynamic_rotate %12 by %c8_i32_12 dim 1 : vector<16x1024xf32>, i32 -> vector<16x1024xf32>
    %c10 = arith.constant 10 : index
    %c0_13 = arith.constant 0 : index
    %64 = vector.load %arg1[%c10, %c0_13] : memref<27x1024xf32, #tpu.memory_space<vmem>>, vector<1x1024xf32>
    %65 = vector.broadcast %64 : vector<1x1024xf32> to vector<16x1024xf32>
    %66 = arith.mulf %63, %65 : vector<16x1024xf32>
    %67 = arith.truncf %66 : vector<16x1024xf32> to vector<16x1024xbf16>
    %c7_i32 = arith.constant 7 : i32
    %68 = tpu.dynamic_rotate %12 by %c7_i32 dim 1 : vector<16x1024xf32>, i32 -> vector<16x1024xf32>
    %c11 = arith.constant 11 : index
    %c0_14 = arith.constant 0 : index
    %69 = vector.load %arg1[%c11, %c0_14] : memref<27x1024xf32, #tpu.memory_space<vmem>>, vector<1x1024xf32>
    %70 = vector.broadcast %69 : vector<1x1024xf32> to vector<16x1024xf32>
    %71 = arith.mulf %68, %70 : vector<16x1024xf32>
    %72 = arith.truncf %71 : vector<16x1024xf32> to vector<16x1024xbf16>
    %c1_i32 = arith.constant 1 : i32
    %73 = tpu.dynamic_rotate %12 by %c1_i32 dim 1 : vector<16x1024xf32>, i32 -> vector<16x1024xf32>
    %c12 = arith.constant 12 : index
    %c0_15 = arith.constant 0 : index
    %74 = vector.load %arg1[%c12, %c0_15] : memref<27x1024xf32, #tpu.memory_space<vmem>>, vector<1x1024xf32>
    %75 = vector.broadcast %74 : vector<1x1024xf32> to vector<16x1024xf32>
    %76 = arith.mulf %73, %75 : vector<16x1024xf32>
    %77 = arith.truncf %76 : vector<16x1024xf32> to vector<16x1024xbf16>
    %78 = arith.truncf %12 : vector<16x1024xf32> to vector<16x1024xbf16>
    %c1023_i32 = arith.constant 1023 : i32
    %79 = tpu.dynamic_rotate %12 by %c1023_i32 dim 1 : vector<16x1024xf32>, i32 -> vector<16x1024xf32>
    %c14 = arith.constant 14 : index
    %c0_16 = arith.constant 0 : index
    %80 = vector.load %arg1[%c14, %c0_16] : memref<27x1024xf32, #tpu.memory_space<vmem>>, vector<1x1024xf32>
    %81 = vector.broadcast %80 : vector<1x1024xf32> to vector<16x1024xf32>
    %82 = arith.mulf %79, %81 : vector<16x1024xf32>
    %83 = arith.truncf %82 : vector<16x1024xf32> to vector<16x1024xbf16>
    %c1017_i32 = arith.constant 1017 : i32
    %84 = tpu.dynamic_rotate %12 by %c1017_i32 dim 1 : vector<16x1024xf32>, i32 -> vector<16x1024xf32>
    %c15 = arith.constant 15 : index
    %c0_17 = arith.constant 0 : index
    %85 = vector.load %arg1[%c15, %c0_17] : memref<27x1024xf32, #tpu.memory_space<vmem>>, vector<1x1024xf32>
    %86 = vector.broadcast %85 : vector<1x1024xf32> to vector<16x1024xf32>
    %87 = arith.mulf %84, %86 : vector<16x1024xf32>
    %88 = arith.truncf %87 : vector<16x1024xf32> to vector<16x1024xbf16>
    %c1016_i32 = arith.constant 1016 : i32
    %89 = tpu.dynamic_rotate %12 by %c1016_i32 dim 1 : vector<16x1024xf32>, i32 -> vector<16x1024xf32>
    %c16 = arith.constant 16 : index
    %c0_18 = arith.constant 0 : index
    %90 = vector.load %arg1[%c16, %c0_18] : memref<27x1024xf32, #tpu.memory_space<vmem>>, vector<1x1024xf32>
    %91 = vector.broadcast %90 : vector<1x1024xf32> to vector<16x1024xf32>
    %92 = arith.mulf %89, %91 : vector<16x1024xf32>
    %93 = arith.truncf %92 : vector<16x1024xf32> to vector<16x1024xbf16>
    %c1015_i32 = arith.constant 1015 : i32
    %94 = tpu.dynamic_rotate %12 by %c1015_i32 dim 1 : vector<16x1024xf32>, i32 -> vector<16x1024xf32>
    %c17 = arith.constant 17 : index
    %c0_19 = arith.constant 0 : index
    %95 = vector.load %arg1[%c17, %c0_19] : memref<27x1024xf32, #tpu.memory_space<vmem>>, vector<1x1024xf32>
    %96 = vector.broadcast %95 : vector<1x1024xf32> to vector<16x1024xf32>
    %97 = arith.mulf %94, %96 : vector<16x1024xf32>
    %98 = arith.truncf %97 : vector<16x1024xf32> to vector<16x1024xbf16>
    %c969_i32 = arith.constant 969 : i32
    %99 = tpu.dynamic_rotate %12 by %c969_i32 dim 1 : vector<16x1024xf32>, i32 -> vector<16x1024xf32>
    %c18 = arith.constant 18 : index
    %c0_20 = arith.constant 0 : index
    %100 = vector.load %arg1[%c18, %c0_20] : memref<27x1024xf32, #tpu.memory_space<vmem>>, vector<1x1024xf32>
    %101 = vector.broadcast %100 : vector<1x1024xf32> to vector<16x1024xf32>
    %102 = arith.mulf %99, %101 : vector<16x1024xf32>
    %103 = arith.truncf %102 : vector<16x1024xf32> to vector<16x1024xbf16>
    %c968_i32 = arith.constant 968 : i32
    %104 = tpu.dynamic_rotate %12 by %c968_i32 dim 1 : vector<16x1024xf32>, i32 -> vector<16x1024xf32>
    %c19 = arith.constant 19 : index
    %c0_21 = arith.constant 0 : index
    %105 = vector.load %arg1[%c19, %c0_21] : memref<27x1024xf32, #tpu.memory_space<vmem>>, vector<1x1024xf32>
    %106 = vector.broadcast %105 : vector<1x1024xf32> to vector<16x1024xf32>
    %107 = arith.mulf %104, %106 : vector<16x1024xf32>
    %108 = arith.truncf %107 : vector<16x1024xf32> to vector<16x1024xbf16>
    %c967_i32 = arith.constant 967 : i32
    %109 = tpu.dynamic_rotate %12 by %c967_i32 dim 1 : vector<16x1024xf32>, i32 -> vector<16x1024xf32>
    %c20 = arith.constant 20 : index
    %c0_22 = arith.constant 0 : index
    %110 = vector.load %arg1[%c20, %c0_22] : memref<27x1024xf32, #tpu.memory_space<vmem>>, vector<1x1024xf32>
    %111 = vector.broadcast %110 : vector<1x1024xf32> to vector<16x1024xf32>
    %112 = arith.mulf %109, %111 : vector<16x1024xf32>
    %113 = arith.truncf %112 : vector<16x1024xf32> to vector<16x1024xbf16>
    %c961_i32 = arith.constant 961 : i32
    %114 = tpu.dynamic_rotate %12 by %c961_i32 dim 1 : vector<16x1024xf32>, i32 -> vector<16x1024xf32>
    %c21 = arith.constant 21 : index
    %c0_23 = arith.constant 0 : index
    %115 = vector.load %arg1[%c21, %c0_23] : memref<27x1024xf32, #tpu.memory_space<vmem>>, vector<1x1024xf32>
    %116 = vector.broadcast %115 : vector<1x1024xf32> to vector<16x1024xf32>
    %117 = arith.mulf %114, %116 : vector<16x1024xf32>
    %118 = arith.truncf %117 : vector<16x1024xf32> to vector<16x1024xbf16>
    %c960_i32 = arith.constant 960 : i32
    %119 = tpu.dynamic_rotate %12 by %c960_i32 dim 1 : vector<16x1024xf32>, i32 -> vector<16x1024xf32>
    %c22 = arith.constant 22 : index
    %c0_24 = arith.constant 0 : index
    %120 = vector.load %arg1[%c22, %c0_24] : memref<27x1024xf32, #tpu.memory_space<vmem>>, vector<1x1024xf32>
    %121 = vector.broadcast %120 : vector<1x1024xf32> to vector<16x1024xf32>
    %122 = arith.mulf %119, %121 : vector<16x1024xf32>
    %123 = arith.truncf %122 : vector<16x1024xf32> to vector<16x1024xbf16>
    %c959_i32 = arith.constant 959 : i32
    %124 = tpu.dynamic_rotate %12 by %c959_i32 dim 1 : vector<16x1024xf32>, i32 -> vector<16x1024xf32>
    %c23 = arith.constant 23 : index
    %c0_25 = arith.constant 0 : index
    %125 = vector.load %arg1[%c23, %c0_25] : memref<27x1024xf32, #tpu.memory_space<vmem>>, vector<1x1024xf32>
    %126 = vector.broadcast %125 : vector<1x1024xf32> to vector<16x1024xf32>
    %127 = arith.mulf %124, %126 : vector<16x1024xf32>
    %128 = arith.truncf %127 : vector<16x1024xf32> to vector<16x1024xbf16>
    %c953_i32 = arith.constant 953 : i32
    %129 = tpu.dynamic_rotate %12 by %c953_i32 dim 1 : vector<16x1024xf32>, i32 -> vector<16x1024xf32>
    %c24 = arith.constant 24 : index
    %c0_26 = arith.constant 0 : index
    %130 = vector.load %arg1[%c24, %c0_26] : memref<27x1024xf32, #tpu.memory_space<vmem>>, vector<1x1024xf32>
    %131 = vector.broadcast %130 : vector<1x1024xf32> to vector<16x1024xf32>
    %132 = arith.mulf %129, %131 : vector<16x1024xf32>
    %133 = arith.truncf %132 : vector<16x1024xf32> to vector<16x1024xbf16>
    %c952_i32 = arith.constant 952 : i32
    %134 = tpu.dynamic_rotate %12 by %c952_i32 dim 1 : vector<16x1024xf32>, i32 -> vector<16x1024xf32>
    %c25 = arith.constant 25 : index
    %c0_27 = arith.constant 0 : index
    %135 = vector.load %arg1[%c25, %c0_27] : memref<27x1024xf32, #tpu.memory_space<vmem>>, vector<1x1024xf32>
    %136 = vector.broadcast %135 : vector<1x1024xf32> to vector<16x1024xf32>
    %137 = arith.mulf %134, %136 : vector<16x1024xf32>
    %138 = arith.truncf %137 : vector<16x1024xf32> to vector<16x1024xbf16>
    %c951_i32 = arith.constant 951 : i32
    %139 = tpu.dynamic_rotate %12 by %c951_i32 dim 1 : vector<16x1024xf32>, i32 -> vector<16x1024xf32>
    %c26 = arith.constant 26 : index
    %c0_28 = arith.constant 0 : index
    %140 = vector.load %arg1[%c26, %c0_28] : memref<27x1024xf32, #tpu.memory_space<vmem>>, vector<1x1024xf32>
    %141 = vector.broadcast %140 : vector<1x1024xf32> to vector<16x1024xf32>
    %142 = arith.mulf %139, %141 : vector<16x1024xf32>
    %143 = arith.truncf %142 : vector<16x1024xf32> to vector<16x1024xbf16>
    %144 = tpu.concatenate %17, %22, %27, %32, %37, %42, %47, %52, %57, %62, %67, %72, %77, %78, %83, %88 in 0 : vector<16x1024xbf16>, vector<16x1024xbf16>, vector<16x1024xbf16>, vector<16x1024xbf16>, vector<16x1024xbf16>, vector<16x1024xbf16>, vector<16x1024xbf16>, vector<16x1024xbf16>, vector<16x1024xbf16>, vector<16x1024xbf16>, vector<16x1024xbf16>, vector<16x1024xbf16>, vector<16x1024xbf16>, vector<16x1024xbf16>, vector<16x1024xbf16>, vector<16x1024xbf16> -> vector<256x1024xbf16>
    %145 = tpu.concatenate %93, %98, %103, %108, %113, %118, %123, %128, %133, %138, %143 in 0 : vector<16x1024xbf16>, vector<16x1024xbf16>, vector<16x1024xbf16>, vector<16x1024xbf16>, vector<16x1024xbf16>, vector<16x1024xbf16>, vector<16x1024xbf16>, vector<16x1024xbf16>, vector<16x1024xbf16>, vector<16x1024xbf16>, vector<16x1024xbf16> -> vector<176x1024xbf16>
    %146 = tpu.concatenate %144, %145 in 0 : vector<256x1024xbf16>, vector<176x1024xbf16> -> vector<432x1024xbf16>
    %c0_29 = arith.constant 0 : index
    %c0_30 = arith.constant 0 : index
    %c0_31 = arith.constant 0 : index
    %147 = vector.load %arg2[%c0_29, %c0_30, %c0_31] : memref<3x16x432xbf16, #tpu.memory_space<vmem>>, vector<1x16x432xbf16>
    %148 = vector.shape_cast %147 : vector<1x16x432xbf16> to vector<16x432xbf16>
    %cst = arith.constant dense<0.000000e+00> : vector<16x1024xf32>
    %149 = tpu.matmul %148, %146, %cst {dimension_numbers = #tpu.dot_dimension_numbers<[1], [0], [0], [1], [0, 0, 1, 1], [], []>} : vector<16x432xbf16>, vector<432x1024xbf16>, vector<16x1024xf32> -> vector<16x1024xf32>
    %cst_32 = arith.constant dense<0.000000e+00> : vector<16xf32>
    %150 = vector.multi_reduction <add>, %149, %cst_32 [1] : vector<16x1024xf32> to vector<16xf32>
    %151 = vector.shape_cast %150 : vector<16xf32> to vector<16x1xf32>
    %cst_33 = arith.constant 1.024000e+03 : f32
    %152 = vector.broadcast %cst_33 : f32 to vector<16x1xf32>
    %153 = arith.divf %151, %152 : vector<16x1xf32>
    %154 = vector.broadcast %153 : vector<16x1xf32> to vector<16x1024xf32>
    %155 = arith.subf %149, %154 : vector<16x1024xf32>
    %156 = arith.mulf %155, %155 : vector<16x1024xf32>
    %cst_34 = arith.constant dense<0.000000e+00> : vector<16xf32>
    %157 = vector.multi_reduction <add>, %156, %cst_34 [1] : vector<16x1024xf32> to vector<16xf32>
    %158 = vector.shape_cast %157 : vector<16xf32> to vector<16x1xf32>
    %cst_35 = arith.constant 1.024000e+03 : f32
    %159 = vector.broadcast %cst_35 : f32 to vector<16x1xf32>
    %160 = arith.divf %158, %159 : vector<16x1xf32>
    %c0_36 = arith.constant 0 : index
    %c0_37 = arith.constant 0 : index
    %c0_38 = arith.constant 0 : index
    %161 = vector.load %arg3[%c0_36, %c0_37, %c0_38] : memref<3x16x1xf32, #tpu.memory_space<vmem>>, vector<1x16x1xf32>
    %162 = vector.shape_cast %161 : vector<1x16x1xf32> to vector<16x1xf32>
    %cst_39 = arith.constant 9.99999974E-6 : f32
    %163 = vector.broadcast %cst_39 : f32 to vector<16x1xf32>
    %164 = arith.addf %160, %163 : vector<16x1xf32>
    %165 = math.rsqrt %164 : vector<16x1xf32>
    %166 = arith.mulf %162, %165 : vector<16x1xf32>
    %c0_40 = arith.constant 0 : index
    %c0_41 = arith.constant 0 : index
    %c0_42 = arith.constant 0 : index
    %167 = vector.load %arg4[%c0_40, %c0_41, %c0_42] : memref<3x16x1xf32, #tpu.memory_space<vmem>>, vector<1x16x1xf32>
    %168 = vector.shape_cast %167 : vector<1x16x1xf32> to vector<16x1xf32>
    %169 = arith.mulf %153, %166 : vector<16x1xf32>
    %170 = arith.subf %168, %169 : vector<16x1xf32>
    %171 = vector.broadcast %166 : vector<16x1xf32> to vector<16x1024xf32>
    %172 = arith.mulf %149, %171 : vector<16x1024xf32>
    %173 = vector.broadcast %170 : vector<16x1xf32> to vector<16x1024xf32>
    %174 = arith.addf %172, %173 : vector<16x1024xf32>
    %cst_43 = arith.constant 0.000000e+00 : f32
    %175 = vector.broadcast %cst_43 : f32 to vector<16x1024xf32>
    %176 = arith.maximumf %174, %175 : vector<16x1024xf32>
    %c73_i32_44 = arith.constant 73 : i32
    %177 = tpu.dynamic_rotate %176 by %c73_i32_44 dim 1 : vector<16x1024xf32>, i32 -> vector<16x1024xf32>
    %c0_45 = arith.constant 0 : index
    %c0_46 = arith.constant 0 : index
    %178 = vector.load %arg1[%c0_45, %c0_46] : memref<27x1024xf32, #tpu.memory_space<vmem>>, vector<1x1024xf32>
    %179 = vector.broadcast %178 : vector<1x1024xf32> to vector<16x1024xf32>
    %180 = arith.mulf %177, %179 : vector<16x1024xf32>
    %181 = arith.truncf %180 : vector<16x1024xf32> to vector<16x1024xbf16>
    %c72_i32_47 = arith.constant 72 : i32
    %182 = tpu.dynamic_rotate %176 by %c72_i32_47 dim 1 : vector<16x1024xf32>, i32 -> vector<16x1024xf32>
    %c1_48 = arith.constant 1 : index
    %c0_49 = arith.constant 0 : index
    %183 = vector.load %arg1[%c1_48, %c0_49] : memref<27x1024xf32, #tpu.memory_space<vmem>>, vector<1x1024xf32>
    %184 = vector.broadcast %183 : vector<1x1024xf32> to vector<16x1024xf32>
    %185 = arith.mulf %182, %184 : vector<16x1024xf32>
    %186 = arith.truncf %185 : vector<16x1024xf32> to vector<16x1024xbf16>
    %c71_i32_50 = arith.constant 71 : i32
    %187 = tpu.dynamic_rotate %176 by %c71_i32_50 dim 1 : vector<16x1024xf32>, i32 -> vector<16x1024xf32>
    %c2_51 = arith.constant 2 : index
    %c0_52 = arith.constant 0 : index
    %188 = vector.load %arg1[%c2_51, %c0_52] : memref<27x1024xf32, #tpu.memory_space<vmem>>, vector<1x1024xf32>
    %189 = vector.broadcast %188 : vector<1x1024xf32> to vector<16x1024xf32>
    %190 = arith.mulf %187, %189 : vector<16x1024xf32>
    %191 = arith.truncf %190 : vector<16x1024xf32> to vector<16x1024xbf16>
    %c65_i32_53 = arith.constant 65 : i32
    %192 = tpu.dynamic_rotate %176 by %c65_i32_53 dim 1 : vector<16x1024xf32>, i32 -> vector<16x1024xf32>
    %c3_54 = arith.constant 3 : index
    %c0_55 = arith.constant 0 : index
    %193 = vector.load %arg1[%c3_54, %c0_55] : memref<27x1024xf32, #tpu.memory_space<vmem>>, vector<1x1024xf32>
    %194 = vector.broadcast %193 : vector<1x1024xf32> to vector<16x1024xf32>
    %195 = arith.mulf %192, %194 : vector<16x1024xf32>
    %196 = arith.truncf %195 : vector<16x1024xf32> to vector<16x1024xbf16>
    %c64_i32_56 = arith.constant 64 : i32
    %197 = tpu.dynamic_rotate %176 by %c64_i32_56 dim 1 : vector<16x1024xf32>, i32 -> vector<16x1024xf32>
    %c4_57 = arith.constant 4 : index
    %c0_58 = arith.constant 0 : index
    %198 = vector.load %arg1[%c4_57, %c0_58] : memref<27x1024xf32, #tpu.memory_space<vmem>>, vector<1x1024xf32>
    %199 = vector.broadcast %198 : vector<1x1024xf32> to vector<16x1024xf32>
    %200 = arith.mulf %197, %199 : vector<16x1024xf32>
    %201 = arith.truncf %200 : vector<16x1024xf32> to vector<16x1024xbf16>
    %c63_i32_59 = arith.constant 63 : i32
    %202 = tpu.dynamic_rotate %176 by %c63_i32_59 dim 1 : vector<16x1024xf32>, i32 -> vector<16x1024xf32>
    %c5_60 = arith.constant 5 : index
    %c0_61 = arith.constant 0 : index
    %203 = vector.load %arg1[%c5_60, %c0_61] : memref<27x1024xf32, #tpu.memory_space<vmem>>, vector<1x1024xf32>
    %204 = vector.broadcast %203 : vector<1x1024xf32> to vector<16x1024xf32>
    %205 = arith.mulf %202, %204 : vector<16x1024xf32>
    %206 = arith.truncf %205 : vector<16x1024xf32> to vector<16x1024xbf16>
    %c57_i32_62 = arith.constant 57 : i32
    %207 = tpu.dynamic_rotate %176 by %c57_i32_62 dim 1 : vector<16x1024xf32>, i32 -> vector<16x1024xf32>
    %c6_63 = arith.constant 6 : index
    %c0_64 = arith.constant 0 : index
    %208 = vector.load %arg1[%c6_63, %c0_64] : memref<27x1024xf32, #tpu.memory_space<vmem>>, vector<1x1024xf32>
    %209 = vector.broadcast %208 : vector<1x1024xf32> to vector<16x1024xf32>
    %210 = arith.mulf %207, %209 : vector<16x1024xf32>
    %211 = arith.truncf %210 : vector<16x1024xf32> to vector<16x1024xbf16>
    %c56_i32_65 = arith.constant 56 : i32
    %212 = tpu.dynamic_rotate %176 by %c56_i32_65 dim 1 : vector<16x1024xf32>, i32 -> vector<16x1024xf32>
    %c7_66 = arith.constant 7 : index
    %c0_67 = arith.constant 0 : index
    %213 = vector.load %arg1[%c7_66, %c0_67] : memref<27x1024xf32, #tpu.memory_space<vmem>>, vector<1x1024xf32>
    %214 = vector.broadcast %213 : vector<1x1024xf32> to vector<16x1024xf32>
    %215 = arith.mulf %212, %214 : vector<16x1024xf32>
    %216 = arith.truncf %215 : vector<16x1024xf32> to vector<16x1024xbf16>
    %c55_i32_68 = arith.constant 55 : i32
    %217 = tpu.dynamic_rotate %176 by %c55_i32_68 dim 1 : vector<16x1024xf32>, i32 -> vector<16x1024xf32>
    %c8_69 = arith.constant 8 : index
    %c0_70 = arith.constant 0 : index
    %218 = vector.load %arg1[%c8_69, %c0_70] : memref<27x1024xf32, #tpu.memory_space<vmem>>, vector<1x1024xf32>
    %219 = vector.broadcast %218 : vector<1x1024xf32> to vector<16x1024xf32>
    %220 = arith.mulf %217, %219 : vector<16x1024xf32>
    %221 = arith.truncf %220 : vector<16x1024xf32> to vector<16x1024xbf16>
    %c9_i32_71 = arith.constant 9 : i32
    %222 = tpu.dynamic_rotate %176 by %c9_i32_71 dim 1 : vector<16x1024xf32>, i32 -> vector<16x1024xf32>
    %c9_72 = arith.constant 9 : index
    %c0_73 = arith.constant 0 : index
    %223 = vector.load %arg1[%c9_72, %c0_73] : memref<27x1024xf32, #tpu.memory_space<vmem>>, vector<1x1024xf32>
    %224 = vector.broadcast %223 : vector<1x1024xf32> to vector<16x1024xf32>
    %225 = arith.mulf %222, %224 : vector<16x1024xf32>
    %226 = arith.truncf %225 : vector<16x1024xf32> to vector<16x1024xbf16>
    %c8_i32_74 = arith.constant 8 : i32
    %227 = tpu.dynamic_rotate %176 by %c8_i32_74 dim 1 : vector<16x1024xf32>, i32 -> vector<16x1024xf32>
    %c10_75 = arith.constant 10 : index
    %c0_76 = arith.constant 0 : index
    %228 = vector.load %arg1[%c10_75, %c0_76] : memref<27x1024xf32, #tpu.memory_space<vmem>>, vector<1x1024xf32>
    %229 = vector.broadcast %228 : vector<1x1024xf32> to vector<16x1024xf32>
    %230 = arith.mulf %227, %229 : vector<16x1024xf32>
    %231 = arith.truncf %230 : vector<16x1024xf32> to vector<16x1024xbf16>
    %c7_i32_77 = arith.constant 7 : i32
    %232 = tpu.dynamic_rotate %176 by %c7_i32_77 dim 1 : vector<16x1024xf32>, i32 -> vector<16x1024xf32>
    %c11_78 = arith.constant 11 : index
    %c0_79 = arith.constant 0 : index
    %233 = vector.load %arg1[%c11_78, %c0_79] : memref<27x1024xf32, #tpu.memory_space<vmem>>, vector<1x1024xf32>
    %234 = vector.broadcast %233 : vector<1x1024xf32> to vector<16x1024xf32>
    %235 = arith.mulf %232, %234 : vector<16x1024xf32>
    %236 = arith.truncf %235 : vector<16x1024xf32> to vector<16x1024xbf16>
    %c1_i32_80 = arith.constant 1 : i32
    %237 = tpu.dynamic_rotate %176 by %c1_i32_80 dim 1 : vector<16x1024xf32>, i32 -> vector<16x1024xf32>
    %c12_81 = arith.constant 12 : index
    %c0_82 = arith.constant 0 : index
    %238 = vector.load %arg1[%c12_81, %c0_82] : memref<27x1024xf32, #tpu.memory_space<vmem>>, vector<1x1024xf32>
    %239 = vector.broadcast %238 : vector<1x1024xf32> to vector<16x1024xf32>
    %240 = arith.mulf %237, %239 : vector<16x1024xf32>
    %241 = arith.truncf %240 : vector<16x1024xf32> to vector<16x1024xbf16>
    %242 = arith.truncf %176 : vector<16x1024xf32> to vector<16x1024xbf16>
    %c1023_i32_83 = arith.constant 1023 : i32
    %243 = tpu.dynamic_rotate %176 by %c1023_i32_83 dim 1 : vector<16x1024xf32>, i32 -> vector<16x1024xf32>
    %c14_84 = arith.constant 14 : index
    %c0_85 = arith.constant 0 : index
    %244 = vector.load %arg1[%c14_84, %c0_85] : memref<27x1024xf32, #tpu.memory_space<vmem>>, vector<1x1024xf32>
    %245 = vector.broadcast %244 : vector<1x1024xf32> to vector<16x1024xf32>
    %246 = arith.mulf %243, %245 : vector<16x1024xf32>
    %247 = arith.truncf %246 : vector<16x1024xf32> to vector<16x1024xbf16>
    %c1017_i32_86 = arith.constant 1017 : i32
    %248 = tpu.dynamic_rotate %176 by %c1017_i32_86 dim 1 : vector<16x1024xf32>, i32 -> vector<16x1024xf32>
    %c15_87 = arith.constant 15 : index
    %c0_88 = arith.constant 0 : index
    %249 = vector.load %arg1[%c15_87, %c0_88] : memref<27x1024xf32, #tpu.memory_space<vmem>>, vector<1x1024xf32>
    %250 = vector.broadcast %249 : vector<1x1024xf32> to vector<16x1024xf32>
    %251 = arith.mulf %248, %250 : vector<16x1024xf32>
    %252 = arith.truncf %251 : vector<16x1024xf32> to vector<16x1024xbf16>
    %c1016_i32_89 = arith.constant 1016 : i32
    %253 = tpu.dynamic_rotate %176 by %c1016_i32_89 dim 1 : vector<16x1024xf32>, i32 -> vector<16x1024xf32>
    %c16_90 = arith.constant 16 : index
    %c0_91 = arith.constant 0 : index
    %254 = vector.load %arg1[%c16_90, %c0_91] : memref<27x1024xf32, #tpu.memory_space<vmem>>, vector<1x1024xf32>
    %255 = vector.broadcast %254 : vector<1x1024xf32> to vector<16x1024xf32>
    %256 = arith.mulf %253, %255 : vector<16x1024xf32>
    %257 = arith.truncf %256 : vector<16x1024xf32> to vector<16x1024xbf16>
    %c1015_i32_92 = arith.constant 1015 : i32
    %258 = tpu.dynamic_rotate %176 by %c1015_i32_92 dim 1 : vector<16x1024xf32>, i32 -> vector<16x1024xf32>
    %c17_93 = arith.constant 17 : index
    %c0_94 = arith.constant 0 : index
    %259 = vector.load %arg1[%c17_93, %c0_94] : memref<27x1024xf32, #tpu.memory_space<vmem>>, vector<1x1024xf32>
    %260 = vector.broadcast %259 : vector<1x1024xf32> to vector<16x1024xf32>
    %261 = arith.mulf %258, %260 : vector<16x1024xf32>
    %262 = arith.truncf %261 : vector<16x1024xf32> to vector<16x1024xbf16>
    %c969_i32_95 = arith.constant 969 : i32
    %263 = tpu.dynamic_rotate %176 by %c969_i32_95 dim 1 : vector<16x1024xf32>, i32 -> vector<16x1024xf32>
    %c18_96 = arith.constant 18 : index
    %c0_97 = arith.constant 0 : index
    %264 = vector.load %arg1[%c18_96, %c0_97] : memref<27x1024xf32, #tpu.memory_space<vmem>>, vector<1x1024xf32>
    %265 = vector.broadcast %264 : vector<1x1024xf32> to vector<16x1024xf32>
    %266 = arith.mulf %263, %265 : vector<16x1024xf32>
    %267 = arith.truncf %266 : vector<16x1024xf32> to vector<16x1024xbf16>
    %c968_i32_98 = arith.constant 968 : i32
    %268 = tpu.dynamic_rotate %176 by %c968_i32_98 dim 1 : vector<16x1024xf32>, i32 -> vector<16x1024xf32>
    %c19_99 = arith.constant 19 : index
    %c0_100 = arith.constant 0 : index
    %269 = vector.load %arg1[%c19_99, %c0_100] : memref<27x1024xf32, #tpu.memory_space<vmem>>, vector<1x1024xf32>
    %270 = vector.broadcast %269 : vector<1x1024xf32> to vector<16x1024xf32>
    %271 = arith.mulf %268, %270 : vector<16x1024xf32>
    %272 = arith.truncf %271 : vector<16x1024xf32> to vector<16x1024xbf16>
    %c967_i32_101 = arith.constant 967 : i32
    %273 = tpu.dynamic_rotate %176 by %c967_i32_101 dim 1 : vector<16x1024xf32>, i32 -> vector<16x1024xf32>
    %c20_102 = arith.constant 20 : index
    %c0_103 = arith.constant 0 : index
    %274 = vector.load %arg1[%c20_102, %c0_103] : memref<27x1024xf32, #tpu.memory_space<vmem>>, vector<1x1024xf32>
    %275 = vector.broadcast %274 : vector<1x1024xf32> to vector<16x1024xf32>
    %276 = arith.mulf %273, %275 : vector<16x1024xf32>
    %277 = arith.truncf %276 : vector<16x1024xf32> to vector<16x1024xbf16>
    %c961_i32_104 = arith.constant 961 : i32
    %278 = tpu.dynamic_rotate %176 by %c961_i32_104 dim 1 : vector<16x1024xf32>, i32 -> vector<16x1024xf32>
    %c21_105 = arith.constant 21 : index
    %c0_106 = arith.constant 0 : index
    %279 = vector.load %arg1[%c21_105, %c0_106] : memref<27x1024xf32, #tpu.memory_space<vmem>>, vector<1x1024xf32>
    %280 = vector.broadcast %279 : vector<1x1024xf32> to vector<16x1024xf32>
    %281 = arith.mulf %278, %280 : vector<16x1024xf32>
    %282 = arith.truncf %281 : vector<16x1024xf32> to vector<16x1024xbf16>
    %c960_i32_107 = arith.constant 960 : i32
    %283 = tpu.dynamic_rotate %176 by %c960_i32_107 dim 1 : vector<16x1024xf32>, i32 -> vector<16x1024xf32>
    %c22_108 = arith.constant 22 : index
    %c0_109 = arith.constant 0 : index
    %284 = vector.load %arg1[%c22_108, %c0_109] : memref<27x1024xf32, #tpu.memory_space<vmem>>, vector<1x1024xf32>
    %285 = vector.broadcast %284 : vector<1x1024xf32> to vector<16x1024xf32>
    %286 = arith.mulf %283, %285 : vector<16x1024xf32>
    %287 = arith.truncf %286 : vector<16x1024xf32> to vector<16x1024xbf16>
    %c959_i32_110 = arith.constant 959 : i32
    %288 = tpu.dynamic_rotate %176 by %c959_i32_110 dim 1 : vector<16x1024xf32>, i32 -> vector<16x1024xf32>
    %c23_111 = arith.constant 23 : index
    %c0_112 = arith.constant 0 : index
    %289 = vector.load %arg1[%c23_111, %c0_112] : memref<27x1024xf32, #tpu.memory_space<vmem>>, vector<1x1024xf32>
    %290 = vector.broadcast %289 : vector<1x1024xf32> to vector<16x1024xf32>
    %291 = arith.mulf %288, %290 : vector<16x1024xf32>
    %292 = arith.truncf %291 : vector<16x1024xf32> to vector<16x1024xbf16>
    %c953_i32_113 = arith.constant 953 : i32
    %293 = tpu.dynamic_rotate %176 by %c953_i32_113 dim 1 : vector<16x1024xf32>, i32 -> vector<16x1024xf32>
    %c24_114 = arith.constant 24 : index
    %c0_115 = arith.constant 0 : index
    %294 = vector.load %arg1[%c24_114, %c0_115] : memref<27x1024xf32, #tpu.memory_space<vmem>>, vector<1x1024xf32>
    %295 = vector.broadcast %294 : vector<1x1024xf32> to vector<16x1024xf32>
    %296 = arith.mulf %293, %295 : vector<16x1024xf32>
    %297 = arith.truncf %296 : vector<16x1024xf32> to vector<16x1024xbf16>
    %c952_i32_116 = arith.constant 952 : i32
    %298 = tpu.dynamic_rotate %176 by %c952_i32_116 dim 1 : vector<16x1024xf32>, i32 -> vector<16x1024xf32>
    %c25_117 = arith.constant 25 : index
    %c0_118 = arith.constant 0 : index
    %299 = vector.load %arg1[%c25_117, %c0_118] : memref<27x1024xf32, #tpu.memory_space<vmem>>, vector<1x1024xf32>
    %300 = vector.broadcast %299 : vector<1x1024xf32> to vector<16x1024xf32>
    %301 = arith.mulf %298, %300 : vector<16x1024xf32>
    %302 = arith.truncf %301 : vector<16x1024xf32> to vector<16x1024xbf16>
    %c951_i32_119 = arith.constant 951 : i32
    %303 = tpu.dynamic_rotate %176 by %c951_i32_119 dim 1 : vector<16x1024xf32>, i32 -> vector<16x1024xf32>
    %c26_120 = arith.constant 26 : index
    %c0_121 = arith.constant 0 : index
    %304 = vector.load %arg1[%c26_120, %c0_121] : memref<27x1024xf32, #tpu.memory_space<vmem>>, vector<1x1024xf32>
    %305 = vector.broadcast %304 : vector<1x1024xf32> to vector<16x1024xf32>
    %306 = arith.mulf %303, %305 : vector<16x1024xf32>
    %307 = arith.truncf %306 : vector<16x1024xf32> to vector<16x1024xbf16>
    %308 = tpu.concatenate %181, %186, %191, %196, %201, %206, %211, %216, %221, %226, %231, %236, %241, %242, %247, %252 in 0 : vector<16x1024xbf16>, vector<16x1024xbf16>, vector<16x1024xbf16>, vector<16x1024xbf16>, vector<16x1024xbf16>, vector<16x1024xbf16>, vector<16x1024xbf16>, vector<16x1024xbf16>, vector<16x1024xbf16>, vector<16x1024xbf16>, vector<16x1024xbf16>, vector<16x1024xbf16>, vector<16x1024xbf16>, vector<16x1024xbf16>, vector<16x1024xbf16>, vector<16x1024xbf16> -> vector<256x1024xbf16>
    %309 = tpu.concatenate %257, %262, %267, %272, %277, %282, %287, %292, %297, %302, %307 in 0 : vector<16x1024xbf16>, vector<16x1024xbf16>, vector<16x1024xbf16>, vector<16x1024xbf16>, vector<16x1024xbf16>, vector<16x1024xbf16>, vector<16x1024xbf16>, vector<16x1024xbf16>, vector<16x1024xbf16>, vector<16x1024xbf16>, vector<16x1024xbf16> -> vector<176x1024xbf16>
    %310 = tpu.concatenate %308, %309 in 0 : vector<256x1024xbf16>, vector<176x1024xbf16> -> vector<432x1024xbf16>
    %c1_122 = arith.constant 1 : index
    %c0_123 = arith.constant 0 : index
    %c0_124 = arith.constant 0 : index
    %311 = vector.load %arg2[%c1_122, %c0_123, %c0_124] : memref<3x16x432xbf16, #tpu.memory_space<vmem>>, vector<1x16x432xbf16>
    %312 = vector.shape_cast %311 : vector<1x16x432xbf16> to vector<16x432xbf16>
    %cst_125 = arith.constant dense<0.000000e+00> : vector<16x1024xf32>
    %313 = tpu.matmul %312, %310, %cst_125 {dimension_numbers = #tpu.dot_dimension_numbers<[1], [0], [0], [1], [0, 0, 1, 1], [], []>} : vector<16x432xbf16>, vector<432x1024xbf16>, vector<16x1024xf32> -> vector<16x1024xf32>
    %cst_126 = arith.constant dense<0.000000e+00> : vector<16xf32>
    %314 = vector.multi_reduction <add>, %313, %cst_126 [1] : vector<16x1024xf32> to vector<16xf32>
    %315 = vector.shape_cast %314 : vector<16xf32> to vector<16x1xf32>
    %cst_127 = arith.constant 1.024000e+03 : f32
    %316 = vector.broadcast %cst_127 : f32 to vector<16x1xf32>
    %317 = arith.divf %315, %316 : vector<16x1xf32>
    %318 = vector.broadcast %317 : vector<16x1xf32> to vector<16x1024xf32>
    %319 = arith.subf %313, %318 : vector<16x1024xf32>
    %320 = arith.mulf %319, %319 : vector<16x1024xf32>
    %cst_128 = arith.constant dense<0.000000e+00> : vector<16xf32>
    %321 = vector.multi_reduction <add>, %320, %cst_128 [1] : vector<16x1024xf32> to vector<16xf32>
    %322 = vector.shape_cast %321 : vector<16xf32> to vector<16x1xf32>
    %cst_129 = arith.constant 1.024000e+03 : f32
    %323 = vector.broadcast %cst_129 : f32 to vector<16x1xf32>
    %324 = arith.divf %322, %323 : vector<16x1xf32>
    %c1_130 = arith.constant 1 : index
    %c0_131 = arith.constant 0 : index
    %c0_132 = arith.constant 0 : index
    %325 = vector.load %arg3[%c1_130, %c0_131, %c0_132] : memref<3x16x1xf32, #tpu.memory_space<vmem>>, vector<1x16x1xf32>
    %326 = vector.shape_cast %325 : vector<1x16x1xf32> to vector<16x1xf32>
    %cst_133 = arith.constant 9.99999974E-6 : f32
    %327 = vector.broadcast %cst_133 : f32 to vector<16x1xf32>
    %328 = arith.addf %324, %327 : vector<16x1xf32>
    %329 = math.rsqrt %328 : vector<16x1xf32>
    %330 = arith.mulf %326, %329 : vector<16x1xf32>
    %c1_134 = arith.constant 1 : index
    %c0_135 = arith.constant 0 : index
    %c0_136 = arith.constant 0 : index
    %331 = vector.load %arg4[%c1_134, %c0_135, %c0_136] : memref<3x16x1xf32, #tpu.memory_space<vmem>>, vector<1x16x1xf32>
    %332 = vector.shape_cast %331 : vector<1x16x1xf32> to vector<16x1xf32>
    %333 = arith.mulf %317, %330 : vector<16x1xf32>
    %334 = arith.subf %332, %333 : vector<16x1xf32>
    %335 = vector.broadcast %330 : vector<16x1xf32> to vector<16x1024xf32>
    %336 = arith.mulf %313, %335 : vector<16x1024xf32>
    %337 = vector.broadcast %334 : vector<16x1xf32> to vector<16x1024xf32>
    %338 = arith.addf %336, %337 : vector<16x1024xf32>
    %cst_137 = arith.constant 0.000000e+00 : f32
    %339 = vector.broadcast %cst_137 : f32 to vector<16x1024xf32>
    %340 = arith.maximumf %338, %339 : vector<16x1024xf32>
    %c73_i32_138 = arith.constant 73 : i32
    %341 = tpu.dynamic_rotate %340 by %c73_i32_138 dim 1 : vector<16x1024xf32>, i32 -> vector<16x1024xf32>
    %c0_139 = arith.constant 0 : index
    %c0_140 = arith.constant 0 : index
    %342 = vector.load %arg1[%c0_139, %c0_140] : memref<27x1024xf32, #tpu.memory_space<vmem>>, vector<1x1024xf32>
    %343 = vector.broadcast %342 : vector<1x1024xf32> to vector<16x1024xf32>
    %344 = arith.mulf %341, %343 : vector<16x1024xf32>
    %345 = arith.truncf %344 : vector<16x1024xf32> to vector<16x1024xbf16>
    %c72_i32_141 = arith.constant 72 : i32
    %346 = tpu.dynamic_rotate %340 by %c72_i32_141 dim 1 : vector<16x1024xf32>, i32 -> vector<16x1024xf32>
    %c1_142 = arith.constant 1 : index
    %c0_143 = arith.constant 0 : index
    %347 = vector.load %arg1[%c1_142, %c0_143] : memref<27x1024xf32, #tpu.memory_space<vmem>>, vector<1x1024xf32>
    %348 = vector.broadcast %347 : vector<1x1024xf32> to vector<16x1024xf32>
    %349 = arith.mulf %346, %348 : vector<16x1024xf32>
    %350 = arith.truncf %349 : vector<16x1024xf32> to vector<16x1024xbf16>
    %c71_i32_144 = arith.constant 71 : i32
    %351 = tpu.dynamic_rotate %340 by %c71_i32_144 dim 1 : vector<16x1024xf32>, i32 -> vector<16x1024xf32>
    %c2_145 = arith.constant 2 : index
    %c0_146 = arith.constant 0 : index
    %352 = vector.load %arg1[%c2_145, %c0_146] : memref<27x1024xf32, #tpu.memory_space<vmem>>, vector<1x1024xf32>
    %353 = vector.broadcast %352 : vector<1x1024xf32> to vector<16x1024xf32>
    %354 = arith.mulf %351, %353 : vector<16x1024xf32>
    %355 = arith.truncf %354 : vector<16x1024xf32> to vector<16x1024xbf16>
    %c65_i32_147 = arith.constant 65 : i32
    %356 = tpu.dynamic_rotate %340 by %c65_i32_147 dim 1 : vector<16x1024xf32>, i32 -> vector<16x1024xf32>
    %c3_148 = arith.constant 3 : index
    %c0_149 = arith.constant 0 : index
    %357 = vector.load %arg1[%c3_148, %c0_149] : memref<27x1024xf32, #tpu.memory_space<vmem>>, vector<1x1024xf32>
    %358 = vector.broadcast %357 : vector<1x1024xf32> to vector<16x1024xf32>
    %359 = arith.mulf %356, %358 : vector<16x1024xf32>
    %360 = arith.truncf %359 : vector<16x1024xf32> to vector<16x1024xbf16>
    %c64_i32_150 = arith.constant 64 : i32
    %361 = tpu.dynamic_rotate %340 by %c64_i32_150 dim 1 : vector<16x1024xf32>, i32 -> vector<16x1024xf32>
    %c4_151 = arith.constant 4 : index
    %c0_152 = arith.constant 0 : index
    %362 = vector.load %arg1[%c4_151, %c0_152] : memref<27x1024xf32, #tpu.memory_space<vmem>>, vector<1x1024xf32>
    %363 = vector.broadcast %362 : vector<1x1024xf32> to vector<16x1024xf32>
    %364 = arith.mulf %361, %363 : vector<16x1024xf32>
    %365 = arith.truncf %364 : vector<16x1024xf32> to vector<16x1024xbf16>
    %c63_i32_153 = arith.constant 63 : i32
    %366 = tpu.dynamic_rotate %340 by %c63_i32_153 dim 1 : vector<16x1024xf32>, i32 -> vector<16x1024xf32>
    %c5_154 = arith.constant 5 : index
    %c0_155 = arith.constant 0 : index
    %367 = vector.load %arg1[%c5_154, %c0_155] : memref<27x1024xf32, #tpu.memory_space<vmem>>, vector<1x1024xf32>
    %368 = vector.broadcast %367 : vector<1x1024xf32> to vector<16x1024xf32>
    %369 = arith.mulf %366, %368 : vector<16x1024xf32>
    %370 = arith.truncf %369 : vector<16x1024xf32> to vector<16x1024xbf16>
    %c57_i32_156 = arith.constant 57 : i32
    %371 = tpu.dynamic_rotate %340 by %c57_i32_156 dim 1 : vector<16x1024xf32>, i32 -> vector<16x1024xf32>
    %c6_157 = arith.constant 6 : index
    %c0_158 = arith.constant 0 : index
    %372 = vector.load %arg1[%c6_157, %c0_158] : memref<27x1024xf32, #tpu.memory_space<vmem>>, vector<1x1024xf32>
    %373 = vector.broadcast %372 : vector<1x1024xf32> to vector<16x1024xf32>
    %374 = arith.mulf %371, %373 : vector<16x1024xf32>
    %375 = arith.truncf %374 : vector<16x1024xf32> to vector<16x1024xbf16>
    %c56_i32_159 = arith.constant 56 : i32
    %376 = tpu.dynamic_rotate %340 by %c56_i32_159 dim 1 : vector<16x1024xf32>, i32 -> vector<16x1024xf32>
    %c7_160 = arith.constant 7 : index
    %c0_161 = arith.constant 0 : index
    %377 = vector.load %arg1[%c7_160, %c0_161] : memref<27x1024xf32, #tpu.memory_space<vmem>>, vector<1x1024xf32>
    %378 = vector.broadcast %377 : vector<1x1024xf32> to vector<16x1024xf32>
    %379 = arith.mulf %376, %378 : vector<16x1024xf32>
    %380 = arith.truncf %379 : vector<16x1024xf32> to vector<16x1024xbf16>
    %c55_i32_162 = arith.constant 55 : i32
    %381 = tpu.dynamic_rotate %340 by %c55_i32_162 dim 1 : vector<16x1024xf32>, i32 -> vector<16x1024xf32>
    %c8_163 = arith.constant 8 : index
    %c0_164 = arith.constant 0 : index
    %382 = vector.load %arg1[%c8_163, %c0_164] : memref<27x1024xf32, #tpu.memory_space<vmem>>, vector<1x1024xf32>
    %383 = vector.broadcast %382 : vector<1x1024xf32> to vector<16x1024xf32>
    %384 = arith.mulf %381, %383 : vector<16x1024xf32>
    %385 = arith.truncf %384 : vector<16x1024xf32> to vector<16x1024xbf16>
    %c9_i32_165 = arith.constant 9 : i32
    %386 = tpu.dynamic_rotate %340 by %c9_i32_165 dim 1 : vector<16x1024xf32>, i32 -> vector<16x1024xf32>
    %c9_166 = arith.constant 9 : index
    %c0_167 = arith.constant 0 : index
    %387 = vector.load %arg1[%c9_166, %c0_167] : memref<27x1024xf32, #tpu.memory_space<vmem>>, vector<1x1024xf32>
    %388 = vector.broadcast %387 : vector<1x1024xf32> to vector<16x1024xf32>
    %389 = arith.mulf %386, %388 : vector<16x1024xf32>
    %390 = arith.truncf %389 : vector<16x1024xf32> to vector<16x1024xbf16>
    %c8_i32_168 = arith.constant 8 : i32
    %391 = tpu.dynamic_rotate %340 by %c8_i32_168 dim 1 : vector<16x1024xf32>, i32 -> vector<16x1024xf32>
    %c10_169 = arith.constant 10 : index
    %c0_170 = arith.constant 0 : index
    %392 = vector.load %arg1[%c10_169, %c0_170] : memref<27x1024xf32, #tpu.memory_space<vmem>>, vector<1x1024xf32>
    %393 = vector.broadcast %392 : vector<1x1024xf32> to vector<16x1024xf32>
    %394 = arith.mulf %391, %393 : vector<16x1024xf32>
    %395 = arith.truncf %394 : vector<16x1024xf32> to vector<16x1024xbf16>
    %c7_i32_171 = arith.constant 7 : i32
    %396 = tpu.dynamic_rotate %340 by %c7_i32_171 dim 1 : vector<16x1024xf32>, i32 -> vector<16x1024xf32>
    %c11_172 = arith.constant 11 : index
    %c0_173 = arith.constant 0 : index
    %397 = vector.load %arg1[%c11_172, %c0_173] : memref<27x1024xf32, #tpu.memory_space<vmem>>, vector<1x1024xf32>
    %398 = vector.broadcast %397 : vector<1x1024xf32> to vector<16x1024xf32>
    %399 = arith.mulf %396, %398 : vector<16x1024xf32>
    %400 = arith.truncf %399 : vector<16x1024xf32> to vector<16x1024xbf16>
    %c1_i32_174 = arith.constant 1 : i32
    %401 = tpu.dynamic_rotate %340 by %c1_i32_174 dim 1 : vector<16x1024xf32>, i32 -> vector<16x1024xf32>
    %c12_175 = arith.constant 12 : index
    %c0_176 = arith.constant 0 : index
    %402 = vector.load %arg1[%c12_175, %c0_176] : memref<27x1024xf32, #tpu.memory_space<vmem>>, vector<1x1024xf32>
    %403 = vector.broadcast %402 : vector<1x1024xf32> to vector<16x1024xf32>
    %404 = arith.mulf %401, %403 : vector<16x1024xf32>
    %405 = arith.truncf %404 : vector<16x1024xf32> to vector<16x1024xbf16>
    %406 = arith.truncf %340 : vector<16x1024xf32> to vector<16x1024xbf16>
    %c1023_i32_177 = arith.constant 1023 : i32
    %407 = tpu.dynamic_rotate %340 by %c1023_i32_177 dim 1 : vector<16x1024xf32>, i32 -> vector<16x1024xf32>
    %c14_178 = arith.constant 14 : index
    %c0_179 = arith.constant 0 : index
    %408 = vector.load %arg1[%c14_178, %c0_179] : memref<27x1024xf32, #tpu.memory_space<vmem>>, vector<1x1024xf32>
    %409 = vector.broadcast %408 : vector<1x1024xf32> to vector<16x1024xf32>
    %410 = arith.mulf %407, %409 : vector<16x1024xf32>
    %411 = arith.truncf %410 : vector<16x1024xf32> to vector<16x1024xbf16>
    %c1017_i32_180 = arith.constant 1017 : i32
    %412 = tpu.dynamic_rotate %340 by %c1017_i32_180 dim 1 : vector<16x1024xf32>, i32 -> vector<16x1024xf32>
    %c15_181 = arith.constant 15 : index
    %c0_182 = arith.constant 0 : index
    %413 = vector.load %arg1[%c15_181, %c0_182] : memref<27x1024xf32, #tpu.memory_space<vmem>>, vector<1x1024xf32>
    %414 = vector.broadcast %413 : vector<1x1024xf32> to vector<16x1024xf32>
    %415 = arith.mulf %412, %414 : vector<16x1024xf32>
    %416 = arith.truncf %415 : vector<16x1024xf32> to vector<16x1024xbf16>
    %c1016_i32_183 = arith.constant 1016 : i32
    %417 = tpu.dynamic_rotate %340 by %c1016_i32_183 dim 1 : vector<16x1024xf32>, i32 -> vector<16x1024xf32>
    %c16_184 = arith.constant 16 : index
    %c0_185 = arith.constant 0 : index
    %418 = vector.load %arg1[%c16_184, %c0_185] : memref<27x1024xf32, #tpu.memory_space<vmem>>, vector<1x1024xf32>
    %419 = vector.broadcast %418 : vector<1x1024xf32> to vector<16x1024xf32>
    %420 = arith.mulf %417, %419 : vector<16x1024xf32>
    %421 = arith.truncf %420 : vector<16x1024xf32> to vector<16x1024xbf16>
    %c1015_i32_186 = arith.constant 1015 : i32
    %422 = tpu.dynamic_rotate %340 by %c1015_i32_186 dim 1 : vector<16x1024xf32>, i32 -> vector<16x1024xf32>
    %c17_187 = arith.constant 17 : index
    %c0_188 = arith.constant 0 : index
    %423 = vector.load %arg1[%c17_187, %c0_188] : memref<27x1024xf32, #tpu.memory_space<vmem>>, vector<1x1024xf32>
    %424 = vector.broadcast %423 : vector<1x1024xf32> to vector<16x1024xf32>
    %425 = arith.mulf %422, %424 : vector<16x1024xf32>
    %426 = arith.truncf %425 : vector<16x1024xf32> to vector<16x1024xbf16>
    %c969_i32_189 = arith.constant 969 : i32
    %427 = tpu.dynamic_rotate %340 by %c969_i32_189 dim 1 : vector<16x1024xf32>, i32 -> vector<16x1024xf32>
    %c18_190 = arith.constant 18 : index
    %c0_191 = arith.constant 0 : index
    %428 = vector.load %arg1[%c18_190, %c0_191] : memref<27x1024xf32, #tpu.memory_space<vmem>>, vector<1x1024xf32>
    %429 = vector.broadcast %428 : vector<1x1024xf32> to vector<16x1024xf32>
    %430 = arith.mulf %427, %429 : vector<16x1024xf32>
    %431 = arith.truncf %430 : vector<16x1024xf32> to vector<16x1024xbf16>
    %c968_i32_192 = arith.constant 968 : i32
    %432 = tpu.dynamic_rotate %340 by %c968_i32_192 dim 1 : vector<16x1024xf32>, i32 -> vector<16x1024xf32>
    %c19_193 = arith.constant 19 : index
    %c0_194 = arith.constant 0 : index
    %433 = vector.load %arg1[%c19_193, %c0_194] : memref<27x1024xf32, #tpu.memory_space<vmem>>, vector<1x1024xf32>
    %434 = vector.broadcast %433 : vector<1x1024xf32> to vector<16x1024xf32>
    %435 = arith.mulf %432, %434 : vector<16x1024xf32>
    %436 = arith.truncf %435 : vector<16x1024xf32> to vector<16x1024xbf16>
    %c967_i32_195 = arith.constant 967 : i32
    %437 = tpu.dynamic_rotate %340 by %c967_i32_195 dim 1 : vector<16x1024xf32>, i32 -> vector<16x1024xf32>
    %c20_196 = arith.constant 20 : index
    %c0_197 = arith.constant 0 : index
    %438 = vector.load %arg1[%c20_196, %c0_197] : memref<27x1024xf32, #tpu.memory_space<vmem>>, vector<1x1024xf32>
    %439 = vector.broadcast %438 : vector<1x1024xf32> to vector<16x1024xf32>
    %440 = arith.mulf %437, %439 : vector<16x1024xf32>
    %441 = arith.truncf %440 : vector<16x1024xf32> to vector<16x1024xbf16>
    %c961_i32_198 = arith.constant 961 : i32
    %442 = tpu.dynamic_rotate %340 by %c961_i32_198 dim 1 : vector<16x1024xf32>, i32 -> vector<16x1024xf32>
    %c21_199 = arith.constant 21 : index
    %c0_200 = arith.constant 0 : index
    %443 = vector.load %arg1[%c21_199, %c0_200] : memref<27x1024xf32, #tpu.memory_space<vmem>>, vector<1x1024xf32>
    %444 = vector.broadcast %443 : vector<1x1024xf32> to vector<16x1024xf32>
    %445 = arith.mulf %442, %444 : vector<16x1024xf32>
    %446 = arith.truncf %445 : vector<16x1024xf32> to vector<16x1024xbf16>
    %c960_i32_201 = arith.constant 960 : i32
    %447 = tpu.dynamic_rotate %340 by %c960_i32_201 dim 1 : vector<16x1024xf32>, i32 -> vector<16x1024xf32>
    %c22_202 = arith.constant 22 : index
    %c0_203 = arith.constant 0 : index
    %448 = vector.load %arg1[%c22_202, %c0_203] : memref<27x1024xf32, #tpu.memory_space<vmem>>, vector<1x1024xf32>
    %449 = vector.broadcast %448 : vector<1x1024xf32> to vector<16x1024xf32>
    %450 = arith.mulf %447, %449 : vector<16x1024xf32>
    %451 = arith.truncf %450 : vector<16x1024xf32> to vector<16x1024xbf16>
    %c959_i32_204 = arith.constant 959 : i32
    %452 = tpu.dynamic_rotate %340 by %c959_i32_204 dim 1 : vector<16x1024xf32>, i32 -> vector<16x1024xf32>
    %c23_205 = arith.constant 23 : index
    %c0_206 = arith.constant 0 : index
    %453 = vector.load %arg1[%c23_205, %c0_206] : memref<27x1024xf32, #tpu.memory_space<vmem>>, vector<1x1024xf32>
    %454 = vector.broadcast %453 : vector<1x1024xf32> to vector<16x1024xf32>
    %455 = arith.mulf %452, %454 : vector<16x1024xf32>
    %456 = arith.truncf %455 : vector<16x1024xf32> to vector<16x1024xbf16>
    %c953_i32_207 = arith.constant 953 : i32
    %457 = tpu.dynamic_rotate %340 by %c953_i32_207 dim 1 : vector<16x1024xf32>, i32 -> vector<16x1024xf32>
    %c24_208 = arith.constant 24 : index
    %c0_209 = arith.constant 0 : index
    %458 = vector.load %arg1[%c24_208, %c0_209] : memref<27x1024xf32, #tpu.memory_space<vmem>>, vector<1x1024xf32>
    %459 = vector.broadcast %458 : vector<1x1024xf32> to vector<16x1024xf32>
    %460 = arith.mulf %457, %459 : vector<16x1024xf32>
    %461 = arith.truncf %460 : vector<16x1024xf32> to vector<16x1024xbf16>
    %c952_i32_210 = arith.constant 952 : i32
    %462 = tpu.dynamic_rotate %340 by %c952_i32_210 dim 1 : vector<16x1024xf32>, i32 -> vector<16x1024xf32>
    %c25_211 = arith.constant 25 : index
    %c0_212 = arith.constant 0 : index
    %463 = vector.load %arg1[%c25_211, %c0_212] : memref<27x1024xf32, #tpu.memory_space<vmem>>, vector<1x1024xf32>
    %464 = vector.broadcast %463 : vector<1x1024xf32> to vector<16x1024xf32>
    %465 = arith.mulf %462, %464 : vector<16x1024xf32>
    %466 = arith.truncf %465 : vector<16x1024xf32> to vector<16x1024xbf16>
    %c951_i32_213 = arith.constant 951 : i32
    %467 = tpu.dynamic_rotate %340 by %c951_i32_213 dim 1 : vector<16x1024xf32>, i32 -> vector<16x1024xf32>
    %c26_214 = arith.constant 26 : index
    %c0_215 = arith.constant 0 : index
    %468 = vector.load %arg1[%c26_214, %c0_215] : memref<27x1024xf32, #tpu.memory_space<vmem>>, vector<1x1024xf32>
    %469 = vector.broadcast %468 : vector<1x1024xf32> to vector<16x1024xf32>
    %470 = arith.mulf %467, %469 : vector<16x1024xf32>
    %471 = arith.truncf %470 : vector<16x1024xf32> to vector<16x1024xbf16>
    %472 = tpu.concatenate %345, %350, %355, %360, %365, %370, %375, %380, %385, %390, %395, %400, %405, %406, %411, %416 in 0 : vector<16x1024xbf16>, vector<16x1024xbf16>, vector<16x1024xbf16>, vector<16x1024xbf16>, vector<16x1024xbf16>, vector<16x1024xbf16>, vector<16x1024xbf16>, vector<16x1024xbf16>, vector<16x1024xbf16>, vector<16x1024xbf16>, vector<16x1024xbf16>, vector<16x1024xbf16>, vector<16x1024xbf16>, vector<16x1024xbf16>, vector<16x1024xbf16>, vector<16x1024xbf16> -> vector<256x1024xbf16>
    %473 = tpu.concatenate %421, %426, %431, %436, %441, %446, %451, %456, %461, %466, %471 in 0 : vector<16x1024xbf16>, vector<16x1024xbf16>, vector<16x1024xbf16>, vector<16x1024xbf16>, vector<16x1024xbf16>, vector<16x1024xbf16>, vector<16x1024xbf16>, vector<16x1024xbf16>, vector<16x1024xbf16>, vector<16x1024xbf16>, vector<16x1024xbf16> -> vector<176x1024xbf16>
    %474 = tpu.concatenate %472, %473 in 0 : vector<256x1024xbf16>, vector<176x1024xbf16> -> vector<432x1024xbf16>
    %c2_216 = arith.constant 2 : index
    %c0_217 = arith.constant 0 : index
    %c0_218 = arith.constant 0 : index
    %475 = vector.load %arg2[%c2_216, %c0_217, %c0_218] : memref<3x16x432xbf16, #tpu.memory_space<vmem>>, vector<1x16x432xbf16>
    %476 = vector.shape_cast %475 : vector<1x16x432xbf16> to vector<16x432xbf16>
    %cst_219 = arith.constant dense<0.000000e+00> : vector<16x1024xf32>
    %477 = tpu.matmul %476, %474, %cst_219 {dimension_numbers = #tpu.dot_dimension_numbers<[1], [0], [0], [1], [0, 0, 1, 1], [], []>} : vector<16x432xbf16>, vector<432x1024xbf16>, vector<16x1024xf32> -> vector<16x1024xf32>
    %cst_220 = arith.constant dense<0.000000e+00> : vector<16xf32>
    %478 = vector.multi_reduction <add>, %477, %cst_220 [1] : vector<16x1024xf32> to vector<16xf32>
    %479 = vector.shape_cast %478 : vector<16xf32> to vector<16x1xf32>
    %cst_221 = arith.constant 1.024000e+03 : f32
    %480 = vector.broadcast %cst_221 : f32 to vector<16x1xf32>
    %481 = arith.divf %479, %480 : vector<16x1xf32>
    %482 = vector.broadcast %481 : vector<16x1xf32> to vector<16x1024xf32>
    %483 = arith.subf %477, %482 : vector<16x1024xf32>
    %484 = arith.mulf %483, %483 : vector<16x1024xf32>
    %cst_222 = arith.constant dense<0.000000e+00> : vector<16xf32>
    %485 = vector.multi_reduction <add>, %484, %cst_222 [1] : vector<16x1024xf32> to vector<16xf32>
    %486 = vector.shape_cast %485 : vector<16xf32> to vector<16x1xf32>
    %cst_223 = arith.constant 1.024000e+03 : f32
    %487 = vector.broadcast %cst_223 : f32 to vector<16x1xf32>
    %488 = arith.divf %486, %487 : vector<16x1xf32>
    %c2_224 = arith.constant 2 : index
    %c0_225 = arith.constant 0 : index
    %c0_226 = arith.constant 0 : index
    %489 = vector.load %arg3[%c2_224, %c0_225, %c0_226] : memref<3x16x1xf32, #tpu.memory_space<vmem>>, vector<1x16x1xf32>
    %490 = vector.shape_cast %489 : vector<1x16x1xf32> to vector<16x1xf32>
    %cst_227 = arith.constant 9.99999974E-6 : f32
    %491 = vector.broadcast %cst_227 : f32 to vector<16x1xf32>
    %492 = arith.addf %488, %491 : vector<16x1xf32>
    %493 = math.rsqrt %492 : vector<16x1xf32>
    %494 = arith.mulf %490, %493 : vector<16x1xf32>
    %c2_228 = arith.constant 2 : index
    %c0_229 = arith.constant 0 : index
    %c0_230 = arith.constant 0 : index
    %495 = vector.load %arg4[%c2_228, %c0_229, %c0_230] : memref<3x16x1xf32, #tpu.memory_space<vmem>>, vector<1x16x1xf32>
    %496 = vector.shape_cast %495 : vector<1x16x1xf32> to vector<16x1xf32>
    %497 = arith.mulf %481, %494 : vector<16x1xf32>
    %498 = arith.subf %496, %497 : vector<16x1xf32>
    %499 = vector.broadcast %494 : vector<16x1xf32> to vector<16x1024xf32>
    %500 = arith.mulf %477, %499 : vector<16x1024xf32>
    %501 = vector.broadcast %498 : vector<16x1xf32> to vector<16x1024xf32>
    %502 = arith.addf %500, %501 : vector<16x1024xf32>
    %cst_231 = arith.constant 0.000000e+00 : f32
    %503 = vector.broadcast %cst_231 : f32 to vector<16x1024xf32>
    %504 = arith.maximumf %502, %503 : vector<16x1024xf32>
    %c1023_i32_232 = arith.constant 1023 : i32
    %505 = tpu.dynamic_rotate %504 by %c1023_i32_232 dim 1 : vector<16x1024xf32>, i32 -> vector<16x1024xf32>
    %506 = arith.maximumf %504, %505 : vector<16x1024xf32>
    %c1022_i32 = arith.constant 1022 : i32
    %507 = tpu.dynamic_rotate %504 by %c1022_i32 dim 1 : vector<16x1024xf32>, i32 -> vector<16x1024xf32>
    %508 = arith.maximumf %506, %507 : vector<16x1024xf32>
    %c1021_i32 = arith.constant 1021 : i32
    %509 = tpu.dynamic_rotate %504 by %c1021_i32 dim 1 : vector<16x1024xf32>, i32 -> vector<16x1024xf32>
    %510 = arith.maximumf %508, %509 : vector<16x1024xf32>
    %c1016_i32_233 = arith.constant 1016 : i32
    %511 = tpu.dynamic_rotate %510 by %c1016_i32_233 dim 1 : vector<16x1024xf32>, i32 -> vector<16x1024xf32>
    %512 = arith.maximumf %510, %511 : vector<16x1024xf32>
    %c1008_i32 = arith.constant 1008 : i32
    %513 = tpu.dynamic_rotate %510 by %c1008_i32 dim 1 : vector<16x1024xf32>, i32 -> vector<16x1024xf32>
    %514 = arith.maximumf %512, %513 : vector<16x1024xf32>
    %c1000_i32 = arith.constant 1000 : i32
    %515 = tpu.dynamic_rotate %510 by %c1000_i32 dim 1 : vector<16x1024xf32>, i32 -> vector<16x1024xf32>
    %516 = arith.maximumf %514, %515 : vector<16x1024xf32>
    %c960_i32_234 = arith.constant 960 : i32
    %517 = tpu.dynamic_rotate %516 by %c960_i32_234 dim 1 : vector<16x1024xf32>, i32 -> vector<16x1024xf32>
    %518 = arith.maximumf %516, %517 : vector<16x1024xf32>
    %c896_i32 = arith.constant 896 : i32
    %519 = tpu.dynamic_rotate %516 by %c896_i32 dim 1 : vector<16x1024xf32>, i32 -> vector<16x1024xf32>
    %520 = arith.maximumf %518, %519 : vector<16x1024xf32>
    %c832_i32 = arith.constant 832 : i32
    %521 = tpu.dynamic_rotate %516 by %c832_i32 dim 1 : vector<16x1024xf32>, i32 -> vector<16x1024xf32>
    %522 = arith.maximumf %520, %521 : vector<16x1024xf32>
    %c0_235 = arith.constant 0 : index
    %c0_236 = arith.constant 0 : index
    %523 = vector.load %arg5[%c0_235, %c0_236] : memref<16x1024xf32, #tpu.memory_space<vmem>>, vector<16x1024xf32>
    %524 = arith.mulf %522, %523 : vector<16x1024xf32>
    %525 = vector.extract_strided_slice %524 {offsets = [0, 0], sizes = [16, 512], strides = [1, 1]} : vector<16x1024xf32> to vector<16x512xf32>
    %cst_237 = arith.constant dense<0.000000e+00> : vector<16xf32>
    %526 = vector.multi_reduction <add>, %525, %cst_237 [1] : vector<16x512xf32> to vector<16xf32>
    %527 = vector.shape_cast %526 : vector<16xf32> to vector<16x1xf32>
    %cst_238 = arith.constant dense<0.000000e+00> : vector<1xf32>
    %528 = vector.multi_reduction <add>, %527, %cst_238 [0] : vector<16x1xf32> to vector<1xf32>
    %529 = vector.shape_cast %528 : vector<1xf32> to vector<1x1xf32>
    %530 = vector.extract_strided_slice %524 {offsets = [0, 512], sizes = [16, 512], strides = [1, 1]} : vector<16x1024xf32> to vector<16x512xf32>
    %cst_239 = arith.constant dense<0.000000e+00> : vector<16xf32>
    %531 = vector.multi_reduction <add>, %530, %cst_239 [1] : vector<16x512xf32> to vector<16xf32>
    %532 = vector.shape_cast %531 : vector<16xf32> to vector<16x1xf32>
    %cst_240 = arith.constant dense<0.000000e+00> : vector<1xf32>
    %533 = vector.multi_reduction <add>, %532, %cst_240 [0] : vector<16x1xf32> to vector<1xf32>
    %534 = vector.shape_cast %533 : vector<1xf32> to vector<1x1xf32>
    %535 = tpu.concatenate %529, %534 in 0 : vector<1x1xf32>, vector<1x1xf32> -> vector<2x1xf32>
    %c0_241 = arith.constant 0 : index
    %c0_242 = arith.constant 0 : index
    %536 = vector.load %arg6[%c0_241, %c0_242] : memref<2x7xf32, #tpu.memory_space<vmem>>, vector<2x7xf32>
    %c0_243 = arith.constant 0 : index
    %c0_244 = arith.constant 0 : index
    %537 = vector.load %arg7[%c0_243, %c0_244] : memref<1x7xf32, #tpu.memory_space<vmem>>, vector<1x7xf32>
    %538 = vector.broadcast %537 : vector<1x7xf32> to vector<2x7xf32>
    %539 = arith.mulf %536, %538 : vector<2x7xf32>
    %cst_245 = arith.constant dense<0.000000e+00> : vector<2xf32>
    %540 = vector.multi_reduction <add>, %539, %cst_245 [1] : vector<2x7xf32> to vector<2xf32>
    %541 = vector.shape_cast %540 : vector<2xf32> to vector<2x1xf32>
    %542 = arith.addf %535, %541 : vector<2x1xf32>
    %c0_246 = arith.constant 0 : index
    %543 = memref.load %arg8[%c0_246] : memref<1xf32, #tpu.memory_space<smem>>
    %544 = vector.broadcast %543 : f32 to vector<2x1xf32>
    %545 = arith.addf %542, %544 : vector<2x1xf32>
    %c0_247 = arith.constant 0 : index
    %c0_248 = arith.constant 0 : index
    %546 = vector.load %arg9[%c0_247, %c0_248] : memref<2x1xf32, #tpu.memory_space<vmem>>, vector<2x1xf32>
    tpu.vector_store %arg9[%c0_247, %c0_248], %545 {strides = array<i32>} : memref<2x1xf32, #tpu.memory_space<vmem>>, vector<2x1xf32>,
    return
  }
}

</mosaic_0001>

<llo_original>
// kernel: tpu_custom_call.1
$region0: #{tpu_custom_call.1}
  #allocation0 [shape = 'u32[]', space=smem, size = 0x4, offset = 0x4, fixed_abs, tag = 'smem constant byte address 0x4 - core index']
  #allocation1 [shape = 'u32[144,128]{1,0:T(1,128)}', space=vmem, size = 0x12000, scoped, tag = 'internal scratch']
  #allocation2 [shape = 'f32[1]{0:T(128)S(6)}', space=smem, size = 0x200, scoped, tag = 'scoped memory for tpu_custom_call.1']
  %s0 = inlined_call_operand.hbm [shape: f32[16,1024], index: 0, kind: input, shape index: {}]
  %s1 = inlined_call_operand.hbm [shape: f32[27,1024], index: 1, kind: input, shape index: {}]
  %s2 = inlined_call_operand.vmem [shape: bf16[3,16,432], index: 2, kind: input, shape index: {}]
  %s3 = inlined_call_operand.vmem [shape: f32[3,16,1], index: 3, kind: input, shape index: {}]
  %s4 = inlined_call_operand.vmem [shape: f32[3,16,1], index: 4, kind: input, shape index: {}]
  %s5 = inlined_call_operand.hbm [shape: f32[16,1024], index: 5, kind: input, shape index: {}]
  %s6 = inlined_call_operand.vmem [shape: f32[2,7], index: 6, kind: input, shape index: {}]
  %s7 = inlined_call_operand.vmem [shape: f32[1,7], index: 7, kind: input, shape index: {}]
  %s8 = inlined_call_operand.<no memory space> [shape: f32[1], index: 8, kind: input, shape index: {}]
  %s9 = inlined_call_operand.vmem [shape: f32[2,1], index: 9, kind: output, shape index: {}]
  %s10 = sld [smem:[#allocation0]]
  $region58: #{tpu_custom_call.1} parent=0
    _
  %s12 = ssub.s32 1, %s10
  %s13 = scalar_select 0, %s12, %s10
  %14 = sst [smem:[#allocation2]] %s8
  $region1: #{tpu_custom_call.1} parent=0
    #allocation3 [shape = 'u8[65536]{0}', space=vmem, size = 0x10000, scoped, tag = 'input window, operand 0, single buffered']
    #allocation4 [shape = 's32[1]{0}', space=sflag, size = 0x4, scoped, tag = 'scoped memory for tpu_custom_call.1']
    #allocation5 [shape = 'u8[131072]{0}', space=vmem, size = 0x20000, scoped, tag = 'input window, operand 1, single buffered']
    #allocation6 [shape = 's32[1]{0}', space=sflag, size = 0x4, scoped, tag = 'scoped memory for tpu_custom_call.1']
    #allocation7 [shape = 'u8[65536]{0}', space=vmem, size = 0x10000, scoped, tag = 'input window, operand 5, single buffered']
    %15 = vsyncpa [#allocation4], 0
    %16 = vsyncpa [#allocation6], 0
    // Predicated region
    $region2: #{tpu_custom_call.1} parent=1 // pred_check
      _
    $region3: #{tpu_custom_call.1} parent=1 // pred_check_branch
      %18 = sbr.rel (0) target = $region5
    $region4: #{tpu_custom_call.1} parent=1 // pred_region
      %s20 = ssub.s32 2048, 2048
      %21 = vsyncadd [#allocation4], %s20
      %s22 = sshll.u32 [#allocation3], 4
      %s23 = int_to_ptr.vmem [resolvable:$true] %s22
      %28 = dma.hbm_to_vmem [thread:$0]  %s0, 2048, %s23, [#allocation4], 1024, 1024, 64
    $region5: #{tpu_custom_call.1} parent=1 // pred_fallthru
      _
    // Predicated region
    $region6: #{tpu_custom_call.1} parent=1 // pred_check
      _
    $region7: #{tpu_custom_call.1} parent=1 // pred_check_branch
      %30 = sbr.rel (0) target = $region9
    $region8: #{tpu_custom_call.1} parent=1 // pred_region
      %s32 = ssub.s32 4096, 4096
      %33 = vsyncadd [#allocation6], %s32
      %s34 = sshll.u32 [#allocation5], 4
      %s35 = int_to_ptr.vmem [resolvable:$true] %s34
      %40 = dma.hbm_to_vmem [thread:$0]  %s1, 4096, %s35, [#allocation6], 1024, 1024, 64
    $region9: #{tpu_custom_call.1} parent=1 // pred_fallthru
      _
    // Predicated region
    $region10: #{tpu_custom_call.1} parent=1 // pred_check
      _
    $region11: #{tpu_custom_call.1} parent=1 // pred_check_branch
      %42 = sbr.rel (0) target = $region13
    $region12: #{tpu_custom_call.1} parent=1 // pred_region
      _
    $region13: #{tpu_custom_call.1} parent=1 // pred_fallthru
      _
    // Predicated region
    $region14: #{tpu_custom_call.1} parent=1 // pred_check
      _
    $region15: #{tpu_custom_call.1} parent=1 // pred_check_branch
      %44 = sbr.rel (0) target = $region17
    $region16: #{tpu_custom_call.1} parent=1 // pred_region
      _
    $region17: #{tpu_custom_call.1} parent=1 // pred_fallthru
      _
    // Predicated region
    $region18: #{tpu_custom_call.1} parent=1 // pred_check
      _
    $region19: #{tpu_custom_call.1} parent=1 // pred_check_branch
      %46 = sbr.rel (0) target = $region21
    $region20: #{tpu_custom_call.1} parent=1 // pred_region
      _
    $region21: #{tpu_custom_call.1} parent=1 // pred_fallthru
      _
    // Predicated region
    $region22: #{tpu_custom_call.1} parent=1 // pred_check
      _
    $region23: #{tpu_custom_call.1} parent=1 // pred_check_branch
      %48 = sbr.rel (0) target = $region25
    $region24: #{tpu_custom_call.1} parent=1 // pred_region
      %s50 = ssub.s32 2048, 2048
      %51 = vsyncadd [#allocation6], %s50
      %s52 = sshll.u32 [#allocation7], 4
      %s53 = int_to_ptr.vmem [resolvable:$true] %s52
      %58 = dma.hbm_to_vmem [thread:$0]  %s5, 2048, %s53, [#allocation6], 1024, 1024, 64
    $region25: #{tpu_custom_call.1} parent=1 // pred_fallthru
      _
    // Predicated region
    $region26: #{tpu_custom_call.1} parent=1 // pred_check
      _
    $region27: #{tpu_custom_call.1} parent=1 // pred_check_branch
      %60 = sbr.rel (0) target = $region29
    $region28: #{tpu_custom_call.1} parent=1 // pred_region
      _
    $region29: #{tpu_custom_call.1} parent=1 // pred_fallthru
      _
    // Predicated region
    $region30: #{tpu_custom_call.1} parent=1 // pred_check
      _
    $region31: #{tpu_custom_call.1} parent=1 // pred_check_branch
      %62 = sbr.rel (0) target = $region33
    $region32: #{tpu_custom_call.1} parent=1 // pred_region
      _
    $region33: #{tpu_custom_call.1} parent=1 // pred_fallthru
      _
    // Predicated region
    $region34: #{tpu_custom_call.1} parent=1 // pred_check
      _
    $region35: #{tpu_custom_call.1} parent=1 // pred_check_branch
      %64 = sbr.rel (0) target = $region37
    $region36: #{tpu_custom_call.1} parent=1 // pred_region
      _
    $region37: #{tpu_custom_call.1} parent=1 // pred_fallthru
      _
    // Predicated region
    $region38: #{tpu_custom_call.1} parent=1 // pred_check
      _
    $region39: #{tpu_custom_call.1} parent=1 // pred_check_branch
      %66 = sbr.rel (0) target = $region41
    $region40: #{tpu_custom_call.1} parent=1 // pred_region
      %67 = dma.done [#allocation4], 2048
    $region41: #{tpu_custom_call.1} parent=1 // pred_fallthru
      _
    // Predicated region
    $region42: #{tpu_custom_call.1} parent=1 // pred_check
      _
    $region43: #{tpu_custom_call.1} parent=1 // pred_check_branch
      %69 = sbr.rel (0) target = $region45
    $region44: #{tpu_custom_call.1} parent=1 // pred_region
      %70 = dma.done [#allocation6], 4096
    $region45: #{tpu_custom_call.1} parent=1 // pred_fallthru
      _
    // Predicated region
    $region46: #{tpu_custom_call.1} parent=1 // pred_check
      _
    $region47: #{tpu_custom_call.1} parent=1 // pred_check_branch
      %72 = sbr.rel (0) target = $region49
    $region48: #{tpu_custom_call.1} parent=1 // pred_region
      %73 = dma.done [#allocation6], 2048
    $region49: #{tpu_custom_call.1} parent=1 // pred_fallthru
      _
    %v75 = vld [vmem:[#allocation3] sm:$0xff]
    %v76 = vld [vmem:[#allocation3 + $0x8] sm:$0xff]
    %v77 = vld [vmem:[#allocation3 + $0x10] sm:$0xff]
    %v78 = vld [vmem:[#allocation3 + $0x18] sm:$0xff]
    %v79 = vld [vmem:[#allocation3 + $0x20] sm:$0xff]
    %v80 = vld [vmem:[#allocation3 + $0x28] sm:$0xff]
    %v81 = vld [vmem:[#allocation3 + $0x30] sm:$0xff]
    %v82 = vld [vmem:[#allocation3 + $0x38] sm:$0xff]
    %v83 = vld [vmem:[#allocation3 + $0x40] sm:$0xff]
    %v84 = vld [vmem:[#allocation3 + $0x48] sm:$0xff]
    %v85 = vld [vmem:[#allocation3 + $0x50] sm:$0xff]
    %v86 = vld [vmem:[#allocation3 + $0x58] sm:$0xff]
    %v87 = vld [vmem:[#allocation3 + $0x60] sm:$0xff]
    %v88 = vld [vmem:[#allocation3 + $0x68] sm:$0xff]
    %v89 = vld [vmem:[#allocation3 + $0x70] sm:$0xff]
    %v90 = vld [vmem:[#allocation3 + $0x78] sm:$0xff]
    %v91 = vlaneseq
    %v92 = vshrl.u32 %v91, 7
    %v93 = vadd.s32 %v92, 8
    %vm94 = vcmp.ge.s32.totalorder %v92, 8
    %vm95 = vcmp.ge.s32.totalorder %v93, 8
    %vm96 = vcmp.le.s32.totalorder %v92, 10
    %vm97 = vcmp.le.s32.totalorder %v93, 10
    %vm98 = vmand %vm94, %vm96
    %vm99 = vmand %vm95, %vm97
    %v100 = vlaneseq
    %v101 = vshrl.u32 %v100, 7
    %v102 = vsub.s32 7, %v101
    %v103 = vrot.slane %v75, %v102
    %v104 = vlaneseq
    %v105 = vshrl.u32 %v104, 7
    %v106 = vsub.s32 7, %v105
    %v107 = vrot.slane %v76, %v106
    %v108 = vlaneseq
    %v109 = vshrl.u32 %v108, 7
    %v110 = vsub.s32 7, %v109
    %v111 = vrot.slane %v77, %v110
    %v112 = vlaneseq
    %v113 = vshrl.u32 %v112, 7
    %v114 = vsub.s32 7, %v113
    %v115 = vrot.slane %v78, %v114
    %v116 = vlaneseq
    %v117 = vshrl.u32 %v116, 7
    %v118 = vsub.s32 7, %v117
    %v119 = vrot.slane %v79, %v118
    %v120 = vlaneseq
    %v121 = vshrl.u32 %v120, 7
    %v122 = vsub.s32 7, %v121
    %v123 = vrot.slane %v80, %v122
    %v124 = vlaneseq
    %v125 = vshrl.u32 %v124, 7
    %v126 = vsub.s32 7, %v125
    %v127 = vrot.slane %v81, %v126
    %v128 = vlaneseq
    %v129 = vshrl.u32 %v128, 7
    %v130 = vsub.s32 7, %v129
    %v131 = vrot.slane %v82, %v130
    %v132 = vmul.f32 %v75, %v103
    %v133 = vmul.f32 %v76, %v107
    %v134 = vmul.f32 %v77, %v111
    %v135 = vmul.f32 %v78, %v115
    %v136 = vmul.f32 %v79, %v119
    %v137 = vmul.f32 %v80, %v123
    %v138 = vmul.f32 %v81, %v127
    %v139 = vmul.f32 %v82, %v131
    %v140 = vmul.f32 %v83, %v103
    %v141 = vmul.f32 %v84, %v107
    %v142 = vmul.f32 %v85, %v111
    %v143 = vmul.f32 %v86, %v115
    %v144 = vmul.f32 %v87, %v119
    %v145 = vmul.f32 %v88, %v123
    %v146 = vmul.f32 %v89, %v127
    %v147 = vmul.f32 %v90, %v131
    %v148 = vsel %vm98, 1, 0
    %v149 = vsel %vm99, 1, 0
    %vm150 = vcmp.eq.s32.totalorder %v148, 1
    %vm151 = vcmp.eq.s32.totalorder %v149, 1
    %v152 = vsel %vm150, %v132, %v75
    %v153 = vsel %vm150, %v133, %v76
    %v154 = vsel %vm150, %v134, %v77
    %v155 = vsel %vm150, %v135, %v78
    %v156 = vsel %vm150, %v136, %v79
    %v157 = vsel %vm150, %v137, %v80
    %v158 = vsel %vm150, %v138, %v81
    %v159 = vsel %vm150, %v139, %v82
    %v160 = vsel %vm151, %v140, %v83
    %v161 = vsel %vm151, %v141, %v84
    %v162 = vsel %vm151, %v142, %v85
    %v163 = vsel %vm151, %v143, %v86
    %v164 = vsel %vm151, %v144, %v87
    %v165 = vsel %vm151, %v145, %v88
    %v166 = vsel %vm151, %v146, %v89
    %v167 = vsel %vm151, %v147, %v90
    %168 = vrot.lane.b32.xlu0 %v152, 73
    %v169 = vpop.permute.xlu0 %168
    %170 = vrot.lane.b32.xlu0 %v160, 73
    %v171 = vpop.permute.xlu0 %170
    %172 = vrot.lane.b32.xlu0 %v153, 73
    %v173 = vpop.permute.xlu0 %172
    %174 = vrot.lane.b32.xlu0 %v161, 73
    %v175 = vpop.permute.xlu0 %174
    %176 = vrot.lane.b32.xlu0 %v154, 73
    %v177 = vpop.permute.xlu0 %176
    %178 = vrot.lane.b32.xlu0 %v162, 73
    %v179 = vpop.permute.xlu0 %178
    %180 = vrot.lane.b32.xlu0 %v155, 73
    %v181 = vpop.permute.xlu0 %180
    %182 = vrot.lane.b32.xlu0 %v163, 73
    %v183 = vpop.permute.xlu0 %182
    %184 = vrot.lane.b32.xlu0 %v156, 73
    %v185 = vpop.permute.xlu0 %184
    %186 = vrot.lane.b32.xlu0 %v164, 73
    %v187 = vpop.permute.xlu0 %186
    %188 = vrot.lane.b32.xlu0 %v157, 73
    %v189 = vpop.permute.xlu0 %188
    %190 = vrot.lane.b32.xlu0 %v165, 73
    %v191 = vpop.permute.xlu0 %190
    %192 = vrot.lane.b32.xlu0 %v158, 73
    %v193 = vpop.permute.xlu0 %192
    %194 = vrot.lane.b32.xlu0 %v166, 73
    %v195 = vpop.permute.xlu0 %194
    %196 = vrot.lane.b32.xlu0 %v159, 73
    %v197 = vpop.permute.xlu0 %196
    %198 = vrot.lane.b32.xlu0 %v167, 73
    %v199 = vpop.permute.xlu0 %198
    %v200 = vlaneseq
    %v201 = vand.u32 %v200, 127
    %vm202 = vcmp.lt.s32.totalorder %v201, 73
    %v203 = vsel %vm202, %v193, %v197
    %v204 = vsel %vm202, %v195, %v199
    %v205 = vsel %vm202, %v189, %v193
    %v206 = vsel %vm202, %v191, %v195
    %v207 = vsel %vm202, %v185, %v189
    %v208 = vsel %vm202, %v187, %v191
    %v209 = vsel %vm202, %v181, %v185
    %v210 = vsel %vm202, %v183, %v187
    %v211 = vsel %vm202, %v177, %v181
    %v212 = vsel %vm202, %v179, %v183
    %v213 = vsel %vm202, %v173, %v177
    %v214 = vsel %vm202, %v175, %v179
    %v215 = vsel %vm202, %v169, %v173
    %v216 = vsel %vm202, %v171, %v175
    %v217 = vsel %vm202, %v197, %v169
    %v218 = vsel %vm202, %v199, %v171
    %v219 = vld [vmem:[#allocation5] ss:$8 sm:$0xf]
    %v220 = vld [vmem:[#allocation5] ss:$8 sm:$0xf0]
    %v221 = vor.u32 %v219, %v220
    %v223 = vlaneseq
    %v224 = vshrl.u32 %v223, 7
    %v225 = vsub.s32 0, %v224
    %v226 = vrot.slane %v221, %v225
    %v227 = vlaneseq
    %v228 = vshrl.u32 %v227, 7
    %v229 = vsub.s32 1, %v228
    %v230 = vrot.slane %v221, %v229
    %v231 = vlaneseq
    %v232 = vshrl.u32 %v231, 7
    %v233 = vsub.s32 2, %v232
    %v234 = vrot.slane %v221, %v233
    %v235 = vlaneseq
    %v236 = vshrl.u32 %v235, 7
    %v237 = vsub.s32 3, %v236
    %v238 = vrot.slane %v221, %v237
    %v239 = vlaneseq
    %v240 = vshrl.u32 %v239, 7
    %v241 = vsub.s32 4, %v240
    %v242 = vrot.slane %v221, %v241
    %v243 = vlaneseq
    %v244 = vshrl.u32 %v243, 7
    %v245 = vsub.s32 5, %v244
    %v246 = vrot.slane %v221, %v245
    %v247 = vlaneseq
    %v248 = vshrl.u32 %v247, 7
    %v249 = vsub.s32 6, %v248
    %v250 = vrot.slane %v221, %v249
    %v251 = vlaneseq
    %v252 = vshrl.u32 %v251, 7
    %v253 = vsub.s32 7, %v252
    %v254 = vrot.slane %v221, %v253
    %v263 = vmul.f32 %v217, %v226
    %v264 = vmul.f32 %v215, %v230
    %v265 = vmul.f32 %v213, %v234
    %v266 = vmul.f32 %v211, %v238
    %v267 = vmul.f32 %v209, %v242
    %v268 = vmul.f32 %v207, %v246
    %v269 = vmul.f32 %v205, %v250
    %v270 = vmul.f32 %v203, %v254
    %v271 = vmul.f32 %v218, %v226
    %v272 = vmul.f32 %v216, %v230
    %v273 = vmul.f32 %v214, %v234
    %v274 = vmul.f32 %v212, %v238
    %v275 = vmul.f32 %v210, %v242
    %v276 = vmul.f32 %v208, %v246
    %v277 = vmul.f32 %v206, %v250
    %v278 = vmul.f32 %v204, %v254
    %v279 = vpack.c.bf16 %v271, %v263
    %v280 = vpack.c.bf16 %v272, %v264
    %v281 = vpack.c.bf16 %v273, %v265
    %v282 = vpack.c.bf16 %v274, %v266
    %v283 = vpack.c.bf16 %v275, %v267
    %v284 = vpack.c.bf16 %v276, %v268
    %v285 = vpack.c.bf16 %v277, %v269
    %v286 = vpack.c.bf16 %v278, %v270
    %287 = vrot.lane.b32.xlu0 %v152, 72
    %v288 = vpop.permute.xlu0 %287
    %289 = vrot.lane.b32.xlu0 %v160, 72
    %v290 = vpop.permute.xlu0 %289
    %291 = vrot.lane.b32.xlu0 %v153, 72
    %v292 = vpop.permute.xlu0 %291
    %293 = vrot.lane.b32.xlu0 %v161, 72
    %v294 = vpop.permute.xlu0 %293
    %295 = vrot.lane.b32.xlu0 %v154, 72
    %v296 = vpop.permute.xlu0 %295
    %297 = vrot.lane.b32.xlu0 %v162, 72
    %v298 = vpop.permute.xlu0 %297
    %299 = vrot.lane.b32.xlu0 %v155, 72
    %v300 = vpop.permute.xlu0 %299
    %301 = vrot.lane.b32.xlu0 %v163, 72
    %v302 = vpop.permute.xlu0 %301
    %303 = vrot.lane.b32.xlu0 %v156, 72
    %v304 = vpop.permute.xlu0 %303
    %305 = vrot.lane.b32.xlu0 %v164, 72
    %v306 = vpop.permute.xlu0 %305
    %307 = vrot.lane.b32.xlu0 %v157, 72
    %v308 = vpop.permute.xlu0 %307
    %309 = vrot.lane.b32.xlu0 %v165, 72
    %v310 = vpop.permute.xlu0 %309
    %311 = vrot.lane.b32.xlu0 %v158, 72
    %v312 = vpop.permute.xlu0 %311
    %313 = vrot.lane.b32.xlu0 %v166, 72
    %v314 = vpop.permute.xlu0 %313
    %315 = vrot.lane.b32.xlu0 %v159, 72
    %v316 = vpop.permute.xlu0 %315
    %317 = vrot.lane.b32.xlu0 %v167, 72
    %v318 = vpop.permute.xlu0 %317
    %vm319 = vcmp.lt.s32.totalorder %v201, 72
    %v320 = vsel %vm319, %v312, %v316
    %v321 = vsel %vm319, %v314, %v318
    %v322 = vsel %vm319, %v308, %v312
    %v323 = vsel %vm319, %v310, %v314
    %v324 = vsel %vm319, %v304, %v308
    %v325 = vsel %vm319, %v306, %v310
    %v326 = vsel %vm319, %v300, %v304
    %v327 = vsel %vm319, %v302, %v306
    %v328 = vsel %vm319, %v296, %v300
    %v329 = vsel %vm319, %v298, %v302
    %v330 = vsel %vm319, %v292, %v296
    %v331 = vsel %vm319, %v294, %v298
    %v332 = vsel %vm319, %v288, %v292
    %v333 = vsel %vm319, %v290, %v294
    %v334 = vsel %vm319, %v316, %v288
    %v335 = vsel %vm319, %v318, %v290
    %s336 = scalar_lea.vmem [#allocation5], 1
    %v337 = vld [vmem:[%s336] ss:$8 sm:$0xf]
    %v338 = vld [vmem:[%s336] ss:$8 sm:$0xf0]
    %v339 = vor.u32 %v337, %v338
    %v341 = vlaneseq
    %v342 = vshrl.u32 %v341, 7
    %v343 = vsub.s32 0, %v342
    %v344 = vrot.slane %v339, %v343
    %v345 = vlaneseq
    %v346 = vshrl.u32 %v345, 7
    %v347 = vsub.s32 1, %v346
    %v348 = vrot.slane %v339, %v347
    %v349 = vlaneseq
    %v350 = vshrl.u32 %v349, 7
    %v351 = vsub.s32 2, %v350
    %v352 = vrot.slane %v339, %v351
    %v353 = vlaneseq
    %v354 = vshrl.u32 %v353, 7
    %v355 = vsub.s32 3, %v354
    %v356 = vrot.slane %v339, %v355
    %v357 = vlaneseq
    %v358 = vshrl.u32 %v357, 7
    %v359 = vsub.s32 4, %v358
    %v360 = vrot.slane %v339, %v359
    %v361 = vlaneseq
    %v362 = vshrl.u32 %v361, 7
    %v363 = vsub.s32 5, %v362
    %v364 = vrot.slane %v339, %v363
    %v365 = vlaneseq
    %v366 = vshrl.u32 %v365, 7
    %v367 = vsub.s32 6, %v366
    %v368 = vrot.slane %v339, %v367
    %v369 = vlaneseq
    %v370 = vshrl.u32 %v369, 7
    %v371 = vsub.s32 7, %v370
    %v372 = vrot.slane %v339, %v371
    %v381 = vmul.f32 %v334, %v344
    %v382 = vmul.f32 %v332, %v348
    %v383 = vmul.f32 %v330, %v352
    %v384 = vmul.f32 %v328, %v356
    %v385 = vmul.f32 %v326, %v360
    %v386 = vmul.f32 %v324, %v364
    %v387 = vmul.f32 %v322, %v368
    %v388 = vmul.f32 %v320, %v372
    %v389 = vmul.f32 %v335, %v344
    %v390 = vmul.f32 %v333, %v348
    %v391 = vmul.f32 %v331, %v352
    %v392 = vmul.f32 %v329, %v356
    %v393 = vmul.f32 %v327, %v360
    %v394 = vmul.f32 %v325, %v364
    %v395 = vmul.f32 %v323, %v368
    %v396 = vmul.f32 %v321, %v372
    %v397 = vpack.c.bf16 %v389, %v381
    %v398 = vpack.c.bf16 %v390, %v382
    %v399 = vpack.c.bf16 %v391, %v383
    %v400 = vpack.c.bf16 %v392, %v384
    %v401 = vpack.c.bf16 %v393, %v385
    %v402 = vpack.c.bf16 %v394, %v386
    %v403 = vpack.c.bf16 %v395, %v387
    %v404 = vpack.c.bf16 %v396, %v388
    %405 = vrot.lane.b32.xlu0 %v152, 71
    %v406 = vpop.permute.xlu0 %405
    %407 = vrot.lane.b32.xlu0 %v160, 71
    %v408 = vpop.permute.xlu0 %407
    %409 = vrot.lane.b32.xlu0 %v153, 71
    %v410 = vpop.permute.xlu0 %409
    %411 = vrot.lane.b32.xlu0 %v161, 71
    %v412 = vpop.permute.xlu0 %411
    %413 = vrot.lane.b32.xlu0 %v154, 71
    %v414 = vpop.permute.xlu0 %413
    %415 = vrot.lane.b32.xlu0 %v162, 71
    %v416 = vpop.permute.xlu0 %415
    %417 = vrot.lane.b32.xlu0 %v155, 71
    %v418 = vpop.permute.xlu0 %417
    %419 = vrot.lane.b32.xlu0 %v163, 71
    %v420 = vpop.permute.xlu0 %419
    %421 = vrot.lane.b32.xlu0 %v156, 71
    %v422 = vpop.permute.xlu0 %421
    %423 = vrot.lane.b32.xlu0 %v164, 71
    %v424 = vpop.permute.xlu0 %423
    %425 = vrot.lane.b32.xlu0 %v157, 71
    %v426 = vpop.permute.xlu0 %425
    %427 = vrot.lane.b32.xlu0 %v165, 71
    %v428 = vpop.permute.xlu0 %427
    %429 = vrot.lane.b32.xlu0 %v158, 71
    %v430 = vpop.permute.xlu0 %429
    %431 = vrot.lane.b32.xlu0 %v166, 71
    %v432 = vpop.permute.xlu0 %431
    %433 = vrot.lane.b32.xlu0 %v159, 71
    %v434 = vpop.permute.xlu0 %433
    %435 = vrot.lane.b32.xlu0 %v167, 71
    %v436 = vpop.permute.xlu0 %435
    %vm437 = vcmp.lt.s32.totalorder %v201, 71
    %v438 = vsel %vm437, %v430, %v434
    %v439 = vsel %vm437, %v432, %v436
    %v440 = vsel %vm437, %v426, %v430
    %v441 = vsel %vm437, %v428, %v432
    %v442 = vsel %vm437, %v422, %v426
    %v443 = vsel %vm437, %v424, %v428
    %v444 = vsel %vm437, %v418, %v422
    %v445 = vsel %vm437, %v420, %v424
    %v446 = vsel %vm437, %v414, %v418
    %v447 = vsel %vm437, %v416, %v420
    %v448 = vsel %vm437, %v410, %v414
    %v449 = vsel %vm437, %v412, %v416
    %v450 = vsel %vm437, %v406, %v410
    %v451 = vsel %vm437, %v408, %v412
    %v452 = vsel %vm437, %v434, %v406
    %v453 = vsel %vm437, %v436, %v408
    %s454 = scalar_lea.vmem [#allocation5], 2
    %v455 = vld [vmem:[%s454] ss:$8 sm:$0xf]
    %v456 = vld [vmem:[%s454] ss:$8 sm:$0xf0]
    %v457 = vor.u32 %v455, %v456
    %v459 = vlaneseq
    %v460 = vshrl.u32 %v459, 7
    %v461 = vsub.s32 0, %v460
    %v462 = vrot.slane %v457, %v461
    %v463 = vlaneseq
    %v464 = vshrl.u32 %v463, 7
    %v465 = vsub.s32 1, %v464
    %v466 = vrot.slane %v457, %v465
    %v467 = vlaneseq
    %v468 = vshrl.u32 %v467, 7
    %v469 = vsub.s32 2, %v468
    %v470 = vrot.slane %v457, %v469
    %v471 = vlaneseq
    %v472 = vshrl.u32 %v471, 7
    %v473 = vsub.s32 3, %v472
    %v474 = vrot.slane %v457, %v473
    %v475 = vlaneseq
    %v476 = vshrl.u32 %v475, 7
    %v477 = vsub.s32 4, %v476
    %v478 = vrot.slane %v457, %v477
    %v479 = vlaneseq
    %v480 = vshrl.u32 %v479, 7
    %v481 = vsub.s32 5, %v480
    %v482 = vrot.slane %v457, %v481
    %v483 = vlaneseq
    %v484 = vshrl.u32 %v483, 7
    %v485 = vsub.s32 6, %v484
    %v486 = vrot.slane %v457, %v485
    %v487 = vlaneseq
    %v488 = vshrl.u32 %v487, 7
    %v489 = vsub.s32 7, %v488
    %v490 = vrot.slane %v457, %v489
    %v499 = vmul.f32 %v452, %v462
    %v500 = vmul.f32 %v450, %v466
    %v501 = vmul.f32 %v448, %v470
    %v502 = vmul.f32 %v446, %v474
    %v503 = vmul.f32 %v444, %v478
    %v504 = vmul.f32 %v442, %v482
    %v505 = vmul.f32 %v440, %v486
    %v506 = vmul.f32 %v438, %v490
    %v507 = vmul.f32 %v453, %v462
    %v508 = vmul.f32 %v451, %v466
    %v509 = vmul.f32 %v449, %v470
    %v510 = vmul.f32 %v447, %v474
    %v511 = vmul.f32 %v445, %v478
    %v512 = vmul.f32 %v443, %v482
    %v513 = vmul.f32 %v441, %v486
    %v514 = vmul.f32 %v439, %v490
    %v515 = vpack.c.bf16 %v507, %v499
    %v516 = vpack.c.bf16 %v508, %v500
    %v517 = vpack.c.bf16 %v509, %v501
    %v518 = vpack.c.bf16 %v510, %v502
    %v519 = vpack.c.bf16 %v511, %v503
    %v520 = vpack.c.bf16 %v512, %v504
    %v521 = vpack.c.bf16 %v513, %v505
    %v522 = vpack.c.bf16 %v514, %v506
    %523 = vrot.lane.b32.xlu0 %v152, 65
    %v524 = vpop.permute.xlu0 %523
    %525 = vrot.lane.b32.xlu0 %v160, 65
    %v526 = vpop.permute.xlu0 %525
    %527 = vrot.lane.b32.xlu0 %v153, 65
    %v528 = vpop.permute.xlu0 %527
    %529 = vrot.lane.b32.xlu0 %v161, 65
    %v530 = vpop.permute.xlu0 %529
    %531 = vrot.lane.b32.xlu0 %v154, 65
    %v532 = vpop.permute.xlu0 %531
    %533 = vrot.lane.b32.xlu0 %v162, 65
    %v534 = vpop.permute.xlu0 %533
    %535 = vrot.lane.b32.xlu0 %v155, 65
    %v536 = vpop.permute.xlu0 %535
    %537 = vrot.lane.b32.xlu0 %v163, 65
    %v538 = vpop.permute.xlu0 %537
    %539 = vrot.lane.b32.xlu0 %v156, 65
    %v540 = vpop.permute.xlu0 %539
    %541 = vrot.lane.b32.xlu0 %v164, 65
    %v542 = vpop.permute.xlu0 %541
    %543 = vrot.lane.b32.xlu0 %v157, 65
    %v544 = vpop.permute.xlu0 %543
    %545 = vrot.lane.b32.xlu0 %v165, 65
    %v546 = vpop.permute.xlu0 %545
    %547 = vrot.lane.b32.xlu0 %v158, 65
    %v548 = vpop.permute.xlu0 %547
    %549 = vrot.lane.b32.xlu0 %v166, 65
    %v550 = vpop.permute.xlu0 %549
    %551 = vrot.lane.b32.xlu0 %v159, 65
    %v552 = vpop.permute.xlu0 %551
    %553 = vrot.lane.b32.xlu0 %v167, 65
    %v554 = vpop.permute.xlu0 %553
    %vm555 = vcmp.lt.s32.totalorder %v201, 65
    %v556 = vsel %vm555, %v548, %v552
    %v557 = vsel %vm555, %v550, %v554
    %v558 = vsel %vm555, %v544, %v548
    %v559 = vsel %vm555, %v546, %v550
    %v560 = vsel %vm555, %v540, %v544
    %v561 = vsel %vm555, %v542, %v546
    %v562 = vsel %vm555, %v536, %v540
    %v563 = vsel %vm555, %v538, %v542
    %v564 = vsel %vm555, %v532, %v536
    %v565 = vsel %vm555, %v534, %v538
    %v566 = vsel %vm555, %v528, %v532
    %v567 = vsel %vm555, %v530, %v534
    %v568 = vsel %vm555, %v524, %v528
    %v569 = vsel %vm555, %v526, %v530
    %v570 = vsel %vm555, %v552, %v524
    %v571 = vsel %vm555, %v554, %v526
    %s572 = scalar_lea.vmem [#allocation5], 3
    %v573 = vld [vmem:[%s572] ss:$8 sm:$0xf]
    %v574 = vld [vmem:[%s572] ss:$8 sm:$0xf0]
    %v575 = vor.u32 %v573, %v574
    %v577 = vlaneseq
    %v578 = vshrl.u32 %v577, 7
    %v579 = vsub.s32 0, %v578
    %v580 = vrot.slane %v575, %v579
    %v581 = vlaneseq
    %v582 = vshrl.u32 %v581, 7
    %v583 = vsub.s32 1, %v582
    %v584 = vrot.slane %v575, %v583
    %v585 = vlaneseq
    %v586 = vshrl.u32 %v585, 7
    %v587 = vsub.s32 2, %v586
    %v588 = vrot.slane %v575, %v587
    %v589 = vlaneseq
    %v590 = vshrl.u32 %v589, 7
    %v591 = vsub.s32 3, %v590
    %v592 = vrot.slane %v575, %v591
    %v593 = vlaneseq
    %v594 = vshrl.u32 %v593, 7
    %v595 = vsub.s32 4, %v594
    %v596 = vrot.slane %v575, %v595
    %v597 = vlaneseq
    %v598 = vshrl.u32 %v597, 7
    %v599 = vsub.s32 5, %v598
    %v600 = vrot.slane %v575, %v599
    %v601 = vlaneseq
    %v602 = vshrl.u32 %v601, 7
    %v603 = vsub.s32 6, %v602
    %v604 = vrot.slane %v575, %v603
    %v605 = vlaneseq
    %v606 = vshrl.u32 %v605, 7
    %v607 = vsub.s32 7, %v606
    %v608 = vrot.slane %v575, %v607
    %v617 = vmul.f32 %v570, %v580
    %v618 = vmul.f32 %v568, %v584
    %v619 = vmul.f32 %v566, %v588
    %v620 = vmul.f32 %v564, %v592
    %v621 = vmul.f32 %v562, %v596
    %v622 = vmul.f32 %v560, %v600
    %v623 = vmul.f32 %v558, %v604
    %v624 = vmul.f32 %v556, %v608
    %v625 = vmul.f32 %v571, %v580
    %v626 = vmul.f32 %v569, %v584
    %v627 = vmul.f32 %v567, %v588
    %v628 = vmul.f32 %v565, %v592
    %v629 = vmul.f32 %v563, %v596
    %v630 = vmul.f32 %v561, %v600
    %v631 = vmul.f32 %v559, %v604
    %v632 = vmul.f32 %v557, %v608
    %v633 = vpack.c.bf16 %v625, %v617
    %v634 = vpack.c.bf16 %v626, %v618
    %v635 = vpack.c.bf16 %v627, %v619
    %v636 = vpack.c.bf16 %v628, %v620
    %v637 = vpack.c.bf16 %v629, %v621
    %v638 = vpack.c.bf16 %v630, %v622
    %v639 = vpack.c.bf16 %v631, %v623
    %v640 = vpack.c.bf16 %v632, %v624
    %641 = vrot.lane.b32.xlu0 %v152, 64
    %v642 = vpop.permute.xlu0 %641
    %643 = vrot.lane.b32.xlu0 %v160, 64
    %v644 = vpop.permute.xlu0 %643
    %645 = vrot.lane.b32.xlu0 %v153, 64
    %v646 = vpop.permute.xlu0 %645
    %647 = vrot.lane.b32.xlu0 %v161, 64
    %v648 = vpop.permute.xlu0 %647
    %649 = vrot.lane.b32.xlu0 %v154, 64
    %v650 = vpop.permute.xlu0 %649
    %651 = vrot.lane.b32.xlu0 %v162, 64
    %v652 = vpop.permute.xlu0 %651
    %653 = vrot.lane.b32.xlu0 %v155, 64
    %v654 = vpop.permute.xlu0 %653
    %655 = vrot.lane.b32.xlu0 %v163, 64
    %v656 = vpop.permute.xlu0 %655
    %657 = vrot.lane.b32.xlu0 %v156, 64
    %v658 = vpop.permute.xlu0 %657
    %659 = vrot.lane.b32.xlu0 %v164, 64
    %v660 = vpop.permute.xlu0 %659
    %661 = vrot.lane.b32.xlu0 %v157, 64
    %v662 = vpop.permute.xlu0 %661
    %663 = vrot.lane.b32.xlu0 %v165, 64
    %v664 = vpop.permute.xlu0 %663
    %665 = vrot.lane.b32.xlu0 %v158, 64
    %v666 = vpop.permute.xlu0 %665
    %667 = vrot.lane.b32.xlu0 %v166, 64
    %v668 = vpop.permute.xlu0 %667
    %669 = vrot.lane.b32.xlu0 %v159, 64
    %v670 = vpop.permute.xlu0 %669
    %671 = vrot.lane.b32.xlu0 %v167, 64
    %v672 = vpop.permute.xlu0 %671
    %vm673 = vcmp.lt.s32.totalorder %v201, 64
    %v674 = vsel %vm673, %v666, %v670
    %v675 = vsel %vm673, %v668, %v672
    %v676 = vsel %vm673, %v662, %v666
    %v677 = vsel %vm673, %v664, %v668
    %v678 = vsel %vm673, %v658, %v662
    %v679 = vsel %vm673, %v660, %v664
    %v680 = vsel %vm673, %v654, %v658
    %v681 = vsel %vm673, %v656, %v660
    %v682 = vsel %vm673, %v650, %v654
    %v683 = vsel %vm673, %v652, %v656
    %v684 = vsel %vm673, %v646, %v650
    %v685 = vsel %vm673, %v648, %v652
    %v686 = vsel %vm673, %v642, %v646
    %v687 = vsel %vm673, %v644, %v648
    %v688 = vsel %vm673, %v670, %v642
    %v689 = vsel %vm673, %v672, %v644
    %s690 = scalar_lea.vmem [#allocation5], 4
    %v691 = vld [vmem:[%s690] ss:$8 sm:$0xf]
    %v692 = vld [vmem:[%s690] ss:$8 sm:$0xf0]
    %v693 = vor.u32 %v691, %v692
    %v695 = vlaneseq
    %v696 = vshrl.u32 %v695, 7
    %v697 = vsub.s32 0, %v696
    %v698 = vrot.slane %v693, %v697
    %v699 = vlaneseq
    %v700 = vshrl.u32 %v699, 7
    %v701 = vsub.s32 1, %v700
    %v702 = vrot.slane %v693, %v701
    %v703 = vlaneseq
    %v704 = vshrl.u32 %v703, 7
    %v705 = vsub.s32 2, %v704
    %v706 = vrot.slane %v693, %v705
    %v707 = vlaneseq
    %v708 = vshrl.u32 %v707, 7
    %v709 = vsub.s32 3, %v708
    %v710 = vrot.slane %v693, %v709
    %v711 = vlaneseq
    %v712 = vshrl.u32 %v711, 7
    %v713 = vsub.s32 4, %v712
    %v714 = vrot.slane %v693, %v713
    %v715 = vlaneseq
    %v716 = vshrl.u32 %v715, 7
    %v717 = vsub.s32 5, %v716
    %v718 = vrot.slane %v693, %v717
    %v719 = vlaneseq
    %v720 = vshrl.u32 %v719, 7
    %v721 = vsub.s32 6, %v720
    %v722 = vrot.slane %v693, %v721
    %v723 = vlaneseq
    %v724 = vshrl.u32 %v723, 7
    %v725 = vsub.s32 7, %v724
    %v726 = vrot.slane %v693, %v725
    %v735 = vmul.f32 %v688, %v698
    %v736 = vmul.f32 %v686, %v702
    %v737 = vmul.f32 %v684, %v706
    %v738 = vmul.f32 %v682, %v710
    %v739 = vmul.f32 %v680, %v714
    %v740 = vmul.f32 %v678, %v718
    %v741 = vmul.f32 %v676, %v722
    %v742 = vmul.f32 %v674, %v726
    %v743 = vmul.f32 %v689, %v698
    %v744 = vmul.f32 %v687, %v702
    %v745 = vmul.f32 %v685, %v706
    %v746 = vmul.f32 %v683, %v710
    %v747 = vmul.f32 %v681, %v714
    %v748 = vmul.f32 %v679, %v718
    %v749 = vmul.f32 %v677, %v722
    %v750 = vmul.f32 %v675, %v726
    %v751 = vpack.c.bf16 %v743, %v735
    %v752 = vpack.c.bf16 %v744, %v736
    %v753 = vpack.c.bf16 %v745, %v737
    %v754 = vpack.c.bf16 %v746, %v738
    %v755 = vpack.c.bf16 %v747, %v739
    %v756 = vpack.c.bf16 %v748, %v740
    %v757 = vpack.c.bf16 %v749, %v741
    %v758 = vpack.c.bf16 %v750, %v742
    %759 = vrot.lane.b32.xlu0 %v152, 63
    %v760 = vpop.permute.xlu0 %759
    %761 = vrot.lane.b32.xlu0 %v160, 63
    %v762 = vpop.permute.xlu0 %761
    %763 = vrot.lane.b32.xlu0 %v153, 63
    %v764 = vpop.permute.xlu0 %763
    %765 = vrot.lane.b32.xlu0 %v161, 63
    %v766 = vpop.permute.xlu0 %765
    %767 = vrot.lane.b32.xlu0 %v154, 63
    %v768 = vpop.permute.xlu0 %767
    %769 = vrot.lane.b32.xlu0 %v162, 63
    %v770 = vpop.permute.xlu0 %769
    %771 = vrot.lane.b32.xlu0 %v155, 63
    %v772 = vpop.permute.xlu0 %771
    %773 = vrot.lane.b32.xlu0 %v163, 63
    %v774 = vpop.permute.xlu0 %773
    %775 = vrot.lane.b32.xlu0 %v156, 63
    %v776 = vpop.permute.xlu0 %775
    %777 = vrot.lane.b32.xlu0 %v164, 63
    %v778 = vpop.permute.xlu0 %777
    %779 = vrot.lane.b32.xlu0 %v157, 63
    %v780 = vpop.permute.xlu0 %779
    %781 = vrot.lane.b32.xlu0 %v165, 63
    %v782 = vpop.permute.xlu0 %781
    %783 = vrot.lane.b32.xlu0 %v158, 63
    %v784 = vpop.permute.xlu0 %783
    %785 = vrot.lane.b32.xlu0 %v166, 63
    %v786 = vpop.permute.xlu0 %785
    %787 = vrot.lane.b32.xlu0 %v159, 63
    %v788 = vpop.permute.xlu0 %787
    %789 = vrot.lane.b32.xlu0 %v167, 63
    %v790 = vpop.permute.xlu0 %789
    %vm791 = vcmp.lt.s32.totalorder %v201, 63
    %v792 = vsel %vm791, %v784, %v788
    %v793 = vsel %vm791, %v786, %v790
    %v794 = vsel %vm791, %v780, %v784
    %v795 = vsel %vm791, %v782, %v786
    %v796 = vsel %vm791, %v776, %v780
    %v797 = vsel %vm791, %v778, %v782
    %v798 = vsel %vm791, %v772, %v776
    %v799 = vsel %vm791, %v774, %v778
    %v800 = vsel %vm791, %v768, %v772
    %v801 = vsel %vm791, %v770, %v774
    %v802 = vsel %vm791, %v764, %v768
    %v803 = vsel %vm791, %v766, %v770
    %v804 = vsel %vm791, %v760, %v764
    %v805 = vsel %vm791, %v762, %v766
    %v806 = vsel %vm791, %v788, %v760
    %v807 = vsel %vm791, %v790, %v762
    %s808 = scalar_lea.vmem [#allocation5], 5
    %v809 = vld [vmem:[%s808] ss:$8 sm:$0xf]
    %v810 = vld [vmem:[%s808] ss:$8 sm:$0xf0]
    %v811 = vor.u32 %v809, %v810
    %v813 = vlaneseq
    %v814 = vshrl.u32 %v813, 7
    %v815 = vsub.s32 0, %v814
    %v816 = vrot.slane %v811, %v815
    %v817 = vlaneseq
    %v818 = vshrl.u32 %v817, 7
    %v819 = vsub.s32 1, %v818
    %v820 = vrot.slane %v811, %v819
    %v821 = vlaneseq
    %v822 = vshrl.u32 %v821, 7
    %v823 = vsub.s32 2, %v822
    %v824 = vrot.slane %v811, %v823
    %v825 = vlaneseq
    %v826 = vshrl.u32 %v825, 7
    %v827 = vsub.s32 3, %v826
    %v828 = vrot.slane %v811, %v827
    %v829 = vlaneseq
    %v830 = vshrl.u32 %v829, 7
    %v831 = vsub.s32 4, %v830
    %v832 = vrot.slane %v811, %v831
    %v833 = vlaneseq
    %v834 = vshrl.u32 %v833, 7
    %v835 = vsub.s32 5, %v834
    %v836 = vrot.slane %v811, %v835
    %v837 = vlaneseq
    %v838 = vshrl.u32 %v837, 7
    %v839 = vsub.s32 6, %v838
    %v840 = vrot.slane %v811, %v839
    %v841 = vlaneseq
    %v842 = vshrl.u32 %v841, 7
    %v843 = vsub.s32 7, %v842
    %v844 = vrot.slane %v811, %v843
    %v853 = vmul.f32 %v806, %v816
    %v854 = vmul.f32 %v804, %v820
    %v855 = vmul.f32 %v802, %v824
    %v856 = vmul.f32 %v800, %v828
    %v857 = vmul.f32 %v798, %v832
    %v858 = vmul.f32 %v796, %v836
    %v859 = vmul.f32 %v794, %v840
    %v860 = vmul.f32 %v792, %v844
    %v861 = vmul.f32 %v807, %v816
    %v862 = vmul.f32 %v805, %v820
    %v863 = vmul.f32 %v803, %v824
    %v864 = vmul.f32 %v801, %v828
    %v865 = vmul.f32 %v799, %v832
    %v866 = vmul.f32 %v797, %v836
    %v867 = vmul.f32 %v795, %v840
    %v868 = vmul.f32 %v793, %v844
    %v869 = vpack.c.bf16 %v861, %v853
    %v870 = vpack.c.bf16 %v862, %v854
    %v871 = vpack.c.bf16 %v863, %v855
    %v872 = vpack.c.bf16 %v864, %v856
    %v873 = vpack.c.bf16 %v865, %v857
    %v874 = vpack.c.bf16 %v866, %v858
    %v875 = vpack.c.bf16 %v867, %v859
    %v876 = vpack.c.bf16 %v868, %v860
    %877 = vrot.lane.b32.xlu0 %v152, 57
    %v878 = vpop.permute.xlu0 %877
    %879 = vrot.lane.b32.xlu0 %v160, 57
    %v880 = vpop.permute.xlu0 %879
    %881 = vrot.lane.b32.xlu0 %v153, 57
    %v882 = vpop.permute.xlu0 %881
    %883 = vrot.lane.b32.xlu0 %v161, 57
    %v884 = vpop.permute.xlu0 %883
    %885 = vrot.lane.b32.xlu0 %v154, 57
    %v886 = vpop.permute.xlu0 %885
    %887 = vrot.lane.b32.xlu0 %v162, 57
    %v888 = vpop.permute.xlu0 %887
    %889 = vrot.lane.b32.xlu0 %v155, 57
    %v890 = vpop.permute.xlu0 %889
    %891 = vrot.lane.b32.xlu0 %v163, 57
    %v892 = vpop.permute.xlu0 %891
    %893 = vrot.lane.b32.xlu0 %v156, 57
    %v894 = vpop.permute.xlu0 %893
    %895 = vrot.lane.b32.xlu0 %v164, 57
    %v896 = vpop.permute.xlu0 %895
    %897 = vrot.lane.b32.xlu0 %v157, 57
    %v898 = vpop.permute.xlu0 %897
    %899 = vrot.lane.b32.xlu0 %v165, 57
    %v900 = vpop.permute.xlu0 %899
    %901 = vrot.lane.b32.xlu0 %v158, 57
    %v902 = vpop.permute.xlu0 %901
    %903 = vrot.lane.b32.xlu0 %v166, 57
    %v904 = vpop.permute.xlu0 %903
    %905 = vrot.lane.b32.xlu0 %v159, 57
    %v906 = vpop.permute.xlu0 %905
    %907 = vrot.lane.b32.xlu0 %v167, 57
    %v908 = vpop.permute.xlu0 %907
    %vm909 = vcmp.lt.s32.totalorder %v201, 57
    %v910 = vsel %vm909, %v902, %v906
    %v911 = vsel %vm909, %v904, %v908
    %v912 = vsel %vm909, %v898, %v902
    %v913 = vsel %vm909, %v900, %v904
    %v914 = vsel %vm909, %v894, %v898
    %v915 = vsel %vm909, %v896, %v900
    %v916 = vsel %vm909, %v890, %v894
    %v917 = vsel %vm909, %v892, %v896
    %v918 = vsel %vm909, %v886, %v890
    %v919 = vsel %vm909, %v888, %v892
    %v920 = vsel %vm909, %v882, %v886
    %v921 = vsel %vm909, %v884, %v888
    %v922 = vsel %vm909, %v878, %v882
    %v923 = vsel %vm909, %v880, %v884
    %v924 = vsel %vm909, %v906, %v878
    %v925 = vsel %vm909, %v908, %v880
    %s926 = scalar_lea.vmem [#allocation5], 6
    %v927 = vld [vmem:[%s926] ss:$8 sm:$0xf]
    %v928 = vld [vmem:[%s926] ss:$8 sm:$0xf0]
    %v929 = vor.u32 %v927, %v928
    %v931 = vlaneseq
    %v932 = vshrl.u32 %v931, 7
    %v933 = vsub.s32 0, %v932
    %v934 = vrot.slane %v929, %v933
    %v935 = vlaneseq
    %v936 = vshrl.u32 %v935, 7
    %v937 = vsub.s32 1, %v936
    %v938 = vrot.slane %v929, %v937
    %v939 = vlaneseq
    %v940 = vshrl.u32 %v939, 7
    %v941 = vsub.s32 2, %v940
    %v942 = vrot.slane %v929, %v941
    %v943 = vlaneseq
    %v944 = vshrl.u32 %v943, 7
    %v945 = vsub.s32 3, %v944
    %v946 = vrot.slane %v929, %v945
    %v947 = vlaneseq
    %v948 = vshrl.u32 %v947, 7
    %v949 = vsub.s32 4, %v948
    %v950 = vrot.slane %v929, %v949
    %v951 = vlaneseq
    %v952 = vshrl.u32 %v951, 7
    %v953 = vsub.s32 5, %v952
    %v954 = vrot.slane %v929, %v953
    %v955 = vlaneseq
    %v956 = vshrl.u32 %v955, 7
    %v957 = vsub.s32 6, %v956
    %v958 = vrot.slane %v929, %v957
    %v959 = vlaneseq
    %v960 = vshrl.u32 %v959, 7
    %v961 = vsub.s32 7, %v960
    %v962 = vrot.slane %v929, %v961
    %v971 = vmul.f32 %v924, %v934
    %v972 = vmul.f32 %v922, %v938
    %v973 = vmul.f32 %v920, %v942
    %v974 = vmul.f32 %v918, %v946
    %v975 = vmul.f32 %v916, %v950
    %v976 = vmul.f32 %v914, %v954
    %v977 = vmul.f32 %v912, %v958
    %v978 = vmul.f32 %v910, %v962
    %v979 = vmul.f32 %v925, %v934
    %v980 = vmul.f32 %v923, %v938
    %v981 = vmul.f32 %v921, %v942
    %v982 = vmul.f32 %v919, %v946
    %v983 = vmul.f32 %v917, %v950
    %v984 = vmul.f32 %v915, %v954
    %v985 = vmul.f32 %v913, %v958
    %v986 = vmul.f32 %v911, %v962
    %v987 = vpack.c.bf16 %v979, %v971
    %v988 = vpack.c.bf16 %v980, %v972
    %v989 = vpack.c.bf16 %v981, %v973
    %v990 = vpack.c.bf16 %v982, %v974
    %v991 = vpack.c.bf16 %v983, %v975
    %v992 = vpack.c.bf16 %v984, %v976
    %v993 = vpack.c.bf16 %v985, %v977
    %v994 = vpack.c.bf16 %v986, %v978
    %995 = vrot.lane.b32.xlu0 %v152, 56
    %v996 = vpop.permute.xlu0 %995
    %997 = vrot.lane.b32.xlu0 %v160, 56
    %v998 = vpop.permute.xlu0 %997
    %999 = vrot.lane.b32.xlu0 %v153, 56
    %v1000 = vpop.permute.xlu0 %999
    %1001 = vrot.lane.b32.xlu0 %v161, 56
    %v1002 = vpop.permute.xlu0 %1001
    %1003 = vrot.lane.b32.xlu0 %v154, 56
    %v1004 = vpop.permute.xlu0 %1003
    %1005 = vrot.lane.b32.xlu0 %v162, 56
    %v1006 = vpop.permute.xlu0 %1005
    %1007 = vrot.lane.b32.xlu0 %v155, 56
    %v1008 = vpop.permute.xlu0 %1007
    %1009 = vrot.lane.b32.xlu0 %v163, 56
    %v1010 = vpop.permute.xlu0 %1009
    %1011 = vrot.lane.b32.xlu0 %v156, 56
    %v1012 = vpop.permute.xlu0 %1011
    %1013 = vrot.lane.b32.xlu0 %v164, 56
    %v1014 = vpop.permute.xlu0 %1013
    %1015 = vrot.lane.b32.xlu0 %v157, 56
    %v1016 = vpop.permute.xlu0 %1015
    %1017 = vrot.lane.b32.xlu0 %v165, 56
    %v1018 = vpop.permute.xlu0 %1017
    %1019 = vrot.lane.b32.xlu0 %v158, 56
    %v1020 = vpop.permute.xlu0 %1019
    %1021 = vrot.lane.b32.xlu0 %v166, 56
    %v1022 = vpop.permute.xlu0 %1021
    %1023 = vrot.lane.b32.xlu0 %v159, 56
    %v1024 = vpop.permute.xlu0 %1023
    %1025 = vrot.lane.b32.xlu0 %v167, 56
    %v1026 = vpop.permute.xlu0 %1025
    %vm1027 = vcmp.lt.s32.totalorder %v201, 56
    %v1028 = vsel %vm1027, %v1020, %v1024
    %v1029 = vsel %vm1027, %v1022, %v1026
    %v1030 = vsel %vm1027, %v1016, %v1020
    %v1031 = vsel %vm1027, %v1018, %v1022
    %v1032 = vsel %vm1027, %v1012, %v1016
    %v1033 = vsel %vm1027, %v1014, %v1018
    %v1034 = vsel %vm1027, %v1008, %v1012
    %v1035 = vsel %vm1027, %v1010, %v1014
    %v1036 = vsel %vm1027, %v1004, %v1008
    %v1037 = vsel %vm1027, %v1006, %v1010
    %v1038 = vsel %vm1027, %v1000, %v1004
    %v1039 = vsel %vm1027, %v1002, %v1006
    %v1040 = vsel %vm1027, %v996, %v1000
    %v1041 = vsel %vm1027, %v998, %v1002
    %v1042 = vsel %vm1027, %v1024, %v996
    %v1043 = vsel %vm1027, %v1026, %v998
    %s1044 = scalar_lea.vmem [#allocation5], 7
    %v1045 = vld [vmem:[%s1044] ss:$8 sm:$0xf]
    %v1046 = vld [vmem:[%s1044] ss:$8 sm:$0xf0]
    %v1047 = vor.u32 %v1045, %v1046
    %v1049 = vlaneseq
    %v1050 = vshrl.u32 %v1049, 7
    %v1051 = vsub.s32 0, %v1050
    %v1052 = vrot.slane %v1047, %v1051
    %v1053 = vlaneseq
    %v1054 = vshrl.u32 %v1053, 7
    %v1055 = vsub.s32 1, %v1054
    %v1056 = vrot.slane %v1047, %v1055
    %v1057 = vlaneseq
    %v1058 = vshrl.u32 %v1057, 7
    %v1059 = vsub.s32 2, %v1058
    %v1060 = vrot.slane %v1047, %v1059
    %v1061 = vlaneseq
    %v1062 = vshrl.u32 %v1061, 7
    %v1063 = vsub.s32 3, %v1062
    %v1064 = vrot.slane %v1047, %v1063
    %v1065 = vlaneseq
    %v1066 = vshrl.u32 %v1065, 7
    %v1067 = vsub.s32 4, %v1066
    %v1068 = vrot.slane %v1047, %v1067
    %v1069 = vlaneseq
    %v1070 = vshrl.u32 %v1069, 7
    %v1071 = vsub.s32 5, %v1070
    %v1072 = vrot.slane %v1047, %v1071
    %v1073 = vlaneseq
    %v1074 = vshrl.u32 %v1073, 7
    %v1075 = vsub.s32 6, %v1074
    %v1076 = vrot.slane %v1047, %v1075
    %v1077 = vlaneseq
    %v1078 = vshrl.u32 %v1077, 7
    %v1079 = vsub.s32 7, %v1078
    %v1080 = vrot.slane %v1047, %v1079
    %v1089 = vmul.f32 %v1042, %v1052
    %v1090 = vmul.f32 %v1040, %v1056
    %v1091 = vmul.f32 %v1038, %v1060
    %v1092 = vmul.f32 %v1036, %v1064
    %v1093 = vmul.f32 %v1034, %v1068
    %v1094 = vmul.f32 %v1032, %v1072
    %v1095 = vmul.f32 %v1030, %v1076
    %v1096 = vmul.f32 %v1028, %v1080
    %v1097 = vmul.f32 %v1043, %v1052
    %v1098 = vmul.f32 %v1041, %v1056
    %v1099 = vmul.f32 %v1039, %v1060
    %v1100 = vmul.f32 %v1037, %v1064
    %v1101 = vmul.f32 %v1035, %v1068
    %v1102 = vmul.f32 %v1033, %v1072
    %v1103 = vmul.f32 %v1031, %v1076
    %v1104 = vmul.f32 %v1029, %v1080
    %v1105 = vpack.c.bf16 %v1097, %v1089
    %v1106 = vpack.c.bf16 %v1098, %v1090
    %v1107 = vpack.c.bf16 %v1099, %v1091
    %v1108 = vpack.c.bf16 %v1100, %v1092
    %v1109 = vpack.c.bf16 %v1101, %v1093
    %v1110 = vpack.c.bf16 %v1102, %v1094
    %v1111 = vpack.c.bf16 %v1103, %v1095
    %v1112 = vpack.c.bf16 %v1104, %v1096
    %1113 = vrot.lane.b32.xlu0 %v152, 55
    %v1114 = vpop.permute.xlu0 %1113
    %1115 = vrot.lane.b32.xlu0 %v160, 55
    %v1116 = vpop.permute.xlu0 %1115
    %1117 = vrot.lane.b32.xlu0 %v153, 55
    %v1118 = vpop.permute.xlu0 %1117
    %1119 = vrot.lane.b32.xlu0 %v161, 55
    %v1120 = vpop.permute.xlu0 %1119
    %1121 = vrot.lane.b32.xlu0 %v154, 55
    %v1122 = vpop.permute.xlu0 %1121
    %1123 = vrot.lane.b32.xlu0 %v162, 55
    %v1124 = vpop.permute.xlu0 %1123
    %1125 = vrot.lane.b32.xlu0 %v155, 55
    %v1126 = vpop.permute.xlu0 %1125
    %1127 = vrot.lane.b32.xlu0 %v163, 55
    %v1128 = vpop.permute.xlu0 %1127
    %1129 = vrot.lane.b32.xlu0 %v156, 55
    %v1130 = vpop.permute.xlu0 %1129
    %1131 = vrot.lane.b32.xlu0 %v164, 55
    %v1132 = vpop.permute.xlu0 %1131
    %1133 = vrot.lane.b32.xlu0 %v157, 55
    %v1134 = vpop.permute.xlu0 %1133
    %1135 = vrot.lane.b32.xlu0 %v165, 55
    %v1136 = vpop.permute.xlu0 %1135
    %1137 = vrot.lane.b32.xlu0 %v158, 55
    %v1138 = vpop.permute.xlu0 %1137
    %1139 = vrot.lane.b32.xlu0 %v166, 55
    %v1140 = vpop.permute.xlu0 %1139
    %1141 = vrot.lane.b32.xlu0 %v159, 55
    %v1142 = vpop.permute.xlu0 %1141
    %1143 = vrot.lane.b32.xlu0 %v167, 55
    %v1144 = vpop.permute.xlu0 %1143
    %vm1145 = vcmp.lt.s32.totalorder %v201, 55
    %v1146 = vsel %vm1145, %v1138, %v1142
    %v1147 = vsel %vm1145, %v1140, %v1144
    %v1148 = vsel %vm1145, %v1134, %v1138
    %v1149 = vsel %vm1145, %v1136, %v1140
    %v1150 = vsel %vm1145, %v1130, %v1134
    %v1151 = vsel %vm1145, %v1132, %v1136
    %v1152 = vsel %vm1145, %v1126, %v1130
    %v1153 = vsel %vm1145, %v1128, %v1132
    %v1154 = vsel %vm1145, %v1122, %v1126
    %v1155 = vsel %vm1145, %v1124, %v1128
    %v1156 = vsel %vm1145, %v1118, %v1122
    %v1157 = vsel %vm1145, %v1120, %v1124
    %v1158 = vsel %vm1145, %v1114, %v1118
    %v1159 = vsel %vm1145, %v1116, %v1120
    %v1160 = vsel %vm1145, %v1142, %v1114
    %v1161 = vsel %vm1145, %v1144, %v1116
    %s1162 = scalar_lea.vmem [#allocation5], 64
    %v1163 = vld [vmem:[%s1162] ss:$8 sm:$0xf]
    %v1164 = vld [vmem:[%s1162] ss:$8 sm:$0xf0]
    %v1165 = vor.u32 %v1163, %v1164
    %v1167 = vlaneseq
    %v1168 = vshrl.u32 %v1167, 7
    %v1169 = vsub.s32 0, %v1168
    %v1170 = vrot.slane %v1165, %v1169
    %v1171 = vlaneseq
    %v1172 = vshrl.u32 %v1171, 7
    %v1173 = vsub.s32 1, %v1172
    %v1174 = vrot.slane %v1165, %v1173
    %v1175 = vlaneseq
    %v1176 = vshrl.u32 %v1175, 7
    %v1177 = vsub.s32 2, %v1176
    %v1178 = vrot.slane %v1165, %v1177
    %v1179 = vlaneseq
    %v1180 = vshrl.u32 %v1179, 7
    %v1181 = vsub.s32 3, %v1180
    %v1182 = vrot.slane %v1165, %v1181
    %v1183 = vlaneseq
    %v1184 = vshrl.u32 %v1183, 7
    %v1185 = vsub.s32 4, %v1184
    %v1186 = vrot.slane %v1165, %v1185
    %v1187 = vlaneseq
    %v1188 = vshrl.u32 %v1187, 7
    %v1189 = vsub.s32 5, %v1188
    %v1190 = vrot.slane %v1165, %v1189
    %v1191 = vlaneseq
    %v1192 = vshrl.u32 %v1191, 7
    %v1193 = vsub.s32 6, %v1192
    %v1194 = vrot.slane %v1165, %v1193
    %v1195 = vlaneseq
    %v1196 = vshrl.u32 %v1195, 7
    %v1197 = vsub.s32 7, %v1196
    %v1198 = vrot.slane %v1165, %v1197
    %v1207 = vmul.f32 %v1160, %v1170
    %v1208 = vmul.f32 %v1158, %v1174
    %v1209 = vmul.f32 %v1156, %v1178
    %v1210 = vmul.f32 %v1154, %v1182
    %v1211 = vmul.f32 %v1152, %v1186
    %v1212 = vmul.f32 %v1150, %v1190
    %v1213 = vmul.f32 %v1148, %v1194
    %v1214 = vmul.f32 %v1146, %v1198
    %v1215 = vmul.f32 %v1161, %v1170
    %v1216 = vmul.f32 %v1159, %v1174
    %v1217 = vmul.f32 %v1157, %v1178
    %v1218 = vmul.f32 %v1155, %v1182
    %v1219 = vmul.f32 %v1153, %v1186
    %v1220 = vmul.f32 %v1151, %v1190
    %v1221 = vmul.f32 %v1149, %v1194
    %v1222 = vmul.f32 %v1147, %v1198
    %v1223 = vpack.c.bf16 %v1215, %v1207
    %v1224 = vpack.c.bf16 %v1216, %v1208
    %v1225 = vpack.c.bf16 %v1217, %v1209
    %v1226 = vpack.c.bf16 %v1218, %v1210
    %v1227 = vpack.c.bf16 %v1219, %v1211
    %v1228 = vpack.c.bf16 %v1220, %v1212
    %v1229 = vpack.c.bf16 %v1221, %v1213
    %v1230 = vpack.c.bf16 %v1222, %v1214
    %1231 = vrot.lane.b32.xlu0 %v152, 9
    %v1232 = vpop.permute.xlu0 %1231
    %1233 = vrot.lane.b32.xlu0 %v160, 9
    %v1234 = vpop.permute.xlu0 %1233
    %1235 = vrot.lane.b32.xlu0 %v153, 9
    %v1236 = vpop.permute.xlu0 %1235
    %1237 = vrot.lane.b32.xlu0 %v161, 9
    %v1238 = vpop.permute.xlu0 %1237
    %1239 = vrot.lane.b32.xlu0 %v154, 9
    %v1240 = vpop.permute.xlu0 %1239
    %1241 = vrot.lane.b32.xlu0 %v162, 9
    %v1242 = vpop.permute.xlu0 %1241
    %1243 = vrot.lane.b32.xlu0 %v155, 9
    %v1244 = vpop.permute.xlu0 %1243
    %1245 = vrot.lane.b32.xlu0 %v163, 9
    %v1246 = vpop.permute.xlu0 %1245
    %1247 = vrot.lane.b32.xlu0 %v156, 9
    %v1248 = vpop.permute.xlu0 %1247
    %1249 = vrot.lane.b32.xlu0 %v164, 9
    %v1250 = vpop.permute.xlu0 %1249
    %1251 = vrot.lane.b32.xlu0 %v157, 9
    %v1252 = vpop.permute.xlu0 %1251
    %1253 = vrot.lane.b32.xlu0 %v165, 9
    %v1254 = vpop.permute.xlu0 %1253
    %1255 = vrot.lane.b32.xlu0 %v158, 9
    %v1256 = vpop.permute.xlu0 %1255
    %1257 = vrot.lane.b32.xlu0 %v166, 9
    %v1258 = vpop.permute.xlu0 %1257
    %1259 = vrot.lane.b32.xlu0 %v159, 9
    %v1260 = vpop.permute.xlu0 %1259
    %1261 = vrot.lane.b32.xlu0 %v167, 9
    %v1262 = vpop.permute.xlu0 %1261
    %vm1263 = vcmp.lt.s32.totalorder %v201, 9
    %v1264 = vsel %vm1263, %v1256, %v1260
    %v1265 = vsel %vm1263, %v1258, %v1262
    %v1266 = vsel %vm1263, %v1252, %v1256
    %v1267 = vsel %vm1263, %v1254, %v1258
    %v1268 = vsel %vm1263, %v1248, %v1252
    %v1269 = vsel %vm1263, %v1250, %v1254
    %v1270 = vsel %vm1263, %v1244, %v1248
    %v1271 = vsel %vm1263, %v1246, %v1250
    %v1272 = vsel %vm1263, %v1240, %v1244
    %v1273 = vsel %vm1263, %v1242, %v1246
    %v1274 = vsel %vm1263, %v1236, %v1240
    %v1275 = vsel %vm1263, %v1238, %v1242
    %v1276 = vsel %vm1263, %v1232, %v1236
    %v1277 = vsel %vm1263, %v1234, %v1238
    %v1278 = vsel %vm1263, %v1260, %v1232
    %v1279 = vsel %vm1263, %v1262, %v1234
    %s1280 = scalar_lea.vmem [#allocation5], 65
    %v1281 = vld [vmem:[%s1280] ss:$8 sm:$0xf]
    %v1282 = vld [vmem:[%s1280] ss:$8 sm:$0xf0]
    %v1283 = vor.u32 %v1281, %v1282
    %v1285 = vlaneseq
    %v1286 = vshrl.u32 %v1285, 7
    %v1287 = vsub.s32 0, %v1286
    %v1288 = vrot.slane %v1283, %v1287
    %v1289 = vlaneseq
    %v1290 = vshrl.u32 %v1289, 7
    %v1291 = vsub.s32 1, %v1290
    %v1292 = vrot.slane %v1283, %v1291
    %v1293 = vlaneseq
    %v1294 = vshrl.u32 %v1293, 7
    %v1295 = vsub.s32 2, %v1294
    %v1296 = vrot.slane %v1283, %v1295
    %v1297 = vlaneseq
    %v1298 = vshrl.u32 %v1297, 7
    %v1299 = vsub.s32 3, %v1298
    %v1300 = vrot.slane %v1283, %v1299
    %v1301 = vlaneseq
    %v1302 = vshrl.u32 %v1301, 7
    %v1303 = vsub.s32 4, %v1302
    %v1304 = vrot.slane %v1283, %v1303
    %v1305 = vlaneseq
    %v1306 = vshrl.u32 %v1305, 7
    %v1307 = vsub.s32 5, %v1306
    %v1308 = vrot.slane %v1283, %v1307
    %v1309 = vlaneseq
    %v1310 = vshrl.u32 %v1309, 7
    %v1311 = vsub.s32 6, %v1310
    %v1312 = vrot.slane %v1283, %v1311
    %v1313 = vlaneseq
    %v1314 = vshrl.u32 %v1313, 7
    %v1315 = vsub.s32 7, %v1314
    %v1316 = vrot.slane %v1283, %v1315
    %v1325 = vmul.f32 %v1278, %v1288
    %v1326 = vmul.f32 %v1276, %v1292
    %v1327 = vmul.f32 %v1274, %v1296
    %v1328 = vmul.f32 %v1272, %v1300
    %v1329 = vmul.f32 %v1270, %v1304
    %v1330 = vmul.f32 %v1268, %v1308
    %v1331 = vmul.f32 %v1266, %v1312
    %v1332 = vmul.f32 %v1264, %v1316
    %v1333 = vmul.f32 %v1279, %v1288
    %v1334 = vmul.f32 %v1277, %v1292
    %v1335 = vmul.f32 %v1275, %v1296
    %v1336 = vmul.f32 %v1273, %v1300
    %v1337 = vmul.f32 %v1271, %v1304
    %v1338 = vmul.f32 %v1269, %v1308
    %v1339 = vmul.f32 %v1267, %v1312
    %v1340 = vmul.f32 %v1265, %v1316
    %v1341 = vpack.c.bf16 %v1333, %v1325
    %v1342 = vpack.c.bf16 %v1334, %v1326
    %v1343 = vpack.c.bf16 %v1335, %v1327
    %v1344 = vpack.c.bf16 %v1336, %v1328
    %v1345 = vpack.c.bf16 %v1337, %v1329
    %v1346 = vpack.c.bf16 %v1338, %v1330
    %v1347 = vpack.c.bf16 %v1339, %v1331
    %v1348 = vpack.c.bf16 %v1340, %v1332
    %1349 = vrot.lane.b32.xlu0 %v152, 8
    %v1350 = vpop.permute.xlu0 %1349
    %1351 = vrot.lane.b32.xlu0 %v160, 8
    %v1352 = vpop.permute.xlu0 %1351
    %1353 = vrot.lane.b32.xlu0 %v153, 8
    %v1354 = vpop.permute.xlu0 %1353
    %1355 = vrot.lane.b32.xlu0 %v161, 8
    %v1356 = vpop.permute.xlu0 %1355
    %1357 = vrot.lane.b32.xlu0 %v154, 8
    %v1358 = vpop.permute.xlu0 %1357
    %1359 = vrot.lane.b32.xlu0 %v162, 8
    %v1360 = vpop.permute.xlu0 %1359
    %1361 = vrot.lane.b32.xlu0 %v155, 8
    %v1362 = vpop.permute.xlu0 %1361
    %1363 = vrot.lane.b32.xlu0 %v163, 8
    %v1364 = vpop.permute.xlu0 %1363
    %1365 = vrot.lane.b32.xlu0 %v156, 8
    %v1366 = vpop.permute.xlu0 %1365
    %1367 = vrot.lane.b32.xlu0 %v164, 8
    %v1368 = vpop.permute.xlu0 %1367
    %1369 = vrot.lane.b32.xlu0 %v157, 8
    %v1370 = vpop.permute.xlu0 %1369
    %1371 = vrot.lane.b32.xlu0 %v165, 8
    %v1372 = vpop.permute.xlu0 %1371
    %1373 = vrot.lane.b32.xlu0 %v158, 8
    %v1374 = vpop.permute.xlu0 %1373
    %1375 = vrot.lane.b32.xlu0 %v166, 8
    %v1376 = vpop.permute.xlu0 %1375
    %1377 = vrot.lane.b32.xlu0 %v159, 8
    %v1378 = vpop.permute.xlu0 %1377
    %1379 = vrot.lane.b32.xlu0 %v167, 8
    %v1380 = vpop.permute.xlu0 %1379
    %vm1381 = vcmp.lt.s32.totalorder %v201, 8
    %v1382 = vsel %vm1381, %v1374, %v1378
    %v1383 = vsel %vm1381, %v1376, %v1380
    %v1384 = vsel %vm1381, %v1370, %v1374
    %v1385 = vsel %vm1381, %v1372, %v1376
    %v1386 = vsel %vm1381, %v1366, %v1370
    %v1387 = vsel %vm1381, %v1368, %v1372
    %v1388 = vsel %vm1381, %v1362, %v1366
    %v1389 = vsel %vm1381, %v1364, %v1368
    %v1390 = vsel %vm1381, %v1358, %v1362
    %v1391 = vsel %vm1381, %v1360, %v1364
    %v1392 = vsel %vm1381, %v1354, %v1358
    %v1393 = vsel %vm1381, %v1356, %v1360
    %v1394 = vsel %vm1381, %v1350, %v1354
    %v1395 = vsel %vm1381, %v1352, %v1356
    %v1396 = vsel %vm1381, %v1378, %v1350
    %v1397 = vsel %vm1381, %v1380, %v1352
    %s1398 = scalar_lea.vmem [#allocation5], 66
    %v1399 = vld [vmem:[%s1398] ss:$8 sm:$0xf]
    %v1400 = vld [vmem:[%s1398] ss:$8 sm:$0xf0]
    %v1401 = vor.u32 %v1399, %v1400
    %v1403 = vlaneseq
    %v1404 = vshrl.u32 %v1403, 7
    %v1405 = vsub.s32 0, %v1404
    %v1406 = vrot.slane %v1401, %v1405
    %v1407 = vlaneseq
    %v1408 = vshrl.u32 %v1407, 7
    %v1409 = vsub.s32 1, %v1408
    %v1410 = vrot.slane %v1401, %v1409
    %v1411 = vlaneseq
    %v1412 = vshrl.u32 %v1411, 7
    %v1413 = vsub.s32 2, %v1412
    %v1414 = vrot.slane %v1401, %v1413
    %v1415 = vlaneseq
    %v1416 = vshrl.u32 %v1415, 7
    %v1417 = vsub.s32 3, %v1416
    %v1418 = vrot.slane %v1401, %v1417
    %v1419 = vlaneseq
    %v1420 = vshrl.u32 %v1419, 7
    %v1421 = vsub.s32 4, %v1420
    %v1422 = vrot.slane %v1401, %v1421
    %v1423 = vlaneseq
    %v1424 = vshrl.u32 %v1423, 7
    %v1425 = vsub.s32 5, %v1424
    %v1426 = vrot.slane %v1401, %v1425
    %v1427 = vlaneseq
    %v1428 = vshrl.u32 %v1427, 7
    %v1429 = vsub.s32 6, %v1428
    %v1430 = vrot.slane %v1401, %v1429
    %v1431 = vlaneseq
    %v1432 = vshrl.u32 %v1431, 7
    %v1433 = vsub.s32 7, %v1432
    %v1434 = vrot.slane %v1401, %v1433
    %v1443 = vmul.f32 %v1396, %v1406
    %v1444 = vmul.f32 %v1394, %v1410
    %v1445 = vmul.f32 %v1392, %v1414
    %v1446 = vmul.f32 %v1390, %v1418
    %v1447 = vmul.f32 %v1388, %v1422
    %v1448 = vmul.f32 %v1386, %v1426
    %v1449 = vmul.f32 %v1384, %v1430
    %v1450 = vmul.f32 %v1382, %v1434
    %v1451 = vmul.f32 %v1397, %v1406
    %v1452 = vmul.f32 %v1395, %v1410
    %v1453 = vmul.f32 %v1393, %v1414
    %v1454 = vmul.f32 %v1391, %v1418
    %v1455 = vmul.f32 %v1389, %v1422
    %v1456 = vmul.f32 %v1387, %v1426
    %v1457 = vmul.f32 %v1385, %v1430
    %v1458 = vmul.f32 %v1383, %v1434
    %v1459 = vpack.c.bf16 %v1451, %v1443
    %v1460 = vpack.c.bf16 %v1452, %v1444
    %v1461 = vpack.c.bf16 %v1453, %v1445
    %v1462 = vpack.c.bf16 %v1454, %v1446
    %v1463 = vpack.c.bf16 %v1455, %v1447
    %v1464 = vpack.c.bf16 %v1456, %v1448
    %v1465 = vpack.c.bf16 %v1457, %v1449
    %v1466 = vpack.c.bf16 %v1458, %v1450
    %1467 = vrot.lane.b32.xlu0 %v152, 7
    %v1468 = vpop.permute.xlu0 %1467
    %1469 = vrot.lane.b32.xlu0 %v160, 7
    %v1470 = vpop.permute.xlu0 %1469
    %1471 = vrot.lane.b32.xlu0 %v153, 7
    %v1472 = vpop.permute.xlu0 %1471
    %1473 = vrot.lane.b32.xlu0 %v161, 7
    %v1474 = vpop.permute.xlu0 %1473
    %1475 = vrot.lane.b32.xlu0 %v154, 7
    %v1476 = vpop.permute.xlu0 %1475
    %1477 = vrot.lane.b32.xlu0 %v162, 7
    %v1478 = vpop.permute.xlu0 %1477
    %1479 = vrot.lane.b32.xlu0 %v155, 7
    %v1480 = vpop.permute.xlu0 %1479
    %1481 = vrot.lane.b32.xlu0 %v163, 7
    %v1482 = vpop.permute.xlu0 %1481
    %1483 = vrot.lane.b32.xlu0 %v156, 7
    %v1484 = vpop.permute.xlu0 %1483
    %1485 = vrot.lane.b32.xlu0 %v164, 7
    %v1486 = vpop.permute.xlu0 %1485
    %1487 = vrot.lane.b32.xlu0 %v157, 7
    %v1488 = vpop.permute.xlu0 %1487
    %1489 = vrot.lane.b32.xlu0 %v165, 7
    %v1490 = vpop.permute.xlu0 %1489
    %1491 = vrot.lane.b32.xlu0 %v158, 7
    %v1492 = vpop.permute.xlu0 %1491
    %1493 = vrot.lane.b32.xlu0 %v166, 7
    %v1494 = vpop.permute.xlu0 %1493
    %1495 = vrot.lane.b32.xlu0 %v159, 7
    %v1496 = vpop.permute.xlu0 %1495
    %1497 = vrot.lane.b32.xlu0 %v167, 7
    %v1498 = vpop.permute.xlu0 %1497
    %vm1499 = vcmp.lt.s32.totalorder %v201, 7
    %v1500 = vsel %vm1499, %v1492, %v1496
    %v1501 = vsel %vm1499, %v1494, %v1498
    %v1502 = vsel %vm1499, %v1488, %v1492
    %v1503 = vsel %vm1499, %v1490, %v1494
    %v1504 = vsel %vm1499, %v1484, %v1488
    %v1505 = vsel %vm1499, %v1486, %v1490
    %v1506 = vsel %vm1499, %v1480, %v1484
    %v1507 = vsel %vm1499, %v1482, %v1486
    %v1508 = vsel %vm1499, %v1476, %v1480
    %v1509 = vsel %vm1499, %v1478, %v1482
    %v1510 = vsel %vm1499, %v1472, %v1476
    %v1511 = vsel %vm1499, %v1474, %v1478
    %v1512 = vsel %vm1499, %v1468, %v1472
    %v1513 = vsel %vm1499, %v1470, %v1474
    %v1514 = vsel %vm1499, %v1496, %v1468
    %v1515 = vsel %vm1499, %v1498, %v1470
    %s1516 = scalar_lea.vmem [#allocation5], 67
    %v1517 = vld [vmem:[%s1516] ss:$8 sm:$0xf]
    %v1518 = vld [vmem:[%s1516] ss:$8 sm:$0xf0]
    %v1519 = vor.u32 %v1517, %v1518
    %v1521 = vlaneseq
    %v1522 = vshrl.u32 %v1521, 7
    %v1523 = vsub.s32 0, %v1522
    %v1524 = vrot.slane %v1519, %v1523
    %v1525 = vlaneseq
    %v1526 = vshrl.u32 %v1525, 7
    %v1527 = vsub.s32 1, %v1526
    %v1528 = vrot.slane %v1519, %v1527
    %v1529 = vlaneseq
    %v1530 = vshrl.u32 %v1529, 7
    %v1531 = vsub.s32 2, %v1530
    %v1532 = vrot.slane %v1519, %v1531
    %v1533 = vlaneseq
    %v1534 = vshrl.u32 %v1533, 7
    %v1535 = vsub.s32 3, %v1534
    %v1536 = vrot.slane %v1519, %v1535
    %v1537 = vlaneseq
    %v1538 = vshrl.u32 %v1537, 7
    %v1539 = vsub.s32 4, %v1538
    %v1540 = vrot.slane %v1519, %v1539
    %v1541 = vlaneseq
    %v1542 = vshrl.u32 %v1541, 7
    %v1543 = vsub.s32 5, %v1542
    %v1544 = vrot.slane %v1519, %v1543
    %v1545 = vlaneseq
    %v1546 = vshrl.u32 %v1545, 7
    %v1547 = vsub.s32 6, %v1546
    %v1548 = vrot.slane %v1519, %v1547
    %v1549 = vlaneseq
    %v1550 = vshrl.u32 %v1549, 7
    %v1551 = vsub.s32 7, %v1550
    %v1552 = vrot.slane %v1519, %v1551
    %v1561 = vmul.f32 %v1514, %v1524
    %v1562 = vmul.f32 %v1512, %v1528
    %v1563 = vmul.f32 %v1510, %v1532
    %v1564 = vmul.f32 %v1508, %v1536
    %v1565 = vmul.f32 %v1506, %v1540
    %v1566 = vmul.f32 %v1504, %v1544
    %v1567 = vmul.f32 %v1502, %v1548
    %v1568 = vmul.f32 %v1500, %v1552
    %v1569 = vmul.f32 %v1515, %v1524
    %v1570 = vmul.f32 %v1513, %v1528
    %v1571 = vmul.f32 %v1511, %v1532
    %v1572 = vmul.f32 %v1509, %v1536
    %v1573 = vmul.f32 %v1507, %v1540
    %v1574 = vmul.f32 %v1505, %v1544
    %v1575 = vmul.f32 %v1503, %v1548
    %v1576 = vmul.f32 %v1501, %v1552
    %v1577 = vpack.c.bf16 %v1569, %v1561
    %v1578 = vpack.c.bf16 %v1570, %v1562
    %v1579 = vpack.c.bf16 %v1571, %v1563
    %v1580 = vpack.c.bf16 %v1572, %v1564
    %v1581 = vpack.c.bf16 %v1573, %v1565
    %v1582 = vpack.c.bf16 %v1574, %v1566
    %v1583 = vpack.c.bf16 %v1575, %v1567
    %v1584 = vpack.c.bf16 %v1576, %v1568
    %1585 = vrot.lane.b32.xlu0 %v152, 1
    %v1586 = vpop.permute.xlu0 %1585
    %1587 = vrot.lane.b32.xlu0 %v160, 1
    %v1588 = vpop.permute.xlu0 %1587
    %1589 = vrot.lane.b32.xlu0 %v153, 1
    %v1590 = vpop.permute.xlu0 %1589
    %1591 = vrot.lane.b32.xlu0 %v161, 1
    %v1592 = vpop.permute.xlu0 %1591
    %1593 = vrot.lane.b32.xlu0 %v154, 1
    %v1594 = vpop.permute.xlu0 %1593
    %1595 = vrot.lane.b32.xlu0 %v162, 1
    %v1596 = vpop.permute.xlu0 %1595
    %1597 = vrot.lane.b32.xlu0 %v155, 1
    %v1598 = vpop.permute.xlu0 %1597
    %1599 = vrot.lane.b32.xlu0 %v163, 1
    %v1600 = vpop.permute.xlu0 %1599
    %1601 = vrot.lane.b32.xlu0 %v156, 1
    %v1602 = vpop.permute.xlu0 %1601
    %1603 = vrot.lane.b32.xlu0 %v164, 1
    %v1604 = vpop.permute.xlu0 %1603
    %1605 = vrot.lane.b32.xlu0 %v157, 1
    %v1606 = vpop.permute.xlu0 %1605
    %1607 = vrot.lane.b32.xlu0 %v165, 1
    %v1608 = vpop.permute.xlu0 %1607
    %1609 = vrot.lane.b32.xlu0 %v158, 1
    %v1610 = vpop.permute.xlu0 %1609
    %1611 = vrot.lane.b32.xlu0 %v166, 1
    %v1612 = vpop.permute.xlu0 %1611
    %1613 = vrot.lane.b32.xlu0 %v159, 1
    %v1614 = vpop.permute.xlu0 %1613
    %1615 = vrot.lane.b32.xlu0 %v167, 1
    %v1616 = vpop.permute.xlu0 %1615
    %vm1617 = vcmp.lt.s32.totalorder %v201, 1
    %v1618 = vsel %vm1617, %v1610, %v1614
    %v1619 = vsel %vm1617, %v1612, %v1616
    %v1620 = vsel %vm1617, %v1606, %v1610
    %v1621 = vsel %vm1617, %v1608, %v1612
    %v1622 = vsel %vm1617, %v1602, %v1606
    %v1623 = vsel %vm1617, %v1604, %v1608
    %v1624 = vsel %vm1617, %v1598, %v1602
    %v1625 = vsel %vm1617, %v1600, %v1604
    %v1626 = vsel %vm1617, %v1594, %v1598
    %v1627 = vsel %vm1617, %v1596, %v1600
    %v1628 = vsel %vm1617, %v1590, %v1594
    %v1629 = vsel %vm1617, %v1592, %v1596
    %v1630 = vsel %vm1617, %v1586, %v1590
    %v1631 = vsel %vm1617, %v1588, %v1592
    %v1632 = vsel %vm1617, %v1614, %v1586
    %v1633 = vsel %vm1617, %v1616, %v1588
    %s1634 = scalar_lea.vmem [#allocation5], 68
    %v1635 = vld [vmem:[%s1634] ss:$8 sm:$0xf]
    %v1636 = vld [vmem:[%s1634] ss:$8 sm:$0xf0]
    %v1637 = vor.u32 %v1635, %v1636
    %v1639 = vlaneseq
    %v1640 = vshrl.u32 %v1639, 7
    %v1641 = vsub.s32 0, %v1640
    %v1642 = vrot.slane %v1637, %v1641
    %v1643 = vlaneseq
    %v1644 = vshrl.u32 %v1643, 7
    %v1645 = vsub.s32 1, %v1644
    %v1646 = vrot.slane %v1637, %v1645
    %v1647 = vlaneseq
    %v1648 = vshrl.u32 %v1647, 7
    %v1649 = vsub.s32 2, %v1648
    %v1650 = vrot.slane %v1637, %v1649
    %v1651 = vlaneseq
    %v1652 = vshrl.u32 %v1651, 7
    %v1653 = vsub.s32 3, %v1652
    %v1654 = vrot.slane %v1637, %v1653
    %v1655 = vlaneseq
    %v1656 = vshrl.u32 %v1655, 7
    %v1657 = vsub.s32 4, %v1656
    %v1658 = vrot.slane %v1637, %v1657
    %v1659 = vlaneseq
    %v1660 = vshrl.u32 %v1659, 7
    %v1661 = vsub.s32 5, %v1660
    %v1662 = vrot.slane %v1637, %v1661
    %v1663 = vlaneseq
    %v1664 = vshrl.u32 %v1663, 7
    %v1665 = vsub.s32 6, %v1664
    %v1666 = vrot.slane %v1637, %v1665
    %v1667 = vlaneseq
    %v1668 = vshrl.u32 %v1667, 7
    %v1669 = vsub.s32 7, %v1668
    %v1670 = vrot.slane %v1637, %v1669
    %v1679 = vmul.f32 %v1632, %v1642
    %v1680 = vmul.f32 %v1630, %v1646
    %v1681 = vmul.f32 %v1628, %v1650
    %v1682 = vmul.f32 %v1626, %v1654
    %v1683 = vmul.f32 %v1624, %v1658
    %v1684 = vmul.f32 %v1622, %v1662
    %v1685 = vmul.f32 %v1620, %v1666
    %v1686 = vmul.f32 %v1618, %v1670
    %v1687 = vmul.f32 %v1633, %v1642
    %v1688 = vmul.f32 %v1631, %v1646
    %v1689 = vmul.f32 %v1629, %v1650
    %v1690 = vmul.f32 %v1627, %v1654
    %v1691 = vmul.f32 %v1625, %v1658
    %v1692 = vmul.f32 %v1623, %v1662
    %v1693 = vmul.f32 %v1621, %v1666
    %v1694 = vmul.f32 %v1619, %v1670
    %v1695 = vpack.c.bf16 %v1687, %v1679
    %v1696 = vpack.c.bf16 %v1688, %v1680
    %v1697 = vpack.c.bf16 %v1689, %v1681
    %v1698 = vpack.c.bf16 %v1690, %v1682
    %v1699 = vpack.c.bf16 %v1691, %v1683
    %v1700 = vpack.c.bf16 %v1692, %v1684
    %v1701 = vpack.c.bf16 %v1693, %v1685
    %v1702 = vpack.c.bf16 %v1694, %v1686
    %v1703 = vpack.c.bf16 %v160, %v152
    %v1704 = vpack.c.bf16 %v161, %v153
    %v1705 = vpack.c.bf16 %v162, %v154
    %v1706 = vpack.c.bf16 %v163, %v155
    %v1707 = vpack.c.bf16 %v164, %v156
    %v1708 = vpack.c.bf16 %v165, %v157
    %v1709 = vpack.c.bf16 %v166, %v158
    %v1710 = vpack.c.bf16 %v167, %v159
    %1711 = vrot.lane.b32.xlu0 %v152, 127
    %v1712 = vpop.permute.xlu0 %1711
    %1713 = vrot.lane.b32.xlu0 %v160, 127
    %v1714 = vpop.permute.xlu0 %1713
    %1715 = vrot.lane.b32.xlu0 %v153, 127
    %v1716 = vpop.permute.xlu0 %1715
    %1717 = vrot.lane.b32.xlu0 %v161, 127
    %v1718 = vpop.permute.xlu0 %1717
    %1719 = vrot.lane.b32.xlu0 %v154, 127
    %v1720 = vpop.permute.xlu0 %1719
    %1721 = vrot.lane.b32.xlu0 %v162, 127
    %v1722 = vpop.permute.xlu0 %1721
    %1723 = vrot.lane.b32.xlu0 %v155, 127
    %v1724 = vpop.permute.xlu0 %1723
    %1725 = vrot.lane.b32.xlu0 %v163, 127
    %v1726 = vpop.permute.xlu0 %1725
    %1727 = vrot.lane.b32.xlu0 %v156, 127
    %v1728 = vpop.permute.xlu0 %1727
    %1729 = vrot.lane.b32.xlu0 %v164, 127
    %v1730 = vpop.permute.xlu0 %1729
    %1731 = vrot.lane.b32.xlu0 %v157, 127
    %v1732 = vpop.permute.xlu0 %1731
    %1733 = vrot.lane.b32.xlu0 %v165, 127
    %v1734 = vpop.permute.xlu0 %1733
    %1735 = vrot.lane.b32.xlu0 %v158, 127
    %v1736 = vpop.permute.xlu0 %1735
    %1737 = vrot.lane.b32.xlu0 %v166, 127
    %v1738 = vpop.permute.xlu0 %1737
    %1739 = vrot.lane.b32.xlu0 %v159, 127
    %v1740 = vpop.permute.xlu0 %1739
    %1741 = vrot.lane.b32.xlu0 %v167, 127
    %v1742 = vpop.permute.xlu0 %1741
    %vm1743 = vcmp.lt.s32.totalorder %v201, 127
    %v1744 = vsel %vm1743, %v1736, %v1740
    %v1745 = vsel %vm1743, %v1738, %v1742
    %v1746 = vsel %vm1743, %v1732, %v1736
    %v1747 = vsel %vm1743, %v1734, %v1738
    %v1748 = vsel %vm1743, %v1728, %v1732
    %v1749 = vsel %vm1743, %v1730, %v1734
    %v1750 = vsel %vm1743, %v1724, %v1728
    %v1751 = vsel %vm1743, %v1726, %v1730
    %v1752 = vsel %vm1743, %v1720, %v1724
    %v1753 = vsel %vm1743, %v1722, %v1726
    %v1754 = vsel %vm1743, %v1716, %v1720
    %v1755 = vsel %vm1743, %v1718, %v1722
    %v1756 = vsel %vm1743, %v1712, %v1716
    %v1757 = vsel %vm1743, %v1714, %v1718
    %v1758 = vsel %vm1743, %v1740, %v1712
    %v1759 = vsel %vm1743, %v1742, %v1714
    %s1760 = scalar_lea.vmem [#allocation5], 70
    %v1761 = vld [vmem:[%s1760] ss:$8 sm:$0xf]
    %v1762 = vld [vmem:[%s1760] ss:$8 sm:$0xf0]
    %v1763 = vor.u32 %v1761, %v1762
    %v1765 = vlaneseq
    %v1766 = vshrl.u32 %v1765, 7
    %v1767 = vsub.s32 0, %v1766
    %v1768 = vrot.slane %v1763, %v1767
    %v1769 = vlaneseq
    %v1770 = vshrl.u32 %v1769, 7
    %v1771 = vsub.s32 1, %v1770
    %v1772 = vrot.slane %v1763, %v1771
    %v1773 = vlaneseq
    %v1774 = vshrl.u32 %v1773, 7
    %v1775 = vsub.s32 2, %v1774
    %v1776 = vrot.slane %v1763, %v1775
    %v1777 = vlaneseq
    %v1778 = vshrl.u32 %v1777, 7
    %v1779 = vsub.s32 3, %v1778
    %v1780 = vrot.slane %v1763, %v1779
    %v1781 = vlaneseq
    %v1782 = vshrl.u32 %v1781, 7
    %v1783 = vsub.s32 4, %v1782
    %v1784 = vrot.slane %v1763, %v1783
    %v1785 = vlaneseq
    %v1786 = vshrl.u32 %v1785, 7
    %v1787 = vsub.s32 5, %v1786
    %v1788 = vrot.slane %v1763, %v1787
    %v1789 = vlaneseq
    %v1790 = vshrl.u32 %v1789, 7
    %v1791 = vsub.s32 6, %v1790
    %v1792 = vrot.slane %v1763, %v1791
    %v1793 = vlaneseq
    %v1794 = vshrl.u32 %v1793, 7
    %v1795 = vsub.s32 7, %v1794
    %v1796 = vrot.slane %v1763, %v1795
    %v1805 = vmul.f32 %v1756, %v1768
    %v1806 = vmul.f32 %v1754, %v1772
    %v1807 = vmul.f32 %v1752, %v1776
    %v1808 = vmul.f32 %v1750, %v1780
    %v1809 = vmul.f32 %v1748, %v1784
    %v1810 = vmul.f32 %v1746, %v1788
    %v1811 = vmul.f32 %v1744, %v1792
    %v1812 = vmul.f32 %v1758, %v1796
    %v1813 = vmul.f32 %v1757, %v1768
    %v1814 = vmul.f32 %v1755, %v1772
    %v1815 = vmul.f32 %v1753, %v1776
    %v1816 = vmul.f32 %v1751, %v1780
    %v1817 = vmul.f32 %v1749, %v1784
    %v1818 = vmul.f32 %v1747, %v1788
    %v1819 = vmul.f32 %v1745, %v1792
    %v1820 = vmul.f32 %v1759, %v1796
    %v1821 = vpack.c.bf16 %v1813, %v1805
    %v1822 = vpack.c.bf16 %v1814, %v1806
    %v1823 = vpack.c.bf16 %v1815, %v1807
    %v1824 = vpack.c.bf16 %v1816, %v1808
    %v1825 = vpack.c.bf16 %v1817, %v1809
    %v1826 = vpack.c.bf16 %v1818, %v1810
    %v1827 = vpack.c.bf16 %v1819, %v1811
    %v1828 = vpack.c.bf16 %v1820, %v1812
    %1829 = vrot.lane.b32.xlu0 %v152, 121
    %v1830 = vpop.permute.xlu0 %1829
    %1831 = vrot.lane.b32.xlu0 %v160, 121
    %v1832 = vpop.permute.xlu0 %1831
    %1833 = vrot.lane.b32.xlu0 %v153, 121
    %v1834 = vpop.permute.xlu0 %1833
    %1835 = vrot.lane.b32.xlu0 %v161, 121
    %v1836 = vpop.permute.xlu0 %1835
    %1837 = vrot.lane.b32.xlu0 %v154, 121
    %v1838 = vpop.permute.xlu0 %1837
    %1839 = vrot.lane.b32.xlu0 %v162, 121
    %v1840 = vpop.permute.xlu0 %1839
    %1841 = vrot.lane.b32.xlu0 %v155, 121
    %v1842 = vpop.permute.xlu0 %1841
    %1843 = vrot.lane.b32.xlu0 %v163, 121
    %v1844 = vpop.permute.xlu0 %1843
    %1845 = vrot.lane.b32.xlu0 %v156, 121
    %v1846 = vpop.permute.xlu0 %1845
    %1847 = vrot.lane.b32.xlu0 %v164, 121
    %v1848 = vpop.permute.xlu0 %1847
    %1849 = vrot.lane.b32.xlu0 %v157, 121
    %v1850 = vpop.permute.xlu0 %1849
    %1851 = vrot.lane.b32.xlu0 %v165, 121
    %v1852 = vpop.permute.xlu0 %1851
    %1853 = vrot.lane.b32.xlu0 %v158, 121
    %v1854 = vpop.permute.xlu0 %1853
    %1855 = vrot.lane.b32.xlu0 %v166, 121
    %v1856 = vpop.permute.xlu0 %1855
    %1857 = vrot.lane.b32.xlu0 %v159, 121
    %v1858 = vpop.permute.xlu0 %1857
    %1859 = vrot.lane.b32.xlu0 %v167, 121
    %v1860 = vpop.permute.xlu0 %1859
    %vm1861 = vcmp.lt.s32.totalorder %v201, 121
    %v1862 = vsel %vm1861, %v1854, %v1858
    %v1863 = vsel %vm1861, %v1856, %v1860
    %v1864 = vsel %vm1861, %v1850, %v1854
    %v1865 = vsel %vm1861, %v1852, %v1856
    %v1866 = vsel %vm1861, %v1846, %v1850
    %v1867 = vsel %vm1861, %v1848, %v1852
    %v1868 = vsel %vm1861, %v1842, %v1846
    %v1869 = vsel %vm1861, %v1844, %v1848
    %v1870 = vsel %vm1861, %v1838, %v1842
    %v1871 = vsel %vm1861, %v1840, %v1844
    %v1872 = vsel %vm1861, %v1834, %v1838
    %v1873 = vsel %vm1861, %v1836, %v1840
    %v1874 = vsel %vm1861, %v1830, %v1834
    %v1875 = vsel %vm1861, %v1832, %v1836
    %v1876 = vsel %vm1861, %v1858, %v1830
    %v1877 = vsel %vm1861, %v1860, %v1832
    %s1878 = scalar_lea.vmem [#allocation5], 71
    %v1879 = vld [vmem:[%s1878] ss:$8 sm:$0xf]
    %v1880 = vld [vmem:[%s1878] ss:$8 sm:$0xf0]
    %v1881 = vor.u32 %v1879, %v1880
    %v1883 = vlaneseq
    %v1884 = vshrl.u32 %v1883, 7
    %v1885 = vsub.s32 0, %v1884
    %v1886 = vrot.slane %v1881, %v1885
    %v1887 = vlaneseq
    %v1888 = vshrl.u32 %v1887, 7
    %v1889 = vsub.s32 1, %v1888
    %v1890 = vrot.slane %v1881, %v1889
    %v1891 = vlaneseq
    %v1892 = vshrl.u32 %v1891, 7
    %v1893 = vsub.s32 2, %v1892
    %v1894 = vrot.slane %v1881, %v1893
    %v1895 = vlaneseq
    %v1896 = vshrl.u32 %v1895, 7
    %v1897 = vsub.s32 3, %v1896
    %v1898 = vrot.slane %v1881, %v1897
    %v1899 = vlaneseq
    %v1900 = vshrl.u32 %v1899, 7
    %v1901 = vsub.s32 4, %v1900
    %v1902 = vrot.slane %v1881, %v1901
    %v1903 = vlaneseq
    %v1904 = vshrl.u32 %v1903, 7
    %v1905 = vsub.s32 5, %v1904
    %v1906 = vrot.slane %v1881, %v1905
    %v1907 = vlaneseq
    %v1908 = vshrl.u32 %v1907, 7
    %v1909 = vsub.s32 6, %v1908
    %v1910 = vrot.slane %v1881, %v1909
    %v1911 = vlaneseq
    %v1912 = vshrl.u32 %v1911, 7
    %v1913 = vsub.s32 7, %v1912
    %v1914 = vrot.slane %v1881, %v1913
    %v1923 = vmul.f32 %v1874, %v1886
    %v1924 = vmul.f32 %v1872, %v1890
    %v1925 = vmul.f32 %v1870, %v1894
    %v1926 = vmul.f32 %v1868, %v1898
    %v1927 = vmul.f32 %v1866, %v1902
    %v1928 = vmul.f32 %v1864, %v1906
    %v1929 = vmul.f32 %v1862, %v1910
    %v1930 = vmul.f32 %v1876, %v1914
    %v1931 = vmul.f32 %v1875, %v1886
    %v1932 = vmul.f32 %v1873, %v1890
    %v1933 = vmul.f32 %v1871, %v1894
    %v1934 = vmul.f32 %v1869, %v1898
    %v1935 = vmul.f32 %v1867, %v1902
    %v1936 = vmul.f32 %v1865, %v1906
    %v1937 = vmul.f32 %v1863, %v1910
    %v1938 = vmul.f32 %v1877, %v1914
    %v1939 = vpack.c.bf16 %v1931, %v1923
    %v1940 = vpack.c.bf16 %v1932, %v1924
    %v1941 = vpack.c.bf16 %v1933, %v1925
    %v1942 = vpack.c.bf16 %v1934, %v1926
    %v1943 = vpack.c.bf16 %v1935, %v1927
    %v1944 = vpack.c.bf16 %v1936, %v1928
    %v1945 = vpack.c.bf16 %v1937, %v1929
    %v1946 = vpack.c.bf16 %v1938, %v1930
    %1947 = vrot.lane.b32.xlu0 %v152, 120
    %v1948 = vpop.permute.xlu0 %1947
    %1949 = vrot.lane.b32.xlu0 %v160, 120
    %v1950 = vpop.permute.xlu0 %1949
    %1951 = vrot.lane.b32.xlu0 %v153, 120
    %v1952 = vpop.permute.xlu0 %1951
    %1953 = vrot.lane.b32.xlu0 %v161, 120
    %v1954 = vpop.permute.xlu0 %1953
    %1955 = vrot.lane.b32.xlu0 %v154, 120
    %v1956 = vpop.permute.xlu0 %1955
    %1957 = vrot.lane.b32.xlu0 %v162, 120
    %v1958 = vpop.permute.xlu0 %1957
    %1959 = vrot.lane.b32.xlu0 %v155, 120
    %v1960 = vpop.permute.xlu0 %1959
    %1961 = vrot.lane.b32.xlu0 %v163, 120
    %v1962 = vpop.permute.xlu0 %1961
    %1963 = vrot.lane.b32.xlu0 %v156, 120
    %v1964 = vpop.permute.xlu0 %1963
    %1965 = vrot.lane.b32.xlu0 %v164, 120
    %v1966 = vpop.permute.xlu0 %1965
    %1967 = vrot.lane.b32.xlu0 %v157, 120
    %v1968 = vpop.permute.xlu0 %1967
    %1969 = vrot.lane.b32.xlu0 %v165, 120
    %v1970 = vpop.permute.xlu0 %1969
    %1971 = vrot.lane.b32.xlu0 %v158, 120
    %v1972 = vpop.permute.xlu0 %1971
    %1973 = vrot.lane.b32.xlu0 %v166, 120
    %v1974 = vpop.permute.xlu0 %1973
    %1975 = vrot.lane.b32.xlu0 %v159, 120
    %v1976 = vpop.permute.xlu0 %1975
    %1977 = vrot.lane.b32.xlu0 %v167, 120
    %v1978 = vpop.permute.xlu0 %1977
    %vm1979 = vcmp.lt.s32.totalorder %v201, 120
    %v1980 = vsel %vm1979, %v1972, %v1976
    %v1981 = vsel %vm1979, %v1974, %v1978
    %v1982 = vsel %vm1979, %v1968, %v1972
    %v1983 = vsel %vm1979, %v1970, %v1974
    %v1984 = vsel %vm1979, %v1964, %v1968
    %v1985 = vsel %vm1979, %v1966, %v1970
    %v1986 = vsel %vm1979, %v1960, %v1964
    %v1987 = vsel %vm1979, %v1962, %v1966
    %v1988 = vsel %vm1979, %v1956, %v1960
    %v1989 = vsel %vm1979, %v1958, %v1962
    %v1990 = vsel %vm1979, %v1952, %v1956
    %v1991 = vsel %vm1979, %v1954, %v1958
    %v1992 = vsel %vm1979, %v1948, %v1952
    %v1993 = vsel %vm1979, %v1950, %v1954
    %v1994 = vsel %vm1979, %v1976, %v1948
    %v1995 = vsel %vm1979, %v1978, %v1950
    %s1996 = scalar_lea.vmem [#allocation5], 128
    %v1997 = vld [vmem:[%s1996] ss:$8 sm:$0xf]
    %v1998 = vld [vmem:[%s1996] ss:$8 sm:$0xf0]
    %v1999 = vor.u32 %v1997, %v1998
    %v2001 = vlaneseq
    %v2002 = vshrl.u32 %v2001, 7
    %v2003 = vsub.s32 0, %v2002
    %v2004 = vrot.slane %v1999, %v2003
    %v2005 = vlaneseq
    %v2006 = vshrl.u32 %v2005, 7
    %v2007 = vsub.s32 1, %v2006
    %v2008 = vrot.slane %v1999, %v2007
    %v2009 = vlaneseq
    %v2010 = vshrl.u32 %v2009, 7
    %v2011 = vsub.s32 2, %v2010
    %v2012 = vrot.slane %v1999, %v2011
    %v2013 = vlaneseq
    %v2014 = vshrl.u32 %v2013, 7
    %v2015 = vsub.s32 3, %v2014
    %v2016 = vrot.slane %v1999, %v2015
    %v2017 = vlaneseq
    %v2018 = vshrl.u32 %v2017, 7
    %v2019 = vsub.s32 4, %v2018
    %v2020 = vrot.slane %v1999, %v2019
    %v2021 = vlaneseq
    %v2022 = vshrl.u32 %v2021, 7
    %v2023 = vsub.s32 5, %v2022
    %v2024 = vrot.slane %v1999, %v2023
    %v2025 = vlaneseq
    %v2026 = vshrl.u32 %v2025, 7
    %v2027 = vsub.s32 6, %v2026
    %v2028 = vrot.slane %v1999, %v2027
    %v2029 = vlaneseq
    %v2030 = vshrl.u32 %v2029, 7
    %v2031 = vsub.s32 7, %v2030
    %v2032 = vrot.slane %v1999, %v2031
    %v2041 = vmul.f32 %v1992, %v2004
    %v2042 = vmul.f32 %v1990, %v2008
    %v2043 = vmul.f32 %v1988, %v2012
    %v2044 = vmul.f32 %v1986, %v2016
    %v2045 = vmul.f32 %v1984, %v2020
    %v2046 = vmul.f32 %v1982, %v2024
    %v2047 = vmul.f32 %v1980, %v2028
    %v2048 = vmul.f32 %v1994, %v2032
    %v2049 = vmul.f32 %v1993, %v2004
    %v2050 = vmul.f32 %v1991, %v2008
    %v2051 = vmul.f32 %v1989, %v2012
    %v2052 = vmul.f32 %v1987, %v2016
    %v2053 = vmul.f32 %v1985, %v2020
    %v2054 = vmul.f32 %v1983, %v2024
    %v2055 = vmul.f32 %v1981, %v2028
    %v2056 = vmul.f32 %v1995, %v2032
    %v2057 = vpack.c.bf16 %v2049, %v2041
    %v2058 = vpack.c.bf16 %v2050, %v2042
    %v2059 = vpack.c.bf16 %v2051, %v2043
    %v2060 = vpack.c.bf16 %v2052, %v2044
    %v2061 = vpack.c.bf16 %v2053, %v2045
    %v2062 = vpack.c.bf16 %v2054, %v2046
    %v2063 = vpack.c.bf16 %v2055, %v2047
    %v2064 = vpack.c.bf16 %v2056, %v2048
    %2065 = vrot.lane.b32.xlu0 %v152, 119
    %v2066 = vpop.permute.xlu0 %2065
    %2067 = vrot.lane.b32.xlu0 %v160, 119
    %v2068 = vpop.permute.xlu0 %2067
    %2069 = vrot.lane.b32.xlu0 %v153, 119
    %v2070 = vpop.permute.xlu0 %2069
    %2071 = vrot.lane.b32.xlu0 %v161, 119
    %v2072 = vpop.permute.xlu0 %2071
    %2073 = vrot.lane.b32.xlu0 %v154, 119
    %v2074 = vpop.permute.xlu0 %2073
    %2075 = vrot.lane.b32.xlu0 %v162, 119
    %v2076 = vpop.permute.xlu0 %2075
    %2077 = vrot.lane.b32.xlu0 %v155, 119
    %v2078 = vpop.permute.xlu0 %2077
    %2079 = vrot.lane.b32.xlu0 %v163, 119
    %v2080 = vpop.permute.xlu0 %2079
    %2081 = vrot.lane.b32.xlu0 %v156, 119
    %v2082 = vpop.permute.xlu0 %2081
    %2083 = vrot.lane.b32.xlu0 %v164, 119
    %v2084 = vpop.permute.xlu0 %2083
    %2085 = vrot.lane.b32.xlu0 %v157, 119
    %v2086 = vpop.permute.xlu0 %2085
    %2087 = vrot.lane.b32.xlu0 %v165, 119
    %v2088 = vpop.permute.xlu0 %2087
    %2089 = vrot.lane.b32.xlu0 %v158, 119
    %v2090 = vpop.permute.xlu0 %2089
    %2091 = vrot.lane.b32.xlu0 %v166, 119
    %v2092 = vpop.permute.xlu0 %2091
    %2093 = vrot.lane.b32.xlu0 %v159, 119
    %v2094 = vpop.permute.xlu0 %2093
    %2095 = vrot.lane.b32.xlu0 %v167, 119
    %v2096 = vpop.permute.xlu0 %2095
    %vm2097 = vcmp.lt.s32.totalorder %v201, 119
    %v2098 = vsel %vm2097, %v2090, %v2094
    %v2099 = vsel %vm2097, %v2092, %v2096
    %v2100 = vsel %vm2097, %v2086, %v2090
    %v2101 = vsel %vm2097, %v2088, %v2092
    %v2102 = vsel %vm2097, %v2082, %v2086
    %v2103 = vsel %vm2097, %v2084, %v2088
    %v2104 = vsel %vm2097, %v2078, %v2082
    %v2105 = vsel %vm2097, %v2080, %v2084
    %v2106 = vsel %vm2097, %v2074, %v2078
    %v2107 = vsel %vm2097, %v2076, %v2080
    %v2108 = vsel %vm2097, %v2070, %v2074
    %v2109 = vsel %vm2097, %v2072, %v2076
    %v2110 = vsel %vm2097, %v2066, %v2070
    %v2111 = vsel %vm2097, %v2068, %v2072
    %v2112 = vsel %vm2097, %v2094, %v2066
    %v2113 = vsel %vm2097, %v2096, %v2068
    %s2114 = scalar_lea.vmem [#allocation5], 129
    %v2115 = vld [vmem:[%s2114] ss:$8 sm:$0xf]
    %v2116 = vld [vmem:[%s2114] ss:$8 sm:$0xf0]
    %v2117 = vor.u32 %v2115, %v2116
    %v2119 = vlaneseq
    %v2120 = vshrl.u32 %v2119, 7
    %v2121 = vsub.s32 0, %v2120
    %v2122 = vrot.slane %v2117, %v2121
    %v2123 = vlaneseq
    %v2124 = vshrl.u32 %v2123, 7
    %v2125 = vsub.s32 1, %v2124
    %v2126 = vrot.slane %v2117, %v2125
    %v2127 = vlaneseq
    %v2128 = vshrl.u32 %v2127, 7
    %v2129 = vsub.s32 2, %v2128
    %v2130 = vrot.slane %v2117, %v2129
    %v2131 = vlaneseq
    %v2132 = vshrl.u32 %v2131, 7
    %v2133 = vsub.s32 3, %v2132
    %v2134 = vrot.slane %v2117, %v2133
    %v2135 = vlaneseq
    %v2136 = vshrl.u32 %v2135, 7
    %v2137 = vsub.s32 4, %v2136
    %v2138 = vrot.slane %v2117, %v2137
    %v2139 = vlaneseq
    %v2140 = vshrl.u32 %v2139, 7
    %v2141 = vsub.s32 5, %v2140
    %v2142 = vrot.slane %v2117, %v2141
    %v2143 = vlaneseq
    %v2144 = vshrl.u32 %v2143, 7
    %v2145 = vsub.s32 6, %v2144
    %v2146 = vrot.slane %v2117, %v2145
    %v2147 = vlaneseq
    %v2148 = vshrl.u32 %v2147, 7
    %v2149 = vsub.s32 7, %v2148
    %v2150 = vrot.slane %v2117, %v2149
    %v2159 = vmul.f32 %v2110, %v2122
    %v2160 = vmul.f32 %v2108, %v2126
    %v2161 = vmul.f32 %v2106, %v2130
    %v2162 = vmul.f32 %v2104, %v2134
    %v2163 = vmul.f32 %v2102, %v2138
    %v2164 = vmul.f32 %v2100, %v2142
    %v2165 = vmul.f32 %v2098, %v2146
    %v2166 = vmul.f32 %v2112, %v2150
    %v2167 = vmul.f32 %v2111, %v2122
    %v2168 = vmul.f32 %v2109, %v2126
    %v2169 = vmul.f32 %v2107, %v2130
    %v2170 = vmul.f32 %v2105, %v2134
    %v2171 = vmul.f32 %v2103, %v2138
    %v2172 = vmul.f32 %v2101, %v2142
    %v2173 = vmul.f32 %v2099, %v2146
    %v2174 = vmul.f32 %v2113, %v2150
    %v2175 = vpack.c.bf16 %v2167, %v2159
    %v2176 = vpack.c.bf16 %v2168, %v2160
    %v2177 = vpack.c.bf16 %v2169, %v2161
    %v2178 = vpack.c.bf16 %v2170, %v2162
    %v2179 = vpack.c.bf16 %v2171, %v2163
    %v2180 = vpack.c.bf16 %v2172, %v2164
    %v2181 = vpack.c.bf16 %v2173, %v2165
    %v2182 = vpack.c.bf16 %v2174, %v2166
    %s2183 = scalar_lea.vmem [#allocation5], 130
    %v2184 = vld [vmem:[%s2183] ss:$8 sm:$0xf]
    %v2185 = vld [vmem:[%s2183] ss:$8 sm:$0xf0]
    %v2186 = vor.u32 %v2184, %v2185
    %v2188 = vlaneseq
    %v2189 = vshrl.u32 %v2188, 7
    %v2190 = vsub.s32 0, %v2189
    %v2191 = vrot.slane %v2186, %v2190
    %v2192 = vlaneseq
    %v2193 = vshrl.u32 %v2192, 7
    %v2194 = vsub.s32 1, %v2193
    %v2195 = vrot.slane %v2186, %v2194
    %v2196 = vlaneseq
    %v2197 = vshrl.u32 %v2196, 7
    %v2198 = vsub.s32 2, %v2197
    %v2199 = vrot.slane %v2186, %v2198
    %v2200 = vlaneseq
    %v2201 = vshrl.u32 %v2200, 7
    %v2202 = vsub.s32 3, %v2201
    %v2203 = vrot.slane %v2186, %v2202
    %v2204 = vlaneseq
    %v2205 = vshrl.u32 %v2204, 7
    %v2206 = vsub.s32 4, %v2205
    %v2207 = vrot.slane %v2186, %v2206
    %v2208 = vlaneseq
    %v2209 = vshrl.u32 %v2208, 7
    %v2210 = vsub.s32 5, %v2209
    %v2211 = vrot.slane %v2186, %v2210
    %v2212 = vlaneseq
    %v2213 = vshrl.u32 %v2212, 7
    %v2214 = vsub.s32 6, %v2213
    %v2215 = vrot.slane %v2186, %v2214
    %v2216 = vlaneseq
    %v2217 = vshrl.u32 %v2216, 7
    %v2218 = vsub.s32 7, %v2217
    %v2219 = vrot.slane %v2186, %v2218
    %v2228 = vmul.f32 %v215, %v2191
    %v2229 = vmul.f32 %v213, %v2195
    %v2230 = vmul.f32 %v211, %v2199
    %v2231 = vmul.f32 %v209, %v2203
    %v2232 = vmul.f32 %v207, %v2207
    %v2233 = vmul.f32 %v205, %v2211
    %v2234 = vmul.f32 %v203, %v2215
    %v2235 = vmul.f32 %v217, %v2219
    %v2236 = vmul.f32 %v216, %v2191
    %v2237 = vmul.f32 %v214, %v2195
    %v2238 = vmul.f32 %v212, %v2199
    %v2239 = vmul.f32 %v210, %v2203
    %v2240 = vmul.f32 %v208, %v2207
    %v2241 = vmul.f32 %v206, %v2211
    %v2242 = vmul.f32 %v204, %v2215
    %v2243 = vmul.f32 %v218, %v2219
    %v2244 = vpack.c.bf16 %v2236, %v2228
    %v2245 = vpack.c.bf16 %v2237, %v2229
    %v2246 = vpack.c.bf16 %v2238, %v2230
    %v2247 = vpack.c.bf16 %v2239, %v2231
    %v2248 = vpack.c.bf16 %v2240, %v2232
    %v2249 = vpack.c.bf16 %v2241, %v2233
    %v2250 = vpack.c.bf16 %v2242, %v2234
    %v2251 = vpack.c.bf16 %v2243, %v2235
    %s2252 = scalar_lea.vmem [#allocation5], 131
    %v2253 = vld [vmem:[%s2252] ss:$8 sm:$0xf]
    %v2254 = vld [vmem:[%s2252] ss:$8 sm:$0xf0]
    %v2255 = vor.u32 %v2253, %v2254
    %v2257 = vlaneseq
    %v2258 = vshrl.u32 %v2257, 7
    %v2259 = vsub.s32 0, %v2258
    %v2260 = vrot.slane %v2255, %v2259
    %v2261 = vlaneseq
    %v2262 = vshrl.u32 %v2261, 7
    %v2263 = vsub.s32 1, %v2262
    %v2264 = vrot.slane %v2255, %v2263
    %v2265 = vlaneseq
    %v2266 = vshrl.u32 %v2265, 7
    %v2267 = vsub.s32 2, %v2266
    %v2268 = vrot.slane %v2255, %v2267
    %v2269 = vlaneseq
    %v2270 = vshrl.u32 %v2269, 7
    %v2271 = vsub.s32 3, %v2270
    %v2272 = vrot.slane %v2255, %v2271
    %v2273 = vlaneseq
    %v2274 = vshrl.u32 %v2273, 7
    %v2275 = vsub.s32 4, %v2274
    %v2276 = vrot.slane %v2255, %v2275
    %v2277 = vlaneseq
    %v2278 = vshrl.u32 %v2277, 7
    %v2279 = vsub.s32 5, %v2278
    %v2280 = vrot.slane %v2255, %v2279
    %v2281 = vlaneseq
    %v2282 = vshrl.u32 %v2281, 7
    %v2283 = vsub.s32 6, %v2282
    %v2284 = vrot.slane %v2255, %v2283
    %v2285 = vlaneseq
    %v2286 = vshrl.u32 %v2285, 7
    %v2287 = vsub.s32 7, %v2286
    %v2288 = vrot.slane %v2255, %v2287
    %v2297 = vmul.f32 %v332, %v2260
    %v2298 = vmul.f32 %v330, %v2264
    %v2299 = vmul.f32 %v328, %v2268
    %v2300 = vmul.f32 %v326, %v2272
    %v2301 = vmul.f32 %v324, %v2276
    %v2302 = vmul.f32 %v322, %v2280
    %v2303 = vmul.f32 %v320, %v2284
    %v2304 = vmul.f32 %v334, %v2288
    %v2305 = vmul.f32 %v333, %v2260
    %v2306 = vmul.f32 %v331, %v2264
    %v2307 = vmul.f32 %v329, %v2268
    %v2308 = vmul.f32 %v327, %v2272
    %v2309 = vmul.f32 %v325, %v2276
    %v2310 = vmul.f32 %v323, %v2280
    %v2311 = vmul.f32 %v321, %v2284
    %v2312 = vmul.f32 %v335, %v2288
    %v2313 = vpack.c.bf16 %v2305, %v2297
    %v2314 = vpack.c.bf16 %v2306, %v2298
    %v2315 = vpack.c.bf16 %v2307, %v2299
    %v2316 = vpack.c.bf16 %v2308, %v2300
    %v2317 = vpack.c.bf16 %v2309, %v2301
    %v2318 = vpack.c.bf16 %v2310, %v2302
    %v2319 = vpack.c.bf16 %v2311, %v2303
    %v2320 = vpack.c.bf16 %v2312, %v2304
    %s2321 = scalar_lea.vmem [#allocation5], 132
    %v2322 = vld [vmem:[%s2321] ss:$8 sm:$0xf]
    %v2323 = vld [vmem:[%s2321] ss:$8 sm:$0xf0]
    %v2324 = vor.u32 %v2322, %v2323
    %v2326 = vlaneseq
    %v2327 = vshrl.u32 %v2326, 7
    %v2328 = vsub.s32 0, %v2327
    %v2329 = vrot.slane %v2324, %v2328
    %v2330 = vlaneseq
    %v2331 = vshrl.u32 %v2330, 7
    %v2332 = vsub.s32 1, %v2331
    %v2333 = vrot.slane %v2324, %v2332
    %v2334 = vlaneseq
    %v2335 = vshrl.u32 %v2334, 7
    %v2336 = vsub.s32 2, %v2335
    %v2337 = vrot.slane %v2324, %v2336
    %v2338 = vlaneseq
    %v2339 = vshrl.u32 %v2338, 7
    %v2340 = vsub.s32 3, %v2339
    %v2341 = vrot.slane %v2324, %v2340
    %v2342 = vlaneseq
    %v2343 = vshrl.u32 %v2342, 7
    %v2344 = vsub.s32 4, %v2343
    %v2345 = vrot.slane %v2324, %v2344
    %v2346 = vlaneseq
    %v2347 = vshrl.u32 %v2346, 7
    %v2348 = vsub.s32 5, %v2347
    %v2349 = vrot.slane %v2324, %v2348
    %v2350 = vlaneseq
    %v2351 = vshrl.u32 %v2350, 7
    %v2352 = vsub.s32 6, %v2351
    %v2353 = vrot.slane %v2324, %v2352
    %v2354 = vlaneseq
    %v2355 = vshrl.u32 %v2354, 7
    %v2356 = vsub.s32 7, %v2355
    %v2357 = vrot.slane %v2324, %v2356
    %v2366 = vmul.f32 %v450, %v2329
    %v2367 = vmul.f32 %v448, %v2333
    %v2368 = vmul.f32 %v446, %v2337
    %v2369 = vmul.f32 %v444, %v2341
    %v2370 = vmul.f32 %v442, %v2345
    %v2371 = vmul.f32 %v440, %v2349
    %v2372 = vmul.f32 %v438, %v2353
    %v2373 = vmul.f32 %v452, %v2357
    %v2374 = vmul.f32 %v451, %v2329
    %v2375 = vmul.f32 %v449, %v2333
    %v2376 = vmul.f32 %v447, %v2337
    %v2377 = vmul.f32 %v445, %v2341
    %v2378 = vmul.f32 %v443, %v2345
    %v2379 = vmul.f32 %v441, %v2349
    %v2380 = vmul.f32 %v439, %v2353
    %v2381 = vmul.f32 %v453, %v2357
    %v2382 = vpack.c.bf16 %v2374, %v2366
    %v2383 = vpack.c.bf16 %v2375, %v2367
    %v2384 = vpack.c.bf16 %v2376, %v2368
    %v2385 = vpack.c.bf16 %v2377, %v2369
    %v2386 = vpack.c.bf16 %v2378, %v2370
    %v2387 = vpack.c.bf16 %v2379, %v2371
    %v2388 = vpack.c.bf16 %v2380, %v2372
    %v2389 = vpack.c.bf16 %v2381, %v2373
    %s2390 = scalar_lea.vmem [#allocation5], 133
    %v2391 = vld [vmem:[%s2390] ss:$8 sm:$0xf]
    %v2392 = vld [vmem:[%s2390] ss:$8 sm:$0xf0]
    %v2393 = vor.u32 %v2391, %v2392
    %v2395 = vlaneseq
    %v2396 = vshrl.u32 %v2395, 7
    %v2397 = vsub.s32 0, %v2396
    %v2398 = vrot.slane %v2393, %v2397
    %v2399 = vlaneseq
    %v2400 = vshrl.u32 %v2399, 7
    %v2401 = vsub.s32 1, %v2400
    %v2402 = vrot.slane %v2393, %v2401
    %v2403 = vlaneseq
    %v2404 = vshrl.u32 %v2403, 7
    %v2405 = vsub.s32 2, %v2404
    %v2406 = vrot.slane %v2393, %v2405
    %v2407 = vlaneseq
    %v2408 = vshrl.u32 %v2407, 7
    %v2409 = vsub.s32 3, %v2408
    %v2410 = vrot.slane %v2393, %v2409
    %v2411 = vlaneseq
    %v2412 = vshrl.u32 %v2411, 7
    %v2413 = vsub.s32 4, %v2412
    %v2414 = vrot.slane %v2393, %v2413
    %v2415 = vlaneseq
    %v2416 = vshrl.u32 %v2415, 7
    %v2417 = vsub.s32 5, %v2416
    %v2418 = vrot.slane %v2393, %v2417
    %v2419 = vlaneseq
    %v2420 = vshrl.u32 %v2419, 7
    %v2421 = vsub.s32 6, %v2420
    %v2422 = vrot.slane %v2393, %v2421
    %v2423 = vlaneseq
    %v2424 = vshrl.u32 %v2423, 7
    %v2425 = vsub.s32 7, %v2424
    %v2426 = vrot.slane %v2393, %v2425
    %v2435 = vmul.f32 %v568, %v2398
    %v2436 = vmul.f32 %v566, %v2402
    %v2437 = vmul.f32 %v564, %v2406
    %v2438 = vmul.f32 %v562, %v2410
    %v2439 = vmul.f32 %v560, %v2414
    %v2440 = vmul.f32 %v558, %v2418
    %v2441 = vmul.f32 %v556, %v2422
    %v2442 = vmul.f32 %v570, %v2426
    %v2443 = vmul.f32 %v569, %v2398
    %v2444 = vmul.f32 %v567, %v2402
    %v2445 = vmul.f32 %v565, %v2406
    %v2446 = vmul.f32 %v563, %v2410
    %v2447 = vmul.f32 %v561, %v2414
    %v2448 = vmul.f32 %v559, %v2418
    %v2449 = vmul.f32 %v557, %v2422
    %v2450 = vmul.f32 %v571, %v2426
    %v2451 = vpack.c.bf16 %v2443, %v2435
    %v2452 = vpack.c.bf16 %v2444, %v2436
    %v2453 = vpack.c.bf16 %v2445, %v2437
    %v2454 = vpack.c.bf16 %v2446, %v2438
    %v2455 = vpack.c.bf16 %v2447, %v2439
    %v2456 = vpack.c.bf16 %v2448, %v2440
    %v2457 = vpack.c.bf16 %v2449, %v2441
    %v2458 = vpack.c.bf16 %v2450, %v2442
    %s2459 = scalar_lea.vmem [#allocation5], 134
    %v2460 = vld [vmem:[%s2459] ss:$8 sm:$0xf]
    %v2461 = vld [vmem:[%s2459] ss:$8 sm:$0xf0]
    %v2462 = vor.u32 %v2460, %v2461
    %v2464 = vlaneseq
    %v2465 = vshrl.u32 %v2464, 7
    %v2466 = vsub.s32 0, %v2465
    %v2467 = vrot.slane %v2462, %v2466
    %v2468 = vlaneseq
    %v2469 = vshrl.u32 %v2468, 7
    %v2470 = vsub.s32 1, %v2469
    %v2471 = vrot.slane %v2462, %v2470
    %v2472 = vlaneseq
    %v2473 = vshrl.u32 %v2472, 7
    %v2474 = vsub.s32 2, %v2473
    %v2475 = vrot.slane %v2462, %v2474
    %v2476 = vlaneseq
    %v2477 = vshrl.u32 %v2476, 7
    %v2478 = vsub.s32 3, %v2477
    %v2479 = vrot.slane %v2462, %v2478
    %v2480 = vlaneseq
    %v2481 = vshrl.u32 %v2480, 7
    %v2482 = vsub.s32 4, %v2481
    %v2483 = vrot.slane %v2462, %v2482
    %v2484 = vlaneseq
    %v2485 = vshrl.u32 %v2484, 7
    %v2486 = vsub.s32 5, %v2485
    %v2487 = vrot.slane %v2462, %v2486
    %v2488 = vlaneseq
    %v2489 = vshrl.u32 %v2488, 7
    %v2490 = vsub.s32 6, %v2489
    %v2491 = vrot.slane %v2462, %v2490
    %v2492 = vlaneseq
    %v2493 = vshrl.u32 %v2492, 7
    %v2494 = vsub.s32 7, %v2493
    %v2495 = vrot.slane %v2462, %v2494
    %v2504 = vmul.f32 %v686, %v2467
    %v2505 = vmul.f32 %v684, %v2471
    %v2506 = vmul.f32 %v682, %v2475
    %v2507 = vmul.f32 %v680, %v2479
    %v2508 = vmul.f32 %v678, %v2483
    %v2509 = vmul.f32 %v676, %v2487
    %v2510 = vmul.f32 %v674, %v2491
    %v2511 = vmul.f32 %v688, %v2495
    %v2512 = vmul.f32 %v687, %v2467
    %v2513 = vmul.f32 %v685, %v2471
    %v2514 = vmul.f32 %v683, %v2475
    %v2515 = vmul.f32 %v681, %v2479
    %v2516 = vmul.f32 %v679, %v2483
    %v2517 = vmul.f32 %v677, %v2487
    %v2518 = vmul.f32 %v675, %v2491
    %v2519 = vmul.f32 %v689, %v2495
    %v2520 = vpack.c.bf16 %v2512, %v2504
    %v2521 = vpack.c.bf16 %v2513, %v2505
    %v2522 = vpack.c.bf16 %v2514, %v2506
    %v2523 = vpack.c.bf16 %v2515, %v2507
    %v2524 = vpack.c.bf16 %v2516, %v2508
    %v2525 = vpack.c.bf16 %v2517, %v2509
    %v2526 = vpack.c.bf16 %v2518, %v2510
    %v2527 = vpack.c.bf16 %v2519, %v2511
    %s2528 = scalar_lea.vmem [#allocation5], 135
    %v2529 = vld [vmem:[%s2528] ss:$8 sm:$0xf]
    %v2530 = vld [vmem:[%s2528] ss:$8 sm:$0xf0]
    %v2531 = vor.u32 %v2529, %v2530
    %v2533 = vlaneseq
    %v2534 = vshrl.u32 %v2533, 7
    %v2535 = vsub.s32 0, %v2534
    %v2536 = vrot.slane %v2531, %v2535
    %v2537 = vlaneseq
    %v2538 = vshrl.u32 %v2537, 7
    %v2539 = vsub.s32 1, %v2538
    %v2540 = vrot.slane %v2531, %v2539
    %v2541 = vlaneseq
    %v2542 = vshrl.u32 %v2541, 7
    %v2543 = vsub.s32 2, %v2542
    %v2544 = vrot.slane %v2531, %v2543
    %v2545 = vlaneseq
    %v2546 = vshrl.u32 %v2545, 7
    %v2547 = vsub.s32 3, %v2546
    %v2548 = vrot.slane %v2531, %v2547
    %v2549 = vlaneseq
    %v2550 = vshrl.u32 %v2549, 7
    %v2551 = vsub.s32 4, %v2550
    %v2552 = vrot.slane %v2531, %v2551
    %v2553 = vlaneseq
    %v2554 = vshrl.u32 %v2553, 7
    %v2555 = vsub.s32 5, %v2554
    %v2556 = vrot.slane %v2531, %v2555
    %v2557 = vlaneseq
    %v2558 = vshrl.u32 %v2557, 7
    %v2559 = vsub.s32 6, %v2558
    %v2560 = vrot.slane %v2531, %v2559
    %v2561 = vlaneseq
    %v2562 = vshrl.u32 %v2561, 7
    %v2563 = vsub.s32 7, %v2562
    %v2564 = vrot.slane %v2531, %v2563
    %v2573 = vmul.f32 %v804, %v2536
    %v2574 = vmul.f32 %v802, %v2540
    %v2575 = vmul.f32 %v800, %v2544
    %v2576 = vmul.f32 %v798, %v2548
    %v2577 = vmul.f32 %v796, %v2552
    %v2578 = vmul.f32 %v794, %v2556
    %v2579 = vmul.f32 %v792, %v2560
    %v2580 = vmul.f32 %v806, %v2564
    %v2581 = vmul.f32 %v805, %v2536
    %v2582 = vmul.f32 %v803, %v2540
    %v2583 = vmul.f32 %v801, %v2544
    %v2584 = vmul.f32 %v799, %v2548
    %v2585 = vmul.f32 %v797, %v2552
    %v2586 = vmul.f32 %v795, %v2556
    %v2587 = vmul.f32 %v793, %v2560
    %v2588 = vmul.f32 %v807, %v2564
    %v2589 = vpack.c.bf16 %v2581, %v2573
    %v2590 = vpack.c.bf16 %v2582, %v2574
    %v2591 = vpack.c.bf16 %v2583, %v2575
    %v2592 = vpack.c.bf16 %v2584, %v2576
    %v2593 = vpack.c.bf16 %v2585, %v2577
    %v2594 = vpack.c.bf16 %v2586, %v2578
    %v2595 = vpack.c.bf16 %v2587, %v2579
    %v2596 = vpack.c.bf16 %v2588, %v2580
    %s2597 = scalar_lea.vmem [#allocation5], 192
    %v2598 = vld [vmem:[%s2597] ss:$8 sm:$0xf]
    %v2599 = vld [vmem:[%s2597] ss:$8 sm:$0xf0]
    %v2600 = vor.u32 %v2598, %v2599
    %v2602 = vlaneseq
    %v2603 = vshrl.u32 %v2602, 7
    %v2604 = vsub.s32 0, %v2603
    %v2605 = vrot.slane %v2600, %v2604
    %v2606 = vlaneseq
    %v2607 = vshrl.u32 %v2606, 7
    %v2608 = vsub.s32 1, %v2607
    %v2609 = vrot.slane %v2600, %v2608
    %v2610 = vlaneseq
    %v2611 = vshrl.u32 %v2610, 7
    %v2612 = vsub.s32 2, %v2611
    %v2613 = vrot.slane %v2600, %v2612
    %v2614 = vlaneseq
    %v2615 = vshrl.u32 %v2614, 7
    %v2616 = vsub.s32 3, %v2615
    %v2617 = vrot.slane %v2600, %v2616
    %v2618 = vlaneseq
    %v2619 = vshrl.u32 %v2618, 7
    %v2620 = vsub.s32 4, %v2619
    %v2621 = vrot.slane %v2600, %v2620
    %v2622 = vlaneseq
    %v2623 = vshrl.u32 %v2622, 7
    %v2624 = vsub.s32 5, %v2623
    %v2625 = vrot.slane %v2600, %v2624
    %v2626 = vlaneseq
    %v2627 = vshrl.u32 %v2626, 7
    %v2628 = vsub.s32 6, %v2627
    %v2629 = vrot.slane %v2600, %v2628
    %v2630 = vlaneseq
    %v2631 = vshrl.u32 %v2630, 7
    %v2632 = vsub.s32 7, %v2631
    %v2633 = vrot.slane %v2600, %v2632
    %v2642 = vmul.f32 %v922, %v2605
    %v2643 = vmul.f32 %v920, %v2609
    %v2644 = vmul.f32 %v918, %v2613
    %v2645 = vmul.f32 %v916, %v2617
    %v2646 = vmul.f32 %v914, %v2621
    %v2647 = vmul.f32 %v912, %v2625
    %v2648 = vmul.f32 %v910, %v2629
    %v2649 = vmul.f32 %v924, %v2633
    %v2650 = vmul.f32 %v923, %v2605
    %v2651 = vmul.f32 %v921, %v2609
    %v2652 = vmul.f32 %v919, %v2613
    %v2653 = vmul.f32 %v917, %v2617
    %v2654 = vmul.f32 %v915, %v2621
    %v2655 = vmul.f32 %v913, %v2625
    %v2656 = vmul.f32 %v911, %v2629
    %v2657 = vmul.f32 %v925, %v2633
    %v2658 = vpack.c.bf16 %v2650, %v2642
    %v2659 = vpack.c.bf16 %v2651, %v2643
    %v2660 = vpack.c.bf16 %v2652, %v2644
    %v2661 = vpack.c.bf16 %v2653, %v2645
    %v2662 = vpack.c.bf16 %v2654, %v2646
    %v2663 = vpack.c.bf16 %v2655, %v2647
    %v2664 = vpack.c.bf16 %v2656, %v2648
    %v2665 = vpack.c.bf16 %v2657, %v2649
    %s2666 = scalar_lea.vmem [#allocation5], 193
    %v2667 = vld [vmem:[%s2666] ss:$8 sm:$0xf]
    %v2668 = vld [vmem:[%s2666] ss:$8 sm:$0xf0]
    %v2669 = vor.u32 %v2667, %v2668
    %v2671 = vlaneseq
    %v2672 = vshrl.u32 %v2671, 7
    %v2673 = vsub.s32 0, %v2672
    %v2674 = vrot.slane %v2669, %v2673
    %v2675 = vlaneseq
    %v2676 = vshrl.u32 %v2675, 7
    %v2677 = vsub.s32 1, %v2676
    %v2678 = vrot.slane %v2669, %v2677
    %v2679 = vlaneseq
    %v2680 = vshrl.u32 %v2679, 7
    %v2681 = vsub.s32 2, %v2680
    %v2682 = vrot.slane %v2669, %v2681
    %v2683 = vlaneseq
    %v2684 = vshrl.u32 %v2683, 7
    %v2685 = vsub.s32 3, %v2684
    %v2686 = vrot.slane %v2669, %v2685
    %v2687 = vlaneseq
    %v2688 = vshrl.u32 %v2687, 7
    %v2689 = vsub.s32 4, %v2688
    %v2690 = vrot.slane %v2669, %v2689
    %v2691 = vlaneseq
    %v2692 = vshrl.u32 %v2691, 7
    %v2693 = vsub.s32 5, %v2692
    %v2694 = vrot.slane %v2669, %v2693
    %v2695 = vlaneseq
    %v2696 = vshrl.u32 %v2695, 7
    %v2697 = vsub.s32 6, %v2696
    %v2698 = vrot.slane %v2669, %v2697
    %v2699 = vlaneseq
    %v2700 = vshrl.u32 %v2699, 7
    %v2701 = vsub.s32 7, %v2700
    %v2702 = vrot.slane %v2669, %v2701
    %v2711 = vmul.f32 %v1040, %v2674
    %v2712 = vmul.f32 %v1038, %v2678
    %v2713 = vmul.f32 %v1036, %v2682
    %v2714 = vmul.f32 %v1034, %v2686
    %v2715 = vmul.f32 %v1032, %v2690
    %v2716 = vmul.f32 %v1030, %v2694
    %v2717 = vmul.f32 %v1028, %v2698
    %v2718 = vmul.f32 %v1042, %v2702
    %v2719 = vmul.f32 %v1041, %v2674
    %v2720 = vmul.f32 %v1039, %v2678
    %v2721 = vmul.f32 %v1037, %v2682
    %v2722 = vmul.f32 %v1035, %v2686
    %v2723 = vmul.f32 %v1033, %v2690
    %v2724 = vmul.f32 %v1031, %v2694
    %v2725 = vmul.f32 %v1029, %v2698
    %v2726 = vmul.f32 %v1043, %v2702
    %v2727 = vpack.c.bf16 %v2719, %v2711
    %v2728 = vpack.c.bf16 %v2720, %v2712
    %v2729 = vpack.c.bf16 %v2721, %v2713
    %v2730 = vpack.c.bf16 %v2722, %v2714
    %v2731 = vpack.c.bf16 %v2723, %v2715
    %v2732 = vpack.c.bf16 %v2724, %v2716
    %v2733 = vpack.c.bf16 %v2725, %v2717
    %v2734 = vpack.c.bf16 %v2726, %v2718
    %s2735 = scalar_lea.vmem [#allocation5], 194
    %v2736 = vld [vmem:[%s2735] ss:$8 sm:$0xf]
    %v2737 = vld [vmem:[%s2735] ss:$8 sm:$0xf0]
    %v2738 = vor.u32 %v2736, %v2737
    %v2740 = vlaneseq
    %v2741 = vshrl.u32 %v2740, 7
    %v2742 = vsub.s32 0, %v2741
    %v2743 = vrot.slane %v2738, %v2742
    %v2744 = vlaneseq
    %v2745 = vshrl.u32 %v2744, 7
    %v2746 = vsub.s32 1, %v2745
    %v2747 = vrot.slane %v2738, %v2746
    %v2748 = vlaneseq
    %v2749 = vshrl.u32 %v2748, 7
    %v2750 = vsub.s32 2, %v2749
    %v2751 = vrot.slane %v2738, %v2750
    %v2752 = vlaneseq
    %v2753 = vshrl.u32 %v2752, 7
    %v2754 = vsub.s32 3, %v2753
    %v2755 = vrot.slane %v2738, %v2754
    %v2756 = vlaneseq
    %v2757 = vshrl.u32 %v2756, 7
    %v2758 = vsub.s32 4, %v2757
    %v2759 = vrot.slane %v2738, %v2758
    %v2760 = vlaneseq
    %v2761 = vshrl.u32 %v2760, 7
    %v2762 = vsub.s32 5, %v2761
    %v2763 = vrot.slane %v2738, %v2762
    %v2764 = vlaneseq
    %v2765 = vshrl.u32 %v2764, 7
    %v2766 = vsub.s32 6, %v2765
    %v2767 = vrot.slane %v2738, %v2766
    %v2768 = vlaneseq
    %v2769 = vshrl.u32 %v2768, 7
    %v2770 = vsub.s32 7, %v2769
    %v2771 = vrot.slane %v2738, %v2770
    %v2780 = vmul.f32 %v1158, %v2743
    %v2781 = vmul.f32 %v1156, %v2747
    %v2782 = vmul.f32 %v1154, %v2751
    %v2783 = vmul.f32 %v1152, %v2755
    %v2784 = vmul.f32 %v1150, %v2759
    %v2785 = vmul.f32 %v1148, %v2763
    %v2786 = vmul.f32 %v1146, %v2767
    %v2787 = vmul.f32 %v1160, %v2771
    %v2788 = vmul.f32 %v1159, %v2743
    %v2789 = vmul.f32 %v1157, %v2747
    %v2790 = vmul.f32 %v1155, %v2751
    %v2791 = vmul.f32 %v1153, %v2755
    %v2792 = vmul.f32 %v1151, %v2759
    %v2793 = vmul.f32 %v1149, %v2763
    %v2794 = vmul.f32 %v1147, %v2767
    %v2795 = vmul.f32 %v1161, %v2771
    %v2796 = vpack.c.bf16 %v2788, %v2780
    %v2797 = vpack.c.bf16 %v2789, %v2781
    %v2798 = vpack.c.bf16 %v2790, %v2782
    %v2799 = vpack.c.bf16 %v2791, %v2783
    %v2800 = vpack.c.bf16 %v2792, %v2784
    %v2801 = vpack.c.bf16 %v2793, %v2785
    %v2802 = vpack.c.bf16 %v2794, %v2786
    %v2803 = vpack.c.bf16 %v2795, %v2787
    %v2804 = vld [vmem:[%s2] sm:$0xff]
    %v2805 = vld [vmem:[%s2 + $0x8] sm:$0xff]
    %v2806 = vld [vmem:[%s2 + $0x10] sm:$0xff]
    %v2807 = vld [vmem:[%s2 + $0x18] sm:$0xff]
    %v2812 = vunpack.c.l.b16 %v2804
    %v2813 = vunpack.c.h.b16 %v2804
    %v2814 = vunpack.c.l.b16 %v2805
    %v2815 = vunpack.c.h.b16 %v2805
    %v2816 = vunpack.c.l.b16 %v2806
    %v2817 = vunpack.c.h.b16 %v2806
    %v2818 = vunpack.c.l.b16 %v2807
    %v2819 = vunpack.c.h.b16 %v2807
    %v2820 = vpack.c.b16 %v2816, %v2812
    %v2821 = vpack.c.b16 %v2817, %v2813
    %v2822 = vpack.c.b16 %v2818, %v2814
    %v2823 = vpack.c.b16 %v2819, %v2815
    %vm2827 = vcmask 392192
    %v2829 = vsel %vm2827, %v2823, 0
    %2831 = vmatprep.subr.bf16.mxu0 %v280
    %2832 = vmatpush1.bf16.msra.mxu0 %v279
    %2833 = vmatprep.subr.bf16.mxu0 %v398
    %2834 = vmatpush1.bf16.msra.mxu0 %v397
    %2835 = vmatprep.subr.bf16.mxu0 %v516
    %2836 = vmatpush1.bf16.msra.mxu0 %v515
    %2837 = vmatprep.subr.bf16.mxu0 %v634
    %2838 = vmatpush1.bf16.msra.mxu0 %v633
    %2839 = vmatprep.subr.bf16.mxu0 %v752
    %2840 = vmatpush1.bf16.msra.mxu0 %v751
    %2841 = vmatprep.subr.bf16.mxu0 %v870
    %2842 = vmatpush1.bf16.msra.mxu0 %v869
    %2843 = vmatprep.subr.bf16.mxu0 %v988
    %2844 = vmatpush1.bf16.msra.mxu0 %v987
    %2845 = vmatprep.subr.bf16.mxu0 %v1106
    %2846 = vmatpush1.bf16.msra.mxu0 %v1105
    %2847 = vmatprep.subr.bf16.mxu0 %v1224
    %2848 = vmatpush1.bf16.msra.mxu0 %v1223
    %2849 = vmatprep.subr.bf16.mxu0 %v1342
    %2850 = vmatpush1.bf16.msra.mxu0 %v1341
    %2851 = vmatprep.subr.bf16.mxu0 %v1460
    %2852 = vmatpush1.bf16.msra.mxu0 %v1459
    %2853 = vmatprep.subr.bf16.mxu0 %v1578
    %2854 = vmatpush1.bf16.msra.mxu0 %v1577
    %2855 = vmatprep.subr.bf16.mxu0 %v1696
    %2856 = vmatpush1.bf16.msra.mxu0 %v1695
    %2857 = vmatprep.subr.bf16.mxu0 %v1704
    %2858 = vmatpush1.bf16.msra.mxu0 %v1703
    %2859 = vmatprep.subr.bf16.mxu0 %v1822
    %2860 = vmatpush1.bf16.msra.mxu0 %v1821
    %2861 = vmatprep.subr.bf16.mxu0 %v1940
    %2862 = vmatpush1.bf16.msra.mxu0 %v1939
    %2863 = vmatprep.mubr.bf16.mxu0 %v2821
    %2864 = vmatmul.mubr.bf16.gmra.mrb[0].mxu0 %v2820
    %v2865 = vpop.f32.mrb[0].mxu0
    %v2866 = vadd.f32 0.0, %v2865
    %v2867 = vpop.f32.mrb[0].mxu0
    %v2868 = vadd.f32 0.0, %v2867
    %v2869 = vpop.f32.mrb[0].mxu0
    %v2870 = vadd.f32 0.0, %v2869
    %v2871 = vpop.f32.mrb[0].mxu0
    %v2872 = vadd.f32 0.0, %v2871
    %2873 = vdwg.mxu0
    %2874 = vmatprep.subr.bf16.mxu0 %v2058
    %2875 = vmatpush1.bf16.msra.mxu0 %v2057
    %2876 = vmatprep.subr.bf16.mxu0 %v2176
    %2877 = vmatpush1.bf16.msra.mxu0 %v2175
    %2878 = vmatprep.subr.bf16.mxu0 %v2245
    %2879 = vmatpush1.bf16.msra.mxu0 %v2244
    %2880 = vmatprep.subr.bf16.mxu0 %v2314
    %2881 = vmatpush1.bf16.msra.mxu0 %v2313
    %2882 = vmatprep.subr.bf16.mxu0 %v2383
    %2883 = vmatpush1.bf16.msra.mxu0 %v2382
    %2884 = vmatprep.subr.bf16.mxu0 %v2452
    %2885 = vmatpush1.bf16.msra.mxu0 %v2451
    %2886 = vmatprep.subr.bf16.mxu0 %v2521
    %2887 = vmatpush1.bf16.msra.mxu0 %v2520
    %2888 = vmatprep.subr.bf16.mxu0 %v2590
    %2889 = vmatpush1.bf16.msra.mxu0 %v2589
    %2890 = vmatprep.subr.bf16.mxu0 %v2659
    %2891 = vmatpush1.bf16.msra.mxu0 %v2658
    %2892 = vmatprep.subr.bf16.mxu0 %v2728
    %2893 = vmatpush1.bf16.msra.mxu0 %v2727
    %2894 = vmatprep.subr.bf16.mxu0 %v2797
    %2895 = vmatpush1.bf16.msra.mxu0 %v2796
    %2896 = vmatprep.subr.bf16.mxu0 0
    %2897 = vmatpush1.bf16.msra.mxu0 0
    %2898 = vmatprep.subr.bf16.mxu0 0
    %2899 = vmatpush1.bf16.msra.mxu0 0
    %2900 = vmatprep.subr.bf16.mxu0 0
    %2901 = vmatpush1.bf16.msra.mxu0 0
    %2902 = vmatprep.subr.bf16.mxu0 0
    %2903 = vmatpush1.bf16.msra.mxu0 0
    %2904 = vmatprep.subr.bf16.mxu0 0
    %2905 = vmatpush1.bf16.msra.mxu0 0
    %2906 = vmatprep.mubr.bf16.mxu0 %v2829
    %2907 = vmatmul.mubr.bf16.gmra.mrb[0].mxu0 %v2822
    %v2908 = vpop.f32.mrb[0].mxu0
    %v2909 = vadd.f32 %v2866, %v2908
    %v2910 = vpop.f32.mrb[0].mxu0
    %v2911 = vadd.f32 %v2868, %v2910
    %v2912 = vpop.f32.mrb[0].mxu0
    %v2913 = vadd.f32 %v2870, %v2912
    %v2914 = vpop.f32.mrb[0].mxu0
    %v2915 = vadd.f32 %v2872, %v2914
    %2916 = vdwg.mxu0
    %2917 = vmatprep.subr.bf16.mxu0 %v282
    %2918 = vmatpush1.bf16.msra.mxu0 %v281
    %2919 = vmatprep.subr.bf16.mxu0 %v400
    %2920 = vmatpush1.bf16.msra.mxu0 %v399
    %2921 = vmatprep.subr.bf16.mxu0 %v518
    %2922 = vmatpush1.bf16.msra.mxu0 %v517
    %2923 = vmatprep.subr.bf16.mxu0 %v636
    %2924 = vmatpush1.bf16.msra.mxu0 %v635
    %2925 = vmatprep.subr.bf16.mxu0 %v754
    %2926 = vmatpush1.bf16.msra.mxu0 %v753
    %2927 = vmatprep.subr.bf16.mxu0 %v872
    %2928 = vmatpush1.bf16.msra.mxu0 %v871
    %2929 = vmatprep.subr.bf16.mxu0 %v990
    %2930 = vmatpush1.bf16.msra.mxu0 %v989
    %2931 = vmatprep.subr.bf16.mxu0 %v1108
    %2932 = vmatpush1.bf16.msra.mxu0 %v1107
    %2933 = vmatprep.subr.bf16.mxu0 %v1226
    %2934 = vmatpush1.bf16.msra.mxu0 %v1225
    %2935 = vmatprep.subr.bf16.mxu0 %v1344
    %2936 = vmatpush1.bf16.msra.mxu0 %v1343
    %2937 = vmatprep.subr.bf16.mxu0 %v1462
    %2938 = vmatpush1.bf16.msra.mxu0 %v1461
    %2939 = vmatprep.subr.bf16.mxu0 %v1580
    %2940 = vmatpush1.bf16.msra.mxu0 %v1579
    %2941 = vmatprep.subr.bf16.mxu0 %v1698
    %2942 = vmatpush1.bf16.msra.mxu0 %v1697
    %2943 = vmatprep.subr.bf16.mxu0 %v1706
    %2944 = vmatpush1.bf16.msra.mxu0 %v1705
    %2945 = vmatprep.subr.bf16.mxu0 %v1824
    %2946 = vmatpush1.bf16.msra.mxu0 %v1823
    %2947 = vmatprep.subr.bf16.mxu0 %v1942
    %2948 = vmatpush1.bf16.msra.mxu0 %v1941
    %2949 = vmatprep.mubr.bf16.mxu0 %v2821
    %2950 = vmatmul.mubr.bf16.gmra.mrb[0].mxu0 %v2820
    %v2951 = vpop.f32.mrb[0].mxu0
    %v2952 = vadd.f32 0.0, %v2951
    %v2953 = vpop.f32.mrb[0].mxu0
    %v2954 = vadd.f32 0.0, %v2953
    %v2955 = vpop.f32.mrb[0].mxu0
    %v2956 = vadd.f32 0.0, %v2955
    %v2957 = vpop.f32.mrb[0].mxu0
    %v2958 = vadd.f32 0.0, %v2957
    %2959 = vdwg.mxu0
    %2960 = vmatprep.subr.bf16.mxu0 %v2060
    %2961 = vmatpush1.bf16.msra.mxu0 %v2059
    %2962 = vmatprep.subr.bf16.mxu0 %v2178
    %2963 = vmatpush1.bf16.msra.mxu0 %v2177
    %2964 = vmatprep.subr.bf16.mxu0 %v2247
    %2965 = vmatpush1.bf16.msra.mxu0 %v2246
    %2966 = vmatprep.subr.bf16.mxu0 %v2316
    %2967 = vmatpush1.bf16.msra.mxu0 %v2315
    %2968 = vmatprep.subr.bf16.mxu0 %v2385
    %2969 = vmatpush1.bf16.msra.mxu0 %v2384
    %2970 = vmatprep.subr.bf16.mxu0 %v2454
    %2971 = vmatpush1.bf16.msra.mxu0 %v2453
    %2972 = vmatprep.subr.bf16.mxu0 %v2523
    %2973 = vmatpush1.bf16.msra.mxu0 %v2522
    %2974 = vmatprep.subr.bf16.mxu0 %v2592
    %2975 = vmatpush1.bf16.msra.mxu0 %v2591
    %2976 = vmatprep.subr.bf16.mxu0 %v2661
    %2977 = vmatpush1.bf16.msra.mxu0 %v2660
    %2978 = vmatprep.subr.bf16.mxu0 %v2730
    %2979 = vmatpush1.bf16.msra.mxu0 %v2729
    %2980 = vmatprep.subr.bf16.mxu0 %v2799
    %2981 = vmatpush1.bf16.msra.mxu0 %v2798
    %2982 = vmatprep.subr.bf16.mxu0 0
    %2983 = vmatpush1.bf16.msra.mxu0 0
    %2984 = vmatprep.subr.bf16.mxu0 0
    %2985 = vmatpush1.bf16.msra.mxu0 0
    %2986 = vmatprep.subr.bf16.mxu0 0
    %2987 = vmatpush1.bf16.msra.mxu0 0
    %2988 = vmatprep.subr.bf16.mxu0 0
    %2989 = vmatpush1.bf16.msra.mxu0 0
    %2990 = vmatprep.subr.bf16.mxu0 0
    %2991 = vmatpush1.bf16.msra.mxu0 0
    %2992 = vmatprep.mubr.bf16.mxu0 %v2829
    %2993 = vmatmul.mubr.bf16.gmra.mrb[0].mxu0 %v2822
    %v2994 = vpop.f32.mrb[0].mxu0
    %v2995 = vadd.f32 %v2952, %v2994
    %v2996 = vpop.f32.mrb[0].mxu0
    %v2997 = vadd.f32 %v2954, %v2996
    %v2998 = vpop.f32.mrb[0].mxu0
    %v2999 = vadd.f32 %v2956, %v2998
    %v3000 = vpop.f32.mrb[0].mxu0
    %v3001 = vadd.f32 %v2958, %v3000
    %3002 = vdwg.mxu0
    %3003 = vmatprep.subr.bf16.mxu0 %v284
    %3004 = vmatpush1.bf16.msra.mxu0 %v283
    %3005 = vmatprep.subr.bf16.mxu0 %v402
    %3006 = vmatpush1.bf16.msra.mxu0 %v401
    %3007 = vmatprep.subr.bf16.mxu0 %v520
    %3008 = vmatpush1.bf16.msra.mxu0 %v519
    %3009 = vmatprep.subr.bf16.mxu0 %v638
    %3010 = vmatpush1.bf16.msra.mxu0 %v637
    %3011 = vmatprep.subr.bf16.mxu0 %v756
    %3012 = vmatpush1.bf16.msra.mxu0 %v755
    %3013 = vmatprep.subr.bf16.mxu0 %v874
    %3014 = vmatpush1.bf16.msra.mxu0 %v873
    %3015 = vmatprep.subr.bf16.mxu0 %v992
    %3016 = vmatpush1.bf16.msra.mxu0 %v991
    %3017 = vmatprep.subr.bf16.mxu0 %v1110
    %3018 = vmatpush1.bf16.msra.mxu0 %v1109
    %3019 = vmatprep.subr.bf16.mxu0 %v1228
    %3020 = vmatpush1.bf16.msra.mxu0 %v1227
    %3021 = vmatprep.subr.bf16.mxu0 %v1346
    %3022 = vmatpush1.bf16.msra.mxu0 %v1345
    %3023 = vmatprep.subr.bf16.mxu0 %v1464
    %3024 = vmatpush1.bf16.msra.mxu0 %v1463
    %3025 = vmatprep.subr.bf16.mxu0 %v1582
    %3026 = vmatpush1.bf16.msra.mxu0 %v1581
    %3027 = vmatprep.subr.bf16.mxu0 %v1700
    %3028 = vmatpush1.bf16.msra.mxu0 %v1699
    %3029 = vmatprep.subr.bf16.mxu0 %v1708
    %3030 = vmatpush1.bf16.msra.mxu0 %v1707
    %3031 = vmatprep.subr.bf16.mxu0 %v1826
    %3032 = vmatpush1.bf16.msra.mxu0 %v1825
    %3033 = vmatprep.subr.bf16.mxu0 %v1944
    %3034 = vmatpush1.bf16.msra.mxu0 %v1943
    %3035 = vmatprep.mubr.bf16.mxu0 %v2821
    %3036 = vmatmul.mubr.bf16.gmra.mrb[0].mxu0 %v2820
    %v3037 = vpop.f32.mrb[0].mxu0
    %v3038 = vadd.f32 0.0, %v3037
    %v3039 = vpop.f32.mrb[0].mxu0
    %v3040 = vadd.f32 0.0, %v3039
    %v3041 = vpop.f32.mrb[0].mxu0
    %v3042 = vadd.f32 0.0, %v3041
    %v3043 = vpop.f32.mrb[0].mxu0
    %v3044 = vadd.f32 0.0, %v3043
    %3045 = vdwg.mxu0
    %3046 = vmatprep.subr.bf16.mxu0 %v2062
    %3047 = vmatpush1.bf16.msra.mxu0 %v2061
    %3048 = vmatprep.subr.bf16.mxu0 %v2180
    %3049 = vmatpush1.bf16.msra.mxu0 %v2179
    %3050 = vmatprep.subr.bf16.mxu0 %v2249
    %3051 = vmatpush1.bf16.msra.mxu0 %v2248
    %3052 = vmatprep.subr.bf16.mxu0 %v2318
    %3053 = vmatpush1.bf16.msra.mxu0 %v2317
    %3054 = vmatprep.subr.bf16.mxu0 %v2387
    %3055 = vmatpush1.bf16.msra.mxu0 %v2386
    %3056 = vmatprep.subr.bf16.mxu0 %v2456
    %3057 = vmatpush1.bf16.msra.mxu0 %v2455
    %3058 = vmatprep.subr.bf16.mxu0 %v2525
    %3059 = vmatpush1.bf16.msra.mxu0 %v2524
    %3060 = vmatprep.subr.bf16.mxu0 %v2594
    %3061 = vmatpush1.bf16.msra.mxu0 %v2593
    %3062 = vmatprep.subr.bf16.mxu0 %v2663
    %3063 = vmatpush1.bf16.msra.mxu0 %v2662
    %3064 = vmatprep.subr.bf16.mxu0 %v2732
    %3065 = vmatpush1.bf16.msra.mxu0 %v2731
    %3066 = vmatprep.subr.bf16.mxu0 %v2801
    %3067 = vmatpush1.bf16.msra.mxu0 %v2800
    %3068 = vmatprep.subr.bf16.mxu0 0
    %3069 = vmatpush1.bf16.msra.mxu0 0
    %3070 = vmatprep.subr.bf16.mxu0 0
    %3071 = vmatpush1.bf16.msra.mxu0 0
    %3072 = vmatprep.subr.bf16.mxu0 0
    %3073 = vmatpush1.bf16.msra.mxu0 0
    %3074 = vmatprep.subr.bf16.mxu0 0
    %3075 = vmatpush1.bf16.msra.mxu0 0
    %3076 = vmatprep.subr.bf16.mxu0 0
    %3077 = vmatpush1.bf16.msra.mxu0 0
    %3078 = vmatprep.mubr.bf16.mxu0 %v2829
    %3079 = vmatmul.mubr.bf16.gmra.mrb[0].mxu0 %v2822
    %v3080 = vpop.f32.mrb[0].mxu0
    %v3081 = vadd.f32 %v3038, %v3080
    %v3082 = vpop.f32.mrb[0].mxu0
    %v3083 = vadd.f32 %v3040, %v3082
    %v3084 = vpop.f32.mrb[0].mxu0
    %v3085 = vadd.f32 %v3042, %v3084
    %v3086 = vpop.f32.mrb[0].mxu0
    %v3087 = vadd.f32 %v3044, %v3086
    %3088 = vdwg.mxu0
    %3089 = vmatprep.subr.bf16.mxu0 %v286
    %3090 = vmatpush1.bf16.msra.mxu0 %v285
    %3091 = vmatprep.subr.bf16.mxu0 %v404
    %3092 = vmatpush1.bf16.msra.mxu0 %v403
    %3093 = vmatprep.subr.bf16.mxu0 %v522
    %3094 = vmatpush1.bf16.msra.mxu0 %v521
    %3095 = vmatprep.subr.bf16.mxu0 %v640
    %3096 = vmatpush1.bf16.msra.mxu0 %v639
    %3097 = vmatprep.subr.bf16.mxu0 %v758
    %3098 = vmatpush1.bf16.msra.mxu0 %v757
    %3099 = vmatprep.subr.bf16.mxu0 %v876
    %3100 = vmatpush1.bf16.msra.mxu0 %v875
    %3101 = vmatprep.subr.bf16.mxu0 %v994
    %3102 = vmatpush1.bf16.msra.mxu0 %v993
    %3103 = vmatprep.subr.bf16.mxu0 %v1112
    %3104 = vmatpush1.bf16.msra.mxu0 %v1111
    %3105 = vmatprep.subr.bf16.mxu0 %v1230
    %3106 = vmatpush1.bf16.msra.mxu0 %v1229
    %3107 = vmatprep.subr.bf16.mxu0 %v1348
    %3108 = vmatpush1.bf16.msra.mxu0 %v1347
    %3109 = vmatprep.subr.bf16.mxu0 %v1466
    %3110 = vmatpush1.bf16.msra.mxu0 %v1465
    %3111 = vmatprep.subr.bf16.mxu0 %v1584
    %3112 = vmatpush1.bf16.msra.mxu0 %v1583
    %3113 = vmatprep.subr.bf16.mxu0 %v1702
    %3114 = vmatpush1.bf16.msra.mxu0 %v1701
    %3115 = vmatprep.subr.bf16.mxu0 %v1710
    %3116 = vmatpush1.bf16.msra.mxu0 %v1709
    %3117 = vmatprep.subr.bf16.mxu0 %v1828
    %3118 = vmatpush1.bf16.msra.mxu0 %v1827
    %3119 = vmatprep.subr.bf16.mxu0 %v1946
    %3120 = vmatpush1.bf16.msra.mxu0 %v1945
    %3121 = vmatprep.mubr.bf16.mxu0 %v2821
    %3122 = vmatmul.mubr.bf16.gmra.mrb[0].mxu0 %v2820
    %v3123 = vpop.f32.mrb[0].mxu0
    %v3124 = vadd.f32 0.0, %v3123
    %v3125 = vpop.f32.mrb[0].mxu0
    %v3126 = vadd.f32 0.0, %v3125
    %v3127 = vpop.f32.mrb[0].mxu0
    %v3128 = vadd.f32 0.0, %v3127
    %v3129 = vpop.f32.mrb[0].mxu0
    %v3130 = vadd.f32 0.0, %v3129
    %3131 = vdwg.mxu0
    %3132 = vmatprep.subr.bf16.mxu0 %v2064
    %3133 = vmatpush1.bf16.msra.mxu0 %v2063
    %3134 = vmatprep.subr.bf16.mxu0 %v2182
    %3135 = vmatpush1.bf16.msra.mxu0 %v2181
    %3136 = vmatprep.subr.bf16.mxu0 %v2251
    %3137 = vmatpush1.bf16.msra.mxu0 %v2250
    %3138 = vmatprep.subr.bf16.mxu0 %v2320
    %3139 = vmatpush1.bf16.msra.mxu0 %v2319
    %3140 = vmatprep.subr.bf16.mxu0 %v2389
    %3141 = vmatpush1.bf16.msra.mxu0 %v2388
    %3142 = vmatprep.subr.bf16.mxu0 %v2458
    %3143 = vmatpush1.bf16.msra.mxu0 %v2457
    %3144 = vmatprep.subr.bf16.mxu0 %v2527
    %3145 = vmatpush1.bf16.msra.mxu0 %v2526
    %3146 = vmatprep.subr.bf16.mxu0 %v2596
    %3147 = vmatpush1.bf16.msra.mxu0 %v2595
    %3148 = vmatprep.subr.bf16.mxu0 %v2665
    %3149 = vmatpush1.bf16.msra.mxu0 %v2664
    %3150 = vmatprep.subr.bf16.mxu0 %v2734
    %3151 = vmatpush1.bf16.msra.mxu0 %v2733
    %3152 = vmatprep.subr.bf16.mxu0 %v2803
    %3153 = vmatpush1.bf16.msra.mxu0 %v2802
    %3154 = vmatprep.subr.bf16.mxu0 0
    %3155 = vmatpush1.bf16.msra.mxu0 0
    %3156 = vmatprep.subr.bf16.mxu0 0
    %3157 = vmatpush1.bf16.msra.mxu0 0
    %3158 = vmatprep.subr.bf16.mxu0 0
    %3159 = vmatpush1.bf16.msra.mxu0 0
    %3160 = vmatprep.subr.bf16.mxu0 0
    %3161 = vmatpush1.bf16.msra.mxu0 0
    %3162 = vmatprep.subr.bf16.mxu0 0
    %3163 = vmatpush1.bf16.msra.mxu0 0
    %3164 = vmatprep.mubr.bf16.mxu0 %v2829
    %3165 = vmatmul.mubr.bf16.gmra.mrb[0].mxu0 %v2822
    %v3166 = vpop.f32.mrb[0].mxu0
    %v3167 = vadd.f32 %v3124, %v3166
    %v3168 = vpop.f32.mrb[0].mxu0
    %v3169 = vadd.f32 %v3126, %v3168
    %v3170 = vpop.f32.mrb[0].mxu0
    %v3171 = vadd.f32 %v3128, %v3170
    %v3172 = vpop.f32.mrb[0].mxu0
    %v3173 = vadd.f32 %v3130, %v3172
    %3174 = vdwg.mxu0
    %v3175 = vadd.f32 %v2909, %v2911
    %v3176 = vadd.f32 %v3175, %v2995
    %v3177 = vadd.f32 %v3176, %v2997
    %v3178 = vadd.f32 %v3177, %v3081
    %v3179 = vadd.f32 %v3178, %v3083
    %v3180 = vadd.f32 %v3179, %v3167
    %v3181 = vadd.f32 %v3180, %v3169
    %3182 = vadd.xlane.f32.xlu0 %v3181
    %v3183 = vpop.xlane.xlu0 %3182
    %v3184 = vadd.f32 %v2913, %v2915
    %v3185 = vadd.f32 %v3184, %v2999
    %v3186 = vadd.f32 %v3185, %v3001
    %v3187 = vadd.f32 %v3186, %v3085
    %v3188 = vadd.f32 %v3187, %v3087
    %v3189 = vadd.f32 %v3188, %v3171
    %v3190 = vadd.f32 %v3189, %v3173
    %3191 = vadd.xlane.f32.xlu0 %v3190
    %v3192 = vpop.xlane.xlu0 %3191
    %v3193 = vrcp.pop 1024.0
    %v3194 = vmul.f32 %v3183, %v3193
    %v3195 = vmul.f32 %v3192, %v3193
    %v3196 = vsub.f32 %v2909, %v3194
    %v3197 = vsub.f32 %v2911, %v3194
    %v3198 = vsub.f32 %v2995, %v3194
    %v3199 = vsub.f32 %v2997, %v3194
    %v3200 = vsub.f32 %v3081, %v3194
    %v3201 = vsub.f32 %v3083, %v3194
    %v3202 = vsub.f32 %v3167, %v3194
    %v3203 = vsub.f32 %v3169, %v3194
    %v3204 = vsub.f32 %v2913, %v3195
    %v3205 = vsub.f32 %v2915, %v3195
    %v3206 = vsub.f32 %v2999, %v3195
    %v3207 = vsub.f32 %v3001, %v3195
    %v3208 = vsub.f32 %v3085, %v3195
    %v3209 = vsub.f32 %v3087, %v3195
    %v3210 = vsub.f32 %v3171, %v3195
    %v3211 = vsub.f32 %v3173, %v3195
    %v3212 = vmul.f32 %v3196, %v3196
    %v3213 = vmul.f32 %v3197, %v3197
    %v3214 = vmul.f32 %v3198, %v3198
    %v3215 = vmul.f32 %v3199, %v3199
    %v3216 = vmul.f32 %v3200, %v3200
    %v3217 = vmul.f32 %v3201, %v3201
    %v3218 = vmul.f32 %v3202, %v3202
    %v3219 = vmul.f32 %v3203, %v3203
    %v3220 = vmul.f32 %v3204, %v3204
    %v3221 = vmul.f32 %v3205, %v3205
    %v3222 = vmul.f32 %v3206, %v3206
    %v3223 = vmul.f32 %v3207, %v3207
    %v3224 = vmul.f32 %v3208, %v3208
    %v3225 = vmul.f32 %v3209, %v3209
    %v3226 = vmul.f32 %v3210, %v3210
    %v3227 = vmul.f32 %v3211, %v3211
    %v3228 = vadd.f32 %v3212, %v3213
    %v3229 = vadd.f32 %v3228, %v3214
    %v3230 = vadd.f32 %v3229, %v3215
    %v3231 = vadd.f32 %v3230, %v3216
    %v3232 = vadd.f32 %v3231, %v3217
    %v3233 = vadd.f32 %v3232, %v3218
    %v3234 = vadd.f32 %v3233, %v3219
    %3235 = vadd.xlane.f32.xlu0 %v3234
    %v3236 = vpop.xlane.xlu0 %3235
    %v3237 = vadd.f32 %v3220, %v3221
    %v3238 = vadd.f32 %v3237, %v3222
    %v3239 = vadd.f32 %v3238, %v3223
    %v3240 = vadd.f32 %v3239, %v3224
    %v3241 = vadd.f32 %v3240, %v3225
    %v3242 = vadd.f32 %v3241, %v3226
    %v3243 = vadd.f32 %v3242, %v3227
    %3244 = vadd.xlane.f32.xlu0 %v3243
    %v3245 = vpop.xlane.xlu0 %3244
    %v3246 = vmul.f32 %v3236, %v3193
    %v3247 = vmul.f32 %v3245, %v3193
    %v3248 = vld [vmem:[%s3] sm:$0xff]
    %v3249 = vld [vmem:[%s3 + $0x8] sm:$0xff]
    %v3250 = vadd.f32 %v3246, 1e-05
    %v3251 = vadd.f32 %v3247, 1e-05
    %v3252 = vrsqrt.pop %v3250
    %v3253 = vrsqrt.pop %v3251
    %v3254 = vmul.f32 %v3248, %v3252
    %v3255 = vmul.f32 %v3249, %v3253
    %v3256 = vld [vmem:[%s4] sm:$0xff]
    %v3257 = vld [vmem:[%s4 + $0x8] sm:$0xff]
    %v3258 = vmul.f32 %v3194, %v3254
    %v3259 = vmul.f32 %v3195, %v3255
    %v3260 = vsub.f32 %v3256, %v3258
    %v3261 = vsub.f32 %v3257, %v3259
    %3263 = vset.pattern.permute.xlu0 0
    %3264 = vperm.xlu0 %3263, %v3254
    %v3265 = vpop.permute.xlu0 %3264
    %3268 = vset.pattern.permute.xlu0 0
    %3269 = vperm.xlu0 %3268, %v3255
    %v3270 = vpop.permute.xlu0 %3269
    %v3272 = vmul.f32 %v2909, %v3265
    %v3273 = vmul.f32 %v2911, %v3265
    %v3274 = vmul.f32 %v2995, %v3265
    %v3275 = vmul.f32 %v2997, %v3265
    %v3276 = vmul.f32 %v3081, %v3265
    %v3277 = vmul.f32 %v3083, %v3265
    %v3278 = vmul.f32 %v3167, %v3265
    %v3279 = vmul.f32 %v3169, %v3265
    %v3280 = vmul.f32 %v2913, %v3270
    %v3281 = vmul.f32 %v2915, %v3270
    %v3282 = vmul.f32 %v2999, %v3270
    %v3283 = vmul.f32 %v3001, %v3270
    %v3284 = vmul.f32 %v3085, %v3270
    %v3285 = vmul.f32 %v3087, %v3270
    %v3286 = vmul.f32 %v3171, %v3270
    %v3287 = vmul.f32 %v3173, %v3270
    %3289 = vset.pattern.permute.xlu0 0
    %3290 = vperm.xlu0 %3289, %v3260
    %v3291 = vpop.permute.xlu0 %3290
    %3294 = vset.pattern.permute.xlu0 0
    %3295 = vperm.xlu0 %3294, %v3261
    %v3296 = vpop.permute.xlu0 %3295
    %v3298 = vadd.f32 %v3272, %v3291
    %v3299 = vadd.f32 %v3273, %v3291
    %v3300 = vadd.f32 %v3274, %v3291
    %v3301 = vadd.f32 %v3275, %v3291
    %v3302 = vadd.f32 %v3276, %v3291
    %v3303 = vadd.f32 %v3277, %v3291
    %v3304 = vadd.f32 %v3278, %v3291
    %v3305 = vadd.f32 %v3279, %v3291
    %v3306 = vadd.f32 %v3280, %v3296
    %v3307 = vadd.f32 %v3281, %v3296
    %v3308 = vadd.f32 %v3282, %v3296
    %v3309 = vadd.f32 %v3283, %v3296
    %v3310 = vadd.f32 %v3284, %v3296
    %v3311 = vadd.f32 %v3285, %v3296
    %v3312 = vadd.f32 %v3286, %v3296
    %v3313 = vadd.f32 %v3287, %v3296
    %v3314 = vmax.f32 %v3298, 0.0
    %v3315 = vmax.f32 %v3299, 0.0
    %v3316 = vmax.f32 %v3300, 0.0
    %v3317 = vmax.f32 %v3301, 0.0
    %v3318 = vmax.f32 %v3302, 0.0
    %v3319 = vmax.f32 %v3303, 0.0
    %v3320 = vmax.f32 %v3304, 0.0
    %v3321 = vmax.f32 %v3305, 0.0
    %v3322 = vmax.f32 %v3306, 0.0
    %v3323 = vmax.f32 %v3307, 0.0
    %v3324 = vmax.f32 %v3308, 0.0
    %v3325 = vmax.f32 %v3309, 0.0
    %v3326 = vmax.f32 %v3310, 0.0
    %v3327 = vmax.f32 %v3311, 0.0
    %v3328 = vmax.f32 %v3312, 0.0
    %v3329 = vmax.f32 %v3313, 0.0
    %3330 = vrot.lane.b32.xlu0 %v3314, 73
    %v3331 = vpop.permute.xlu0 %3330
    %3332 = vrot.lane.b32.xlu0 %v3322, 73
    %v3333 = vpop.permute.xlu0 %3332
    %3334 = vrot.lane.b32.xlu0 %v3315, 73
    %v3335 = vpop.permute.xlu0 %3334
    %3336 = vrot.lane.b32.xlu0 %v3323, 73
    %v3337 = vpop.permute.xlu0 %3336
    %3338 = vrot.lane.b32.xlu0 %v3316, 73
    %v3339 = vpop.permute.xlu0 %3338
    %3340 = vrot.lane.b32.xlu0 %v3324, 73
    %v3341 = vpop.permute.xlu0 %3340
    %3342 = vrot.lane.b32.xlu0 %v3317, 73
    %v3343 = vpop.permute.xlu0 %3342
    %3344 = vrot.lane.b32.xlu0 %v3325, 73
    %v3345 = vpop.permute.xlu0 %3344
    %3346 = vrot.lane.b32.xlu0 %v3318, 73
    %v3347 = vpop.permute.xlu0 %3346
    %3348 = vrot.lane.b32.xlu0 %v3326, 73
    %v3349 = vpop.permute.xlu0 %3348
    %3350 = vrot.lane.b32.xlu0 %v3319, 73
    %v3351 = vpop.permute.xlu0 %3350
    %3352 = vrot.lane.b32.xlu0 %v3327, 73
    %v3353 = vpop.permute.xlu0 %3352
    %3354 = vrot.lane.b32.xlu0 %v3320, 73
    %v3355 = vpop.permute.xlu0 %3354
    %3356 = vrot.lane.b32.xlu0 %v3328, 73
    %v3357 = vpop.permute.xlu0 %3356
    %3358 = vrot.lane.b32.xlu0 %v3321, 73
    %v3359 = vpop.permute.xlu0 %3358
    %3360 = vrot.lane.b32.xlu0 %v3329, 73
    %v3361 = vpop.permute.xlu0 %3360
    %v3362 = vsel %vm202, %v3355, %v3359
    %v3363 = vsel %vm202, %v3357, %v3361
    %v3364 = vsel %vm202, %v3351, %v3355
    %v3365 = vsel %vm202, %v3353, %v3357
    %v3366 = vsel %vm202, %v3347, %v3351
    %v3367 = vsel %vm202, %v3349, %v3353
    %v3368 = vsel %vm202, %v3343, %v3347
    %v3369 = vsel %vm202, %v3345, %v3349
    %v3370 = vsel %vm202, %v3339, %v3343
    %v3371 = vsel %vm202, %v3341, %v3345
    %v3372 = vsel %vm202, %v3335, %v3339
    %v3373 = vsel %vm202, %v3337, %v3341
    %v3374 = vsel %vm202, %v3331, %v3335
    %v3375 = vsel %vm202, %v3333, %v3337
    %v3376 = vsel %vm202, %v3359, %v3331
    %v3377 = vsel %vm202, %v3361, %v3333
    %v3378 = vmul.f32 %v3376, %v226
    %v3379 = vmul.f32 %v3374, %v230
    %v3380 = vmul.f32 %v3372, %v234
    %v3381 = vmul.f32 %v3370, %v238
    %v3382 = vmul.f32 %v3368, %v242
    %v3383 = vmul.f32 %v3366, %v246
    %v3384 = vmul.f32 %v3364, %v250
    %v3385 = vmul.f32 %v3362, %v254
    %v3386 = vmul.f32 %v3377, %v226
    %v3387 = vmul.f32 %v3375, %v230
    %v3388 = vmul.f32 %v3373, %v234
    %v3389 = vmul.f32 %v3371, %v238
    %v3390 = vmul.f32 %v3369, %v242
    %v3391 = vmul.f32 %v3367, %v246
    %v3392 = vmul.f32 %v3365, %v250
    %v3393 = vmul.f32 %v3363, %v254
    %v3394 = vpack.c.bf16 %v3386, %v3378
    %v3395 = vpack.c.bf16 %v3387, %v3379
    %v3396 = vpack.c.bf16 %v3388, %v3380
    %v3397 = vpack.c.bf16 %v3389, %v3381
    %v3398 = vpack.c.bf16 %v3390, %v3382
    %v3399 = vpack.c.bf16 %v3391, %v3383
    %v3400 = vpack.c.bf16 %v3392, %v3384
    %v3401 = vpack.c.bf16 %v3393, %v3385
    %3402 = vrot.lane.b32.xlu0 %v3314, 72
    %v3403 = vpop.permute.xlu0 %3402
    %3404 = vrot.lane.b32.xlu0 %v3322, 72
    %v3405 = vpop.permute.xlu0 %3404
    %3406 = vrot.lane.b32.xlu0 %v3315, 72
    %v3407 = vpop.permute.xlu0 %3406
    %3408 = vrot.lane.b32.xlu0 %v3323, 72
    %v3409 = vpop.permute.xlu0 %3408
    %3410 = vrot.lane.b32.xlu0 %v3316, 72
    %v3411 = vpop.permute.xlu0 %3410
    %3412 = vrot.lane.b32.xlu0 %v3324, 72
    %v3413 = vpop.permute.xlu0 %3412
    %3414 = vrot.lane.b32.xlu0 %v3317, 72
    %v3415 = vpop.permute.xlu0 %3414
    %3416 = vrot.lane.b32.xlu0 %v3325, 72
    %v3417 = vpop.permute.xlu0 %3416
    %3418 = vrot.lane.b32.xlu0 %v3318, 72
    %v3419 = vpop.permute.xlu0 %3418
    %3420 = vrot.lane.b32.xlu0 %v3326, 72
    %v3421 = vpop.permute.xlu0 %3420
    %3422 = vrot.lane.b32.xlu0 %v3319, 72
    %v3423 = vpop.permute.xlu0 %3422
    %3424 = vrot.lane.b32.xlu0 %v3327, 72
    %v3425 = vpop.permute.xlu0 %3424
    %3426 = vrot.lane.b32.xlu0 %v3320, 72
    %v3427 = vpop.permute.xlu0 %3426
    %3428 = vrot.lane.b32.xlu0 %v3328, 72
    %v3429 = vpop.permute.xlu0 %3428
    %3430 = vrot.lane.b32.xlu0 %v3321, 72
    %v3431 = vpop.permute.xlu0 %3430
    %3432 = vrot.lane.b32.xlu0 %v3329, 72
    %v3433 = vpop.permute.xlu0 %3432
    %v3434 = vsel %vm319, %v3427, %v3431
    %v3435 = vsel %vm319, %v3429, %v3433
    %v3436 = vsel %vm319, %v3423, %v3427
    %v3437 = vsel %vm319, %v3425, %v3429
    %v3438 = vsel %vm319, %v3419, %v3423
    %v3439 = vsel %vm319, %v3421, %v3425
    %v3440 = vsel %vm319, %v3415, %v3419
    %v3441 = vsel %vm319, %v3417, %v3421
    %v3442 = vsel %vm319, %v3411, %v3415
    %v3443 = vsel %vm319, %v3413, %v3417
    %v3444 = vsel %vm319, %v3407, %v3411
    %v3445 = vsel %vm319, %v3409, %v3413
    %v3446 = vsel %vm319, %v3403, %v3407
    %v3447 = vsel %vm319, %v3405, %v3409
    %v3448 = vsel %vm319, %v3431, %v3403
    %v3449 = vsel %vm319, %v3433, %v3405
    %v3450 = vmul.f32 %v3448, %v344
    %v3451 = vmul.f32 %v3446, %v348
    %v3452 = vmul.f32 %v3444, %v352
    %v3453 = vmul.f32 %v3442, %v356
    %v3454 = vmul.f32 %v3440, %v360
    %v3455 = vmul.f32 %v3438, %v364
    %v3456 = vmul.f32 %v3436, %v368
    %v3457 = vmul.f32 %v3434, %v372
    %v3458 = vmul.f32 %v3449, %v344
    %v3459 = vmul.f32 %v3447, %v348
    %v3460 = vmul.f32 %v3445, %v352
    %v3461 = vmul.f32 %v3443, %v356
    %v3462 = vmul.f32 %v3441, %v360
    %v3463 = vmul.f32 %v3439, %v364
    %v3464 = vmul.f32 %v3437, %v368
    %v3465 = vmul.f32 %v3435, %v372
    %v3466 = vpack.c.bf16 %v3458, %v3450
    %v3467 = vpack.c.bf16 %v3459, %v3451
    %v3468 = vpack.c.bf16 %v3460, %v3452
    %v3469 = vpack.c.bf16 %v3461, %v3453
    %v3470 = vpack.c.bf16 %v3462, %v3454
    %v3471 = vpack.c.bf16 %v3463, %v3455
    %v3472 = vpack.c.bf16 %v3464, %v3456
    %v3473 = vpack.c.bf16 %v3465, %v3457
    %3474 = vrot.lane.b32.xlu0 %v3314, 71
    %v3475 = vpop.permute.xlu0 %3474
    %3476 = vrot.lane.b32.xlu0 %v3322, 71
    %v3477 = vpop.permute.xlu0 %3476
    %3478 = vrot.lane.b32.xlu0 %v3315, 71
    %v3479 = vpop.permute.xlu0 %3478
    %3480 = vrot.lane.b32.xlu0 %v3323, 71
    %v3481 = vpop.permute.xlu0 %3480
    %3482 = vrot.lane.b32.xlu0 %v3316, 71
    %v3483 = vpop.permute.xlu0 %3482
    %3484 = vrot.lane.b32.xlu0 %v3324, 71
    %v3485 = vpop.permute.xlu0 %3484
    %3486 = vrot.lane.b32.xlu0 %v3317, 71
    %v3487 = vpop.permute.xlu0 %3486
    %3488 = vrot.lane.b32.xlu0 %v3325, 71
    %v3489 = vpop.permute.xlu0 %3488
    %3490 = vrot.lane.b32.xlu0 %v3318, 71
    %v3491 = vpop.permute.xlu0 %3490
    %3492 = vrot.lane.b32.xlu0 %v3326, 71
    %v3493 = vpop.permute.xlu0 %3492
    %3494 = vrot.lane.b32.xlu0 %v3319, 71
    %v3495 = vpop.permute.xlu0 %3494
    %3496 = vrot.lane.b32.xlu0 %v3327, 71
    %v3497 = vpop.permute.xlu0 %3496
    %3498 = vrot.lane.b32.xlu0 %v3320, 71
    %v3499 = vpop.permute.xlu0 %3498
    %3500 = vrot.lane.b32.xlu0 %v3328, 71
    %v3501 = vpop.permute.xlu0 %3500
    %3502 = vrot.lane.b32.xlu0 %v3321, 71
    %v3503 = vpop.permute.xlu0 %3502
    %3504 = vrot.lane.b32.xlu0 %v3329, 71
    %v3505 = vpop.permute.xlu0 %3504
    %v3506 = vsel %vm437, %v3499, %v3503
    %v3507 = vsel %vm437, %v3501, %v3505
    %v3508 = vsel %vm437, %v3495, %v3499
    %v3509 = vsel %vm437, %v3497, %v3501
    %v3510 = vsel %vm437, %v3491, %v3495
    %v3511 = vsel %vm437, %v3493, %v3497
    %v3512 = vsel %vm437, %v3487, %v3491
    %v3513 = vsel %vm437, %v3489, %v3493
    %v3514 = vsel %vm437, %v3483, %v3487
    %v3515 = vsel %vm437, %v3485, %v3489
    %v3516 = vsel %vm437, %v3479, %v3483
    %v3517 = vsel %vm437, %v3481, %v3485
    %v3518 = vsel %vm437, %v3475, %v3479
    %v3519 = vsel %vm437, %v3477, %v3481
    %v3520 = vsel %vm437, %v3503, %v3475
    %v3521 = vsel %vm437, %v3505, %v3477
    %v3522 = vmul.f32 %v3520, %v462
    %v3523 = vmul.f32 %v3518, %v466
    %v3524 = vmul.f32 %v3516, %v470
    %v3525 = vmul.f32 %v3514, %v474
    %v3526 = vmul.f32 %v3512, %v478
    %v3527 = vmul.f32 %v3510, %v482
    %v3528 = vmul.f32 %v3508, %v486
    %v3529 = vmul.f32 %v3506, %v490
    %v3530 = vmul.f32 %v3521, %v462
    %v3531 = vmul.f32 %v3519, %v466
    %v3532 = vmul.f32 %v3517, %v470
    %v3533 = vmul.f32 %v3515, %v474
    %v3534 = vmul.f32 %v3513, %v478
    %v3535 = vmul.f32 %v3511, %v482
    %v3536 = vmul.f32 %v3509, %v486
    %v3537 = vmul.f32 %v3507, %v490
    %v3538 = vpack.c.bf16 %v3530, %v3522
    %v3539 = vpack.c.bf16 %v3531, %v3523
    %v3540 = vpack.c.bf16 %v3532, %v3524
    %v3541 = vpack.c.bf16 %v3533, %v3525
    %v3542 = vpack.c.bf16 %v3534, %v3526
    %v3543 = vpack.c.bf16 %v3535, %v3527
    %v3544 = vpack.c.bf16 %v3536, %v3528
    %v3545 = vpack.c.bf16 %v3537, %v3529
    %3546 = vrot.lane.b32.xlu0 %v3314, 65
    %v3547 = vpop.permute.xlu0 %3546
    %3548 = vrot.lane.b32.xlu0 %v3322, 65
    %v3549 = vpop.permute.xlu0 %3548
    %3550 = vrot.lane.b32.xlu0 %v3315, 65
    %v3551 = vpop.permute.xlu0 %3550
    %3552 = vrot.lane.b32.xlu0 %v3323, 65
    %v3553 = vpop.permute.xlu0 %3552
    %3554 = vrot.lane.b32.xlu0 %v3316, 65
    %v3555 = vpop.permute.xlu0 %3554
    %3556 = vrot.lane.b32.xlu0 %v3324, 65
    %v3557 = vpop.permute.xlu0 %3556
    %3558 = vrot.lane.b32.xlu0 %v3317, 65
    %v3559 = vpop.permute.xlu0 %3558
    %3560 = vrot.lane.b32.xlu0 %v3325, 65
    %v3561 = vpop.permute.xlu0 %3560
    %3562 = vrot.lane.b32.xlu0 %v3318, 65
    %v3563 = vpop.permute.xlu0 %3562
    %3564 = vrot.lane.b32.xlu0 %v3326, 65
    %v3565 = vpop.permute.xlu0 %3564
    %3566 = vrot.lane.b32.xlu0 %v3319, 65
    %v3567 = vpop.permute.xlu0 %3566
    %3568 = vrot.lane.b32.xlu0 %v3327, 65
    %v3569 = vpop.permute.xlu0 %3568
    %3570 = vrot.lane.b32.xlu0 %v3320, 65
    %v3571 = vpop.permute.xlu0 %3570
    %3572 = vrot.lane.b32.xlu0 %v3328, 65
    %v3573 = vpop.permute.xlu0 %3572
    %3574 = vrot.lane.b32.xlu0 %v3321, 65
    %v3575 = vpop.permute.xlu0 %3574
    %3576 = vrot.lane.b32.xlu0 %v3329, 65
    %v3577 = vpop.permute.xlu0 %3576
    %v3578 = vsel %vm555, %v3571, %v3575
    %v3579 = vsel %vm555, %v3573, %v3577
    %v3580 = vsel %vm555, %v3567, %v3571
    %v3581 = vsel %vm555, %v3569, %v3573
    %v3582 = vsel %vm555, %v3563, %v3567
    %v3583 = vsel %vm555, %v3565, %v3569
    %v3584 = vsel %vm555, %v3559, %v3563
    %v3585 = vsel %vm555, %v3561, %v3565
    %v3586 = vsel %vm555, %v3555, %v3559
    %v3587 = vsel %vm555, %v3557, %v3561
    %v3588 = vsel %vm555, %v3551, %v3555
    %v3589 = vsel %vm555, %v3553, %v3557
    %v3590 = vsel %vm555, %v3547, %v3551
    %v3591 = vsel %vm555, %v3549, %v3553
    %v3592 = vsel %vm555, %v3575, %v3547
    %v3593 = vsel %vm555, %v3577, %v3549
    %v3594 = vmul.f32 %v3592, %v580
    %v3595 = vmul.f32 %v3590, %v584
    %v3596 = vmul.f32 %v3588, %v588
    %v3597 = vmul.f32 %v3586, %v592
    %v3598 = vmul.f32 %v3584, %v596
    %v3599 = vmul.f32 %v3582, %v600
    %v3600 = vmul.f32 %v3580, %v604
    %v3601 = vmul.f32 %v3578, %v608
    %v3602 = vmul.f32 %v3593, %v580
    %v3603 = vmul.f32 %v3591, %v584
    %v3604 = vmul.f32 %v3589, %v588
    %v3605 = vmul.f32 %v3587, %v592
    %v3606 = vmul.f32 %v3585, %v596
    %v3607 = vmul.f32 %v3583, %v600
    %v3608 = vmul.f32 %v3581, %v604
    %v3609 = vmul.f32 %v3579, %v608
    %v3610 = vpack.c.bf16 %v3602, %v3594
    %v3611 = vpack.c.bf16 %v3603, %v3595
    %v3612 = vpack.c.bf16 %v3604, %v3596
    %v3613 = vpack.c.bf16 %v3605, %v3597
    %v3614 = vpack.c.bf16 %v3606, %v3598
    %v3615 = vpack.c.bf16 %v3607, %v3599
    %v3616 = vpack.c.bf16 %v3608, %v3600
    %v3617 = vpack.c.bf16 %v3609, %v3601
    %3618 = vrot.lane.b32.xlu0 %v3314, 64
    %v3619 = vpop.permute.xlu0 %3618
    %3620 = vrot.lane.b32.xlu0 %v3322, 64
    %v3621 = vpop.permute.xlu0 %3620
    %3622 = vrot.lane.b32.xlu0 %v3315, 64
    %v3623 = vpop.permute.xlu0 %3622
    %3624 = vrot.lane.b32.xlu0 %v3323, 64
    %v3625 = vpop.permute.xlu0 %3624
    %3626 = vrot.lane.b32.xlu0 %v3316, 64
    %v3627 = vpop.permute.xlu0 %3626
    %3628 = vrot.lane.b32.xlu0 %v3324, 64
    %v3629 = vpop.permute.xlu0 %3628
    %3630 = vrot.lane.b32.xlu0 %v3317, 64
    %v3631 = vpop.permute.xlu0 %3630
    %3632 = vrot.lane.b32.xlu0 %v3325, 64
    %v3633 = vpop.permute.xlu0 %3632
    %3634 = vrot.lane.b32.xlu0 %v3318, 64
    %v3635 = vpop.permute.xlu0 %3634
    %3636 = vrot.lane.b32.xlu0 %v3326, 64
    %v3637 = vpop.permute.xlu0 %3636
    %3638 = vrot.lane.b32.xlu0 %v3319, 64
    %v3639 = vpop.permute.xlu0 %3638
    %3640 = vrot.lane.b32.xlu0 %v3327, 64
    %v3641 = vpop.permute.xlu0 %3640
    %3642 = vrot.lane.b32.xlu0 %v3320, 64
    %v3643 = vpop.permute.xlu0 %3642
    %3644 = vrot.lane.b32.xlu0 %v3328, 64
    %v3645 = vpop.permute.xlu0 %3644
    %3646 = vrot.lane.b32.xlu0 %v3321, 64
    %v3647 = vpop.permute.xlu0 %3646
    %3648 = vrot.lane.b32.xlu0 %v3329, 64
    %v3649 = vpop.permute.xlu0 %3648
    %v3650 = vsel %vm673, %v3643, %v3647
    %v3651 = vsel %vm673, %v3645, %v3649
    %v3652 = vsel %vm673, %v3639, %v3643
    %v3653 = vsel %vm673, %v3641, %v3645
    %v3654 = vsel %vm673, %v3635, %v3639
    %v3655 = vsel %vm673, %v3637, %v3641
    %v3656 = vsel %vm673, %v3631, %v3635
    %v3657 = vsel %vm673, %v3633, %v3637
    %v3658 = vsel %vm673, %v3627, %v3631
    %v3659 = vsel %vm673, %v3629, %v3633
    %v3660 = vsel %vm673, %v3623, %v3627
    %v3661 = vsel %vm673, %v3625, %v3629
    %v3662 = vsel %vm673, %v3619, %v3623
    %v3663 = vsel %vm673, %v3621, %v3625
    %v3664 = vsel %vm673, %v3647, %v3619
    %v3665 = vsel %vm673, %v3649, %v3621
    %v3666 = vmul.f32 %v3664, %v698
    %v3667 = vmul.f32 %v3662, %v702
    %v3668 = vmul.f32 %v3660, %v706
    %v3669 = vmul.f32 %v3658, %v710
    %v3670 = vmul.f32 %v3656, %v714
    %v3671 = vmul.f32 %v3654, %v718
    %v3672 = vmul.f32 %v3652, %v722
    %v3673 = vmul.f32 %v3650, %v726
    %v3674 = vmul.f32 %v3665, %v698
    %v3675 = vmul.f32 %v3663, %v702
    %v3676 = vmul.f32 %v3661, %v706
    %v3677 = vmul.f32 %v3659, %v710
    %v3678 = vmul.f32 %v3657, %v714
    %v3679 = vmul.f32 %v3655, %v718
    %v3680 = vmul.f32 %v3653, %v722
    %v3681 = vmul.f32 %v3651, %v726
    %v3682 = vpack.c.bf16 %v3674, %v3666
    %v3683 = vpack.c.bf16 %v3675, %v3667
    %v3684 = vpack.c.bf16 %v3676, %v3668
    %v3685 = vpack.c.bf16 %v3677, %v3669
    %v3686 = vpack.c.bf16 %v3678, %v3670
    %v3687 = vpack.c.bf16 %v3679, %v3671
    %v3688 = vpack.c.bf16 %v3680, %v3672
    %v3689 = vpack.c.bf16 %v3681, %v3673
    %3690 = vrot.lane.b32.xlu0 %v3314, 63
    %v3691 = vpop.permute.xlu0 %3690
    %3692 = vrot.lane.b32.xlu0 %v3322, 63
    %v3693 = vpop.permute.xlu0 %3692
    %3694 = vrot.lane.b32.xlu0 %v3315, 63
    %v3695 = vpop.permute.xlu0 %3694
    %3696 = vrot.lane.b32.xlu0 %v3323, 63
    %v3697 = vpop.permute.xlu0 %3696
    %3698 = vrot.lane.b32.xlu0 %v3316, 63
    %v3699 = vpop.permute.xlu0 %3698
    %3700 = vrot.lane.b32.xlu0 %v3324, 63
    %v3701 = vpop.permute.xlu0 %3700
    %3702 = vrot.lane.b32.xlu0 %v3317, 63
    %v3703 = vpop.permute.xlu0 %3702
    %3704 = vrot.lane.b32.xlu0 %v3325, 63
    %v3705 = vpop.permute.xlu0 %3704
    %3706 = vrot.lane.b32.xlu0 %v3318, 63
    %v3707 = vpop.permute.xlu0 %3706
    %3708 = vrot.lane.b32.xlu0 %v3326, 63
    %v3709 = vpop.permute.xlu0 %3708
    %3710 = vrot.lane.b32.xlu0 %v3319, 63
    %v3711 = vpop.permute.xlu0 %3710
    %3712 = vrot.lane.b32.xlu0 %v3327, 63
    %v3713 = vpop.permute.xlu0 %3712
    %3714 = vrot.lane.b32.xlu0 %v3320, 63
    %v3715 = vpop.permute.xlu0 %3714
    %3716 = vrot.lane.b32.xlu0 %v3328, 63
    %v3717 = vpop.permute.xlu0 %3716
    %3718 = vrot.lane.b32.xlu0 %v3321, 63
    %v3719 = vpop.permute.xlu0 %3718
    %3720 = vrot.lane.b32.xlu0 %v3329, 63
    %v3721 = vpop.permute.xlu0 %3720
    %v3722 = vsel %vm791, %v3715, %v3719
    %v3723 = vsel %vm791, %v3717, %v3721
    %v3724 = vsel %vm791, %v3711, %v3715
    %v3725 = vsel %vm791, %v3713, %v3717
    %v3726 = vsel %vm791, %v3707, %v3711
    %v3727 = vsel %vm791, %v3709, %v3713
    %v3728 = vsel %vm791, %v3703, %v3707
    %v3729 = vsel %vm791, %v3705, %v3709
    %v3730 = vsel %vm791, %v3699, %v3703
    %v3731 = vsel %vm791, %v3701, %v3705
    %v3732 = vsel %vm791, %v3695, %v3699
    %v3733 = vsel %vm791, %v3697, %v3701
    %v3734 = vsel %vm791, %v3691, %v3695
    %v3735 = vsel %vm791, %v3693, %v3697
    %v3736 = vsel %vm791, %v3719, %v3691
    %v3737 = vsel %vm791, %v3721, %v3693
    %v3738 = vmul.f32 %v3736, %v816
    %v3739 = vmul.f32 %v3734, %v820
    %v3740 = vmul.f32 %v3732, %v824
    %v3741 = vmul.f32 %v3730, %v828
    %v3742 = vmul.f32 %v3728, %v832
    %v3743 = vmul.f32 %v3726, %v836
    %v3744 = vmul.f32 %v3724, %v840
    %v3745 = vmul.f32 %v3722, %v844
    %v3746 = vmul.f32 %v3737, %v816
    %v3747 = vmul.f32 %v3735, %v820
    %v3748 = vmul.f32 %v3733, %v824
    %v3749 = vmul.f32 %v3731, %v828
    %v3750 = vmul.f32 %v3729, %v832
    %v3751 = vmul.f32 %v3727, %v836
    %v3752 = vmul.f32 %v3725, %v840
    %v3753 = vmul.f32 %v3723, %v844
    %v3754 = vpack.c.bf16 %v3746, %v3738
    %v3755 = vpack.c.bf16 %v3747, %v3739
    %v3756 = vpack.c.bf16 %v3748, %v3740
    %v3757 = vpack.c.bf16 %v3749, %v3741
    %v3758 = vpack.c.bf16 %v3750, %v3742
    %v3759 = vpack.c.bf16 %v3751, %v3743
    %v3760 = vpack.c.bf16 %v3752, %v3744
    %v3761 = vpack.c.bf16 %v3753, %v3745
    %3762 = vrot.lane.b32.xlu0 %v3314, 57
    %v3763 = vpop.permute.xlu0 %3762
    %3764 = vrot.lane.b32.xlu0 %v3322, 57
    %v3765 = vpop.permute.xlu0 %3764
    %3766 = vrot.lane.b32.xlu0 %v3315, 57
    %v3767 = vpop.permute.xlu0 %3766
    %3768 = vrot.lane.b32.xlu0 %v3323, 57
    %v3769 = vpop.permute.xlu0 %3768
    %3770 = vrot.lane.b32.xlu0 %v3316, 57
    %v3771 = vpop.permute.xlu0 %3770
    %3772 = vrot.lane.b32.xlu0 %v3324, 57
    %v3773 = vpop.permute.xlu0 %3772
    %3774 = vrot.lane.b32.xlu0 %v3317, 57
    %v3775 = vpop.permute.xlu0 %3774
    %3776 = vrot.lane.b32.xlu0 %v3325, 57
    %v3777 = vpop.permute.xlu0 %3776
    %3778 = vrot.lane.b32.xlu0 %v3318, 57
    %v3779 = vpop.permute.xlu0 %3778
    %3780 = vrot.lane.b32.xlu0 %v3326, 57
    %v3781 = vpop.permute.xlu0 %3780
    %3782 = vrot.lane.b32.xlu0 %v3319, 57
    %v3783 = vpop.permute.xlu0 %3782
    %3784 = vrot.lane.b32.xlu0 %v3327, 57
    %v3785 = vpop.permute.xlu0 %3784
    %3786 = vrot.lane.b32.xlu0 %v3320, 57
    %v3787 = vpop.permute.xlu0 %3786
    %3788 = vrot.lane.b32.xlu0 %v3328, 57
    %v3789 = vpop.permute.xlu0 %3788
    %3790 = vrot.lane.b32.xlu0 %v3321, 57
    %v3791 = vpop.permute.xlu0 %3790
    %3792 = vrot.lane.b32.xlu0 %v3329, 57
    %v3793 = vpop.permute.xlu0 %3792
    %v3794 = vsel %vm909, %v3787, %v3791
    %v3795 = vsel %vm909, %v3789, %v3793
    %v3796 = vsel %vm909, %v3783, %v3787
    %v3797 = vsel %vm909, %v3785, %v3789
    %v3798 = vsel %vm909, %v3779, %v3783
    %v3799 = vsel %vm909, %v3781, %v3785
    %v3800 = vsel %vm909, %v3775, %v3779
    %v3801 = vsel %vm909, %v3777, %v3781
    %v3802 = vsel %vm909, %v3771, %v3775
    %v3803 = vsel %vm909, %v3773, %v3777
    %v3804 = vsel %vm909, %v3767, %v3771
    %v3805 = vsel %vm909, %v3769, %v3773
    %v3806 = vsel %vm909, %v3763, %v3767
    %v3807 = vsel %vm909, %v3765, %v3769
    %v3808 = vsel %vm909, %v3791, %v3763
    %v3809 = vsel %vm909, %v3793, %v3765
    %v3810 = vmul.f32 %v3808, %v934
    %v3811 = vmul.f32 %v3806, %v938
    %v3812 = vmul.f32 %v3804, %v942
    %v3813 = vmul.f32 %v3802, %v946
    %v3814 = vmul.f32 %v3800, %v950
    %v3815 = vmul.f32 %v3798, %v954
    %v3816 = vmul.f32 %v3796, %v958
    %v3817 = vmul.f32 %v3794, %v962
    %v3818 = vmul.f32 %v3809, %v934
    %v3819 = vmul.f32 %v3807, %v938
    %v3820 = vmul.f32 %v3805, %v942
    %v3821 = vmul.f32 %v3803, %v946
    %v3822 = vmul.f32 %v3801, %v950
    %v3823 = vmul.f32 %v3799, %v954
    %v3824 = vmul.f32 %v3797, %v958
    %v3825 = vmul.f32 %v3795, %v962
    %v3826 = vpack.c.bf16 %v3818, %v3810
    %v3827 = vpack.c.bf16 %v3819, %v3811
    %v3828 = vpack.c.bf16 %v3820, %v3812
    %v3829 = vpack.c.bf16 %v3821, %v3813
    %v3830 = vpack.c.bf16 %v3822, %v3814
    %v3831 = vpack.c.bf16 %v3823, %v3815
    %v3832 = vpack.c.bf16 %v3824, %v3816
    %v3833 = vpack.c.bf16 %v3825, %v3817
    %3834 = vrot.lane.b32.xlu0 %v3314, 56
    %v3835 = vpop.permute.xlu0 %3834
    %3836 = vrot.lane.b32.xlu0 %v3322, 56
    %v3837 = vpop.permute.xlu0 %3836
    %3838 = vrot.lane.b32.xlu0 %v3315, 56
    %v3839 = vpop.permute.xlu0 %3838
    %3840 = vrot.lane.b32.xlu0 %v3323, 56
    %v3841 = vpop.permute.xlu0 %3840
    %3842 = vrot.lane.b32.xlu0 %v3316, 56
    %v3843 = vpop.permute.xlu0 %3842
    %3844 = vrot.lane.b32.xlu0 %v3324, 56
    %v3845 = vpop.permute.xlu0 %3844
    %3846 = vrot.lane.b32.xlu0 %v3317, 56
    %v3847 = vpop.permute.xlu0 %3846
    %3848 = vrot.lane.b32.xlu0 %v3325, 56
    %v3849 = vpop.permute.xlu0 %3848
    %3850 = vrot.lane.b32.xlu0 %v3318, 56
    %v3851 = vpop.permute.xlu0 %3850
    %3852 = vrot.lane.b32.xlu0 %v3326, 56
    %v3853 = vpop.permute.xlu0 %3852
    %3854 = vrot.lane.b32.xlu0 %v3319, 56
    %v3855 = vpop.permute.xlu0 %3854
    %3856 = vrot.lane.b32.xlu0 %v3327, 56
    %v3857 = vpop.permute.xlu0 %3856
    %3858 = vrot.lane.b32.xlu0 %v3320, 56
    %v3859 = vpop.permute.xlu0 %3858
    %3860 = vrot.lane.b32.xlu0 %v3328, 56
    %v3861 = vpop.permute.xlu0 %3860
    %3862 = vrot.lane.b32.xlu0 %v3321, 56
    %v3863 = vpop.permute.xlu0 %3862
    %3864 = vrot.lane.b32.xlu0 %v3329, 56
    %v3865 = vpop.permute.xlu0 %3864
    %v3866 = vsel %vm1027, %v3859, %v3863
    %v3867 = vsel %vm1027, %v3861, %v3865
    %v3868 = vsel %vm1027, %v3855, %v3859
    %v3869 = vsel %vm1027, %v3857, %v3861
    %v3870 = vsel %vm1027, %v3851, %v3855
    %v3871 = vsel %vm1027, %v3853, %v3857
    %v3872 = vsel %vm1027, %v3847, %v3851
    %v3873 = vsel %vm1027, %v3849, %v3853
    %v3874 = vsel %vm1027, %v3843, %v3847
    %v3875 = vsel %vm1027, %v3845, %v3849
    %v3876 = vsel %vm1027, %v3839, %v3843
    %v3877 = vsel %vm1027, %v3841, %v3845
    %v3878 = vsel %vm1027, %v3835, %v3839
    %v3879 = vsel %vm1027, %v3837, %v3841
    %v3880 = vsel %vm1027, %v3863, %v3835
    %v3881 = vsel %vm1027, %v3865, %v3837
    %v3882 = vmul.f32 %v3880, %v1052
    %v3883 = vmul.f32 %v3878, %v1056
    %v3884 = vmul.f32 %v3876, %v1060
    %v3885 = vmul.f32 %v3874, %v1064
    %v3886 = vmul.f32 %v3872, %v1068
    %v3887 = vmul.f32 %v3870, %v1072
    %v3888 = vmul.f32 %v3868, %v1076
    %v3889 = vmul.f32 %v3866, %v1080
    %v3890 = vmul.f32 %v3881, %v1052
    %v3891 = vmul.f32 %v3879, %v1056
    %v3892 = vmul.f32 %v3877, %v1060
    %v3893 = vmul.f32 %v3875, %v1064
    %v3894 = vmul.f32 %v3873, %v1068
    %v3895 = vmul.f32 %v3871, %v1072
    %v3896 = vmul.f32 %v3869, %v1076
    %v3897 = vmul.f32 %v3867, %v1080
    %v3898 = vpack.c.bf16 %v3890, %v3882
    %v3899 = vpack.c.bf16 %v3891, %v3883
    %v3900 = vpack.c.bf16 %v3892, %v3884
    %v3901 = vpack.c.bf16 %v3893, %v3885
    %v3902 = vpack.c.bf16 %v3894, %v3886
    %v3903 = vpack.c.bf16 %v3895, %v3887
    %v3904 = vpack.c.bf16 %v3896, %v3888
    %v3905 = vpack.c.bf16 %v3897, %v3889
    %3906 = vrot.lane.b32.xlu0 %v3314, 55
    %v3907 = vpop.permute.xlu0 %3906
    %3908 = vrot.lane.b32.xlu0 %v3322, 55
    %v3909 = vpop.permute.xlu0 %3908
    %3910 = vrot.lane.b32.xlu0 %v3315, 55
    %v3911 = vpop.permute.xlu0 %3910
    %3912 = vrot.lane.b32.xlu0 %v3323, 55
    %v3913 = vpop.permute.xlu0 %3912
    %3914 = vrot.lane.b32.xlu0 %v3316, 55
    %v3915 = vpop.permute.xlu0 %3914
    %3916 = vrot.lane.b32.xlu0 %v3324, 55
    %v3917 = vpop.permute.xlu0 %3916
    %3918 = vrot.lane.b32.xlu0 %v3317, 55
    %v3919 = vpop.permute.xlu0 %3918
    %3920 = vrot.lane.b32.xlu0 %v3325, 55
    %v3921 = vpop.permute.xlu0 %3920
    %3922 = vrot.lane.b32.xlu0 %v3318, 55
    %v3923 = vpop.permute.xlu0 %3922
    %3924 = vrot.lane.b32.xlu0 %v3326, 55
    %v3925 = vpop.permute.xlu0 %3924
    %3926 = vrot.lane.b32.xlu0 %v3319, 55
    %v3927 = vpop.permute.xlu0 %3926
    %3928 = vrot.lane.b32.xlu0 %v3327, 55
    %v3929 = vpop.permute.xlu0 %3928
    %3930 = vrot.lane.b32.xlu0 %v3320, 55
    %v3931 = vpop.permute.xlu0 %3930
    %3932 = vrot.lane.b32.xlu0 %v3328, 55
    %v3933 = vpop.permute.xlu0 %3932
    %3934 = vrot.lane.b32.xlu0 %v3321, 55
    %v3935 = vpop.permute.xlu0 %3934
    %3936 = vrot.lane.b32.xlu0 %v3329, 55
    %v3937 = vpop.permute.xlu0 %3936
    %v3938 = vsel %vm1145, %v3931, %v3935
    %v3939 = vsel %vm1145, %v3933, %v3937
    %v3940 = vsel %vm1145, %v3927, %v3931
    %v3941 = vsel %vm1145, %v3929, %v3933
    %v3942 = vsel %vm1145, %v3923, %v3927
    %v3943 = vsel %vm1145, %v3925, %v3929
    %v3944 = vsel %vm1145, %v3919, %v3923
    %v3945 = vsel %vm1145, %v3921, %v3925
    %v3946 = vsel %vm1145, %v3915, %v3919
    %v3947 = vsel %vm1145, %v3917, %v3921
    %v3948 = vsel %vm1145, %v3911, %v3915
    %v3949 = vsel %vm1145, %v3913, %v3917
    %v3950 = vsel %vm1145, %v3907, %v3911
    %v3951 = vsel %vm1145, %v3909, %v3913
    %v3952 = vsel %vm1145, %v3935, %v3907
    %v3953 = vsel %vm1145, %v3937, %v3909
    %v3954 = vmul.f32 %v3952, %v1170
    %v3955 = vmul.f32 %v3950, %v1174
    %v3956 = vmul.f32 %v3948, %v1178
    %v3957 = vmul.f32 %v3946, %v1182
    %v3958 = vmul.f32 %v3944, %v1186
    %v3959 = vmul.f32 %v3942, %v1190
    %v3960 = vmul.f32 %v3940, %v1194
    %v3961 = vmul.f32 %v3938, %v1198
    %v3962 = vmul.f32 %v3953, %v1170
    %v3963 = vmul.f32 %v3951, %v1174
    %v3964 = vmul.f32 %v3949, %v1178
    %v3965 = vmul.f32 %v3947, %v1182
    %v3966 = vmul.f32 %v3945, %v1186
    %v3967 = vmul.f32 %v3943, %v1190
    %v3968 = vmul.f32 %v3941, %v1194
    %v3969 = vmul.f32 %v3939, %v1198
    %v3970 = vpack.c.bf16 %v3962, %v3954
    %v3971 = vpack.c.bf16 %v3963, %v3955
    %v3972 = vpack.c.bf16 %v3964, %v3956
    %v3973 = vpack.c.bf16 %v3965, %v3957
    %v3974 = vpack.c.bf16 %v3966, %v3958
    %v3975 = vpack.c.bf16 %v3967, %v3959
    %v3976 = vpack.c.bf16 %v3968, %v3960
    %v3977 = vpack.c.bf16 %v3969, %v3961
    %3978 = vrot.lane.b32.xlu0 %v3314, 9
    %v3979 = vpop.permute.xlu0 %3978
    %3980 = vrot.lane.b32.xlu0 %v3322, 9
    %v3981 = vpop.permute.xlu0 %3980
    %3982 = vrot.lane.b32.xlu0 %v3315, 9
    %v3983 = vpop.permute.xlu0 %3982
    %3984 = vrot.lane.b32.xlu0 %v3323, 9
    %v3985 = vpop.permute.xlu0 %3984
    %3986 = vrot.lane.b32.xlu0 %v3316, 9
    %v3987 = vpop.permute.xlu0 %3986
    %3988 = vrot.lane.b32.xlu0 %v3324, 9
    %v3989 = vpop.permute.xlu0 %3988
    %3990 = vrot.lane.b32.xlu0 %v3317, 9
    %v3991 = vpop.permute.xlu0 %3990
    %3992 = vrot.lane.b32.xlu0 %v3325, 9
    %v3993 = vpop.permute.xlu0 %3992
    %3994 = vrot.lane.b32.xlu0 %v3318, 9
    %v3995 = vpop.permute.xlu0 %3994
    %3996 = vrot.lane.b32.xlu0 %v3326, 9
    %v3997 = vpop.permute.xlu0 %3996
    %3998 = vrot.lane.b32.xlu0 %v3319, 9
    %v3999 = vpop.permute.xlu0 %3998
    %4000 = vrot.lane.b32.xlu0 %v3327, 9
    %v4001 = vpop.permute.xlu0 %4000
    %4002 = vrot.lane.b32.xlu0 %v3320, 9
    %v4003 = vpop.permute.xlu0 %4002
    %4004 = vrot.lane.b32.xlu0 %v3328, 9
    %v4005 = vpop.permute.xlu0 %4004
    %4006 = vrot.lane.b32.xlu0 %v3321, 9
    %v4007 = vpop.permute.xlu0 %4006
    %4008 = vrot.lane.b32.xlu0 %v3329, 9
    %v4009 = vpop.permute.xlu0 %4008
    %v4010 = vsel %vm1263, %v4003, %v4007
    %v4011 = vsel %vm1263, %v4005, %v4009
    %v4012 = vsel %vm1263, %v3999, %v4003
    %v4013 = vsel %vm1263, %v4001, %v4005
    %v4014 = vsel %vm1263, %v3995, %v3999
    %v4015 = vsel %vm1263, %v3997, %v4001
    %v4016 = vsel %vm1263, %v3991, %v3995
    %v4017 = vsel %vm1263, %v3993, %v3997
    %v4018 = vsel %vm1263, %v3987, %v3991
    %v4019 = vsel %vm1263, %v3989, %v3993
    %v4020 = vsel %vm1263, %v3983, %v3987
    %v4021 = vsel %vm1263, %v3985, %v3989
    %v4022 = vsel %vm1263, %v3979, %v3983
    %v4023 = vsel %vm1263, %v3981, %v3985
    %v4024 = vsel %vm1263, %v4007, %v3979
    %v4025 = vsel %vm1263, %v4009, %v3981
    %v4026 = vmul.f32 %v4024, %v1288
    %v4027 = vmul.f32 %v4022, %v1292
    %v4028 = vmul.f32 %v4020, %v1296
    %v4029 = vmul.f32 %v4018, %v1300
    %v4030 = vmul.f32 %v4016, %v1304
    %v4031 = vmul.f32 %v4014, %v1308
    %v4032 = vmul.f32 %v4012, %v1312
    %v4033 = vmul.f32 %v4010, %v1316
    %v4034 = vmul.f32 %v4025, %v1288
    %v4035 = vmul.f32 %v4023, %v1292
    %v4036 = vmul.f32 %v4021, %v1296
    %v4037 = vmul.f32 %v4019, %v1300
    %v4038 = vmul.f32 %v4017, %v1304
    %v4039 = vmul.f32 %v4015, %v1308
    %v4040 = vmul.f32 %v4013, %v1312
    %v4041 = vmul.f32 %v4011, %v1316
    %v4042 = vpack.c.bf16 %v4034, %v4026
    %v4043 = vpack.c.bf16 %v4035, %v4027
    %v4044 = vpack.c.bf16 %v4036, %v4028
    %v4045 = vpack.c.bf16 %v4037, %v4029
    %v4046 = vpack.c.bf16 %v4038, %v4030
    %v4047 = vpack.c.bf16 %v4039, %v4031
    %v4048 = vpack.c.bf16 %v4040, %v4032
    %v4049 = vpack.c.bf16 %v4041, %v4033
    %4050 = vrot.lane.b32.xlu0 %v3314, 8
    %v4051 = vpop.permute.xlu0 %4050
    %4052 = vrot.lane.b32.xlu0 %v3322, 8
    %v4053 = vpop.permute.xlu0 %4052
    %4054 = vrot.lane.b32.xlu0 %v3315, 8
    %v4055 = vpop.permute.xlu0 %4054
    %4056 = vrot.lane.b32.xlu0 %v3323, 8
    %v4057 = vpop.permute.xlu0 %4056
    %4058 = vrot.lane.b32.xlu0 %v3316, 8
    %v4059 = vpop.permute.xlu0 %4058
    %4060 = vrot.lane.b32.xlu0 %v3324, 8
    %v4061 = vpop.permute.xlu0 %4060
    %4062 = vrot.lane.b32.xlu0 %v3317, 8
    %v4063 = vpop.permute.xlu0 %4062
    %4064 = vrot.lane.b32.xlu0 %v3325, 8
    %v4065 = vpop.permute.xlu0 %4064
    %4066 = vrot.lane.b32.xlu0 %v3318, 8
    %v4067 = vpop.permute.xlu0 %4066
    %4068 = vrot.lane.b32.xlu0 %v3326, 8
    %v4069 = vpop.permute.xlu0 %4068
    %4070 = vrot.lane.b32.xlu0 %v3319, 8
    %v4071 = vpop.permute.xlu0 %4070
    %4072 = vrot.lane.b32.xlu0 %v3327, 8
    %v4073 = vpop.permute.xlu0 %4072
    %4074 = vrot.lane.b32.xlu0 %v3320, 8
    %v4075 = vpop.permute.xlu0 %4074
    %4076 = vrot.lane.b32.xlu0 %v3328, 8
    %v4077 = vpop.permute.xlu0 %4076
    %4078 = vrot.lane.b32.xlu0 %v3321, 8
    %v4079 = vpop.permute.xlu0 %4078
    %4080 = vrot.lane.b32.xlu0 %v3329, 8
    %v4081 = vpop.permute.xlu0 %4080
    %v4082 = vsel %vm1381, %v4075, %v4079
    %v4083 = vsel %vm1381, %v4077, %v4081
    %v4084 = vsel %vm1381, %v4071, %v4075
    %v4085 = vsel %vm1381, %v4073, %v4077
    %v4086 = vsel %vm1381, %v4067, %v4071
    %v4087 = vsel %vm1381, %v4069, %v4073
    %v4088 = vsel %vm1381, %v4063, %v4067
    %v4089 = vsel %vm1381, %v4065, %v4069
    %v4090 = vsel %vm1381, %v4059, %v4063
    %v4091 = vsel %vm1381, %v4061, %v4065
    %v4092 = vsel %vm1381, %v4055, %v4059
    %v4093 = vsel %vm1381, %v4057, %v4061
    %v4094 = vsel %vm1381, %v4051, %v4055
    %v4095 = vsel %vm1381, %v4053, %v4057
    %v4096 = vsel %vm1381, %v4079, %v4051
    %v4097 = vsel %vm1381, %v4081, %v4053
    %v4098 = vmul.f32 %v4096, %v1406
    %v4099 = vmul.f32 %v4094, %v1410
    %v4100 = vmul.f32 %v4092, %v1414
    %v4101 = vmul.f32 %v4090, %v1418
    %v4102 = vmul.f32 %v4088, %v1422
    %v4103 = vmul.f32 %v4086, %v1426
    %v4104 = vmul.f32 %v4084, %v1430
    %v4105 = vmul.f32 %v4082, %v1434
    %v4106 = vmul.f32 %v4097, %v1406
    %v4107 = vmul.f32 %v4095, %v1410
    %v4108 = vmul.f32 %v4093, %v1414
    %v4109 = vmul.f32 %v4091, %v1418
    %v4110 = vmul.f32 %v4089, %v1422
    %v4111 = vmul.f32 %v4087, %v1426
    %v4112 = vmul.f32 %v4085, %v1430
    %v4113 = vmul.f32 %v4083, %v1434
    %v4114 = vpack.c.bf16 %v4106, %v4098
    %v4115 = vpack.c.bf16 %v4107, %v4099
    %v4116 = vpack.c.bf16 %v4108, %v4100
    %v4117 = vpack.c.bf16 %v4109, %v4101
    %v4118 = vpack.c.bf16 %v4110, %v4102
    %v4119 = vpack.c.bf16 %v4111, %v4103
    %v4120 = vpack.c.bf16 %v4112, %v4104
    %v4121 = vpack.c.bf16 %v4113, %v4105
    %4122 = vrot.lane.b32.xlu0 %v3314, 7
    %v4123 = vpop.permute.xlu0 %4122
    %4124 = vrot.lane.b32.xlu0 %v3322, 7
    %v4125 = vpop.permute.xlu0 %4124
    %4126 = vrot.lane.b32.xlu0 %v3315, 7
    %v4127 = vpop.permute.xlu0 %4126
    %4128 = vrot.lane.b32.xlu0 %v3323, 7
    %v4129 = vpop.permute.xlu0 %4128
    %4130 = vrot.lane.b32.xlu0 %v3316, 7
    %v4131 = vpop.permute.xlu0 %4130
    %4132 = vrot.lane.b32.xlu0 %v3324, 7
    %v4133 = vpop.permute.xlu0 %4132
    %4134 = vrot.lane.b32.xlu0 %v3317, 7
    %v4135 = vpop.permute.xlu0 %4134
    %4136 = vrot.lane.b32.xlu0 %v3325, 7
    %v4137 = vpop.permute.xlu0 %4136
    %4138 = vrot.lane.b32.xlu0 %v3318, 7
    %v4139 = vpop.permute.xlu0 %4138
    %4140 = vrot.lane.b32.xlu0 %v3326, 7
    %v4141 = vpop.permute.xlu0 %4140
    %4142 = vrot.lane.b32.xlu0 %v3319, 7
    %v4143 = vpop.permute.xlu0 %4142
    %4144 = vrot.lane.b32.xlu0 %v3327, 7
    %v4145 = vpop.permute.xlu0 %4144
    %4146 = vrot.lane.b32.xlu0 %v3320, 7
    %v4147 = vpop.permute.xlu0 %4146
    %4148 = vrot.lane.b32.xlu0 %v3328, 7
    %v4149 = vpop.permute.xlu0 %4148
    %4150 = vrot.lane.b32.xlu0 %v3321, 7
    %v4151 = vpop.permute.xlu0 %4150
    %4152 = vrot.lane.b32.xlu0 %v3329, 7
    %v4153 = vpop.permute.xlu0 %4152
    %v4154 = vsel %vm1499, %v4147, %v4151
    %v4155 = vsel %vm1499, %v4149, %v4153
    %v4156 = vsel %vm1499, %v4143, %v4147
    %v4157 = vsel %vm1499, %v4145, %v4149
    %v4158 = vsel %vm1499, %v4139, %v4143
    %v4159 = vsel %vm1499, %v4141, %v4145
    %v4160 = vsel %vm1499, %v4135, %v4139
    %v4161 = vsel %vm1499, %v4137, %v4141
    %v4162 = vsel %vm1499, %v4131, %v4135
    %v4163 = vsel %vm1499, %v4133, %v4137
    %v4164 = vsel %vm1499, %v4127, %v4131
    %v4165 = vsel %vm1499, %v4129, %v4133
    %v4166 = vsel %vm1499, %v4123, %v4127
    %v4167 = vsel %vm1499, %v4125, %v4129
    %v4168 = vsel %vm1499, %v4151, %v4123
    %v4169 = vsel %vm1499, %v4153, %v4125
    %v4170 = vmul.f32 %v4168, %v1524
    %v4171 = vmul.f32 %v4166, %v1528
    %v4172 = vmul.f32 %v4164, %v1532
    %v4173 = vmul.f32 %v4162, %v1536
    %v4174 = vmul.f32 %v4160, %v1540
    %v4175 = vmul.f32 %v4158, %v1544
    %v4176 = vmul.f32 %v4156, %v1548
    %v4177 = vmul.f32 %v4154, %v1552
    %v4178 = vmul.f32 %v4169, %v1524
    %v4179 = vmul.f32 %v4167, %v1528
    %v4180 = vmul.f32 %v4165, %v1532
    %v4181 = vmul.f32 %v4163, %v1536
    %v4182 = vmul.f32 %v4161, %v1540
    %v4183 = vmul.f32 %v4159, %v1544
    %v4184 = vmul.f32 %v4157, %v1548
    %v4185 = vmul.f32 %v4155, %v1552
    %v4186 = vpack.c.bf16 %v4178, %v4170
    %v4187 = vpack.c.bf16 %v4179, %v4171
    %v4188 = vpack.c.bf16 %v4180, %v4172
    %v4189 = vpack.c.bf16 %v4181, %v4173
    %v4190 = vpack.c.bf16 %v4182, %v4174
    %v4191 = vpack.c.bf16 %v4183, %v4175
    %v4192 = vpack.c.bf16 %v4184, %v4176
    %v4193 = vpack.c.bf16 %v4185, %v4177
    %4194 = vrot.lane.b32.xlu0 %v3314, 1
    %v4195 = vpop.permute.xlu0 %4194
    %4196 = vrot.lane.b32.xlu0 %v3322, 1
    %v4197 = vpop.permute.xlu0 %4196
    %4198 = vrot.lane.b32.xlu0 %v3315, 1
    %v4199 = vpop.permute.xlu0 %4198
    %4200 = vrot.lane.b32.xlu0 %v3323, 1
    %v4201 = vpop.permute.xlu0 %4200
    %4202 = vrot.lane.b32.xlu0 %v3316, 1
    %v4203 = vpop.permute.xlu0 %4202
    %4204 = vrot.lane.b32.xlu0 %v3324, 1
    %v4205 = vpop.permute.xlu0 %4204
    %4206 = vrot.lane.b32.xlu0 %v3317, 1
    %v4207 = vpop.permute.xlu0 %4206
    %4208 = vrot.lane.b32.xlu0 %v3325, 1
    %v4209 = vpop.permute.xlu0 %4208
    %4210 = vrot.lane.b32.xlu0 %v3318, 1
    %v4211 = vpop.permute.xlu0 %4210
    %4212 = vrot.lane.b32.xlu0 %v3326, 1
    %v4213 = vpop.permute.xlu0 %4212
    %4214 = vrot.lane.b32.xlu0 %v3319, 1
    %v4215 = vpop.permute.xlu0 %4214
    %4216 = vrot.lane.b32.xlu0 %v3327, 1
    %v4217 = vpop.permute.xlu0 %4216
    %4218 = vrot.lane.b32.xlu0 %v3320, 1
    %v4219 = vpop.permute.xlu0 %4218
    %4220 = vrot.lane.b32.xlu0 %v3328, 1
    %v4221 = vpop.permute.xlu0 %4220
    %4222 = vrot.lane.b32.xlu0 %v3321, 1
    %v4223 = vpop.permute.xlu0 %4222
    %4224 = vrot.lane.b32.xlu0 %v3329, 1
    %v4225 = vpop.permute.xlu0 %4224
    %v4226 = vsel %vm1617, %v4219, %v4223
    %v4227 = vsel %vm1617, %v4221, %v4225
    %v4228 = vsel %vm1617, %v4215, %v4219
    %v4229 = vsel %vm1617, %v4217, %v4221
    %v4230 = vsel %vm1617, %v4211, %v4215
    %v4231 = vsel %vm1617, %v4213, %v4217
    %v4232 = vsel %vm1617, %v4207, %v4211
    %v4233 = vsel %vm1617, %v4209, %v4213
    %v4234 = vsel %vm1617, %v4203, %v4207
    %v4235 = vsel %vm1617, %v4205, %v4209
    %v4236 = vsel %vm1617, %v4199, %v4203
    %v4237 = vsel %vm1617, %v4201, %v4205
    %v4238 = vsel %vm1617, %v4195, %v4199
    %v4239 = vsel %vm1617, %v4197, %v4201
    %v4240 = vsel %vm1617, %v4223, %v4195
    %v4241 = vsel %vm1617, %v4225, %v4197
    %v4242 = vmul.f32 %v4240, %v1642
    %v4243 = vmul.f32 %v4238, %v1646
    %v4244 = vmul.f32 %v4236, %v1650
    %v4245 = vmul.f32 %v4234, %v1654
    %v4246 = vmul.f32 %v4232, %v1658
    %v4247 = vmul.f32 %v4230, %v1662
    %v4248 = vmul.f32 %v4228, %v1666
    %v4249 = vmul.f32 %v4226, %v1670
    %v4250 = vmul.f32 %v4241, %v1642
    %v4251 = vmul.f32 %v4239, %v1646
    %v4252 = vmul.f32 %v4237, %v1650
    %v4253 = vmul.f32 %v4235, %v1654
    %v4254 = vmul.f32 %v4233, %v1658
    %v4255 = vmul.f32 %v4231, %v1662
    %v4256 = vmul.f32 %v4229, %v1666
    %v4257 = vmul.f32 %v4227, %v1670
    %v4258 = vpack.c.bf16 %v4250, %v4242
    %v4259 = vpack.c.bf16 %v4251, %v4243
    %v4260 = vpack.c.bf16 %v4252, %v4244
    %v4261 = vpack.c.bf16 %v4253, %v4245
    %v4262 = vpack.c.bf16 %v4254, %v4246
    %v4263 = vpack.c.bf16 %v4255, %v4247
    %v4264 = vpack.c.bf16 %v4256, %v4248
    %v4265 = vpack.c.bf16 %v4257, %v4249
    %v4266 = vpack.c.bf16 %v3322, %v3314
    %v4267 = vpack.c.bf16 %v3323, %v3315
    %v4268 = vpack.c.bf16 %v3324, %v3316
    %v4269 = vpack.c.bf16 %v3325, %v3317
    %v4270 = vpack.c.bf16 %v3326, %v3318
    %v4271 = vpack.c.bf16 %v3327, %v3319
    %v4272 = vpack.c.bf16 %v3328, %v3320
    %v4273 = vpack.c.bf16 %v3329, %v3321
    %4274 = vrot.lane.b32.xlu0 %v3314, 127
    %v4275 = vpop.permute.xlu0 %4274
    %4276 = vrot.lane.b32.xlu0 %v3322, 127
    %v4277 = vpop.permute.xlu0 %4276
    %4278 = vrot.lane.b32.xlu0 %v3315, 127
    %v4279 = vpop.permute.xlu0 %4278
    %4280 = vrot.lane.b32.xlu0 %v3323, 127
    %v4281 = vpop.permute.xlu0 %4280
    %4282 = vrot.lane.b32.xlu0 %v3316, 127
    %v4283 = vpop.permute.xlu0 %4282
    %4284 = vrot.lane.b32.xlu0 %v3324, 127
    %v4285 = vpop.permute.xlu0 %4284
    %4286 = vrot.lane.b32.xlu0 %v3317, 127
    %v4287 = vpop.permute.xlu0 %4286
    %4288 = vrot.lane.b32.xlu0 %v3325, 127
    %v4289 = vpop.permute.xlu0 %4288
    %4290 = vrot.lane.b32.xlu0 %v3318, 127
    %v4291 = vpop.permute.xlu0 %4290
    %4292 = vrot.lane.b32.xlu0 %v3326, 127
    %v4293 = vpop.permute.xlu0 %4292
    %4294 = vrot.lane.b32.xlu0 %v3319, 127
    %v4295 = vpop.permute.xlu0 %4294
    %4296 = vrot.lane.b32.xlu0 %v3327, 127
    %v4297 = vpop.permute.xlu0 %4296
    %4298 = vrot.lane.b32.xlu0 %v3320, 127
    %v4299 = vpop.permute.xlu0 %4298
    %4300 = vrot.lane.b32.xlu0 %v3328, 127
    %v4301 = vpop.permute.xlu0 %4300
    %4302 = vrot.lane.b32.xlu0 %v3321, 127
    %v4303 = vpop.permute.xlu0 %4302
    %4304 = vrot.lane.b32.xlu0 %v3329, 127
    %v4305 = vpop.permute.xlu0 %4304
    %v4306 = vsel %vm1743, %v4299, %v4303
    %v4307 = vsel %vm1743, %v4301, %v4305
    %v4308 = vsel %vm1743, %v4295, %v4299
    %v4309 = vsel %vm1743, %v4297, %v4301
    %v4310 = vsel %vm1743, %v4291, %v4295
    %v4311 = vsel %vm1743, %v4293, %v4297
    %v4312 = vsel %vm1743, %v4287, %v4291
    %v4313 = vsel %vm1743, %v4289, %v4293
    %v4314 = vsel %vm1743, %v4283, %v4287
    %v4315 = vsel %vm1743, %v4285, %v4289
    %v4316 = vsel %vm1743, %v4279, %v4283
    %v4317 = vsel %vm1743, %v4281, %v4285
    %v4318 = vsel %vm1743, %v4275, %v4279
    %v4319 = vsel %vm1743, %v4277, %v4281
    %v4320 = vsel %vm1743, %v4303, %v4275
    %v4321 = vsel %vm1743, %v4305, %v4277
    %v4322 = vmul.f32 %v4318, %v1768
    %v4323 = vmul.f32 %v4316, %v1772
    %v4324 = vmul.f32 %v4314, %v1776
    %v4325 = vmul.f32 %v4312, %v1780
    %v4326 = vmul.f32 %v4310, %v1784
    %v4327 = vmul.f32 %v4308, %v1788
    %v4328 = vmul.f32 %v4306, %v1792
    %v4329 = vmul.f32 %v4320, %v1796
    %v4330 = vmul.f32 %v4319, %v1768
    %v4331 = vmul.f32 %v4317, %v1772
    %v4332 = vmul.f32 %v4315, %v1776
    %v4333 = vmul.f32 %v4313, %v1780
    %v4334 = vmul.f32 %v4311, %v1784
    %v4335 = vmul.f32 %v4309, %v1788
    %v4336 = vmul.f32 %v4307, %v1792
    %v4337 = vmul.f32 %v4321, %v1796
    %v4338 = vpack.c.bf16 %v4330, %v4322
    %v4339 = vpack.c.bf16 %v4331, %v4323
    %v4340 = vpack.c.bf16 %v4332, %v4324
    %v4341 = vpack.c.bf16 %v4333, %v4325
    %v4342 = vpack.c.bf16 %v4334, %v4326
    %v4343 = vpack.c.bf16 %v4335, %v4327
    %v4344 = vpack.c.bf16 %v4336, %v4328
    %v4345 = vpack.c.bf16 %v4337, %v4329
    %4346 = vrot.lane.b32.xlu0 %v3314, 121
    %v4347 = vpop.permute.xlu0 %4346
    %4348 = vrot.lane.b32.xlu0 %v3322, 121
    %v4349 = vpop.permute.xlu0 %4348
    %4350 = vrot.lane.b32.xlu0 %v3315, 121
    %v4351 = vpop.permute.xlu0 %4350
    %4352 = vrot.lane.b32.xlu0 %v3323, 121
    %v4353 = vpop.permute.xlu0 %4352
    %4354 = vrot.lane.b32.xlu0 %v3316, 121
    %v4355 = vpop.permute.xlu0 %4354
    %4356 = vrot.lane.b32.xlu0 %v3324, 121
    %v4357 = vpop.permute.xlu0 %4356
    %4358 = vrot.lane.b32.xlu0 %v3317, 121
    %v4359 = vpop.permute.xlu0 %4358
    %4360 = vrot.lane.b32.xlu0 %v3325, 121
    %v4361 = vpop.permute.xlu0 %4360
    %4362 = vrot.lane.b32.xlu0 %v3318, 121
    %v4363 = vpop.permute.xlu0 %4362
    %4364 = vrot.lane.b32.xlu0 %v3326, 121
    %v4365 = vpop.permute.xlu0 %4364
    %4366 = vrot.lane.b32.xlu0 %v3319, 121
    %v4367 = vpop.permute.xlu0 %4366
    %4368 = vrot.lane.b32.xlu0 %v3327, 121
    %v4369 = vpop.permute.xlu0 %4368
    %4370 = vrot.lane.b32.xlu0 %v3320, 121
    %v4371 = vpop.permute.xlu0 %4370
    %4372 = vrot.lane.b32.xlu0 %v3328, 121
    %v4373 = vpop.permute.xlu0 %4372
    %4374 = vrot.lane.b32.xlu0 %v3321, 121
    %v4375 = vpop.permute.xlu0 %4374
    %4376 = vrot.lane.b32.xlu0 %v3329, 121
    %v4377 = vpop.permute.xlu0 %4376
    %v4378 = vsel %vm1861, %v4371, %v4375
    %v4379 = vsel %vm1861, %v4373, %v4377
    %v4380 = vsel %vm1861, %v4367, %v4371
    %v4381 = vsel %vm1861, %v4369, %v4373
    %v4382 = vsel %vm1861, %v4363, %v4367
    %v4383 = vsel %vm1861, %v4365, %v4369
    %v4384 = vsel %vm1861, %v4359, %v4363
    %v4385 = vsel %vm1861, %v4361, %v4365
    %v4386 = vsel %vm1861, %v4355, %v4359
    %v4387 = vsel %vm1861, %v4357, %v4361
    %v4388 = vsel %vm1861, %v4351, %v4355
    %v4389 = vsel %vm1861, %v4353, %v4357
    %v4390 = vsel %vm1861, %v4347, %v4351
    %v4391 = vsel %vm1861, %v4349, %v4353
    %v4392 = vsel %vm1861, %v4375, %v4347
    %v4393 = vsel %vm1861, %v4377, %v4349
    %v4394 = vmul.f32 %v4390, %v1886
    %v4395 = vmul.f32 %v4388, %v1890
    %v4396 = vmul.f32 %v4386, %v1894
    %v4397 = vmul.f32 %v4384, %v1898
    %v4398 = vmul.f32 %v4382, %v1902
    %v4399 = vmul.f32 %v4380, %v1906
    %v4400 = vmul.f32 %v4378, %v1910
    %v4401 = vmul.f32 %v4392, %v1914
    %v4402 = vmul.f32 %v4391, %v1886
    %v4403 = vmul.f32 %v4389, %v1890
    %v4404 = vmul.f32 %v4387, %v1894
    %v4405 = vmul.f32 %v4385, %v1898
    %v4406 = vmul.f32 %v4383, %v1902
    %v4407 = vmul.f32 %v4381, %v1906
    %v4408 = vmul.f32 %v4379, %v1910
    %v4409 = vmul.f32 %v4393, %v1914
    %v4410 = vpack.c.bf16 %v4402, %v4394
    %v4411 = vpack.c.bf16 %v4403, %v4395
    %v4412 = vpack.c.bf16 %v4404, %v4396
    %v4413 = vpack.c.bf16 %v4405, %v4397
    %v4414 = vpack.c.bf16 %v4406, %v4398
    %v4415 = vpack.c.bf16 %v4407, %v4399
    %v4416 = vpack.c.bf16 %v4408, %v4400
    %v4417 = vpack.c.bf16 %v4409, %v4401
    %4418 = vrot.lane.b32.xlu0 %v3314, 120
    %v4419 = vpop.permute.xlu0 %4418
    %4420 = vrot.lane.b32.xlu0 %v3322, 120
    %v4421 = vpop.permute.xlu0 %4420
    %4422 = vrot.lane.b32.xlu0 %v3315, 120
    %v4423 = vpop.permute.xlu0 %4422
    %4424 = vrot.lane.b32.xlu0 %v3323, 120
    %v4425 = vpop.permute.xlu0 %4424
    %4426 = vrot.lane.b32.xlu0 %v3316, 120
    %v4427 = vpop.permute.xlu0 %4426
    %4428 = vrot.lane.b32.xlu0 %v3324, 120
    %v4429 = vpop.permute.xlu0 %4428
    %4430 = vrot.lane.b32.xlu0 %v3317, 120
    %v4431 = vpop.permute.xlu0 %4430
    %4432 = vrot.lane.b32.xlu0 %v3325, 120
    %v4433 = vpop.permute.xlu0 %4432
    %4434 = vrot.lane.b32.xlu0 %v3318, 120
    %v4435 = vpop.permute.xlu0 %4434
    %4436 = vrot.lane.b32.xlu0 %v3326, 120
    %v4437 = vpop.permute.xlu0 %4436
    %4438 = vrot.lane.b32.xlu0 %v3319, 120
    %v4439 = vpop.permute.xlu0 %4438
    %4440 = vrot.lane.b32.xlu0 %v3327, 120
    %v4441 = vpop.permute.xlu0 %4440
    %4442 = vrot.lane.b32.xlu0 %v3320, 120
    %v4443 = vpop.permute.xlu0 %4442
    %4444 = vrot.lane.b32.xlu0 %v3328, 120
    %v4445 = vpop.permute.xlu0 %4444
    %4446 = vrot.lane.b32.xlu0 %v3321, 120
    %v4447 = vpop.permute.xlu0 %4446
    %4448 = vrot.lane.b32.xlu0 %v3329, 120
    %v4449 = vpop.permute.xlu0 %4448
    %v4450 = vsel %vm1979, %v4443, %v4447
    %v4451 = vsel %vm1979, %v4445, %v4449
    %v4452 = vsel %vm1979, %v4439, %v4443
    %v4453 = vsel %vm1979, %v4441, %v4445
    %v4454 = vsel %vm1979, %v4435, %v4439
    %v4455 = vsel %vm1979, %v4437, %v4441
    %v4456 = vsel %vm1979, %v4431, %v4435
    %v4457 = vsel %vm1979, %v4433, %v4437
    %v4458 = vsel %vm1979, %v4427, %v4431
    %v4459 = vsel %vm1979, %v4429, %v4433
    %v4460 = vsel %vm1979, %v4423, %v4427
    %v4461 = vsel %vm1979, %v4425, %v4429
    %v4462 = vsel %vm1979, %v4419, %v4423
    %v4463 = vsel %vm1979, %v4421, %v4425
    %v4464 = vsel %vm1979, %v4447, %v4419
    %v4465 = vsel %vm1979, %v4449, %v4421
    %v4466 = vmul.f32 %v4462, %v2004
    %v4467 = vmul.f32 %v4460, %v2008
    %v4468 = vmul.f32 %v4458, %v2012
    %v4469 = vmul.f32 %v4456, %v2016
    %v4470 = vmul.f32 %v4454, %v2020
    %v4471 = vmul.f32 %v4452, %v2024
    %v4472 = vmul.f32 %v4450, %v2028
    %v4473 = vmul.f32 %v4464, %v2032
    %v4474 = vmul.f32 %v4463, %v2004
    %v4475 = vmul.f32 %v4461, %v2008
    %v4476 = vmul.f32 %v4459, %v2012
    %v4477 = vmul.f32 %v4457, %v2016
    %v4478 = vmul.f32 %v4455, %v2020
    %v4479 = vmul.f32 %v4453, %v2024
    %v4480 = vmul.f32 %v4451, %v2028
    %v4481 = vmul.f32 %v4465, %v2032
    %v4482 = vpack.c.bf16 %v4474, %v4466
    %v4483 = vpack.c.bf16 %v4475, %v4467
    %v4484 = vpack.c.bf16 %v4476, %v4468
    %v4485 = vpack.c.bf16 %v4477, %v4469
    %v4486 = vpack.c.bf16 %v4478, %v4470
    %v4487 = vpack.c.bf16 %v4479, %v4471
    %v4488 = vpack.c.bf16 %v4480, %v4472
    %v4489 = vpack.c.bf16 %v4481, %v4473
    %4490 = vrot.lane.b32.xlu0 %v3314, 119
    %v4491 = vpop.permute.xlu0 %4490
    %4492 = vrot.lane.b32.xlu0 %v3322, 119
    %v4493 = vpop.permute.xlu0 %4492
    %4494 = vrot.lane.b32.xlu0 %v3315, 119
    %v4495 = vpop.permute.xlu0 %4494
    %4496 = vrot.lane.b32.xlu0 %v3323, 119
    %v4497 = vpop.permute.xlu0 %4496
    %4498 = vrot.lane.b32.xlu0 %v3316, 119
    %v4499 = vpop.permute.xlu0 %4498
    %4500 = vrot.lane.b32.xlu0 %v3324, 119
    %v4501 = vpop.permute.xlu0 %4500
    %4502 = vrot.lane.b32.xlu0 %v3317, 119
    %v4503 = vpop.permute.xlu0 %4502
    %4504 = vrot.lane.b32.xlu0 %v3325, 119
    %v4505 = vpop.permute.xlu0 %4504
    %4506 = vrot.lane.b32.xlu0 %v3318, 119
    %v4507 = vpop.permute.xlu0 %4506
    %4508 = vrot.lane.b32.xlu0 %v3326, 119
    %v4509 = vpop.permute.xlu0 %4508
    %4510 = vrot.lane.b32.xlu0 %v3319, 119
    %v4511 = vpop.permute.xlu0 %4510
    %4512 = vrot.lane.b32.xlu0 %v3327, 119
    %v4513 = vpop.permute.xlu0 %4512
    %4514 = vrot.lane.b32.xlu0 %v3320, 119
    %v4515 = vpop.permute.xlu0 %4514
    %4516 = vrot.lane.b32.xlu0 %v3328, 119
    %v4517 = vpop.permute.xlu0 %4516
    %4518 = vrot.lane.b32.xlu0 %v3321, 119
    %v4519 = vpop.permute.xlu0 %4518
    %4520 = vrot.lane.b32.xlu0 %v3329, 119
    %v4521 = vpop.permute.xlu0 %4520
    %v4522 = vsel %vm2097, %v4515, %v4519
    %v4523 = vsel %vm2097, %v4517, %v4521
    %v4524 = vsel %vm2097, %v4511, %v4515
    %v4525 = vsel %vm2097, %v4513, %v4517
    %v4526 = vsel %vm2097, %v4507, %v4511
    %v4527 = vsel %vm2097, %v4509, %v4513
    %v4528 = vsel %vm2097, %v4503, %v4507
    %v4529 = vsel %vm2097, %v4505, %v4509
    %v4530 = vsel %vm2097, %v4499, %v4503
    %v4531 = vsel %vm2097, %v4501, %v4505
    %v4532 = vsel %vm2097, %v4495, %v4499
    %v4533 = vsel %vm2097, %v4497, %v4501
    %v4534 = vsel %vm2097, %v4491, %v4495
    %v4535 = vsel %vm2097, %v4493, %v4497
    %v4536 = vsel %vm2097, %v4519, %v4491
    %v4537 = vsel %vm2097, %v4521, %v4493
    %v4538 = vmul.f32 %v4534, %v2122
    %v4539 = vmul.f32 %v4532, %v2126
    %v4540 = vmul.f32 %v4530, %v2130
    %v4541 = vmul.f32 %v4528, %v2134
    %v4542 = vmul.f32 %v4526, %v2138
    %v4543 = vmul.f32 %v4524, %v2142
    %v4544 = vmul.f32 %v4522, %v2146
    %v4545 = vmul.f32 %v4536, %v2150
    %v4546 = vmul.f32 %v4535, %v2122
    %v4547 = vmul.f32 %v4533, %v2126
    %v4548 = vmul.f32 %v4531, %v2130
    %v4549 = vmul.f32 %v4529, %v2134
    %v4550 = vmul.f32 %v4527, %v2138
    %v4551 = vmul.f32 %v4525, %v2142
    %v4552 = vmul.f32 %v4523, %v2146
    %v4553 = vmul.f32 %v4537, %v2150
    %v4554 = vpack.c.bf16 %v4546, %v4538
    %v4555 = vpack.c.bf16 %v4547, %v4539
    %v4556 = vpack.c.bf16 %v4548, %v4540
    %v4557 = vpack.c.bf16 %v4549, %v4541
    %v4558 = vpack.c.bf16 %v4550, %v4542
    %v4559 = vpack.c.bf16 %v4551, %v4543
    %v4560 = vpack.c.bf16 %v4552, %v4544
    %v4561 = vpack.c.bf16 %v4553, %v4545
    %v4562 = vmul.f32 %v3374, %v2191
    %v4563 = vmul.f32 %v3372, %v2195
    %v4564 = vmul.f32 %v3370, %v2199
    %v4565 = vmul.f32 %v3368, %v2203
    %v4566 = vmul.f32 %v3366, %v2207
    %v4567 = vmul.f32 %v3364, %v2211
    %v4568 = vmul.f32 %v3362, %v2215
    %v4569 = vmul.f32 %v3376, %v2219
    %v4570 = vmul.f32 %v3375, %v2191
    %v4571 = vmul.f32 %v3373, %v2195
    %v4572 = vmul.f32 %v3371, %v2199
    %v4573 = vmul.f32 %v3369, %v2203
    %v4574 = vmul.f32 %v3367, %v2207
    %v4575 = vmul.f32 %v3365, %v2211
    %v4576 = vmul.f32 %v3363, %v2215
    %v4577 = vmul.f32 %v3377, %v2219
    %v4578 = vpack.c.bf16 %v4570, %v4562
    %v4579 = vpack.c.bf16 %v4571, %v4563
    %v4580 = vpack.c.bf16 %v4572, %v4564
    %v4581 = vpack.c.bf16 %v4573, %v4565
    %v4582 = vpack.c.bf16 %v4574, %v4566
    %v4583 = vpack.c.bf16 %v4575, %v4567
    %v4584 = vpack.c.bf16 %v4576, %v4568
    %v4585 = vpack.c.bf16 %v4577, %v4569
    %v4586 = vmul.f32 %v3446, %v2260
    %v4587 = vmul.f32 %v3444, %v2264
    %v4588 = vmul.f32 %v3442, %v2268
    %v4589 = vmul.f32 %v3440, %v2272
    %v4590 = vmul.f32 %v3438, %v2276
    %v4591 = vmul.f32 %v3436, %v2280
    %v4592 = vmul.f32 %v3434, %v2284
    %v4593 = vmul.f32 %v3448, %v2288
    %v4594 = vmul.f32 %v3447, %v2260
    %v4595 = vmul.f32 %v3445, %v2264
    %v4596 = vmul.f32 %v3443, %v2268
    %v4597 = vmul.f32 %v3441, %v2272
    %v4598 = vmul.f32 %v3439, %v2276
    %v4599 = vmul.f32 %v3437, %v2280
    %v4600 = vmul.f32 %v3435, %v2284
    %v4601 = vmul.f32 %v3449, %v2288
    %v4602 = vpack.c.bf16 %v4594, %v4586
    %v4603 = vpack.c.bf16 %v4595, %v4587
    %v4604 = vpack.c.bf16 %v4596, %v4588
    %v4605 = vpack.c.bf16 %v4597, %v4589
    %v4606 = vpack.c.bf16 %v4598, %v4590
    %v4607 = vpack.c.bf16 %v4599, %v4591
    %v4608 = vpack.c.bf16 %v4600, %v4592
    %v4609 = vpack.c.bf16 %v4601, %v4593
    %v4610 = vmul.f32 %v3518, %v2329
    %v4611 = vmul.f32 %v3516, %v2333
    %v4612 = vmul.f32 %v3514, %v2337
    %v4613 = vmul.f32 %v3512, %v2341
    %v4614 = vmul.f32 %v3510, %v2345
    %v4615 = vmul.f32 %v3508, %v2349
    %v4616 = vmul.f32 %v3506, %v2353
    %v4617 = vmul.f32 %v3520, %v2357
    %v4618 = vmul.f32 %v3519, %v2329
    %v4619 = vmul.f32 %v3517, %v2333
    %v4620 = vmul.f32 %v3515, %v2337
    %v4621 = vmul.f32 %v3513, %v2341
    %v4622 = vmul.f32 %v3511, %v2345
    %v4623 = vmul.f32 %v3509, %v2349
    %v4624 = vmul.f32 %v3507, %v2353
    %v4625 = vmul.f32 %v3521, %v2357
    %v4626 = vpack.c.bf16 %v4618, %v4610
    %v4627 = vpack.c.bf16 %v4619, %v4611
    %v4628 = vpack.c.bf16 %v4620, %v4612
    %v4629 = vpack.c.bf16 %v4621, %v4613
    %v4630 = vpack.c.bf16 %v4622, %v4614
    %v4631 = vpack.c.bf16 %v4623, %v4615
    %v4632 = vpack.c.bf16 %v4624, %v4616
    %v4633 = vpack.c.bf16 %v4625, %v4617
    %v4634 = vmul.f32 %v3590, %v2398
    %v4635 = vmul.f32 %v3588, %v2402
    %v4636 = vmul.f32 %v3586, %v2406
    %v4637 = vmul.f32 %v3584, %v2410
    %v4638 = vmul.f32 %v3582, %v2414
    %v4639 = vmul.f32 %v3580, %v2418
    %v4640 = vmul.f32 %v3578, %v2422
    %v4641 = vmul.f32 %v3592, %v2426
    %v4642 = vmul.f32 %v3591, %v2398
    %v4643 = vmul.f32 %v3589, %v2402
    %v4644 = vmul.f32 %v3587, %v2406
    %v4645 = vmul.f32 %v3585, %v2410
    %v4646 = vmul.f32 %v3583, %v2414
    %v4647 = vmul.f32 %v3581, %v2418
    %v4648 = vmul.f32 %v3579, %v2422
    %v4649 = vmul.f32 %v3593, %v2426
    %v4650 = vpack.c.bf16 %v4642, %v4634
    %v4651 = vpack.c.bf16 %v4643, %v4635
    %v4652 = vpack.c.bf16 %v4644, %v4636
    %v4653 = vpack.c.bf16 %v4645, %v4637
    %v4654 = vpack.c.bf16 %v4646, %v4638
    %v4655 = vpack.c.bf16 %v4647, %v4639
    %v4656 = vpack.c.bf16 %v4648, %v4640
    %v4657 = vpack.c.bf16 %v4649, %v4641
    %v4658 = vmul.f32 %v3662, %v2467
    %v4659 = vmul.f32 %v3660, %v2471
    %v4660 = vmul.f32 %v3658, %v2475
    %v4661 = vmul.f32 %v3656, %v2479
    %v4662 = vmul.f32 %v3654, %v2483
    %v4663 = vmul.f32 %v3652, %v2487
    %v4664 = vmul.f32 %v3650, %v2491
    %v4665 = vmul.f32 %v3664, %v2495
    %v4666 = vmul.f32 %v3663, %v2467
    %v4667 = vmul.f32 %v3661, %v2471
    %v4668 = vmul.f32 %v3659, %v2475
    %v4669 = vmul.f32 %v3657, %v2479
    %v4670 = vmul.f32 %v3655, %v2483
    %v4671 = vmul.f32 %v3653, %v2487
    %v4672 = vmul.f32 %v3651, %v2491
    %v4673 = vmul.f32 %v3665, %v2495
    %v4674 = vpack.c.bf16 %v4666, %v4658
    %v4675 = vpack.c.bf16 %v4667, %v4659
    %v4676 = vpack.c.bf16 %v4668, %v4660
    %v4677 = vpack.c.bf16 %v4669, %v4661
    %v4678 = vpack.c.bf16 %v4670, %v4662
    %v4679 = vpack.c.bf16 %v4671, %v4663
    %v4680 = vpack.c.bf16 %v4672, %v4664
    %v4681 = vpack.c.bf16 %v4673, %v4665
    %v4682 = vmul.f32 %v3734, %v2536
    %v4683 = vmul.f32 %v3732, %v2540
    %v4684 = vmul.f32 %v3730, %v2544
    %v4685 = vmul.f32 %v3728, %v2548
    %v4686 = vmul.f32 %v3726, %v2552
    %v4687 = vmul.f32 %v3724, %v2556
    %v4688 = vmul.f32 %v3722, %v2560
    %v4689 = vmul.f32 %v3736, %v2564
    %v4690 = vmul.f32 %v3735, %v2536
    %v4691 = vmul.f32 %v3733, %v2540
    %v4692 = vmul.f32 %v3731, %v2544
    %v4693 = vmul.f32 %v3729, %v2548
    %v4694 = vmul.f32 %v3727, %v2552
    %v4695 = vmul.f32 %v3725, %v2556
    %v4696 = vmul.f32 %v3723, %v2560
    %v4697 = vmul.f32 %v3737, %v2564
    %v4698 = vpack.c.bf16 %v4690, %v4682
    %v4699 = vpack.c.bf16 %v4691, %v4683
    %v4700 = vpack.c.bf16 %v4692, %v4684
    %v4701 = vpack.c.bf16 %v4693, %v4685
    %v4702 = vpack.c.bf16 %v4694, %v4686
    %v4703 = vpack.c.bf16 %v4695, %v4687
    %v4704 = vpack.c.bf16 %v4696, %v4688
    %v4705 = vpack.c.bf16 %v4697, %v4689
    %v4706 = vmul.f32 %v3806, %v2605
    %v4707 = vmul.f32 %v3804, %v2609
    %v4708 = vmul.f32 %v3802, %v2613
    %v4709 = vmul.f32 %v3800, %v2617
    %v4710 = vmul.f32 %v3798, %v2621
    %v4711 = vmul.f32 %v3796, %v2625
    %v4712 = vmul.f32 %v3794, %v2629
    %v4713 = vmul.f32 %v3808, %v2633
    %v4714 = vmul.f32 %v3807, %v2605
    %v4715 = vmul.f32 %v3805, %v2609
    %v4716 = vmul.f32 %v3803, %v2613
    %v4717 = vmul.f32 %v3801, %v2617
    %v4718 = vmul.f32 %v3799, %v2621
    %v4719 = vmul.f32 %v3797, %v2625
    %v4720 = vmul.f32 %v3795, %v2629
    %v4721 = vmul.f32 %v3809, %v2633
    %v4722 = vpack.c.bf16 %v4714, %v4706
    %v4723 = vpack.c.bf16 %v4715, %v4707
    %v4724 = vpack.c.bf16 %v4716, %v4708
    %v4725 = vpack.c.bf16 %v4717, %v4709
    %v4726 = vpack.c.bf16 %v4718, %v4710
    %v4727 = vpack.c.bf16 %v4719, %v4711
    %v4728 = vpack.c.bf16 %v4720, %v4712
    %v4729 = vpack.c.bf16 %v4721, %v4713
    %v4730 = vmul.f32 %v3878, %v2674
    %v4731 = vmul.f32 %v3876, %v2678
    %v4732 = vmul.f32 %v3874, %v2682
    %v4733 = vmul.f32 %v3872, %v2686
    %v4734 = vmul.f32 %v3870, %v2690
    %v4735 = vmul.f32 %v3868, %v2694
    %v4736 = vmul.f32 %v3866, %v2698
    %v4737 = vmul.f32 %v3880, %v2702
    %v4738 = vmul.f32 %v3879, %v2674
    %v4739 = vmul.f32 %v3877, %v2678
    %v4740 = vmul.f32 %v3875, %v2682
    %v4741 = vmul.f32 %v3873, %v2686
    %v4742 = vmul.f32 %v3871, %v2690
    %v4743 = vmul.f32 %v3869, %v2694
    %v4744 = vmul.f32 %v3867, %v2698
    %v4745 = vmul.f32 %v3881, %v2702
    %v4746 = vpack.c.bf16 %v4738, %v4730
    %v4747 = vpack.c.bf16 %v4739, %v4731
    %v4748 = vpack.c.bf16 %v4740, %v4732
    %v4749 = vpack.c.bf16 %v4741, %v4733
    %v4750 = vpack.c.bf16 %v4742, %v4734
    %v4751 = vpack.c.bf16 %v4743, %v4735
    %v4752 = vpack.c.bf16 %v4744, %v4736
    %v4753 = vpack.c.bf16 %v4745, %v4737
    %v4754 = vmul.f32 %v3950, %v2743
    %v4755 = vmul.f32 %v3948, %v2747
    %v4756 = vmul.f32 %v3946, %v2751
    %v4757 = vmul.f32 %v3944, %v2755
    %v4758 = vmul.f32 %v3942, %v2759
    %v4759 = vmul.f32 %v3940, %v2763
    %v4760 = vmul.f32 %v3938, %v2767
    %v4761 = vmul.f32 %v3952, %v2771
    %v4762 = vmul.f32 %v3951, %v2743
    %v4763 = vmul.f32 %v3949, %v2747
    %v4764 = vmul.f32 %v3947, %v2751
    %v4765 = vmul.f32 %v3945, %v2755
    %v4766 = vmul.f32 %v3943, %v2759
    %v4767 = vmul.f32 %v3941, %v2763
    %v4768 = vmul.f32 %v3939, %v2767
    %v4769 = vmul.f32 %v3953, %v2771
    %v4770 = vpack.c.bf16 %v4762, %v4754
    %v4771 = vpack.c.bf16 %v4763, %v4755
    %v4772 = vpack.c.bf16 %v4764, %v4756
    %v4773 = vpack.c.bf16 %v4765, %v4757
    %v4774 = vpack.c.bf16 %v4766, %v4758
    %v4775 = vpack.c.bf16 %v4767, %v4759
    %v4776 = vpack.c.bf16 %v4768, %v4760
    %v4777 = vpack.c.bf16 %v4769, %v4761
    %s4778 = scalar_lea.vmem %s2, 32
    %v4779 = vld [vmem:[%s4778] sm:$0xff]
    %v4780 = vld [vmem:[%s4778 + $0x8] sm:$0xff]
    %v4781 = vld [vmem:[%s4778 + $0x10] sm:$0xff]
    %v4782 = vld [vmem:[%s4778 + $0x18] sm:$0xff]
    %v4787 = vunpack.c.l.b16 %v4779
    %v4788 = vunpack.c.h.b16 %v4779
    %v4789 = vunpack.c.l.b16 %v4780
    %v4790 = vunpack.c.h.b16 %v4780
    %v4791 = vunpack.c.l.b16 %v4781
    %v4792 = vunpack.c.h.b16 %v4781
    %v4793 = vunpack.c.l.b16 %v4782
    %v4794 = vunpack.c.h.b16 %v4782
    %v4795 = vpack.c.b16 %v4791, %v4787
    %v4796 = vpack.c.b16 %v4792, %v4788
    %v4797 = vpack.c.b16 %v4793, %v4789
    %v4798 = vpack.c.b16 %v4794, %v4790
    %v4803 = vsel %vm2827, %v4798, 0
    %4805 = vmatprep.subr.bf16.mxu0 %v3395
    %4806 = vmatpush1.bf16.msra.mxu0 %v3394
    %4807 = vmatprep.subr.bf16.mxu0 %v3467
    %4808 = vmatpush1.bf16.msra.mxu0 %v3466
    %4809 = vmatprep.subr.bf16.mxu0 %v3539
    %4810 = vmatpush1.bf16.msra.mxu0 %v3538
    %4811 = vmatprep.subr.bf16.mxu0 %v3611
    %4812 = vmatpush1.bf16.msra.mxu0 %v3610
    %4813 = vmatprep.subr.bf16.mxu0 %v3683
    %4814 = vmatpush1.bf16.msra.mxu0 %v3682
    %4815 = vmatprep.subr.bf16.mxu0 %v3755
    %4816 = vmatpush1.bf16.msra.mxu0 %v3754
    %4817 = vmatprep.subr.bf16.mxu0 %v3827
    %4818 = vmatpush1.bf16.msra.mxu0 %v3826
    %4819 = vmatprep.subr.bf16.mxu0 %v3899
    %4820 = vmatpush1.bf16.msra.mxu0 %v3898
    %4821 = vmatprep.subr.bf16.mxu0 %v3971
    %4822 = vmatpush1.bf16.msra.mxu0 %v3970
    %4823 = vmatprep.subr.bf16.mxu0 %v4043
    %4824 = vmatpush1.bf16.msra.mxu0 %v4042
    %4825 = vmatprep.subr.bf16.mxu0 %v4115
    %4826 = vmatpush1.bf16.msra.mxu0 %v4114
    %4827 = vmatprep.subr.bf16.mxu0 %v4187
    %4828 = vmatpush1.bf16.msra.mxu0 %v4186
    %4829 = vmatprep.subr.bf16.mxu0 %v4259
    %4830 = vmatpush1.bf16.msra.mxu0 %v4258
    %4831 = vmatprep.subr.bf16.mxu0 %v4267
    %4832 = vmatpush1.bf16.msra.mxu0 %v4266
    %4833 = vmatprep.subr.bf16.mxu0 %v4339
    %4834 = vmatpush1.bf16.msra.mxu0 %v4338
    %4835 = vmatprep.subr.bf16.mxu0 %v4411
    %4836 = vmatpush1.bf16.msra.mxu0 %v4410
    %4837 = vmatprep.mubr.bf16.mxu0 %v4796
    %4838 = vmatmul.mubr.bf16.gmra.mrb[0].mxu0 %v4795
    %v4839 = vpop.f32.mrb[0].mxu0
    %v4840 = vadd.f32 0.0, %v4839
    %v4841 = vpop.f32.mrb[0].mxu0
    %v4842 = vadd.f32 0.0, %v4841
    %v4843 = vpop.f32.mrb[0].mxu0
    %v4844 = vadd.f32 0.0, %v4843
    %v4845 = vpop.f32.mrb[0].mxu0
    %v4846 = vadd.f32 0.0, %v4845
    %4847 = vdwg.mxu0
    %4848 = vmatprep.subr.bf16.mxu0 %v4483
    %4849 = vmatpush1.bf16.msra.mxu0 %v4482
    %4850 = vmatprep.subr.bf16.mxu0 %v4555
    %4851 = vmatpush1.bf16.msra.mxu0 %v4554
    %4852 = vmatprep.subr.bf16.mxu0 %v4579
    %4853 = vmatpush1.bf16.msra.mxu0 %v4578
    %4854 = vmatprep.subr.bf16.mxu0 %v4603
    %4855 = vmatpush1.bf16.msra.mxu0 %v4602
    %4856 = vmatprep.subr.bf16.mxu0 %v4627
    %4857 = vmatpush1.bf16.msra.mxu0 %v4626
    %4858 = vmatprep.subr.bf16.mxu0 %v4651
    %4859 = vmatpush1.bf16.msra.mxu0 %v4650
    %4860 = vmatprep.subr.bf16.mxu0 %v4675
    %4861 = vmatpush1.bf16.msra.mxu0 %v4674
    %4862 = vmatprep.subr.bf16.mxu0 %v4699
    %4863 = vmatpush1.bf16.msra.mxu0 %v4698
    %4864 = vmatprep.subr.bf16.mxu0 %v4723
    %4865 = vmatpush1.bf16.msra.mxu0 %v4722
    %4866 = vmatprep.subr.bf16.mxu0 %v4747
    %4867 = vmatpush1.bf16.msra.mxu0 %v4746
    %4868 = vmatprep.subr.bf16.mxu0 %v4771
    %4869 = vmatpush1.bf16.msra.mxu0 %v4770
    %4870 = vmatprep.subr.bf16.mxu0 0
    %4871 = vmatpush1.bf16.msra.mxu0 0
    %4872 = vmatprep.subr.bf16.mxu0 0
    %4873 = vmatpush1.bf16.msra.mxu0 0
    %4874 = vmatprep.subr.bf16.mxu0 0
    %4875 = vmatpush1.bf16.msra.mxu0 0
    %4876 = vmatprep.subr.bf16.mxu0 0
    %4877 = vmatpush1.bf16.msra.mxu0 0
    %4878 = vmatprep.subr.bf16.mxu0 0
    %4879 = vmatpush1.bf16.msra.mxu0 0
    %4880 = vmatprep.mubr.bf16.mxu0 %v4803
    %4881 = vmatmul.mubr.bf16.gmra.mrb[0].mxu0 %v4797
    %v4882 = vpop.f32.mrb[0].mxu0
    %v4883 = vadd.f32 %v4840, %v4882
    %v4884 = vpop.f32.mrb[0].mxu0
    %v4885 = vadd.f32 %v4842, %v4884
    %v4886 = vpop.f32.mrb[0].mxu0
    %v4887 = vadd.f32 %v4844, %v4886
    %v4888 = vpop.f32.mrb[0].mxu0
    %v4889 = vadd.f32 %v4846, %v4888
    %4890 = vdwg.mxu0
    %4891 = vmatprep.subr.bf16.mxu0 %v3397
    %4892 = vmatpush1.bf16.msra.mxu0 %v3396
    %4893 = vmatprep.subr.bf16.mxu0 %v3469
    %4894 = vmatpush1.bf16.msra.mxu0 %v3468
    %4895 = vmatprep.subr.bf16.mxu0 %v3541
    %4896 = vmatpush1.bf16.msra.mxu0 %v3540
    %4897 = vmatprep.subr.bf16.mxu0 %v3613
    %4898 = vmatpush1.bf16.msra.mxu0 %v3612
    %4899 = vmatprep.subr.bf16.mxu0 %v3685
    %4900 = vmatpush1.bf16.msra.mxu0 %v3684
    %4901 = vmatprep.subr.bf16.mxu0 %v3757
    %4902 = vmatpush1.bf16.msra.mxu0 %v3756
    %4903 = vmatprep.subr.bf16.mxu0 %v3829
    %4904 = vmatpush1.bf16.msra.mxu0 %v3828
    %4905 = vmatprep.subr.bf16.mxu0 %v3901
    %4906 = vmatpush1.bf16.msra.mxu0 %v3900
    %4907 = vmatprep.subr.bf16.mxu0 %v3973
    %4908 = vmatpush1.bf16.msra.mxu0 %v3972
    %4909 = vmatprep.subr.bf16.mxu0 %v4045
    %4910 = vmatpush1.bf16.msra.mxu0 %v4044
    %4911 = vmatprep.subr.bf16.mxu0 %v4117
    %4912 = vmatpush1.bf16.msra.mxu0 %v4116
    %4913 = vmatprep.subr.bf16.mxu0 %v4189
    %4914 = vmatpush1.bf16.msra.mxu0 %v4188
    %4915 = vmatprep.subr.bf16.mxu0 %v4261
    %4916 = vmatpush1.bf16.msra.mxu0 %v4260
    %4917 = vmatprep.subr.bf16.mxu0 %v4269
    %4918 = vmatpush1.bf16.msra.mxu0 %v4268
    %4919 = vmatprep.subr.bf16.mxu0 %v4341
    %4920 = vmatpush1.bf16.msra.mxu0 %v4340
    %4921 = vmatprep.subr.bf16.mxu0 %v4413
    %4922 = vmatpush1.bf16.msra.mxu0 %v4412
    %4923 = vmatprep.mubr.bf16.mxu0 %v4796
    %4924 = vmatmul.mubr.bf16.gmra.mrb[0].mxu0 %v4795
    %v4925 = vpop.f32.mrb[0].mxu0
    %v4926 = vadd.f32 0.0, %v4925
    %v4927 = vpop.f32.mrb[0].mxu0
    %v4928 = vadd.f32 0.0, %v4927
    %v4929 = vpop.f32.mrb[0].mxu0
    %v4930 = vadd.f32 0.0, %v4929
    %v4931 = vpop.f32.mrb[0].mxu0
    %v4932 = vadd.f32 0.0, %v4931
    %4933 = vdwg.mxu0
    %4934 = vmatprep.subr.bf16.mxu0 %v4485
    %4935 = vmatpush1.bf16.msra.mxu0 %v4484
    %4936 = vmatprep.subr.bf16.mxu0 %v4557
    %4937 = vmatpush1.bf16.msra.mxu0 %v4556
    %4938 = vmatprep.subr.bf16.mxu0 %v4581
    %4939 = vmatpush1.bf16.msra.mxu0 %v4580
    %4940 = vmatprep.subr.bf16.mxu0 %v4605
    %4941 = vmatpush1.bf16.msra.mxu0 %v4604
    %4942 = vmatprep.subr.bf16.mxu0 %v4629
    %4943 = vmatpush1.bf16.msra.mxu0 %v4628
    %4944 = vmatprep.subr.bf16.mxu0 %v4653
    %4945 = vmatpush1.bf16.msra.mxu0 %v4652
    %4946 = vmatprep.subr.bf16.mxu0 %v4677
    %4947 = vmatpush1.bf16.msra.mxu0 %v4676
    %4948 = vmatprep.subr.bf16.mxu0 %v4701
    %4949 = vmatpush1.bf16.msra.mxu0 %v4700
    %4950 = vmatprep.subr.bf16.mxu0 %v4725
    %4951 = vmatpush1.bf16.msra.mxu0 %v4724
    %4952 = vmatprep.subr.bf16.mxu0 %v4749
    %4953 = vmatpush1.bf16.msra.mxu0 %v4748
    %4954 = vmatprep.subr.bf16.mxu0 %v4773
    %4955 = vmatpush1.bf16.msra.mxu0 %v4772
    %4956 = vmatprep.subr.bf16.mxu0 0
    %4957 = vmatpush1.bf16.msra.mxu0 0
    %4958 = vmatprep.subr.bf16.mxu0 0
    %4959 = vmatpush1.bf16.msra.mxu0 0
    %4960 = vmatprep.subr.bf16.mxu0 0
    %4961 = vmatpush1.bf16.msra.mxu0 0
    %4962 = vmatprep.subr.bf16.mxu0 0
    %4963 = vmatpush1.bf16.msra.mxu0 0
    %4964 = vmatprep.subr.bf16.mxu0 0
    %4965 = vmatpush1.bf16.msra.mxu0 0
    %4966 = vmatprep.mubr.bf16.mxu0 %v4803
    %4967 = vmatmul.mubr.bf16.gmra.mrb[0].mxu0 %v4797
    %v4968 = vpop.f32.mrb[0].mxu0
    %v4969 = vadd.f32 %v4926, %v4968
    %v4970 = vpop.f32.mrb[0].mxu0
    %v4971 = vadd.f32 %v4928, %v4970
    %v4972 = vpop.f32.mrb[0].mxu0
    %v4973 = vadd.f32 %v4930, %v4972
    %v4974 = vpop.f32.mrb[0].mxu0
    %v4975 = vadd.f32 %v4932, %v4974
    %4976 = vdwg.mxu0
    %4977 = vmatprep.subr.bf16.mxu0 %v3399
    %4978 = vmatpush1.bf16.msra.mxu0 %v3398
    %4979 = vmatprep.subr.bf16.mxu0 %v3471
    %4980 = vmatpush1.bf16.msra.mxu0 %v3470
    %4981 = vmatprep.subr.bf16.mxu0 %v3543
    %4982 = vmatpush1.bf16.msra.mxu0 %v3542
    %4983 = vmatprep.subr.bf16.mxu0 %v3615
    %4984 = vmatpush1.bf16.msra.mxu0 %v3614
    %4985 = vmatprep.subr.bf16.mxu0 %v3687
    %4986 = vmatpush1.bf16.msra.mxu0 %v3686
    %4987 = vmatprep.subr.bf16.mxu0 %v3759
    %4988 = vmatpush1.bf16.msra.mxu0 %v3758
    %4989 = vmatprep.subr.bf16.mxu0 %v3831
    %4990 = vmatpush1.bf16.msra.mxu0 %v3830
    %4991 = vmatprep.subr.bf16.mxu0 %v3903
    %4992 = vmatpush1.bf16.msra.mxu0 %v3902
    %4993 = vmatprep.subr.bf16.mxu0 %v3975
    %4994 = vmatpush1.bf16.msra.mxu0 %v3974
    %4995 = vmatprep.subr.bf16.mxu0 %v4047
    %4996 = vmatpush1.bf16.msra.mxu0 %v4046
    %4997 = vmatprep.subr.bf16.mxu0 %v4119
    %4998 = vmatpush1.bf16.msra.mxu0 %v4118
    %4999 = vmatprep.subr.bf16.mxu0 %v4191
    %5000 = vmatpush1.bf16.msra.mxu0 %v4190
    %5001 = vmatprep.subr.bf16.mxu0 %v4263
    %5002 = vmatpush1.bf16.msra.mxu0 %v4262
    %5003 = vmatprep.subr.bf16.mxu0 %v4271
    %5004 = vmatpush1.bf16.msra.mxu0 %v4270
    %5005 = vmatprep.subr.bf16.mxu0 %v4343
    %5006 = vmatpush1.bf16.msra.mxu0 %v4342
    %5007 = vmatprep.subr.bf16.mxu0 %v4415
    %5008 = vmatpush1.bf16.msra.mxu0 %v4414
    %5009 = vmatprep.mubr.bf16.mxu0 %v4796
    %5010 = vmatmul.mubr.bf16.gmra.mrb[0].mxu0 %v4795
    %v5011 = vpop.f32.mrb[0].mxu0
    %v5012 = vadd.f32 0.0, %v5011
    %v5013 = vpop.f32.mrb[0].mxu0
    %v5014 = vadd.f32 0.0, %v5013
    %v5015 = vpop.f32.mrb[0].mxu0
    %v5016 = vadd.f32 0.0, %v5015
    %v5017 = vpop.f32.mrb[0].mxu0
    %v5018 = vadd.f32 0.0, %v5017
    %5019 = vdwg.mxu0
    %5020 = vmatprep.subr.bf16.mxu0 %v4487
    %5021 = vmatpush1.bf16.msra.mxu0 %v4486
    %5022 = vmatprep.subr.bf16.mxu0 %v4559
    %5023 = vmatpush1.bf16.msra.mxu0 %v4558
    %5024 = vmatprep.subr.bf16.mxu0 %v4583
    %5025 = vmatpush1.bf16.msra.mxu0 %v4582
    %5026 = vmatprep.subr.bf16.mxu0 %v4607
    %5027 = vmatpush1.bf16.msra.mxu0 %v4606
    %5028 = vmatprep.subr.bf16.mxu0 %v4631
    %5029 = vmatpush1.bf16.msra.mxu0 %v4630
    %5030 = vmatprep.subr.bf16.mxu0 %v4655
    %5031 = vmatpush1.bf16.msra.mxu0 %v4654
    %5032 = vmatprep.subr.bf16.mxu0 %v4679
    %5033 = vmatpush1.bf16.msra.mxu0 %v4678
    %5034 = vmatprep.subr.bf16.mxu0 %v4703
    %5035 = vmatpush1.bf16.msra.mxu0 %v4702
    %5036 = vmatprep.subr.bf16.mxu0 %v4727
    %5037 = vmatpush1.bf16.msra.mxu0 %v4726
    %5038 = vmatprep.subr.bf16.mxu0 %v4751
    %5039 = vmatpush1.bf16.msra.mxu0 %v4750
    %5040 = vmatprep.subr.bf16.mxu0 %v4775
    %5041 = vmatpush1.bf16.msra.mxu0 %v4774
    %5042 = vmatprep.subr.bf16.mxu0 0
    %5043 = vmatpush1.bf16.msra.mxu0 0
    %5044 = vmatprep.subr.bf16.mxu0 0
    %5045 = vmatpush1.bf16.msra.mxu0 0
    %5046 = vmatprep.subr.bf16.mxu0 0
    %5047 = vmatpush1.bf16.msra.mxu0 0
    %5048 = vmatprep.subr.bf16.mxu0 0
    %5049 = vmatpush1.bf16.msra.mxu0 0
    %5050 = vmatprep.subr.bf16.mxu0 0
    %5051 = vmatpush1.bf16.msra.mxu0 0
    %5052 = vmatprep.mubr.bf16.mxu0 %v4803
    %5053 = vmatmul.mubr.bf16.gmra.mrb[0].mxu0 %v4797
    %v5054 = vpop.f32.mrb[0].mxu0
    %v5055 = vadd.f32 %v5012, %v5054
    %v5056 = vpop.f32.mrb[0].mxu0
    %v5057 = vadd.f32 %v5014, %v5056
    %v5058 = vpop.f32.mrb[0].mxu0
    %v5059 = vadd.f32 %v5016, %v5058
    %v5060 = vpop.f32.mrb[0].mxu0
    %v5061 = vadd.f32 %v5018, %v5060
    %5062 = vdwg.mxu0
    %5063 = vmatprep.subr.bf16.mxu0 %v3401
    %5064 = vmatpush1.bf16.msra.mxu0 %v3400
    %5065 = vmatprep.subr.bf16.mxu0 %v3473
    %5066 = vmatpush1.bf16.msra.mxu0 %v3472
    %5067 = vmatprep.subr.bf16.mxu0 %v3545
    %5068 = vmatpush1.bf16.msra.mxu0 %v3544
    %5069 = vmatprep.subr.bf16.mxu0 %v3617
    %5070 = vmatpush1.bf16.msra.mxu0 %v3616
    %5071 = vmatprep.subr.bf16.mxu0 %v3689
    %5072 = vmatpush1.bf16.msra.mxu0 %v3688
    %5073 = vmatprep.subr.bf16.mxu0 %v3761
    %5074 = vmatpush1.bf16.msra.mxu0 %v3760
    %5075 = vmatprep.subr.bf16.mxu0 %v3833
    %5076 = vmatpush1.bf16.msra.mxu0 %v3832
    %5077 = vmatprep.subr.bf16.mxu0 %v3905
    %5078 = vmatpush1.bf16.msra.mxu0 %v3904
    %5079 = vmatprep.subr.bf16.mxu0 %v3977
    %5080 = vmatpush1.bf16.msra.mxu0 %v3976
    %5081 = vmatprep.subr.bf16.mxu0 %v4049
    %5082 = vmatpush1.bf16.msra.mxu0 %v4048
    %5083 = vmatprep.subr.bf16.mxu0 %v4121
    %5084 = vmatpush1.bf16.msra.mxu0 %v4120
    %5085 = vmatprep.subr.bf16.mxu0 %v4193
    %5086 = vmatpush1.bf16.msra.mxu0 %v4192
    %5087 = vmatprep.subr.bf16.mxu0 %v4265
    %5088 = vmatpush1.bf16.msra.mxu0 %v4264
    %5089 = vmatprep.subr.bf16.mxu0 %v4273
    %5090 = vmatpush1.bf16.msra.mxu0 %v4272
    %5091 = vmatprep.subr.bf16.mxu0 %v4345
    %5092 = vmatpush1.bf16.msra.mxu0 %v4344
    %5093 = vmatprep.subr.bf16.mxu0 %v4417
    %5094 = vmatpush1.bf16.msra.mxu0 %v4416
    %5095 = vmatprep.mubr.bf16.mxu0 %v4796
    %5096 = vmatmul.mubr.bf16.gmra.mrb[0].mxu0 %v4795
    %v5097 = vpop.f32.mrb[0].mxu0
    %v5098 = vadd.f32 0.0, %v5097
    %v5099 = vpop.f32.mrb[0].mxu0
    %v5100 = vadd.f32 0.0, %v5099
    %v5101 = vpop.f32.mrb[0].mxu0
    %v5102 = vadd.f32 0.0, %v5101
    %v5103 = vpop.f32.mrb[0].mxu0
    %v5104 = vadd.f32 0.0, %v5103
    %5105 = vdwg.mxu0
    %5106 = vmatprep.subr.bf16.mxu0 %v4489
    %5107 = vmatpush1.bf16.msra.mxu0 %v4488
    %5108 = vmatprep.subr.bf16.mxu0 %v4561
    %5109 = vmatpush1.bf16.msra.mxu0 %v4560
    %5110 = vmatprep.subr.bf16.mxu0 %v4585
    %5111 = vmatpush1.bf16.msra.mxu0 %v4584
    %5112 = vmatprep.subr.bf16.mxu0 %v4609
    %5113 = vmatpush1.bf16.msra.mxu0 %v4608
    %5114 = vmatprep.subr.bf16.mxu0 %v4633
    %5115 = vmatpush1.bf16.msra.mxu0 %v4632
    %5116 = vmatprep.subr.bf16.mxu0 %v4657
    %5117 = vmatpush1.bf16.msra.mxu0 %v4656
    %5118 = vmatprep.subr.bf16.mxu0 %v4681
    %5119 = vmatpush1.bf16.msra.mxu0 %v4680
    %5120 = vmatprep.subr.bf16.mxu0 %v4705
    %5121 = vmatpush1.bf16.msra.mxu0 %v4704
    %5122 = vmatprep.subr.bf16.mxu0 %v4729
    %5123 = vmatpush1.bf16.msra.mxu0 %v4728
    %5124 = vmatprep.subr.bf16.mxu0 %v4753
    %5125 = vmatpush1.bf16.msra.mxu0 %v4752
    %5126 = vmatprep.subr.bf16.mxu0 %v4777
    %5127 = vmatpush1.bf16.msra.mxu0 %v4776
    %5128 = vmatprep.subr.bf16.mxu0 0
    %5129 = vmatpush1.bf16.msra.mxu0 0
    %5130 = vmatprep.subr.bf16.mxu0 0
    %5131 = vmatpush1.bf16.msra.mxu0 0
    %5132 = vmatprep.subr.bf16.mxu0 0
    %5133 = vmatpush1.bf16.msra.mxu0 0
    %5134 = vmatprep.subr.bf16.mxu0 0
    %5135 = vmatpush1.bf16.msra.mxu0 0
    %5136 = vmatprep.subr.bf16.mxu0 0
    %5137 = vmatpush1.bf16.msra.mxu0 0
    %5138 = vmatprep.mubr.bf16.mxu0 %v4803
    %5139 = vmatmul.mubr.bf16.gmra.mrb[0].mxu0 %v4797
    %v5140 = vpop.f32.mrb[0].mxu0
    %v5141 = vadd.f32 %v5098, %v5140
    %v5142 = vpop.f32.mrb[0].mxu0
    %v5143 = vadd.f32 %v5100, %v5142
    %v5144 = vpop.f32.mrb[0].mxu0
    %v5145 = vadd.f32 %v5102, %v5144
    %v5146 = vpop.f32.mrb[0].mxu0
    %v5147 = vadd.f32 %v5104, %v5146
    %5148 = vdwg.mxu0
    %v5149 = vadd.f32 %v4883, %v4885
    %v5150 = vadd.f32 %v5149, %v4969
    %v5151 = vadd.f32 %v5150, %v4971
    %v5152 = vadd.f32 %v5151, %v5055
    %v5153 = vadd.f32 %v5152, %v5057
    %v5154 = vadd.f32 %v5153, %v5141
    %v5155 = vadd.f32 %v5154, %v5143
    %5156 = vadd.xlane.f32.xlu0 %v5155
    %v5157 = vpop.xlane.xlu0 %5156
    %v5158 = vadd.f32 %v4887, %v4889
    %v5159 = vadd.f32 %v5158, %v4973
    %v5160 = vadd.f32 %v5159, %v4975
    %v5161 = vadd.f32 %v5160, %v5059
    %v5162 = vadd.f32 %v5161, %v5061
    %v5163 = vadd.f32 %v5162, %v5145
    %v5164 = vadd.f32 %v5163, %v5147
    %5165 = vadd.xlane.f32.xlu0 %v5164
    %v5166 = vpop.xlane.xlu0 %5165
    %v5167 = vmul.f32 %v5157, %v3193
    %v5168 = vmul.f32 %v5166, %v3193
    %v5169 = vsub.f32 %v4883, %v5167
    %v5170 = vsub.f32 %v4885, %v5167
    %v5171 = vsub.f32 %v4969, %v5167
    %v5172 = vsub.f32 %v4971, %v5167
    %v5173 = vsub.f32 %v5055, %v5167
    %v5174 = vsub.f32 %v5057, %v5167
    %v5175 = vsub.f32 %v5141, %v5167
    %v5176 = vsub.f32 %v5143, %v5167
    %v5177 = vsub.f32 %v4887, %v5168
    %v5178 = vsub.f32 %v4889, %v5168
    %v5179 = vsub.f32 %v4973, %v5168
    %v5180 = vsub.f32 %v4975, %v5168
    %v5181 = vsub.f32 %v5059, %v5168
    %v5182 = vsub.f32 %v5061, %v5168
    %v5183 = vsub.f32 %v5145, %v5168
    %v5184 = vsub.f32 %v5147, %v5168
    %v5185 = vmul.f32 %v5169, %v5169
    %v5186 = vmul.f32 %v5170, %v5170
    %v5187 = vmul.f32 %v5171, %v5171
    %v5188 = vmul.f32 %v5172, %v5172
    %v5189 = vmul.f32 %v5173, %v5173
    %v5190 = vmul.f32 %v5174, %v5174
    %v5191 = vmul.f32 %v5175, %v5175
    %v5192 = vmul.f32 %v5176, %v5176
    %v5193 = vmul.f32 %v5177, %v5177
    %v5194 = vmul.f32 %v5178, %v5178
    %v5195 = vmul.f32 %v5179, %v5179
    %v5196 = vmul.f32 %v5180, %v5180
    %v5197 = vmul.f32 %v5181, %v5181
    %v5198 = vmul.f32 %v5182, %v5182
    %v5199 = vmul.f32 %v5183, %v5183
    %v5200 = vmul.f32 %v5184, %v5184
    %v5201 = vadd.f32 %v5185, %v5186
    %v5202 = vadd.f32 %v5201, %v5187
    %v5203 = vadd.f32 %v5202, %v5188
    %v5204 = vadd.f32 %v5203, %v5189
    %v5205 = vadd.f32 %v5204, %v5190
    %v5206 = vadd.f32 %v5205, %v5191
    %v5207 = vadd.f32 %v5206, %v5192
    %5208 = vadd.xlane.f32.xlu0 %v5207
    %v5209 = vpop.xlane.xlu0 %5208
    %v5210 = vadd.f32 %v5193, %v5194
    %v5211 = vadd.f32 %v5210, %v5195
    %v5212 = vadd.f32 %v5211, %v5196
    %v5213 = vadd.f32 %v5212, %v5197
    %v5214 = vadd.f32 %v5213, %v5198
    %v5215 = vadd.f32 %v5214, %v5199
    %v5216 = vadd.f32 %v5215, %v5200
    %5217 = vadd.xlane.f32.xlu0 %v5216
    %v5218 = vpop.xlane.xlu0 %5217
    %v5219 = vmul.f32 %v5209, %v3193
    %v5220 = vmul.f32 %v5218, %v3193
    %s5221 = scalar_lea.vmem %s3, 16
    %v5222 = vld [vmem:[%s5221] sm:$0xff]
    %v5223 = vld [vmem:[%s5221 + $0x8] sm:$0xff]
    %v5224 = vadd.f32 %v5219, 1e-05
    %v5225 = vadd.f32 %v5220, 1e-05
    %v5226 = vrsqrt.pop %v5224
    %v5227 = vrsqrt.pop %v5225
    %v5228 = vmul.f32 %v5222, %v5226
    %v5229 = vmul.f32 %v5223, %v5227
    %s5230 = scalar_lea.vmem %s4, 16
    %v5231 = vld [vmem:[%s5230] sm:$0xff]
    %v5232 = vld [vmem:[%s5230 + $0x8] sm:$0xff]
    %v5233 = vmul.f32 %v5167, %v5228
    %v5234 = vmul.f32 %v5168, %v5229
    %v5235 = vsub.f32 %v5231, %v5233
    %v5236 = vsub.f32 %v5232, %v5234
    %5238 = vset.pattern.permute.xlu0 0
    %5239 = vperm.xlu0 %5238, %v5228
    %v5240 = vpop.permute.xlu0 %5239
    %5243 = vset.pattern.permute.xlu0 0
    %5244 = vperm.xlu0 %5243, %v5229
    %v5245 = vpop.permute.xlu0 %5244
    %v5247 = vmul.f32 %v4883, %v5240
    %v5248 = vmul.f32 %v4885, %v5240
    %v5249 = vmul.f32 %v4969, %v5240
    %v5250 = vmul.f32 %v4971, %v5240
    %v5251 = vmul.f32 %v5055, %v5240
    %v5252 = vmul.f32 %v5057, %v5240
    %v5253 = vmul.f32 %v5141, %v5240
    %v5254 = vmul.f32 %v5143, %v5240
    %v5255 = vmul.f32 %v4887, %v5245
    %v5256 = vmul.f32 %v4889, %v5245
    %v5257 = vmul.f32 %v4973, %v5245
    %v5258 = vmul.f32 %v4975, %v5245
    %v5259 = vmul.f32 %v5059, %v5245
    %v5260 = vmul.f32 %v5061, %v5245
    %v5261 = vmul.f32 %v5145, %v5245
    %v5262 = vmul.f32 %v5147, %v5245
    %5264 = vset.pattern.permute.xlu0 0
    %5265 = vperm.xlu0 %5264, %v5235
    %v5266 = vpop.permute.xlu0 %5265
    %5269 = vset.pattern.permute.xlu0 0
    %5270 = vperm.xlu0 %5269, %v5236
    %v5271 = vpop.permute.xlu0 %5270
    %v5273 = vadd.f32 %v5247, %v5266
    %v5274 = vadd.f32 %v5248, %v5266
    %v5275 = vadd.f32 %v5249, %v5266
    %v5276 = vadd.f32 %v5250, %v5266
    %v5277 = vadd.f32 %v5251, %v5266
    %v5278 = vadd.f32 %v5252, %v5266
    %v5279 = vadd.f32 %v5253, %v5266
    %v5280 = vadd.f32 %v5254, %v5266
    %v5281 = vadd.f32 %v5255, %v5271
    %v5282 = vadd.f32 %v5256, %v5271
    %v5283 = vadd.f32 %v5257, %v5271
    %v5284 = vadd.f32 %v5258, %v5271
    %v5285 = vadd.f32 %v5259, %v5271
    %v5286 = vadd.f32 %v5260, %v5271
    %v5287 = vadd.f32 %v5261, %v5271
    %v5288 = vadd.f32 %v5262, %v5271
    %v5289 = vmax.f32 %v5273, 0.0
    %v5290 = vmax.f32 %v5274, 0.0
    %v5291 = vmax.f32 %v5275, 0.0
    %v5292 = vmax.f32 %v5276, 0.0
    %v5293 = vmax.f32 %v5277, 0.0
    %v5294 = vmax.f32 %v5278, 0.0
    %v5295 = vmax.f32 %v5279, 0.0
    %v5296 = vmax.f32 %v5280, 0.0
    %v5297 = vmax.f32 %v5281, 0.0
    %v5298 = vmax.f32 %v5282, 0.0
    %v5299 = vmax.f32 %v5283, 0.0
    %v5300 = vmax.f32 %v5284, 0.0
    %v5301 = vmax.f32 %v5285, 0.0
    %v5302 = vmax.f32 %v5286, 0.0
    %v5303 = vmax.f32 %v5287, 0.0
    %v5304 = vmax.f32 %v5288, 0.0
    %5305 = vrot.lane.b32.xlu0 %v5289, 73
    %v5306 = vpop.permute.xlu0 %5305
    %5307 = vrot.lane.b32.xlu0 %v5297, 73
    %v5308 = vpop.permute.xlu0 %5307
    %5309 = vrot.lane.b32.xlu0 %v5290, 73
    %v5310 = vpop.permute.xlu0 %5309
    %5311 = vrot.lane.b32.xlu0 %v5298, 73
    %v5312 = vpop.permute.xlu0 %5311
    %5313 = vrot.lane.b32.xlu0 %v5291, 73
    %v5314 = vpop.permute.xlu0 %5313
    %5315 = vrot.lane.b32.xlu0 %v5299, 73
    %v5316 = vpop.permute.xlu0 %5315
    %5317 = vrot.lane.b32.xlu0 %v5292, 73
    %v5318 = vpop.permute.xlu0 %5317
    %5319 = vrot.lane.b32.xlu0 %v5300, 73
    %v5320 = vpop.permute.xlu0 %5319
    %5321 = vrot.lane.b32.xlu0 %v5293, 73
    %v5322 = vpop.permute.xlu0 %5321
    %5323 = vrot.lane.b32.xlu0 %v5301, 73
    %v5324 = vpop.permute.xlu0 %5323
    %5325 = vrot.lane.b32.xlu0 %v5294, 73
    %v5326 = vpop.permute.xlu0 %5325
    %5327 = vrot.lane.b32.xlu0 %v5302, 73
    %v5328 = vpop.permute.xlu0 %5327
    %5329 = vrot.lane.b32.xlu0 %v5295, 73
    %v5330 = vpop.permute.xlu0 %5329
    %5331 = vrot.lane.b32.xlu0 %v5303, 73
    %v5332 = vpop.permute.xlu0 %5331
    %5333 = vrot.lane.b32.xlu0 %v5296, 73
    %v5334 = vpop.permute.xlu0 %5333
    %5335 = vrot.lane.b32.xlu0 %v5304, 73
    %v5336 = vpop.permute.xlu0 %5335
    %v5337 = vsel %vm202, %v5330, %v5334
    %v5338 = vsel %vm202, %v5332, %v5336
    %v5339 = vsel %vm202, %v5326, %v5330
    %v5340 = vsel %vm202, %v5328, %v5332
    %v5341 = vsel %vm202, %v5322, %v5326
    %v5342 = vsel %vm202, %v5324, %v5328
    %v5343 = vsel %vm202, %v5318, %v5322
    %v5344 = vsel %vm202, %v5320, %v5324
    %v5345 = vsel %vm202, %v5314, %v5318
    %v5346 = vsel %vm202, %v5316, %v5320
    %v5347 = vsel %vm202, %v5310, %v5314
    %v5348 = vsel %vm202, %v5312, %v5316
    %v5349 = vsel %vm202, %v5306, %v5310
    %v5350 = vsel %vm202, %v5308, %v5312
    %v5351 = vsel %vm202, %v5334, %v5306
    %v5352 = vsel %vm202, %v5336, %v5308
    %v5353 = vmul.f32 %v5351, %v226
    %v5354 = vmul.f32 %v5349, %v230
    %v5355 = vmul.f32 %v5347, %v234
    %v5356 = vmul.f32 %v5345, %v238
    %v5357 = vmul.f32 %v5343, %v242
    %v5358 = vmul.f32 %v5341, %v246
    %v5359 = vmul.f32 %v5339, %v250
    %v5360 = vmul.f32 %v5337, %v254
    %v5361 = vmul.f32 %v5352, %v226
    %v5362 = vmul.f32 %v5350, %v230
    %v5363 = vmul.f32 %v5348, %v234
    %v5364 = vmul.f32 %v5346, %v238
    %v5365 = vmul.f32 %v5344, %v242
    %v5366 = vmul.f32 %v5342, %v246
    %v5367 = vmul.f32 %v5340, %v250
    %v5368 = vmul.f32 %v5338, %v254
    %v5369 = vpack.c.bf16 %v5361, %v5353
    %v5370 = vpack.c.bf16 %v5362, %v5354
    %v5371 = vpack.c.bf16 %v5363, %v5355
    %v5372 = vpack.c.bf16 %v5364, %v5356
    %v5373 = vpack.c.bf16 %v5365, %v5357
    %v5374 = vpack.c.bf16 %v5366, %v5358
    %v5375 = vpack.c.bf16 %v5367, %v5359
    %v5376 = vpack.c.bf16 %v5368, %v5360
    %5377 = vrot.lane.b32.xlu0 %v5289, 72
    %v5378 = vpop.permute.xlu0 %5377
    %5379 = vrot.lane.b32.xlu0 %v5297, 72
    %v5380 = vpop.permute.xlu0 %5379
    %5381 = vrot.lane.b32.xlu0 %v5290, 72
    %v5382 = vpop.permute.xlu0 %5381
    %5383 = vrot.lane.b32.xlu0 %v5298, 72
    %v5384 = vpop.permute.xlu0 %5383
    %5385 = vrot.lane.b32.xlu0 %v5291, 72
    %v5386 = vpop.permute.xlu0 %5385
    %5387 = vrot.lane.b32.xlu0 %v5299, 72
    %v5388 = vpop.permute.xlu0 %5387
    %5389 = vrot.lane.b32.xlu0 %v5292, 72
    %v5390 = vpop.permute.xlu0 %5389
    %5391 = vrot.lane.b32.xlu0 %v5300, 72
    %v5392 = vpop.permute.xlu0 %5391
    %5393 = vrot.lane.b32.xlu0 %v5293, 72
    %v5394 = vpop.permute.xlu0 %5393
    %5395 = vrot.lane.b32.xlu0 %v5301, 72
    %v5396 = vpop.permute.xlu0 %5395
    %5397 = vrot.lane.b32.xlu0 %v5294, 72
    %v5398 = vpop.permute.xlu0 %5397
    %5399 = vrot.lane.b32.xlu0 %v5302, 72
    %v5400 = vpop.permute.xlu0 %5399
    %5401 = vrot.lane.b32.xlu0 %v5295, 72
    %v5402 = vpop.permute.xlu0 %5401
    %5403 = vrot.lane.b32.xlu0 %v5303, 72
    %v5404 = vpop.permute.xlu0 %5403
    %5405 = vrot.lane.b32.xlu0 %v5296, 72
    %v5406 = vpop.permute.xlu0 %5405
    %5407 = vrot.lane.b32.xlu0 %v5304, 72
    %v5408 = vpop.permute.xlu0 %5407
    %v5409 = vsel %vm319, %v5402, %v5406
    %v5410 = vsel %vm319, %v5404, %v5408
    %v5411 = vsel %vm319, %v5398, %v5402
    %v5412 = vsel %vm319, %v5400, %v5404
    %v5413 = vsel %vm319, %v5394, %v5398
    %v5414 = vsel %vm319, %v5396, %v5400
    %v5415 = vsel %vm319, %v5390, %v5394
    %v5416 = vsel %vm319, %v5392, %v5396
    %v5417 = vsel %vm319, %v5386, %v5390
    %v5418 = vsel %vm319, %v5388, %v5392
    %v5419 = vsel %vm319, %v5382, %v5386
    %v5420 = vsel %vm319, %v5384, %v5388
    %v5421 = vsel %vm319, %v5378, %v5382
    %v5422 = vsel %vm319, %v5380, %v5384
    %v5423 = vsel %vm319, %v5406, %v5378
    %v5424 = vsel %vm319, %v5408, %v5380
    %v5425 = vmul.f32 %v5423, %v344
    %v5426 = vmul.f32 %v5421, %v348
    %v5427 = vmul.f32 %v5419, %v352
    %v5428 = vmul.f32 %v5417, %v356
    %v5429 = vmul.f32 %v5415, %v360
    %v5430 = vmul.f32 %v5413, %v364
    %v5431 = vmul.f32 %v5411, %v368
    %v5432 = vmul.f32 %v5409, %v372
    %v5433 = vmul.f32 %v5424, %v344
    %v5434 = vmul.f32 %v5422, %v348
    %v5435 = vmul.f32 %v5420, %v352
    %v5436 = vmul.f32 %v5418, %v356
    %v5437 = vmul.f32 %v5416, %v360
    %v5438 = vmul.f32 %v5414, %v364
    %v5439 = vmul.f32 %v5412, %v368
    %v5440 = vmul.f32 %v5410, %v372
    %v5441 = vpack.c.bf16 %v5433, %v5425
    %v5442 = vpack.c.bf16 %v5434, %v5426
    %v5443 = vpack.c.bf16 %v5435, %v5427
    %v5444 = vpack.c.bf16 %v5436, %v5428
    %v5445 = vpack.c.bf16 %v5437, %v5429
    %v5446 = vpack.c.bf16 %v5438, %v5430
    %v5447 = vpack.c.bf16 %v5439, %v5431
    %v5448 = vpack.c.bf16 %v5440, %v5432
    %5449 = vrot.lane.b32.xlu0 %v5289, 71
    %v5450 = vpop.permute.xlu0 %5449
    %5451 = vrot.lane.b32.xlu0 %v5297, 71
    %v5452 = vpop.permute.xlu0 %5451
    %5453 = vrot.lane.b32.xlu0 %v5290, 71
    %v5454 = vpop.permute.xlu0 %5453
    %5455 = vrot.lane.b32.xlu0 %v5298, 71
    %v5456 = vpop.permute.xlu0 %5455
    %5457 = vrot.lane.b32.xlu0 %v5291, 71
    %v5458 = vpop.permute.xlu0 %5457
    %5459 = vrot.lane.b32.xlu0 %v5299, 71
    %v5460 = vpop.permute.xlu0 %5459
    %5461 = vrot.lane.b32.xlu0 %v5292, 71
    %v5462 = vpop.permute.xlu0 %5461
    %5463 = vrot.lane.b32.xlu0 %v5300, 71
    %v5464 = vpop.permute.xlu0 %5463
    %5465 = vrot.lane.b32.xlu0 %v5293, 71
    %v5466 = vpop.permute.xlu0 %5465
    %5467 = vrot.lane.b32.xlu0 %v5301, 71
    %v5468 = vpop.permute.xlu0 %5467
    %5469 = vrot.lane.b32.xlu0 %v5294, 71
    %v5470 = vpop.permute.xlu0 %5469
    %5471 = vrot.lane.b32.xlu0 %v5302, 71
    %v5472 = vpop.permute.xlu0 %5471
    %5473 = vrot.lane.b32.xlu0 %v5295, 71
    %v5474 = vpop.permute.xlu0 %5473
    %5475 = vrot.lane.b32.xlu0 %v5303, 71
    %v5476 = vpop.permute.xlu0 %5475
    %5477 = vrot.lane.b32.xlu0 %v5296, 71
    %v5478 = vpop.permute.xlu0 %5477
    %5479 = vrot.lane.b32.xlu0 %v5304, 71
    %v5480 = vpop.permute.xlu0 %5479
    %v5481 = vsel %vm437, %v5474, %v5478
    %v5482 = vsel %vm437, %v5476, %v5480
    %v5483 = vsel %vm437, %v5470, %v5474
    %v5484 = vsel %vm437, %v5472, %v5476
    %v5485 = vsel %vm437, %v5466, %v5470
    %v5486 = vsel %vm437, %v5468, %v5472
    %v5487 = vsel %vm437, %v5462, %v5466
    %v5488 = vsel %vm437, %v5464, %v5468
    %v5489 = vsel %vm437, %v5458, %v5462
    %v5490 = vsel %vm437, %v5460, %v5464
    %v5491 = vsel %vm437, %v5454, %v5458
    %v5492 = vsel %vm437, %v5456, %v5460
    %v5493 = vsel %vm437, %v5450, %v5454
    %v5494 = vsel %vm437, %v5452, %v5456
    %v5495 = vsel %vm437, %v5478, %v5450
    %v5496 = vsel %vm437, %v5480, %v5452
    %v5497 = vmul.f32 %v5495, %v462
    %v5498 = vmul.f32 %v5493, %v466
    %v5499 = vmul.f32 %v5491, %v470
    %v5500 = vmul.f32 %v5489, %v474
    %v5501 = vmul.f32 %v5487, %v478
    %v5502 = vmul.f32 %v5485, %v482
    %v5503 = vmul.f32 %v5483, %v486
    %v5504 = vmul.f32 %v5481, %v490
    %v5505 = vmul.f32 %v5496, %v462
    %v5506 = vmul.f32 %v5494, %v466
    %v5507 = vmul.f32 %v5492, %v470
    %v5508 = vmul.f32 %v5490, %v474
    %v5509 = vmul.f32 %v5488, %v478
    %v5510 = vmul.f32 %v5486, %v482
    %v5511 = vmul.f32 %v5484, %v486
    %v5512 = vmul.f32 %v5482, %v490
    %v5513 = vpack.c.bf16 %v5505, %v5497
    %v5514 = vpack.c.bf16 %v5506, %v5498
    %v5515 = vpack.c.bf16 %v5507, %v5499
    %v5516 = vpack.c.bf16 %v5508, %v5500
    %v5517 = vpack.c.bf16 %v5509, %v5501
    %v5518 = vpack.c.bf16 %v5510, %v5502
    %v5519 = vpack.c.bf16 %v5511, %v5503
    %v5520 = vpack.c.bf16 %v5512, %v5504
    %5521 = vrot.lane.b32.xlu0 %v5289, 65
    %v5522 = vpop.permute.xlu0 %5521
    %5523 = vrot.lane.b32.xlu0 %v5297, 65
    %v5524 = vpop.permute.xlu0 %5523
    %5525 = vrot.lane.b32.xlu0 %v5290, 65
    %v5526 = vpop.permute.xlu0 %5525
    %5527 = vrot.lane.b32.xlu0 %v5298, 65
    %v5528 = vpop.permute.xlu0 %5527
    %5529 = vrot.lane.b32.xlu0 %v5291, 65
    %v5530 = vpop.permute.xlu0 %5529
    %5531 = vrot.lane.b32.xlu0 %v5299, 65
    %v5532 = vpop.permute.xlu0 %5531
    %5533 = vrot.lane.b32.xlu0 %v5292, 65
    %v5534 = vpop.permute.xlu0 %5533
    %5535 = vrot.lane.b32.xlu0 %v5300, 65
    %v5536 = vpop.permute.xlu0 %5535
    %5537 = vrot.lane.b32.xlu0 %v5293, 65
    %v5538 = vpop.permute.xlu0 %5537
    %5539 = vrot.lane.b32.xlu0 %v5301, 65
    %v5540 = vpop.permute.xlu0 %5539
    %5541 = vrot.lane.b32.xlu0 %v5294, 65
    %v5542 = vpop.permute.xlu0 %5541
    %5543 = vrot.lane.b32.xlu0 %v5302, 65
    %v5544 = vpop.permute.xlu0 %5543
    %5545 = vrot.lane.b32.xlu0 %v5295, 65
    %v5546 = vpop.permute.xlu0 %5545
    %5547 = vrot.lane.b32.xlu0 %v5303, 65
    %v5548 = vpop.permute.xlu0 %5547
    %5549 = vrot.lane.b32.xlu0 %v5296, 65
    %v5550 = vpop.permute.xlu0 %5549
    %5551 = vrot.lane.b32.xlu0 %v5304, 65
    %v5552 = vpop.permute.xlu0 %5551
    %v5553 = vsel %vm555, %v5546, %v5550
    %v5554 = vsel %vm555, %v5548, %v5552
    %v5555 = vsel %vm555, %v5542, %v5546
    %v5556 = vsel %vm555, %v5544, %v5548
    %v5557 = vsel %vm555, %v5538, %v5542
    %v5558 = vsel %vm555, %v5540, %v5544
    %v5559 = vsel %vm555, %v5534, %v5538
    %v5560 = vsel %vm555, %v5536, %v5540
    %v5561 = vsel %vm555, %v5530, %v5534
    %v5562 = vsel %vm555, %v5532, %v5536
    %v5563 = vsel %vm555, %v5526, %v5530
    %v5564 = vsel %vm555, %v5528, %v5532
    %v5565 = vsel %vm555, %v5522, %v5526
    %v5566 = vsel %vm555, %v5524, %v5528
    %v5567 = vsel %vm555, %v5550, %v5522
    %v5568 = vsel %vm555, %v5552, %v5524
    %v5569 = vmul.f32 %v5567, %v580
    %v5570 = vmul.f32 %v5565, %v584
    %v5571 = vmul.f32 %v5563, %v588
    %v5572 = vmul.f32 %v5561, %v592
    %v5573 = vmul.f32 %v5559, %v596
    %v5574 = vmul.f32 %v5557, %v600
    %v5575 = vmul.f32 %v5555, %v604
    %v5576 = vmul.f32 %v5553, %v608
    %v5577 = vmul.f32 %v5568, %v580
    %v5578 = vmul.f32 %v5566, %v584
    %v5579 = vmul.f32 %v5564, %v588
    %v5580 = vmul.f32 %v5562, %v592
    %v5581 = vmul.f32 %v5560, %v596
    %v5582 = vmul.f32 %v5558, %v600
    %v5583 = vmul.f32 %v5556, %v604
    %v5584 = vmul.f32 %v5554, %v608
    %v5585 = vpack.c.bf16 %v5577, %v5569
    %v5586 = vpack.c.bf16 %v5578, %v5570
    %v5587 = vpack.c.bf16 %v5579, %v5571
    %v5588 = vpack.c.bf16 %v5580, %v5572
    %v5589 = vpack.c.bf16 %v5581, %v5573
    %v5590 = vpack.c.bf16 %v5582, %v5574
    %v5591 = vpack.c.bf16 %v5583, %v5575
    %v5592 = vpack.c.bf16 %v5584, %v5576
    %5593 = vrot.lane.b32.xlu0 %v5289, 64
    %v5594 = vpop.permute.xlu0 %5593
    %5595 = vrot.lane.b32.xlu0 %v5297, 64
    %v5596 = vpop.permute.xlu0 %5595
    %5597 = vrot.lane.b32.xlu0 %v5290, 64
    %v5598 = vpop.permute.xlu0 %5597
    %5599 = vrot.lane.b32.xlu0 %v5298, 64
    %v5600 = vpop.permute.xlu0 %5599
    %5601 = vrot.lane.b32.xlu0 %v5291, 64
    %v5602 = vpop.permute.xlu0 %5601
    %5603 = vrot.lane.b32.xlu0 %v5299, 64
    %v5604 = vpop.permute.xlu0 %5603
    %5605 = vrot.lane.b32.xlu0 %v5292, 64
    %v5606 = vpop.permute.xlu0 %5605
    %5607 = vrot.lane.b32.xlu0 %v5300, 64
    %v5608 = vpop.permute.xlu0 %5607
    %5609 = vrot.lane.b32.xlu0 %v5293, 64
    %v5610 = vpop.permute.xlu0 %5609
    %5611 = vrot.lane.b32.xlu0 %v5301, 64
    %v5612 = vpop.permute.xlu0 %5611
    %5613 = vrot.lane.b32.xlu0 %v5294, 64
    %v5614 = vpop.permute.xlu0 %5613
    %5615 = vrot.lane.b32.xlu0 %v5302, 64
    %v5616 = vpop.permute.xlu0 %5615
    %5617 = vrot.lane.b32.xlu0 %v5295, 64
    %v5618 = vpop.permute.xlu0 %5617
    %5619 = vrot.lane.b32.xlu0 %v5303, 64
    %v5620 = vpop.permute.xlu0 %5619
    %5621 = vrot.lane.b32.xlu0 %v5296, 64
    %v5622 = vpop.permute.xlu0 %5621
    %5623 = vrot.lane.b32.xlu0 %v5304, 64
    %v5624 = vpop.permute.xlu0 %5623
    %v5625 = vsel %vm673, %v5618, %v5622
    %v5626 = vsel %vm673, %v5620, %v5624
    %v5627 = vsel %vm673, %v5614, %v5618
    %v5628 = vsel %vm673, %v5616, %v5620
    %v5629 = vsel %vm673, %v5610, %v5614
    %v5630 = vsel %vm673, %v5612, %v5616
    %v5631 = vsel %vm673, %v5606, %v5610
    %v5632 = vsel %vm673, %v5608, %v5612
    %v5633 = vsel %vm673, %v5602, %v5606
    %v5634 = vsel %vm673, %v5604, %v5608
    %v5635 = vsel %vm673, %v5598, %v5602
    %v5636 = vsel %vm673, %v5600, %v5604
    %v5637 = vsel %vm673, %v5594, %v5598
    %v5638 = vsel %vm673, %v5596, %v5600
    %v5639 = vsel %vm673, %v5622, %v5594
    %v5640 = vsel %vm673, %v5624, %v5596
    %v5641 = vmul.f32 %v5639, %v698
    %v5642 = vmul.f32 %v5637, %v702
    %v5643 = vmul.f32 %v5635, %v706
    %v5644 = vmul.f32 %v5633, %v710
    %v5645 = vmul.f32 %v5631, %v714
    %v5646 = vmul.f32 %v5629, %v718
    %v5647 = vmul.f32 %v5627, %v722
    %v5648 = vmul.f32 %v5625, %v726
    %v5649 = vmul.f32 %v5640, %v698
    %v5650 = vmul.f32 %v5638, %v702
    %v5651 = vmul.f32 %v5636, %v706
    %v5652 = vmul.f32 %v5634, %v710
    %v5653 = vmul.f32 %v5632, %v714
    %v5654 = vmul.f32 %v5630, %v718
    %v5655 = vmul.f32 %v5628, %v722
    %v5656 = vmul.f32 %v5626, %v726
    %v5657 = vpack.c.bf16 %v5649, %v5641
    %v5658 = vpack.c.bf16 %v5650, %v5642
    %v5659 = vpack.c.bf16 %v5651, %v5643
    %v5660 = vpack.c.bf16 %v5652, %v5644
    %v5661 = vpack.c.bf16 %v5653, %v5645
    %v5662 = vpack.c.bf16 %v5654, %v5646
    %v5663 = vpack.c.bf16 %v5655, %v5647
    %v5664 = vpack.c.bf16 %v5656, %v5648
    %5665 = vrot.lane.b32.xlu0 %v5289, 63
    %v5666 = vpop.permute.xlu0 %5665
    %5667 = vrot.lane.b32.xlu0 %v5297, 63
    %v5668 = vpop.permute.xlu0 %5667
    %5669 = vrot.lane.b32.xlu0 %v5290, 63
    %v5670 = vpop.permute.xlu0 %5669
    %5671 = vrot.lane.b32.xlu0 %v5298, 63
    %v5672 = vpop.permute.xlu0 %5671
    %5673 = vrot.lane.b32.xlu0 %v5291, 63
    %v5674 = vpop.permute.xlu0 %5673
    %5675 = vrot.lane.b32.xlu0 %v5299, 63
    %v5676 = vpop.permute.xlu0 %5675
    %5677 = vrot.lane.b32.xlu0 %v5292, 63
    %v5678 = vpop.permute.xlu0 %5677
    %5679 = vrot.lane.b32.xlu0 %v5300, 63
    %v5680 = vpop.permute.xlu0 %5679
    %5681 = vrot.lane.b32.xlu0 %v5293, 63
    %v5682 = vpop.permute.xlu0 %5681
    %5683 = vrot.lane.b32.xlu0 %v5301, 63
    %v5684 = vpop.permute.xlu0 %5683
    %5685 = vrot.lane.b32.xlu0 %v5294, 63
    %v5686 = vpop.permute.xlu0 %5685
    %5687 = vrot.lane.b32.xlu0 %v5302, 63
    %v5688 = vpop.permute.xlu0 %5687
    %5689 = vrot.lane.b32.xlu0 %v5295, 63
    %v5690 = vpop.permute.xlu0 %5689
    %5691 = vrot.lane.b32.xlu0 %v5303, 63
    %v5692 = vpop.permute.xlu0 %5691
    %5693 = vrot.lane.b32.xlu0 %v5296, 63
    %v5694 = vpop.permute.xlu0 %5693
    %5695 = vrot.lane.b32.xlu0 %v5304, 63
    %v5696 = vpop.permute.xlu0 %5695
    %v5697 = vsel %vm791, %v5690, %v5694
    %v5698 = vsel %vm791, %v5692, %v5696
    %v5699 = vsel %vm791, %v5686, %v5690
    %v5700 = vsel %vm791, %v5688, %v5692
    %v5701 = vsel %vm791, %v5682, %v5686
    %v5702 = vsel %vm791, %v5684, %v5688
    %v5703 = vsel %vm791, %v5678, %v5682
    %v5704 = vsel %vm791, %v5680, %v5684
    %v5705 = vsel %vm791, %v5674, %v5678
    %v5706 = vsel %vm791, %v5676, %v5680
    %v5707 = vsel %vm791, %v5670, %v5674
    %v5708 = vsel %vm791, %v5672, %v5676
    %v5709 = vsel %vm791, %v5666, %v5670
    %v5710 = vsel %vm791, %v5668, %v5672
    %v5711 = vsel %vm791, %v5694, %v5666
    %v5712 = vsel %vm791, %v5696, %v5668
    %v5713 = vmul.f32 %v5711, %v816
    %v5714 = vmul.f32 %v5709, %v820
    %v5715 = vmul.f32 %v5707, %v824
    %v5716 = vmul.f32 %v5705, %v828
    %v5717 = vmul.f32 %v5703, %v832
    %v5718 = vmul.f32 %v5701, %v836
    %v5719 = vmul.f32 %v5699, %v840
    %v5720 = vmul.f32 %v5697, %v844
    %v5721 = vmul.f32 %v5712, %v816
    %v5722 = vmul.f32 %v5710, %v820
    %v5723 = vmul.f32 %v5708, %v824
    %v5724 = vmul.f32 %v5706, %v828
    %v5725 = vmul.f32 %v5704, %v832
    %v5726 = vmul.f32 %v5702, %v836
    %v5727 = vmul.f32 %v5700, %v840
    %v5728 = vmul.f32 %v5698, %v844
    %v5729 = vpack.c.bf16 %v5721, %v5713
    %v5730 = vpack.c.bf16 %v5722, %v5714
    %v5731 = vpack.c.bf16 %v5723, %v5715
    %v5732 = vpack.c.bf16 %v5724, %v5716
    %v5733 = vpack.c.bf16 %v5725, %v5717
    %v5734 = vpack.c.bf16 %v5726, %v5718
    %v5735 = vpack.c.bf16 %v5727, %v5719
    %v5736 = vpack.c.bf16 %v5728, %v5720
    %5737 = vrot.lane.b32.xlu0 %v5289, 57
    %v5738 = vpop.permute.xlu0 %5737
    %5739 = vrot.lane.b32.xlu0 %v5297, 57
    %v5740 = vpop.permute.xlu0 %5739
    %5741 = vrot.lane.b32.xlu0 %v5290, 57
    %v5742 = vpop.permute.xlu0 %5741
    %5743 = vrot.lane.b32.xlu0 %v5298, 57
    %v5744 = vpop.permute.xlu0 %5743
    %5745 = vrot.lane.b32.xlu0 %v5291, 57
    %v5746 = vpop.permute.xlu0 %5745
    %5747 = vrot.lane.b32.xlu0 %v5299, 57
    %v5748 = vpop.permute.xlu0 %5747
    %5749 = vrot.lane.b32.xlu0 %v5292, 57
    %v5750 = vpop.permute.xlu0 %5749
    %5751 = vrot.lane.b32.xlu0 %v5300, 57
    %v5752 = vpop.permute.xlu0 %5751
    %5753 = vrot.lane.b32.xlu0 %v5293, 57
    %v5754 = vpop.permute.xlu0 %5753
    %5755 = vrot.lane.b32.xlu0 %v5301, 57
    %v5756 = vpop.permute.xlu0 %5755
    %5757 = vrot.lane.b32.xlu0 %v5294, 57
    %v5758 = vpop.permute.xlu0 %5757
    %5759 = vrot.lane.b32.xlu0 %v5302, 57
    %v5760 = vpop.permute.xlu0 %5759
    %5761 = vrot.lane.b32.xlu0 %v5295, 57
    %v5762 = vpop.permute.xlu0 %5761
    %5763 = vrot.lane.b32.xlu0 %v5303, 57
    %v5764 = vpop.permute.xlu0 %5763
    %5765 = vrot.lane.b32.xlu0 %v5296, 57
    %v5766 = vpop.permute.xlu0 %5765
    %5767 = vrot.lane.b32.xlu0 %v5304, 57
    %v5768 = vpop.permute.xlu0 %5767
    %v5769 = vsel %vm909, %v5762, %v5766
    %v5770 = vsel %vm909, %v5764, %v5768
    %v5771 = vsel %vm909, %v5758, %v5762
    %v5772 = vsel %vm909, %v5760, %v5764
    %v5773 = vsel %vm909, %v5754, %v5758
    %v5774 = vsel %vm909, %v5756, %v5760
    %v5775 = vsel %vm909, %v5750, %v5754
    %v5776 = vsel %vm909, %v5752, %v5756
    %v5777 = vsel %vm909, %v5746, %v5750
    %v5778 = vsel %vm909, %v5748, %v5752
    %v5779 = vsel %vm909, %v5742, %v5746
    %v5780 = vsel %vm909, %v5744, %v5748
    %v5781 = vsel %vm909, %v5738, %v5742
    %v5782 = vsel %vm909, %v5740, %v5744
    %v5783 = vsel %vm909, %v5766, %v5738
    %v5784 = vsel %vm909, %v5768, %v5740
    %v5785 = vmul.f32 %v5783, %v934
    %v5786 = vmul.f32 %v5781, %v938
    %v5787 = vmul.f32 %v5779, %v942
    %v5788 = vmul.f32 %v5777, %v946
    %v5789 = vmul.f32 %v5775, %v950
    %v5790 = vmul.f32 %v5773, %v954
    %v5791 = vmul.f32 %v5771, %v958
    %v5792 = vmul.f32 %v5769, %v962
    %v5793 = vmul.f32 %v5784, %v934
    %v5794 = vmul.f32 %v5782, %v938
    %v5795 = vmul.f32 %v5780, %v942
    %v5796 = vmul.f32 %v5778, %v946
    %v5797 = vmul.f32 %v5776, %v950
    %v5798 = vmul.f32 %v5774, %v954
    %v5799 = vmul.f32 %v5772, %v958
    %v5800 = vmul.f32 %v5770, %v962
    %v5801 = vpack.c.bf16 %v5793, %v5785
    %v5802 = vpack.c.bf16 %v5794, %v5786
    %v5803 = vpack.c.bf16 %v5795, %v5787
    %v5804 = vpack.c.bf16 %v5796, %v5788
    %v5805 = vpack.c.bf16 %v5797, %v5789
    %v5806 = vpack.c.bf16 %v5798, %v5790
    %v5807 = vpack.c.bf16 %v5799, %v5791
    %v5808 = vpack.c.bf16 %v5800, %v5792
    %5809 = vrot.lane.b32.xlu0 %v5289, 56
    %v5810 = vpop.permute.xlu0 %5809
    %5811 = vrot.lane.b32.xlu0 %v5297, 56
    %v5812 = vpop.permute.xlu0 %5811
    %5813 = vrot.lane.b32.xlu0 %v5290, 56
    %v5814 = vpop.permute.xlu0 %5813
    %5815 = vrot.lane.b32.xlu0 %v5298, 56
    %v5816 = vpop.permute.xlu0 %5815
    %5817 = vrot.lane.b32.xlu0 %v5291, 56
    %v5818 = vpop.permute.xlu0 %5817
    %5819 = vrot.lane.b32.xlu0 %v5299, 56
    %v5820 = vpop.permute.xlu0 %5819
    %5821 = vrot.lane.b32.xlu0 %v5292, 56
    %v5822 = vpop.permute.xlu0 %5821
    %5823 = vrot.lane.b32.xlu0 %v5300, 56
    %v5824 = vpop.permute.xlu0 %5823
    %5825 = vrot.lane.b32.xlu0 %v5293, 56
    %v5826 = vpop.permute.xlu0 %5825
    %5827 = vrot.lane.b32.xlu0 %v5301, 56
    %v5828 = vpop.permute.xlu0 %5827
    %5829 = vrot.lane.b32.xlu0 %v5294, 56
    %v5830 = vpop.permute.xlu0 %5829
    %5831 = vrot.lane.b32.xlu0 %v5302, 56
    %v5832 = vpop.permute.xlu0 %5831
    %5833 = vrot.lane.b32.xlu0 %v5295, 56
    %v5834 = vpop.permute.xlu0 %5833
    %5835 = vrot.lane.b32.xlu0 %v5303, 56
    %v5836 = vpop.permute.xlu0 %5835
    %5837 = vrot.lane.b32.xlu0 %v5296, 56
    %v5838 = vpop.permute.xlu0 %5837
    %5839 = vrot.lane.b32.xlu0 %v5304, 56
    %v5840 = vpop.permute.xlu0 %5839
    %v5841 = vsel %vm1027, %v5834, %v5838
    %v5842 = vsel %vm1027, %v5836, %v5840
    %v5843 = vsel %vm1027, %v5830, %v5834
    %v5844 = vsel %vm1027, %v5832, %v5836
    %v5845 = vsel %vm1027, %v5826, %v5830
    %v5846 = vsel %vm1027, %v5828, %v5832
    %v5847 = vsel %vm1027, %v5822, %v5826
    %v5848 = vsel %vm1027, %v5824, %v5828
    %v5849 = vsel %vm1027, %v5818, %v5822
    %v5850 = vsel %vm1027, %v5820, %v5824
    %v5851 = vsel %vm1027, %v5814, %v5818
    %v5852 = vsel %vm1027, %v5816, %v5820
    %v5853 = vsel %vm1027, %v5810, %v5814
    %v5854 = vsel %vm1027, %v5812, %v5816
    %v5855 = vsel %vm1027, %v5838, %v5810
    %v5856 = vsel %vm1027, %v5840, %v5812
    %v5857 = vmul.f32 %v5855, %v1052
    %v5858 = vmul.f32 %v5853, %v1056
    %v5859 = vmul.f32 %v5851, %v1060
    %v5860 = vmul.f32 %v5849, %v1064
    %v5861 = vmul.f32 %v5847, %v1068
    %v5862 = vmul.f32 %v5845, %v1072
    %v5863 = vmul.f32 %v5843, %v1076
    %v5864 = vmul.f32 %v5841, %v1080
    %v5865 = vmul.f32 %v5856, %v1052
    %v5866 = vmul.f32 %v5854, %v1056
    %v5867 = vmul.f32 %v5852, %v1060
    %v5868 = vmul.f32 %v5850, %v1064
    %v5869 = vmul.f32 %v5848, %v1068
    %v5870 = vmul.f32 %v5846, %v1072
    %v5871 = vmul.f32 %v5844, %v1076
    %v5872 = vmul.f32 %v5842, %v1080
    %v5873 = vpack.c.bf16 %v5865, %v5857
    %v5874 = vpack.c.bf16 %v5866, %v5858
    %v5875 = vpack.c.bf16 %v5867, %v5859
    %v5876 = vpack.c.bf16 %v5868, %v5860
    %v5877 = vpack.c.bf16 %v5869, %v5861
    %v5878 = vpack.c.bf16 %v5870, %v5862
    %v5879 = vpack.c.bf16 %v5871, %v5863
    %v5880 = vpack.c.bf16 %v5872, %v5864
    %5881 = vrot.lane.b32.xlu0 %v5289, 55
    %v5882 = vpop.permute.xlu0 %5881
    %5883 = vrot.lane.b32.xlu0 %v5297, 55
    %v5884 = vpop.permute.xlu0 %5883
    %5885 = vrot.lane.b32.xlu0 %v5290, 55
    %v5886 = vpop.permute.xlu0 %5885
    %5887 = vrot.lane.b32.xlu0 %v5298, 55
    %v5888 = vpop.permute.xlu0 %5887
    %5889 = vrot.lane.b32.xlu0 %v5291, 55
    %v5890 = vpop.permute.xlu0 %5889
    %5891 = vrot.lane.b32.xlu0 %v5299, 55
    %v5892 = vpop.permute.xlu0 %5891
    %5893 = vrot.lane.b32.xlu0 %v5292, 55
    %v5894 = vpop.permute.xlu0 %5893
    %5895 = vrot.lane.b32.xlu0 %v5300, 55
    %v5896 = vpop.permute.xlu0 %5895
    %5897 = vrot.lane.b32.xlu0 %v5293, 55
    %v5898 = vpop.permute.xlu0 %5897
    %5899 = vrot.lane.b32.xlu0 %v5301, 55
    %v5900 = vpop.permute.xlu0 %5899
    %5901 = vrot.lane.b32.xlu0 %v5294, 55
    %v5902 = vpop.permute.xlu0 %5901
    %5903 = vrot.lane.b32.xlu0 %v5302, 55
    %v5904 = vpop.permute.xlu0 %5903
    %5905 = vrot.lane.b32.xlu0 %v5295, 55
    %v5906 = vpop.permute.xlu0 %5905
    %5907 = vrot.lane.b32.xlu0 %v5303, 55
    %v5908 = vpop.permute.xlu0 %5907
    %5909 = vrot.lane.b32.xlu0 %v5296, 55
    %v5910 = vpop.permute.xlu0 %5909
    %5911 = vrot.lane.b32.xlu0 %v5304, 55
    %v5912 = vpop.permute.xlu0 %5911
    %v5913 = vsel %vm1145, %v5906, %v5910
    %v5914 = vsel %vm1145, %v5908, %v5912
    %v5915 = vsel %vm1145, %v5902, %v5906
    %v5916 = vsel %vm1145, %v5904, %v5908
    %v5917 = vsel %vm1145, %v5898, %v5902
    %v5918 = vsel %vm1145, %v5900, %v5904
    %v5919 = vsel %vm1145, %v5894, %v5898
    %v5920 = vsel %vm1145, %v5896, %v5900
    %v5921 = vsel %vm1145, %v5890, %v5894
    %v5922 = vsel %vm1145, %v5892, %v5896
    %v5923 = vsel %vm1145, %v5886, %v5890
    %v5924 = vsel %vm1145, %v5888, %v5892
    %v5925 = vsel %vm1145, %v5882, %v5886
    %v5926 = vsel %vm1145, %v5884, %v5888
    %v5927 = vsel %vm1145, %v5910, %v5882
    %v5928 = vsel %vm1145, %v5912, %v5884
    %v5929 = vmul.f32 %v5927, %v1170
    %v5930 = vmul.f32 %v5925, %v1174
    %v5931 = vmul.f32 %v5923, %v1178
    %v5932 = vmul.f32 %v5921, %v1182
    %v5933 = vmul.f32 %v5919, %v1186
    %v5934 = vmul.f32 %v5917, %v1190
    %v5935 = vmul.f32 %v5915, %v1194
    %v5936 = vmul.f32 %v5913, %v1198
    %v5937 = vmul.f32 %v5928, %v1170
    %v5938 = vmul.f32 %v5926, %v1174
    %v5939 = vmul.f32 %v5924, %v1178
    %v5940 = vmul.f32 %v5922, %v1182
    %v5941 = vmul.f32 %v5920, %v1186
    %v5942 = vmul.f32 %v5918, %v1190
    %v5943 = vmul.f32 %v5916, %v1194
    %v5944 = vmul.f32 %v5914, %v1198
    %v5945 = vpack.c.bf16 %v5937, %v5929
    %v5946 = vpack.c.bf16 %v5938, %v5930
    %v5947 = vpack.c.bf16 %v5939, %v5931
    %v5948 = vpack.c.bf16 %v5940, %v5932
    %v5949 = vpack.c.bf16 %v5941, %v5933
    %v5950 = vpack.c.bf16 %v5942, %v5934
    %v5951 = vpack.c.bf16 %v5943, %v5935
    %v5952 = vpack.c.bf16 %v5944, %v5936
    %5953 = vrot.lane.b32.xlu0 %v5289, 9
    %v5954 = vpop.permute.xlu0 %5953
    %5955 = vrot.lane.b32.xlu0 %v5297, 9
    %v5956 = vpop.permute.xlu0 %5955
    %5957 = vrot.lane.b32.xlu0 %v5290, 9
    %v5958 = vpop.permute.xlu0 %5957
    %5959 = vrot.lane.b32.xlu0 %v5298, 9
    %v5960 = vpop.permute.xlu0 %5959
    %5961 = vrot.lane.b32.xlu0 %v5291, 9
    %v5962 = vpop.permute.xlu0 %5961
    %5963 = vrot.lane.b32.xlu0 %v5299, 9
    %v5964 = vpop.permute.xlu0 %5963
    %5965 = vrot.lane.b32.xlu0 %v5292, 9
    %v5966 = vpop.permute.xlu0 %5965
    %5967 = vrot.lane.b32.xlu0 %v5300, 9
    %v5968 = vpop.permute.xlu0 %5967
    %5969 = vrot.lane.b32.xlu0 %v5293, 9
    %v5970 = vpop.permute.xlu0 %5969
    %5971 = vrot.lane.b32.xlu0 %v5301, 9
    %v5972 = vpop.permute.xlu0 %5971
    %5973 = vrot.lane.b32.xlu0 %v5294, 9
    %v5974 = vpop.permute.xlu0 %5973
    %5975 = vrot.lane.b32.xlu0 %v5302, 9
    %v5976 = vpop.permute.xlu0 %5975
    %5977 = vrot.lane.b32.xlu0 %v5295, 9
    %v5978 = vpop.permute.xlu0 %5977
    %5979 = vrot.lane.b32.xlu0 %v5303, 9
    %v5980 = vpop.permute.xlu0 %5979
    %5981 = vrot.lane.b32.xlu0 %v5296, 9
    %v5982 = vpop.permute.xlu0 %5981
    %5983 = vrot.lane.b32.xlu0 %v5304, 9
    %v5984 = vpop.permute.xlu0 %5983
    %v5985 = vsel %vm1263, %v5978, %v5982
    %v5986 = vsel %vm1263, %v5980, %v5984
    %v5987 = vsel %vm1263, %v5974, %v5978
    %v5988 = vsel %vm1263, %v5976, %v5980
    %v5989 = vsel %vm1263, %v5970, %v5974
    %v5990 = vsel %vm1263, %v5972, %v5976
    %v5991 = vsel %vm1263, %v5966, %v5970
    %v5992 = vsel %vm1263, %v5968, %v5972
    %v5993 = vsel %vm1263, %v5962, %v5966
    %v5994 = vsel %vm1263, %v5964, %v5968
    %v5995 = vsel %vm1263, %v5958, %v5962
    %v5996 = vsel %vm1263, %v5960, %v5964
    %v5997 = vsel %vm1263, %v5954, %v5958
    %v5998 = vsel %vm1263, %v5956, %v5960
    %v5999 = vsel %vm1263, %v5982, %v5954
    %v6000 = vsel %vm1263, %v5984, %v5956
    %v6001 = vmul.f32 %v5999, %v1288
    %v6002 = vmul.f32 %v5997, %v1292
    %v6003 = vmul.f32 %v5995, %v1296
    %v6004 = vmul.f32 %v5993, %v1300
    %v6005 = vmul.f32 %v5991, %v1304
    %v6006 = vmul.f32 %v5989, %v1308
    %v6007 = vmul.f32 %v5987, %v1312
    %v6008 = vmul.f32 %v5985, %v1316
    %v6009 = vmul.f32 %v6000, %v1288
    %v6010 = vmul.f32 %v5998, %v1292
    %v6011 = vmul.f32 %v5996, %v1296
    %v6012 = vmul.f32 %v5994, %v1300
    %v6013 = vmul.f32 %v5992, %v1304
    %v6014 = vmul.f32 %v5990, %v1308
    %v6015 = vmul.f32 %v5988, %v1312
    %v6016 = vmul.f32 %v5986, %v1316
    %v6017 = vpack.c.bf16 %v6009, %v6001
    %v6018 = vpack.c.bf16 %v6010, %v6002
    %v6019 = vpack.c.bf16 %v6011, %v6003
    %v6020 = vpack.c.bf16 %v6012, %v6004
    %v6021 = vpack.c.bf16 %v6013, %v6005
    %v6022 = vpack.c.bf16 %v6014, %v6006
    %v6023 = vpack.c.bf16 %v6015, %v6007
    %v6024 = vpack.c.bf16 %v6016, %v6008
    %6025 = vrot.lane.b32.xlu0 %v5289, 8
    %v6026 = vpop.permute.xlu0 %6025
    %6027 = vrot.lane.b32.xlu0 %v5297, 8
    %v6028 = vpop.permute.xlu0 %6027
    %6029 = vrot.lane.b32.xlu0 %v5290, 8
    %v6030 = vpop.permute.xlu0 %6029
    %6031 = vrot.lane.b32.xlu0 %v5298, 8
    %v6032 = vpop.permute.xlu0 %6031
    %6033 = vrot.lane.b32.xlu0 %v5291, 8
    %v6034 = vpop.permute.xlu0 %6033
    %6035 = vrot.lane.b32.xlu0 %v5299, 8
    %v6036 = vpop.permute.xlu0 %6035
    %6037 = vrot.lane.b32.xlu0 %v5292, 8
    %v6038 = vpop.permute.xlu0 %6037
    %6039 = vrot.lane.b32.xlu0 %v5300, 8
    %v6040 = vpop.permute.xlu0 %6039
    %6041 = vrot.lane.b32.xlu0 %v5293, 8
    %v6042 = vpop.permute.xlu0 %6041
    %6043 = vrot.lane.b32.xlu0 %v5301, 8
    %v6044 = vpop.permute.xlu0 %6043
    %6045 = vrot.lane.b32.xlu0 %v5294, 8
    %v6046 = vpop.permute.xlu0 %6045
    %6047 = vrot.lane.b32.xlu0 %v5302, 8
    %v6048 = vpop.permute.xlu0 %6047
    %6049 = vrot.lane.b32.xlu0 %v5295, 8
    %v6050 = vpop.permute.xlu0 %6049
    %6051 = vrot.lane.b32.xlu0 %v5303, 8
    %v6052 = vpop.permute.xlu0 %6051
    %6053 = vrot.lane.b32.xlu0 %v5296, 8
    %v6054 = vpop.permute.xlu0 %6053
    %6055 = vrot.lane.b32.xlu0 %v5304, 8
    %v6056 = vpop.permute.xlu0 %6055
    %v6057 = vsel %vm1381, %v6050, %v6054
    %v6058 = vsel %vm1381, %v6052, %v6056
    %v6059 = vsel %vm1381, %v6046, %v6050
    %v6060 = vsel %vm1381, %v6048, %v6052
    %v6061 = vsel %vm1381, %v6042, %v6046
    %v6062 = vsel %vm1381, %v6044, %v6048
    %v6063 = vsel %vm1381, %v6038, %v6042
    %v6064 = vsel %vm1381, %v6040, %v6044
    %v6065 = vsel %vm1381, %v6034, %v6038
    %v6066 = vsel %vm1381, %v6036, %v6040
    %v6067 = vsel %vm1381, %v6030, %v6034
    %v6068 = vsel %vm1381, %v6032, %v6036
    %v6069 = vsel %vm1381, %v6026, %v6030
    %v6070 = vsel %vm1381, %v6028, %v6032
    %v6071 = vsel %vm1381, %v6054, %v6026
    %v6072 = vsel %vm1381, %v6056, %v6028
    %v6073 = vmul.f32 %v6071, %v1406
    %v6074 = vmul.f32 %v6069, %v1410
    %v6075 = vmul.f32 %v6067, %v1414
    %v6076 = vmul.f32 %v6065, %v1418
    %v6077 = vmul.f32 %v6063, %v1422
    %v6078 = vmul.f32 %v6061, %v1426
    %v6079 = vmul.f32 %v6059, %v1430
    %v6080 = vmul.f32 %v6057, %v1434
    %v6081 = vmul.f32 %v6072, %v1406
    %v6082 = vmul.f32 %v6070, %v1410
    %v6083 = vmul.f32 %v6068, %v1414
    %v6084 = vmul.f32 %v6066, %v1418
    %v6085 = vmul.f32 %v6064, %v1422
    %v6086 = vmul.f32 %v6062, %v1426
    %v6087 = vmul.f32 %v6060, %v1430
    %v6088 = vmul.f32 %v6058, %v1434
    %v6089 = vpack.c.bf16 %v6081, %v6073
    %v6090 = vpack.c.bf16 %v6082, %v6074
    %v6091 = vpack.c.bf16 %v6083, %v6075
    %v6092 = vpack.c.bf16 %v6084, %v6076
    %v6093 = vpack.c.bf16 %v6085, %v6077
    %v6094 = vpack.c.bf16 %v6086, %v6078
    %v6095 = vpack.c.bf16 %v6087, %v6079
    %v6096 = vpack.c.bf16 %v6088, %v6080
    %6097 = vrot.lane.b32.xlu0 %v5289, 7
    %v6098 = vpop.permute.xlu0 %6097
    %6099 = vrot.lane.b32.xlu0 %v5297, 7
    %v6100 = vpop.permute.xlu0 %6099
    %6101 = vrot.lane.b32.xlu0 %v5290, 7
    %v6102 = vpop.permute.xlu0 %6101
    %6103 = vrot.lane.b32.xlu0 %v5298, 7
    %v6104 = vpop.permute.xlu0 %6103
    %6105 = vrot.lane.b32.xlu0 %v5291, 7
    %v6106 = vpop.permute.xlu0 %6105
    %6107 = vrot.lane.b32.xlu0 %v5299, 7
    %v6108 = vpop.permute.xlu0 %6107
    %6109 = vrot.lane.b32.xlu0 %v5292, 7
    %v6110 = vpop.permute.xlu0 %6109
    %6111 = vrot.lane.b32.xlu0 %v5300, 7
    %v6112 = vpop.permute.xlu0 %6111
    %6113 = vrot.lane.b32.xlu0 %v5293, 7
    %v6114 = vpop.permute.xlu0 %6113
    %6115 = vrot.lane.b32.xlu0 %v5301, 7
    %v6116 = vpop.permute.xlu0 %6115
    %6117 = vrot.lane.b32.xlu0 %v5294, 7
    %v6118 = vpop.permute.xlu0 %6117
    %6119 = vrot.lane.b32.xlu0 %v5302, 7
    %v6120 = vpop.permute.xlu0 %6119
    %6121 = vrot.lane.b32.xlu0 %v5295, 7
    %v6122 = vpop.permute.xlu0 %6121
    %6123 = vrot.lane.b32.xlu0 %v5303, 7
    %v6124 = vpop.permute.xlu0 %6123
    %6125 = vrot.lane.b32.xlu0 %v5296, 7
    %v6126 = vpop.permute.xlu0 %6125
    %6127 = vrot.lane.b32.xlu0 %v5304, 7
    %v6128 = vpop.permute.xlu0 %6127
    %v6129 = vsel %vm1499, %v6122, %v6126
    %v6130 = vsel %vm1499, %v6124, %v6128
    %v6131 = vsel %vm1499, %v6118, %v6122
    %v6132 = vsel %vm1499, %v6120, %v6124
    %v6133 = vsel %vm1499, %v6114, %v6118
    %v6134 = vsel %vm1499, %v6116, %v6120
    %v6135 = vsel %vm1499, %v6110, %v6114
    %v6136 = vsel %vm1499, %v6112, %v6116
    %v6137 = vsel %vm1499, %v6106, %v6110
    %v6138 = vsel %vm1499, %v6108, %v6112
    %v6139 = vsel %vm1499, %v6102, %v6106
    %v6140 = vsel %vm1499, %v6104, %v6108
    %v6141 = vsel %vm1499, %v6098, %v6102
    %v6142 = vsel %vm1499, %v6100, %v6104
    %v6143 = vsel %vm1499, %v6126, %v6098
    %v6144 = vsel %vm1499, %v6128, %v6100
    %v6145 = vmul.f32 %v6143, %v1524
    %v6146 = vmul.f32 %v6141, %v1528
    %v6147 = vmul.f32 %v6139, %v1532
    %v6148 = vmul.f32 %v6137, %v1536
    %v6149 = vmul.f32 %v6135, %v1540
    %v6150 = vmul.f32 %v6133, %v1544
    %v6151 = vmul.f32 %v6131, %v1548
    %v6152 = vmul.f32 %v6129, %v1552
    %v6153 = vmul.f32 %v6144, %v1524
    %v6154 = vmul.f32 %v6142, %v1528
    %v6155 = vmul.f32 %v6140, %v1532
    %v6156 = vmul.f32 %v6138, %v1536
    %v6157 = vmul.f32 %v6136, %v1540
    %v6158 = vmul.f32 %v6134, %v1544
    %v6159 = vmul.f32 %v6132, %v1548
    %v6160 = vmul.f32 %v6130, %v1552
    %v6161 = vpack.c.bf16 %v6153, %v6145
    %v6162 = vpack.c.bf16 %v6154, %v6146
    %v6163 = vpack.c.bf16 %v6155, %v6147
    %v6164 = vpack.c.bf16 %v6156, %v6148
    %v6165 = vpack.c.bf16 %v6157, %v6149
    %v6166 = vpack.c.bf16 %v6158, %v6150
    %v6167 = vpack.c.bf16 %v6159, %v6151
    %v6168 = vpack.c.bf16 %v6160, %v6152
    %6169 = vrot.lane.b32.xlu0 %v5289, 1
    %v6170 = vpop.permute.xlu0 %6169
    %6171 = vrot.lane.b32.xlu0 %v5297, 1
    %v6172 = vpop.permute.xlu0 %6171
    %6173 = vrot.lane.b32.xlu0 %v5290, 1
    %v6174 = vpop.permute.xlu0 %6173
    %6175 = vrot.lane.b32.xlu0 %v5298, 1
    %v6176 = vpop.permute.xlu0 %6175
    %6177 = vrot.lane.b32.xlu0 %v5291, 1
    %v6178 = vpop.permute.xlu0 %6177
    %6179 = vrot.lane.b32.xlu0 %v5299, 1
    %v6180 = vpop.permute.xlu0 %6179
    %6181 = vrot.lane.b32.xlu0 %v5292, 1
    %v6182 = vpop.permute.xlu0 %6181
    %6183 = vrot.lane.b32.xlu0 %v5300, 1
    %v6184 = vpop.permute.xlu0 %6183
    %6185 = vrot.lane.b32.xlu0 %v5293, 1
    %v6186 = vpop.permute.xlu0 %6185
    %6187 = vrot.lane.b32.xlu0 %v5301, 1
    %v6188 = vpop.permute.xlu0 %6187
    %6189 = vrot.lane.b32.xlu0 %v5294, 1
    %v6190 = vpop.permute.xlu0 %6189
    %6191 = vrot.lane.b32.xlu0 %v5302, 1
    %v6192 = vpop.permute.xlu0 %6191
    %6193 = vrot.lane.b32.xlu0 %v5295, 1
    %v6194 = vpop.permute.xlu0 %6193
    %6195 = vrot.lane.b32.xlu0 %v5303, 1
    %v6196 = vpop.permute.xlu0 %6195
    %6197 = vrot.lane.b32.xlu0 %v5296, 1
    %v6198 = vpop.permute.xlu0 %6197
    %6199 = vrot.lane.b32.xlu0 %v5304, 1
    %v6200 = vpop.permute.xlu0 %6199
    %v6201 = vsel %vm1617, %v6194, %v6198
    %v6202 = vsel %vm1617, %v6196, %v6200
    %v6203 = vsel %vm1617, %v6190, %v6194
    %v6204 = vsel %vm1617, %v6192, %v6196
    %v6205 = vsel %vm1617, %v6186, %v6190
    %v6206 = vsel %vm1617, %v6188, %v6192
    %v6207 = vsel %vm1617, %v6182, %v6186
    %v6208 = vsel %vm1617, %v6184, %v6188
    %v6209 = vsel %vm1617, %v6178, %v6182
    %v6210 = vsel %vm1617, %v6180, %v6184
    %v6211 = vsel %vm1617, %v6174, %v6178
    %v6212 = vsel %vm1617, %v6176, %v6180
    %v6213 = vsel %vm1617, %v6170, %v6174
    %v6214 = vsel %vm1617, %v6172, %v6176
    %v6215 = vsel %vm1617, %v6198, %v6170
    %v6216 = vsel %vm1617, %v6200, %v6172
    %v6217 = vmul.f32 %v6215, %v1642
    %v6218 = vmul.f32 %v6213, %v1646
    %v6219 = vmul.f32 %v6211, %v1650
    %v6220 = vmul.f32 %v6209, %v1654
    %v6221 = vmul.f32 %v6207, %v1658
    %v6222 = vmul.f32 %v6205, %v1662
    %v6223 = vmul.f32 %v6203, %v1666
    %v6224 = vmul.f32 %v6201, %v1670
    %v6225 = vmul.f32 %v6216, %v1642
    %v6226 = vmul.f32 %v6214, %v1646
    %v6227 = vmul.f32 %v6212, %v1650
    %v6228 = vmul.f32 %v6210, %v1654
    %v6229 = vmul.f32 %v6208, %v1658
    %v6230 = vmul.f32 %v6206, %v1662
    %v6231 = vmul.f32 %v6204, %v1666
    %v6232 = vmul.f32 %v6202, %v1670
    %v6233 = vpack.c.bf16 %v6225, %v6217
    %v6234 = vpack.c.bf16 %v6226, %v6218
    %v6235 = vpack.c.bf16 %v6227, %v6219
    %v6236 = vpack.c.bf16 %v6228, %v6220
    %v6237 = vpack.c.bf16 %v6229, %v6221
    %v6238 = vpack.c.bf16 %v6230, %v6222
    %v6239 = vpack.c.bf16 %v6231, %v6223
    %v6240 = vpack.c.bf16 %v6232, %v6224
    %v6241 = vpack.c.bf16 %v5297, %v5289
    %v6242 = vpack.c.bf16 %v5298, %v5290
    %v6243 = vpack.c.bf16 %v5299, %v5291
    %v6244 = vpack.c.bf16 %v5300, %v5292
    %v6245 = vpack.c.bf16 %v5301, %v5293
    %v6246 = vpack.c.bf16 %v5302, %v5294
    %v6247 = vpack.c.bf16 %v5303, %v5295
    %v6248 = vpack.c.bf16 %v5304, %v5296
    %6249 = vrot.lane.b32.xlu0 %v5289, 127
    %v6250 = vpop.permute.xlu0 %6249
    %6251 = vrot.lane.b32.xlu0 %v5297, 127
    %v6252 = vpop.permute.xlu0 %6251
    %6253 = vrot.lane.b32.xlu0 %v5290, 127
    %v6254 = vpop.permute.xlu0 %6253
    %6255 = vrot.lane.b32.xlu0 %v5298, 127
    %v6256 = vpop.permute.xlu0 %6255
    %6257 = vrot.lane.b32.xlu0 %v5291, 127
    %v6258 = vpop.permute.xlu0 %6257
    %6259 = vrot.lane.b32.xlu0 %v5299, 127
    %v6260 = vpop.permute.xlu0 %6259
    %6261 = vrot.lane.b32.xlu0 %v5292, 127
    %v6262 = vpop.permute.xlu0 %6261
    %6263 = vrot.lane.b32.xlu0 %v5300, 127
    %v6264 = vpop.permute.xlu0 %6263
    %6265 = vrot.lane.b32.xlu0 %v5293, 127
    %v6266 = vpop.permute.xlu0 %6265
    %6267 = vrot.lane.b32.xlu0 %v5301, 127
    %v6268 = vpop.permute.xlu0 %6267
    %6269 = vrot.lane.b32.xlu0 %v5294, 127
    %v6270 = vpop.permute.xlu0 %6269
    %6271 = vrot.lane.b32.xlu0 %v5302, 127
    %v6272 = vpop.permute.xlu0 %6271
    %6273 = vrot.lane.b32.xlu0 %v5295, 127
    %v6274 = vpop.permute.xlu0 %6273
    %6275 = vrot.lane.b32.xlu0 %v5303, 127
    %v6276 = vpop.permute.xlu0 %6275
    %6277 = vrot.lane.b32.xlu0 %v5296, 127
    %v6278 = vpop.permute.xlu0 %6277
    %6279 = vrot.lane.b32.xlu0 %v5304, 127
    %v6280 = vpop.permute.xlu0 %6279
    %v6281 = vsel %vm1743, %v6274, %v6278
    %v6282 = vsel %vm1743, %v6276, %v6280
    %v6283 = vsel %vm1743, %v6270, %v6274
    %v6284 = vsel %vm1743, %v6272, %v6276
    %v6285 = vsel %vm1743, %v6266, %v6270
    %v6286 = vsel %vm1743, %v6268, %v6272
    %v6287 = vsel %vm1743, %v6262, %v6266
    %v6288 = vsel %vm1743, %v6264, %v6268
    %v6289 = vsel %vm1743, %v6258, %v6262
    %v6290 = vsel %vm1743, %v6260, %v6264
    %v6291 = vsel %vm1743, %v6254, %v6258
    %v6292 = vsel %vm1743, %v6256, %v6260
    %v6293 = vsel %vm1743, %v6250, %v6254
    %v6294 = vsel %vm1743, %v6252, %v6256
    %v6295 = vsel %vm1743, %v6278, %v6250
    %v6296 = vsel %vm1743, %v6280, %v6252
    %v6297 = vmul.f32 %v6293, %v1768
    %v6298 = vmul.f32 %v6291, %v1772
    %v6299 = vmul.f32 %v6289, %v1776
    %v6300 = vmul.f32 %v6287, %v1780
    %v6301 = vmul.f32 %v6285, %v1784
    %v6302 = vmul.f32 %v6283, %v1788
    %v6303 = vmul.f32 %v6281, %v1792
    %v6304 = vmul.f32 %v6295, %v1796
    %v6305 = vmul.f32 %v6294, %v1768
    %v6306 = vmul.f32 %v6292, %v1772
    %v6307 = vmul.f32 %v6290, %v1776
    %v6308 = vmul.f32 %v6288, %v1780
    %v6309 = vmul.f32 %v6286, %v1784
    %v6310 = vmul.f32 %v6284, %v1788
    %v6311 = vmul.f32 %v6282, %v1792
    %v6312 = vmul.f32 %v6296, %v1796
    %v6313 = vpack.c.bf16 %v6305, %v6297
    %v6314 = vpack.c.bf16 %v6306, %v6298
    %v6315 = vpack.c.bf16 %v6307, %v6299
    %v6316 = vpack.c.bf16 %v6308, %v6300
    %v6317 = vpack.c.bf16 %v6309, %v6301
    %v6318 = vpack.c.bf16 %v6310, %v6302
    %v6319 = vpack.c.bf16 %v6311, %v6303
    %v6320 = vpack.c.bf16 %v6312, %v6304
    %6321 = vrot.lane.b32.xlu0 %v5289, 121
    %v6322 = vpop.permute.xlu0 %6321
    %6323 = vrot.lane.b32.xlu0 %v5297, 121
    %v6324 = vpop.permute.xlu0 %6323
    %6325 = vrot.lane.b32.xlu0 %v5290, 121
    %v6326 = vpop.permute.xlu0 %6325
    %6327 = vrot.lane.b32.xlu0 %v5298, 121
    %v6328 = vpop.permute.xlu0 %6327
    %6329 = vrot.lane.b32.xlu0 %v5291, 121
    %v6330 = vpop.permute.xlu0 %6329
    %6331 = vrot.lane.b32.xlu0 %v5299, 121
    %v6332 = vpop.permute.xlu0 %6331
    %6333 = vrot.lane.b32.xlu0 %v5292, 121
    %v6334 = vpop.permute.xlu0 %6333
    %6335 = vrot.lane.b32.xlu0 %v5300, 121
    %v6336 = vpop.permute.xlu0 %6335
    %6337 = vrot.lane.b32.xlu0 %v5293, 121
    %v6338 = vpop.permute.xlu0 %6337
    %6339 = vrot.lane.b32.xlu0 %v5301, 121
    %v6340 = vpop.permute.xlu0 %6339
    %6341 = vrot.lane.b32.xlu0 %v5294, 121
    %v6342 = vpop.permute.xlu0 %6341
    %6343 = vrot.lane.b32.xlu0 %v5302, 121
    %v6344 = vpop.permute.xlu0 %6343
    %6345 = vrot.lane.b32.xlu0 %v5295, 121
    %v6346 = vpop.permute.xlu0 %6345
    %6347 = vrot.lane.b32.xlu0 %v5303, 121
    %v6348 = vpop.permute.xlu0 %6347
    %6349 = vrot.lane.b32.xlu0 %v5296, 121
    %v6350 = vpop.permute.xlu0 %6349
    %6351 = vrot.lane.b32.xlu0 %v5304, 121
    %v6352 = vpop.permute.xlu0 %6351
    %v6353 = vsel %vm1861, %v6346, %v6350
    %v6354 = vsel %vm1861, %v6348, %v6352
    %v6355 = vsel %vm1861, %v6342, %v6346
    %v6356 = vsel %vm1861, %v6344, %v6348
    %v6357 = vsel %vm1861, %v6338, %v6342
    %v6358 = vsel %vm1861, %v6340, %v6344
    %v6359 = vsel %vm1861, %v6334, %v6338
    %v6360 = vsel %vm1861, %v6336, %v6340
    %v6361 = vsel %vm1861, %v6330, %v6334
    %v6362 = vsel %vm1861, %v6332, %v6336
    %v6363 = vsel %vm1861, %v6326, %v6330
    %v6364 = vsel %vm1861, %v6328, %v6332
    %v6365 = vsel %vm1861, %v6322, %v6326
    %v6366 = vsel %vm1861, %v6324, %v6328
    %v6367 = vsel %vm1861, %v6350, %v6322
    %v6368 = vsel %vm1861, %v6352, %v6324
    %v6369 = vmul.f32 %v6365, %v1886
    %v6370 = vmul.f32 %v6363, %v1890
    %v6371 = vmul.f32 %v6361, %v1894
    %v6372 = vmul.f32 %v6359, %v1898
    %v6373 = vmul.f32 %v6357, %v1902
    %v6374 = vmul.f32 %v6355, %v1906
    %v6375 = vmul.f32 %v6353, %v1910
    %v6376 = vmul.f32 %v6367, %v1914
    %v6377 = vmul.f32 %v6366, %v1886
    %v6378 = vmul.f32 %v6364, %v1890
    %v6379 = vmul.f32 %v6362, %v1894
    %v6380 = vmul.f32 %v6360, %v1898
    %v6381 = vmul.f32 %v6358, %v1902
    %v6382 = vmul.f32 %v6356, %v1906
    %v6383 = vmul.f32 %v6354, %v1910
    %v6384 = vmul.f32 %v6368, %v1914
    %v6385 = vpack.c.bf16 %v6377, %v6369
    %v6386 = vpack.c.bf16 %v6378, %v6370
    %v6387 = vpack.c.bf16 %v6379, %v6371
    %v6388 = vpack.c.bf16 %v6380, %v6372
    %v6389 = vpack.c.bf16 %v6381, %v6373
    %v6390 = vpack.c.bf16 %v6382, %v6374
    %v6391 = vpack.c.bf16 %v6383, %v6375
    %v6392 = vpack.c.bf16 %v6384, %v6376
    %6393 = vrot.lane.b32.xlu0 %v5289, 120
    %v6394 = vpop.permute.xlu0 %6393
    %6395 = vrot.lane.b32.xlu0 %v5297, 120
    %v6396 = vpop.permute.xlu0 %6395
    %6397 = vrot.lane.b32.xlu0 %v5290, 120
    %v6398 = vpop.permute.xlu0 %6397
    %6399 = vrot.lane.b32.xlu0 %v5298, 120
    %v6400 = vpop.permute.xlu0 %6399
    %6401 = vrot.lane.b32.xlu0 %v5291, 120
    %v6402 = vpop.permute.xlu0 %6401
    %6403 = vrot.lane.b32.xlu0 %v5299, 120
    %v6404 = vpop.permute.xlu0 %6403
    %6405 = vrot.lane.b32.xlu0 %v5292, 120
    %v6406 = vpop.permute.xlu0 %6405
    %6407 = vrot.lane.b32.xlu0 %v5300, 120
    %v6408 = vpop.permute.xlu0 %6407
    %6409 = vrot.lane.b32.xlu0 %v5293, 120
    %v6410 = vpop.permute.xlu0 %6409
    %6411 = vrot.lane.b32.xlu0 %v5301, 120
    %v6412 = vpop.permute.xlu0 %6411
    %6413 = vrot.lane.b32.xlu0 %v5294, 120
    %v6414 = vpop.permute.xlu0 %6413
    %6415 = vrot.lane.b32.xlu0 %v5302, 120
    %v6416 = vpop.permute.xlu0 %6415
    %6417 = vrot.lane.b32.xlu0 %v5295, 120
    %v6418 = vpop.permute.xlu0 %6417
    %6419 = vrot.lane.b32.xlu0 %v5303, 120
    %v6420 = vpop.permute.xlu0 %6419
    %6421 = vrot.lane.b32.xlu0 %v5296, 120
    %v6422 = vpop.permute.xlu0 %6421
    %6423 = vrot.lane.b32.xlu0 %v5304, 120
    %v6424 = vpop.permute.xlu0 %6423
    %v6425 = vsel %vm1979, %v6418, %v6422
    %v6426 = vsel %vm1979, %v6420, %v6424
    %v6427 = vsel %vm1979, %v6414, %v6418
    %v6428 = vsel %vm1979, %v6416, %v6420
    %v6429 = vsel %vm1979, %v6410, %v6414
    %v6430 = vsel %vm1979, %v6412, %v6416
    %v6431 = vsel %vm1979, %v6406, %v6410
    %v6432 = vsel %vm1979, %v6408, %v6412
    %v6433 = vsel %vm1979, %v6402, %v6406
    %v6434 = vsel %vm1979, %v6404, %v6408
    %v6435 = vsel %vm1979, %v6398, %v6402
    %v6436 = vsel %vm1979, %v6400, %v6404
    %v6437 = vsel %vm1979, %v6394, %v6398
    %v6438 = vsel %vm1979, %v6396, %v6400
    %v6439 = vsel %vm1979, %v6422, %v6394
    %v6440 = vsel %vm1979, %v6424, %v6396
    %v6441 = vmul.f32 %v6437, %v2004
    %v6442 = vmul.f32 %v6435, %v2008
    %v6443 = vmul.f32 %v6433, %v2012
    %v6444 = vmul.f32 %v6431, %v2016
    %v6445 = vmul.f32 %v6429, %v2020
    %v6446 = vmul.f32 %v6427, %v2024
    %v6447 = vmul.f32 %v6425, %v2028
    %v6448 = vmul.f32 %v6439, %v2032
    %v6449 = vmul.f32 %v6438, %v2004
    %v6450 = vmul.f32 %v6436, %v2008
    %v6451 = vmul.f32 %v6434, %v2012
    %v6452 = vmul.f32 %v6432, %v2016
    %v6453 = vmul.f32 %v6430, %v2020
    %v6454 = vmul.f32 %v6428, %v2024
    %v6455 = vmul.f32 %v6426, %v2028
    %v6456 = vmul.f32 %v6440, %v2032
    %v6457 = vpack.c.bf16 %v6449, %v6441
    %v6458 = vpack.c.bf16 %v6450, %v6442
    %v6459 = vpack.c.bf16 %v6451, %v6443
    %v6460 = vpack.c.bf16 %v6452, %v6444
    %v6461 = vpack.c.bf16 %v6453, %v6445
    %v6462 = vpack.c.bf16 %v6454, %v6446
    %v6463 = vpack.c.bf16 %v6455, %v6447
    %v6464 = vpack.c.bf16 %v6456, %v6448
    %6465 = vrot.lane.b32.xlu0 %v5289, 119
    %v6466 = vpop.permute.xlu0 %6465
    %6467 = vrot.lane.b32.xlu0 %v5297, 119
    %v6468 = vpop.permute.xlu0 %6467
    %6469 = vrot.lane.b32.xlu0 %v5290, 119
    %v6470 = vpop.permute.xlu0 %6469
    %6471 = vrot.lane.b32.xlu0 %v5298, 119
    %v6472 = vpop.permute.xlu0 %6471
    %6473 = vrot.lane.b32.xlu0 %v5291, 119
    %v6474 = vpop.permute.xlu0 %6473
    %6475 = vrot.lane.b32.xlu0 %v5299, 119
    %v6476 = vpop.permute.xlu0 %6475
    %6477 = vrot.lane.b32.xlu0 %v5292, 119
    %v6478 = vpop.permute.xlu0 %6477
    %6479 = vrot.lane.b32.xlu0 %v5300, 119
    %v6480 = vpop.permute.xlu0 %6479
    %6481 = vrot.lane.b32.xlu0 %v5293, 119
    %v6482 = vpop.permute.xlu0 %6481
    %6483 = vrot.lane.b32.xlu0 %v5301, 119
    %v6484 = vpop.permute.xlu0 %6483
    %6485 = vrot.lane.b32.xlu0 %v5294, 119
    %v6486 = vpop.permute.xlu0 %6485
    %6487 = vrot.lane.b32.xlu0 %v5302, 119
    %v6488 = vpop.permute.xlu0 %6487
    %6489 = vrot.lane.b32.xlu0 %v5295, 119
    %v6490 = vpop.permute.xlu0 %6489
    %6491 = vrot.lane.b32.xlu0 %v5303, 119
    %v6492 = vpop.permute.xlu0 %6491
    %6493 = vrot.lane.b32.xlu0 %v5296, 119
    %v6494 = vpop.permute.xlu0 %6493
    %6495 = vrot.lane.b32.xlu0 %v5304, 119
    %v6496 = vpop.permute.xlu0 %6495
    %v6497 = vsel %vm2097, %v6490, %v6494
    %v6498 = vsel %vm2097, %v6492, %v6496
    %v6499 = vsel %vm2097, %v6486, %v6490
    %v6500 = vsel %vm2097, %v6488, %v6492
    %v6501 = vsel %vm2097, %v6482, %v6486
    %v6502 = vsel %vm2097, %v6484, %v6488
    %v6503 = vsel %vm2097, %v6478, %v6482
    %v6504 = vsel %vm2097, %v6480, %v6484
    %v6505 = vsel %vm2097, %v6474, %v6478
    %v6506 = vsel %vm2097, %v6476, %v6480
    %v6507 = vsel %vm2097, %v6470, %v6474
    %v6508 = vsel %vm2097, %v6472, %v6476
    %v6509 = vsel %vm2097, %v6466, %v6470
    %v6510 = vsel %vm2097, %v6468, %v6472
    %v6511 = vsel %vm2097, %v6494, %v6466
    %v6512 = vsel %vm2097, %v6496, %v6468
    %v6513 = vmul.f32 %v6509, %v2122
    %v6514 = vmul.f32 %v6507, %v2126
    %v6515 = vmul.f32 %v6505, %v2130
    %v6516 = vmul.f32 %v6503, %v2134
    %v6517 = vmul.f32 %v6501, %v2138
    %v6518 = vmul.f32 %v6499, %v2142
    %v6519 = vmul.f32 %v6497, %v2146
    %v6520 = vmul.f32 %v6511, %v2150
    %v6521 = vmul.f32 %v6510, %v2122
    %v6522 = vmul.f32 %v6508, %v2126
    %v6523 = vmul.f32 %v6506, %v2130
    %v6524 = vmul.f32 %v6504, %v2134
    %v6525 = vmul.f32 %v6502, %v2138
    %v6526 = vmul.f32 %v6500, %v2142
    %v6527 = vmul.f32 %v6498, %v2146
    %v6528 = vmul.f32 %v6512, %v2150
    %v6529 = vpack.c.bf16 %v6521, %v6513
    %v6530 = vpack.c.bf16 %v6522, %v6514
    %v6531 = vpack.c.bf16 %v6523, %v6515
    %v6532 = vpack.c.bf16 %v6524, %v6516
    %v6533 = vpack.c.bf16 %v6525, %v6517
    %v6534 = vpack.c.bf16 %v6526, %v6518
    %v6535 = vpack.c.bf16 %v6527, %v6519
    %v6536 = vpack.c.bf16 %v6528, %v6520
    %v6537 = vmul.f32 %v5349, %v2191
    %v6538 = vmul.f32 %v5347, %v2195
    %v6539 = vmul.f32 %v5345, %v2199
    %v6540 = vmul.f32 %v5343, %v2203
    %v6541 = vmul.f32 %v5341, %v2207
    %v6542 = vmul.f32 %v5339, %v2211
    %v6543 = vmul.f32 %v5337, %v2215
    %v6544 = vmul.f32 %v5351, %v2219
    %v6545 = vmul.f32 %v5350, %v2191
    %v6546 = vmul.f32 %v5348, %v2195
    %v6547 = vmul.f32 %v5346, %v2199
    %v6548 = vmul.f32 %v5344, %v2203
    %v6549 = vmul.f32 %v5342, %v2207
    %v6550 = vmul.f32 %v5340, %v2211
    %v6551 = vmul.f32 %v5338, %v2215
    %v6552 = vmul.f32 %v5352, %v2219
    %v6553 = vpack.c.bf16 %v6545, %v6537
    %v6554 = vpack.c.bf16 %v6546, %v6538
    %v6555 = vpack.c.bf16 %v6547, %v6539
    %v6556 = vpack.c.bf16 %v6548, %v6540
    %v6557 = vpack.c.bf16 %v6549, %v6541
    %v6558 = vpack.c.bf16 %v6550, %v6542
    %v6559 = vpack.c.bf16 %v6551, %v6543
    %v6560 = vpack.c.bf16 %v6552, %v6544
    %v6561 = vmul.f32 %v5421, %v2260
    %v6562 = vmul.f32 %v5419, %v2264
    %v6563 = vmul.f32 %v5417, %v2268
    %v6564 = vmul.f32 %v5415, %v2272
    %v6565 = vmul.f32 %v5413, %v2276
    %v6566 = vmul.f32 %v5411, %v2280
    %v6567 = vmul.f32 %v5409, %v2284
    %v6568 = vmul.f32 %v5423, %v2288
    %v6569 = vmul.f32 %v5422, %v2260
    %v6570 = vmul.f32 %v5420, %v2264
    %v6571 = vmul.f32 %v5418, %v2268
    %v6572 = vmul.f32 %v5416, %v2272
    %v6573 = vmul.f32 %v5414, %v2276
    %v6574 = vmul.f32 %v5412, %v2280
    %v6575 = vmul.f32 %v5410, %v2284
    %v6576 = vmul.f32 %v5424, %v2288
    %v6577 = vpack.c.bf16 %v6569, %v6561
    %v6578 = vpack.c.bf16 %v6570, %v6562
    %v6579 = vpack.c.bf16 %v6571, %v6563
    %v6580 = vpack.c.bf16 %v6572, %v6564
    %v6581 = vpack.c.bf16 %v6573, %v6565
    %v6582 = vpack.c.bf16 %v6574, %v6566
    %v6583 = vpack.c.bf16 %v6575, %v6567
    %v6584 = vpack.c.bf16 %v6576, %v6568
    %v6585 = vmul.f32 %v5493, %v2329
    %v6586 = vmul.f32 %v5491, %v2333
    %v6587 = vmul.f32 %v5489, %v2337
    %v6588 = vmul.f32 %v5487, %v2341
    %v6589 = vmul.f32 %v5485, %v2345
    %v6590 = vmul.f32 %v5483, %v2349
    %v6591 = vmul.f32 %v5481, %v2353
    %v6592 = vmul.f32 %v5495, %v2357
    %v6593 = vmul.f32 %v5494, %v2329
    %v6594 = vmul.f32 %v5492, %v2333
    %v6595 = vmul.f32 %v5490, %v2337
    %v6596 = vmul.f32 %v5488, %v2341
    %v6597 = vmul.f32 %v5486, %v2345
    %v6598 = vmul.f32 %v5484, %v2349
    %v6599 = vmul.f32 %v5482, %v2353
    %v6600 = vmul.f32 %v5496, %v2357
    %v6601 = vpack.c.bf16 %v6593, %v6585
    %v6602 = vpack.c.bf16 %v6594, %v6586
    %v6603 = vpack.c.bf16 %v6595, %v6587
    %v6604 = vpack.c.bf16 %v6596, %v6588
    %v6605 = vpack.c.bf16 %v6597, %v6589
    %v6606 = vpack.c.bf16 %v6598, %v6590
    %v6607 = vpack.c.bf16 %v6599, %v6591
    %v6608 = vpack.c.bf16 %v6600, %v6592
    %v6609 = vmul.f32 %v5565, %v2398
    %v6610 = vmul.f32 %v5563, %v2402
    %v6611 = vmul.f32 %v5561, %v2406
    %v6612 = vmul.f32 %v5559, %v2410
    %v6613 = vmul.f32 %v5557, %v2414
    %v6614 = vmul.f32 %v5555, %v2418
    %v6615 = vmul.f32 %v5553, %v2422
    %v6616 = vmul.f32 %v5567, %v2426
    %v6617 = vmul.f32 %v5566, %v2398
    %v6618 = vmul.f32 %v5564, %v2402
    %v6619 = vmul.f32 %v5562, %v2406
    %v6620 = vmul.f32 %v5560, %v2410
    %v6621 = vmul.f32 %v5558, %v2414
    %v6622 = vmul.f32 %v5556, %v2418
    %v6623 = vmul.f32 %v5554, %v2422
    %v6624 = vmul.f32 %v5568, %v2426
    %v6625 = vpack.c.bf16 %v6617, %v6609
    %v6626 = vpack.c.bf16 %v6618, %v6610
    %v6627 = vpack.c.bf16 %v6619, %v6611
    %v6628 = vpack.c.bf16 %v6620, %v6612
    %v6629 = vpack.c.bf16 %v6621, %v6613
    %v6630 = vpack.c.bf16 %v6622, %v6614
    %v6631 = vpack.c.bf16 %v6623, %v6615
    %v6632 = vpack.c.bf16 %v6624, %v6616
    %v6633 = vmul.f32 %v5637, %v2467
    %v6634 = vmul.f32 %v5635, %v2471
    %v6635 = vmul.f32 %v5633, %v2475
    %v6636 = vmul.f32 %v5631, %v2479
    %v6637 = vmul.f32 %v5629, %v2483
    %v6638 = vmul.f32 %v5627, %v2487
    %v6639 = vmul.f32 %v5625, %v2491
    %v6640 = vmul.f32 %v5639, %v2495
    %v6641 = vmul.f32 %v5638, %v2467
    %v6642 = vmul.f32 %v5636, %v2471
    %v6643 = vmul.f32 %v5634, %v2475
    %v6644 = vmul.f32 %v5632, %v2479
    %v6645 = vmul.f32 %v5630, %v2483
    %v6646 = vmul.f32 %v5628, %v2487
    %v6647 = vmul.f32 %v5626, %v2491
    %v6648 = vmul.f32 %v5640, %v2495
    %v6649 = vpack.c.bf16 %v6641, %v6633
    %v6650 = vpack.c.bf16 %v6642, %v6634
    %v6651 = vpack.c.bf16 %v6643, %v6635
    %v6652 = vpack.c.bf16 %v6644, %v6636
    %v6653 = vpack.c.bf16 %v6645, %v6637
    %v6654 = vpack.c.bf16 %v6646, %v6638
    %v6655 = vpack.c.bf16 %v6647, %v6639
    %v6656 = vpack.c.bf16 %v6648, %v6640
    %v6657 = vmul.f32 %v5709, %v2536
    %v6658 = vmul.f32 %v5707, %v2540
    %v6659 = vmul.f32 %v5705, %v2544
    %v6660 = vmul.f32 %v5703, %v2548
    %v6661 = vmul.f32 %v5701, %v2552
    %v6662 = vmul.f32 %v5699, %v2556
    %v6663 = vmul.f32 %v5697, %v2560
    %v6664 = vmul.f32 %v5711, %v2564
    %v6665 = vmul.f32 %v5710, %v2536
    %v6666 = vmul.f32 %v5708, %v2540
    %v6667 = vmul.f32 %v5706, %v2544
    %v6668 = vmul.f32 %v5704, %v2548
    %v6669 = vmul.f32 %v5702, %v2552
    %v6670 = vmul.f32 %v5700, %v2556
    %v6671 = vmul.f32 %v5698, %v2560
    %v6672 = vmul.f32 %v5712, %v2564
    %v6673 = vpack.c.bf16 %v6665, %v6657
    %v6674 = vpack.c.bf16 %v6666, %v6658
    %v6675 = vpack.c.bf16 %v6667, %v6659
    %v6676 = vpack.c.bf16 %v6668, %v6660
    %v6677 = vpack.c.bf16 %v6669, %v6661
    %v6678 = vpack.c.bf16 %v6670, %v6662
    %v6679 = vpack.c.bf16 %v6671, %v6663
    %v6680 = vpack.c.bf16 %v6672, %v6664
    %v6681 = vmul.f32 %v5781, %v2605
    %v6682 = vmul.f32 %v5779, %v2609
    %v6683 = vmul.f32 %v5777, %v2613
    %v6684 = vmul.f32 %v5775, %v2617
    %v6685 = vmul.f32 %v5773, %v2621
    %v6686 = vmul.f32 %v5771, %v2625
    %v6687 = vmul.f32 %v5769, %v2629
    %v6688 = vmul.f32 %v5783, %v2633
    %v6689 = vmul.f32 %v5782, %v2605
    %v6690 = vmul.f32 %v5780, %v2609
    %v6691 = vmul.f32 %v5778, %v2613
    %v6692 = vmul.f32 %v5776, %v2617
    %v6693 = vmul.f32 %v5774, %v2621
    %v6694 = vmul.f32 %v5772, %v2625
    %v6695 = vmul.f32 %v5770, %v2629
    %v6696 = vmul.f32 %v5784, %v2633
    %v6697 = vpack.c.bf16 %v6689, %v6681
    %v6698 = vpack.c.bf16 %v6690, %v6682
    %v6699 = vpack.c.bf16 %v6691, %v6683
    %v6700 = vpack.c.bf16 %v6692, %v6684
    %v6701 = vpack.c.bf16 %v6693, %v6685
    %v6702 = vpack.c.bf16 %v6694, %v6686
    %v6703 = vpack.c.bf16 %v6695, %v6687
    %v6704 = vpack.c.bf16 %v6696, %v6688
    %v6705 = vmul.f32 %v5853, %v2674
    %v6706 = vmul.f32 %v5851, %v2678
    %v6707 = vmul.f32 %v5849, %v2682
    %v6708 = vmul.f32 %v5847, %v2686
    %v6709 = vmul.f32 %v5845, %v2690
    %v6710 = vmul.f32 %v5843, %v2694
    %v6711 = vmul.f32 %v5841, %v2698
    %v6712 = vmul.f32 %v5855, %v2702
    %v6713 = vmul.f32 %v5854, %v2674
    %v6714 = vmul.f32 %v5852, %v2678
    %v6715 = vmul.f32 %v5850, %v2682
    %v6716 = vmul.f32 %v5848, %v2686
    %v6717 = vmul.f32 %v5846, %v2690
    %v6718 = vmul.f32 %v5844, %v2694
    %v6719 = vmul.f32 %v5842, %v2698
    %v6720 = vmul.f32 %v5856, %v2702
    %v6721 = vpack.c.bf16 %v6713, %v6705
    %v6722 = vpack.c.bf16 %v6714, %v6706
    %v6723 = vpack.c.bf16 %v6715, %v6707
    %v6724 = vpack.c.bf16 %v6716, %v6708
    %v6725 = vpack.c.bf16 %v6717, %v6709
    %v6726 = vpack.c.bf16 %v6718, %v6710
    %v6727 = vpack.c.bf16 %v6719, %v6711
    %v6728 = vpack.c.bf16 %v6720, %v6712
    %v6729 = vmul.f32 %v5925, %v2743
    %v6730 = vmul.f32 %v5923, %v2747
    %v6731 = vmul.f32 %v5921, %v2751
    %v6732 = vmul.f32 %v5919, %v2755
    %v6733 = vmul.f32 %v5917, %v2759
    %v6734 = vmul.f32 %v5915, %v2763
    %v6735 = vmul.f32 %v5913, %v2767
    %v6736 = vmul.f32 %v5927, %v2771
    %v6737 = vmul.f32 %v5926, %v2743
    %v6738 = vmul.f32 %v5924, %v2747
    %v6739 = vmul.f32 %v5922, %v2751
    %v6740 = vmul.f32 %v5920, %v2755
    %v6741 = vmul.f32 %v5918, %v2759
    %v6742 = vmul.f32 %v5916, %v2763
    %v6743 = vmul.f32 %v5914, %v2767
    %v6744 = vmul.f32 %v5928, %v2771
    %v6745 = vpack.c.bf16 %v6737, %v6729
    %v6746 = vpack.c.bf16 %v6738, %v6730
    %v6747 = vpack.c.bf16 %v6739, %v6731
    %v6748 = vpack.c.bf16 %v6740, %v6732
    %v6749 = vpack.c.bf16 %v6741, %v6733
    %v6750 = vpack.c.bf16 %v6742, %v6734
    %v6751 = vpack.c.bf16 %v6743, %v6735
    %v6752 = vpack.c.bf16 %v6744, %v6736
    %s6753 = scalar_lea.vmem %s2, 64
    %v6754 = vld [vmem:[%s6753] sm:$0xff]
    %v6755 = vld [vmem:[%s6753 + $0x8] sm:$0xff]
    %v6756 = vld [vmem:[%s6753 + $0x10] sm:$0xff]
    %v6757 = vld [vmem:[%s6753 + $0x18] sm:$0xff]
    %v6762 = vunpack.c.l.b16 %v6754
    %v6763 = vunpack.c.h.b16 %v6754
    %v6764 = vunpack.c.l.b16 %v6755
    %v6765 = vunpack.c.h.b16 %v6755
    %v6766 = vunpack.c.l.b16 %v6756
    %v6767 = vunpack.c.h.b16 %v6756
    %v6768 = vunpack.c.l.b16 %v6757
    %v6769 = vunpack.c.h.b16 %v6757
    %v6770 = vpack.c.b16 %v6766, %v6762
    %v6771 = vpack.c.b16 %v6767, %v6763
    %v6772 = vpack.c.b16 %v6768, %v6764
    %v6773 = vpack.c.b16 %v6769, %v6765
    %v6778 = vsel %vm2827, %v6773, 0
    %6780 = vmatprep.subr.bf16.mxu0 %v5370
    %6781 = vmatpush1.bf16.msra.mxu0 %v5369
    %6782 = vmatprep.subr.bf16.mxu0 %v5442
    %6783 = vmatpush1.bf16.msra.mxu0 %v5441
    %6784 = vmatprep.subr.bf16.mxu0 %v5514
    %6785 = vmatpush1.bf16.msra.mxu0 %v5513
    %6786 = vmatprep.subr.bf16.mxu0 %v5586
    %6787 = vmatpush1.bf16.msra.mxu0 %v5585
    %6788 = vmatprep.subr.bf16.mxu0 %v5658
    %6789 = vmatpush1.bf16.msra.mxu0 %v5657
    %6790 = vmatprep.subr.bf16.mxu0 %v5730
    %6791 = vmatpush1.bf16.msra.mxu0 %v5729
    %6792 = vmatprep.subr.bf16.mxu0 %v5802
    %6793 = vmatpush1.bf16.msra.mxu0 %v5801
    %6794 = vmatprep.subr.bf16.mxu0 %v5874
    %6795 = vmatpush1.bf16.msra.mxu0 %v5873
    %6796 = vmatprep.subr.bf16.mxu0 %v5946
    %6797 = vmatpush1.bf16.msra.mxu0 %v5945
    %6798 = vmatprep.subr.bf16.mxu0 %v6018
    %6799 = vmatpush1.bf16.msra.mxu0 %v6017
    %6800 = vmatprep.subr.bf16.mxu0 %v6090
    %6801 = vmatpush1.bf16.msra.mxu0 %v6089
    %6802 = vmatprep.subr.bf16.mxu0 %v6162
    %6803 = vmatpush1.bf16.msra.mxu0 %v6161
    %6804 = vmatprep.subr.bf16.mxu0 %v6234
    %6805 = vmatpush1.bf16.msra.mxu0 %v6233
    %6806 = vmatprep.subr.bf16.mxu0 %v6242
    %6807 = vmatpush1.bf16.msra.mxu0 %v6241
    %6808 = vmatprep.subr.bf16.mxu0 %v6314
    %6809 = vmatpush1.bf16.msra.mxu0 %v6313
    %6810 = vmatprep.subr.bf16.mxu0 %v6386
    %6811 = vmatpush1.bf16.msra.mxu0 %v6385
    %6812 = vmatprep.mubr.bf16.mxu0 %v6771
    %6813 = vmatmul.mubr.bf16.gmra.mrb[0].mxu0 %v6770
    %v6814 = vpop.f32.mrb[0].mxu0
    %v6815 = vadd.f32 0.0, %v6814
    %v6816 = vpop.f32.mrb[0].mxu0
    %v6817 = vadd.f32 0.0, %v6816
    %v6818 = vpop.f32.mrb[0].mxu0
    %v6819 = vadd.f32 0.0, %v6818
    %v6820 = vpop.f32.mrb[0].mxu0
    %v6821 = vadd.f32 0.0, %v6820
    %6822 = vdwg.mxu0
    %6823 = vmatprep.subr.bf16.mxu0 %v6458
    %6824 = vmatpush1.bf16.msra.mxu0 %v6457
    %6825 = vmatprep.subr.bf16.mxu0 %v6530
    %6826 = vmatpush1.bf16.msra.mxu0 %v6529
    %6827 = vmatprep.subr.bf16.mxu0 %v6554
    %6828 = vmatpush1.bf16.msra.mxu0 %v6553
    %6829 = vmatprep.subr.bf16.mxu0 %v6578
    %6830 = vmatpush1.bf16.msra.mxu0 %v6577
    %6831 = vmatprep.subr.bf16.mxu0 %v6602
    %6832 = vmatpush1.bf16.msra.mxu0 %v6601
    %6833 = vmatprep.subr.bf16.mxu0 %v6626
    %6834 = vmatpush1.bf16.msra.mxu0 %v6625
    %6835 = vmatprep.subr.bf16.mxu0 %v6650
    %6836 = vmatpush1.bf16.msra.mxu0 %v6649
    %6837 = vmatprep.subr.bf16.mxu0 %v6674
    %6838 = vmatpush1.bf16.msra.mxu0 %v6673
    %6839 = vmatprep.subr.bf16.mxu0 %v6698
    %6840 = vmatpush1.bf16.msra.mxu0 %v6697
    %6841 = vmatprep.subr.bf16.mxu0 %v6722
    %6842 = vmatpush1.bf16.msra.mxu0 %v6721
    %6843 = vmatprep.subr.bf16.mxu0 %v6746
    %6844 = vmatpush1.bf16.msra.mxu0 %v6745
    %6845 = vmatprep.subr.bf16.mxu0 0
    %6846 = vmatpush1.bf16.msra.mxu0 0
    %6847 = vmatprep.subr.bf16.mxu0 0
    %6848 = vmatpush1.bf16.msra.mxu0 0
    %6849 = vmatprep.subr.bf16.mxu0 0
    %6850 = vmatpush1.bf16.msra.mxu0 0
    %6851 = vmatprep.subr.bf16.mxu0 0
    %6852 = vmatpush1.bf16.msra.mxu0 0
    %6853 = vmatprep.subr.bf16.mxu0 0
    %6854 = vmatpush1.bf16.msra.mxu0 0
    %6855 = vmatprep.mubr.bf16.mxu0 %v6778
    %6856 = vmatmul.mubr.bf16.gmra.mrb[0].mxu0 %v6772
    %v6857 = vpop.f32.mrb[0].mxu0
    %v6858 = vadd.f32 %v6815, %v6857
    %v6859 = vpop.f32.mrb[0].mxu0
    %v6860 = vadd.f32 %v6817, %v6859
    %v6861 = vpop.f32.mrb[0].mxu0
    %v6862 = vadd.f32 %v6819, %v6861
    %v6863 = vpop.f32.mrb[0].mxu0
    %v6864 = vadd.f32 %v6821, %v6863
    %6865 = vdwg.mxu0
    %6866 = vmatprep.subr.bf16.mxu0 %v5372
    %6867 = vmatpush1.bf16.msra.mxu0 %v5371
    %6868 = vmatprep.subr.bf16.mxu0 %v5444
    %6869 = vmatpush1.bf16.msra.mxu0 %v5443
    %6870 = vmatprep.subr.bf16.mxu0 %v5516
    %6871 = vmatpush1.bf16.msra.mxu0 %v5515
    %6872 = vmatprep.subr.bf16.mxu0 %v5588
    %6873 = vmatpush1.bf16.msra.mxu0 %v5587
    %6874 = vmatprep.subr.bf16.mxu0 %v5660
    %6875 = vmatpush1.bf16.msra.mxu0 %v5659
    %6876 = vmatprep.subr.bf16.mxu0 %v5732
    %6877 = vmatpush1.bf16.msra.mxu0 %v5731
    %6878 = vmatprep.subr.bf16.mxu0 %v5804
    %6879 = vmatpush1.bf16.msra.mxu0 %v5803
    %6880 = vmatprep.subr.bf16.mxu0 %v5876
    %6881 = vmatpush1.bf16.msra.mxu0 %v5875
    %6882 = vmatprep.subr.bf16.mxu0 %v5948
    %6883 = vmatpush1.bf16.msra.mxu0 %v5947
    %6884 = vmatprep.subr.bf16.mxu0 %v6020
    %6885 = vmatpush1.bf16.msra.mxu0 %v6019
    %6886 = vmatprep.subr.bf16.mxu0 %v6092
    %6887 = vmatpush1.bf16.msra.mxu0 %v6091
    %6888 = vmatprep.subr.bf16.mxu0 %v6164
    %6889 = vmatpush1.bf16.msra.mxu0 %v6163
    %6890 = vmatprep.subr.bf16.mxu0 %v6236
    %6891 = vmatpush1.bf16.msra.mxu0 %v6235
    %6892 = vmatprep.subr.bf16.mxu0 %v6244
    %6893 = vmatpush1.bf16.msra.mxu0 %v6243
    %6894 = vmatprep.subr.bf16.mxu0 %v6316
    %6895 = vmatpush1.bf16.msra.mxu0 %v6315
    %6896 = vmatprep.subr.bf16.mxu0 %v6388
    %6897 = vmatpush1.bf16.msra.mxu0 %v6387
    %6898 = vmatprep.mubr.bf16.mxu0 %v6771
    %6899 = vmatmul.mubr.bf16.gmra.mrb[0].mxu0 %v6770
    %v6900 = vpop.f32.mrb[0].mxu0
    %v6901 = vadd.f32 0.0, %v6900
    %v6902 = vpop.f32.mrb[0].mxu0
    %v6903 = vadd.f32 0.0, %v6902
    %v6904 = vpop.f32.mrb[0].mxu0
    %v6905 = vadd.f32 0.0, %v6904
    %v6906 = vpop.f32.mrb[0].mxu0
    %v6907 = vadd.f32 0.0, %v6906
    %6908 = vdwg.mxu0
    %6909 = vmatprep.subr.bf16.mxu0 %v6460
    %6910 = vmatpush1.bf16.msra.mxu0 %v6459
    %6911 = vmatprep.subr.bf16.mxu0 %v6532
    %6912 = vmatpush1.bf16.msra.mxu0 %v6531
    %6913 = vmatprep.subr.bf16.mxu0 %v6556
    %6914 = vmatpush1.bf16.msra.mxu0 %v6555
    %6915 = vmatprep.subr.bf16.mxu0 %v6580
    %6916 = vmatpush1.bf16.msra.mxu0 %v6579
    %6917 = vmatprep.subr.bf16.mxu0 %v6604
    %6918 = vmatpush1.bf16.msra.mxu0 %v6603
    %6919 = vmatprep.subr.bf16.mxu0 %v6628
    %6920 = vmatpush1.bf16.msra.mxu0 %v6627
    %6921 = vmatprep.subr.bf16.mxu0 %v6652
    %6922 = vmatpush1.bf16.msra.mxu0 %v6651
    %6923 = vmatprep.subr.bf16.mxu0 %v6676
    %6924 = vmatpush1.bf16.msra.mxu0 %v6675
    %6925 = vmatprep.subr.bf16.mxu0 %v6700
    %6926 = vmatpush1.bf16.msra.mxu0 %v6699
    %6927 = vmatprep.subr.bf16.mxu0 %v6724
    %6928 = vmatpush1.bf16.msra.mxu0 %v6723
    %6929 = vmatprep.subr.bf16.mxu0 %v6748
    %6930 = vmatpush1.bf16.msra.mxu0 %v6747
    %6931 = vmatprep.subr.bf16.mxu0 0
    %6932 = vmatpush1.bf16.msra.mxu0 0
    %6933 = vmatprep.subr.bf16.mxu0 0
    %6934 = vmatpush1.bf16.msra.mxu0 0
    %6935 = vmatprep.subr.bf16.mxu0 0
    %6936 = vmatpush1.bf16.msra.mxu0 0
    %6937 = vmatprep.subr.bf16.mxu0 0
    %6938 = vmatpush1.bf16.msra.mxu0 0
    %6939 = vmatprep.subr.bf16.mxu0 0
    %6940 = vmatpush1.bf16.msra.mxu0 0
    %6941 = vmatprep.mubr.bf16.mxu0 %v6778
    %6942 = vmatmul.mubr.bf16.gmra.mrb[0].mxu0 %v6772
    %v6943 = vpop.f32.mrb[0].mxu0
    %v6944 = vadd.f32 %v6901, %v6943
    %v6945 = vpop.f32.mrb[0].mxu0
    %v6946 = vadd.f32 %v6903, %v6945
    %v6947 = vpop.f32.mrb[0].mxu0
    %v6948 = vadd.f32 %v6905, %v6947
    %v6949 = vpop.f32.mrb[0].mxu0
    %v6950 = vadd.f32 %v6907, %v6949
    %6951 = vdwg.mxu0
    %6952 = vmatprep.subr.bf16.mxu0 %v5374
    %6953 = vmatpush1.bf16.msra.mxu0 %v5373
    %6954 = vmatprep.subr.bf16.mxu0 %v5446
    %6955 = vmatpush1.bf16.msra.mxu0 %v5445
    %6956 = vmatprep.subr.bf16.mxu0 %v5518
    %6957 = vmatpush1.bf16.msra.mxu0 %v5517
    %6958 = vmatprep.subr.bf16.mxu0 %v5590
    %6959 = vmatpush1.bf16.msra.mxu0 %v5589
    %6960 = vmatprep.subr.bf16.mxu0 %v5662
    %6961 = vmatpush1.bf16.msra.mxu0 %v5661
    %6962 = vmatprep.subr.bf16.mxu0 %v5734
    %6963 = vmatpush1.bf16.msra.mxu0 %v5733
    %6964 = vmatprep.subr.bf16.mxu0 %v5806
    %6965 = vmatpush1.bf16.msra.mxu0 %v5805
    %6966 = vmatprep.subr.bf16.mxu0 %v5878
    %6967 = vmatpush1.bf16.msra.mxu0 %v5877
    %6968 = vmatprep.subr.bf16.mxu0 %v5950
    %6969 = vmatpush1.bf16.msra.mxu0 %v5949
    %6970 = vmatprep.subr.bf16.mxu0 %v6022
    %6971 = vmatpush1.bf16.msra.mxu0 %v6021
    %6972 = vmatprep.subr.bf16.mxu0 %v6094
    %6973 = vmatpush1.bf16.msra.mxu0 %v6093
    %6974 = vmatprep.subr.bf16.mxu0 %v6166
    %6975 = vmatpush1.bf16.msra.mxu0 %v6165
    %6976 = vmatprep.subr.bf16.mxu0 %v6238
    %6977 = vmatpush1.bf16.msra.mxu0 %v6237
    %6978 = vmatprep.subr.bf16.mxu0 %v6246
    %6979 = vmatpush1.bf16.msra.mxu0 %v6245
    %6980 = vmatprep.subr.bf16.mxu0 %v6318
    %6981 = vmatpush1.bf16.msra.mxu0 %v6317
    %6982 = vmatprep.subr.bf16.mxu0 %v6390
    %6983 = vmatpush1.bf16.msra.mxu0 %v6389
    %6984 = vmatprep.mubr.bf16.mxu0 %v6771
    %6985 = vmatmul.mubr.bf16.gmra.mrb[0].mxu0 %v6770
    %v6986 = vpop.f32.mrb[0].mxu0
    %v6987 = vadd.f32 0.0, %v6986
    %v6988 = vpop.f32.mrb[0].mxu0
    %v6989 = vadd.f32 0.0, %v6988
    %v6990 = vpop.f32.mrb[0].mxu0
    %v6991 = vadd.f32 0.0, %v6990
    %v6992 = vpop.f32.mrb[0].mxu0
    %v6993 = vadd.f32 0.0, %v6992
    %6994 = vdwg.mxu0
    %6995 = vmatprep.subr.bf16.mxu0 %v6462
    %6996 = vmatpush1.bf16.msra.mxu0 %v6461
    %6997 = vmatprep.subr.bf16.mxu0 %v6534
    %6998 = vmatpush1.bf16.msra.mxu0 %v6533
    %6999 = vmatprep.subr.bf16.mxu0 %v6558
    %7000 = vmatpush1.bf16.msra.mxu0 %v6557
    %7001 = vmatprep.subr.bf16.mxu0 %v6582
    %7002 = vmatpush1.bf16.msra.mxu0 %v6581
    %7003 = vmatprep.subr.bf16.mxu0 %v6606
    %7004 = vmatpush1.bf16.msra.mxu0 %v6605
    %7005 = vmatprep.subr.bf16.mxu0 %v6630
    %7006 = vmatpush1.bf16.msra.mxu0 %v6629
    %7007 = vmatprep.subr.bf16.mxu0 %v6654
    %7008 = vmatpush1.bf16.msra.mxu0 %v6653
    %7009 = vmatprep.subr.bf16.mxu0 %v6678
    %7010 = vmatpush1.bf16.msra.mxu0 %v6677
    %7011 = vmatprep.subr.bf16.mxu0 %v6702
    %7012 = vmatpush1.bf16.msra.mxu0 %v6701
    %7013 = vmatprep.subr.bf16.mxu0 %v6726
    %7014 = vmatpush1.bf16.msra.mxu0 %v6725
    %7015 = vmatprep.subr.bf16.mxu0 %v6750
    %7016 = vmatpush1.bf16.msra.mxu0 %v6749
    %7017 = vmatprep.subr.bf16.mxu0 0
    %7018 = vmatpush1.bf16.msra.mxu0 0
    %7019 = vmatprep.subr.bf16.mxu0 0
    %7020 = vmatpush1.bf16.msra.mxu0 0
    %7021 = vmatprep.subr.bf16.mxu0 0
    %7022 = vmatpush1.bf16.msra.mxu0 0
    %7023 = vmatprep.subr.bf16.mxu0 0
    %7024 = vmatpush1.bf16.msra.mxu0 0
    %7025 = vmatprep.subr.bf16.mxu0 0
    %7026 = vmatpush1.bf16.msra.mxu0 0
    %7027 = vmatprep.mubr.bf16.mxu0 %v6778
    %7028 = vmatmul.mubr.bf16.gmra.mrb[0].mxu0 %v6772
    %v7029 = vpop.f32.mrb[0].mxu0
    %v7030 = vadd.f32 %v6987, %v7029
    %v7031 = vpop.f32.mrb[0].mxu0
    %v7032 = vadd.f32 %v6989, %v7031
    %v7033 = vpop.f32.mrb[0].mxu0
    %v7034 = vadd.f32 %v6991, %v7033
    %v7035 = vpop.f32.mrb[0].mxu0
    %v7036 = vadd.f32 %v6993, %v7035
    %7037 = vdwg.mxu0
    %7038 = vmatprep.subr.bf16.mxu0 %v5376
    %7039 = vmatpush1.bf16.msra.mxu0 %v5375
    %7040 = vmatprep.subr.bf16.mxu0 %v5448
    %7041 = vmatpush1.bf16.msra.mxu0 %v5447
    %7042 = vmatprep.subr.bf16.mxu0 %v5520
    %7043 = vmatpush1.bf16.msra.mxu0 %v5519
    %7044 = vmatprep.subr.bf16.mxu0 %v5592
    %7045 = vmatpush1.bf16.msra.mxu0 %v5591
    %7046 = vmatprep.subr.bf16.mxu0 %v5664
    %7047 = vmatpush1.bf16.msra.mxu0 %v5663
    %7048 = vmatprep.subr.bf16.mxu0 %v5736
    %7049 = vmatpush1.bf16.msra.mxu0 %v5735
    %7050 = vmatprep.subr.bf16.mxu0 %v5808
    %7051 = vmatpush1.bf16.msra.mxu0 %v5807
    %7052 = vmatprep.subr.bf16.mxu0 %v5880
    %7053 = vmatpush1.bf16.msra.mxu0 %v5879
    %7054 = vmatprep.subr.bf16.mxu0 %v5952
    %7055 = vmatpush1.bf16.msra.mxu0 %v5951
    %7056 = vmatprep.subr.bf16.mxu0 %v6024
    %7057 = vmatpush1.bf16.msra.mxu0 %v6023
    %7058 = vmatprep.subr.bf16.mxu0 %v6096
    %7059 = vmatpush1.bf16.msra.mxu0 %v6095
    %7060 = vmatprep.subr.bf16.mxu0 %v6168
    %7061 = vmatpush1.bf16.msra.mxu0 %v6167
    %7062 = vmatprep.subr.bf16.mxu0 %v6240
    %7063 = vmatpush1.bf16.msra.mxu0 %v6239
    %7064 = vmatprep.subr.bf16.mxu0 %v6248
    %7065 = vmatpush1.bf16.msra.mxu0 %v6247
    %7066 = vmatprep.subr.bf16.mxu0 %v6320
    %7067 = vmatpush1.bf16.msra.mxu0 %v6319
    %7068 = vmatprep.subr.bf16.mxu0 %v6392
    %7069 = vmatpush1.bf16.msra.mxu0 %v6391
    %7070 = vmatprep.mubr.bf16.mxu0 %v6771
    %7071 = vmatmul.mubr.bf16.gmra.mrb[0].mxu0 %v6770
    %v7072 = vpop.f32.mrb[0].mxu0
    %v7073 = vadd.f32 0.0, %v7072
    %v7074 = vpop.f32.mrb[0].mxu0
    %v7075 = vadd.f32 0.0, %v7074
    %v7076 = vpop.f32.mrb[0].mxu0
    %v7077 = vadd.f32 0.0, %v7076
    %v7078 = vpop.f32.mrb[0].mxu0
    %v7079 = vadd.f32 0.0, %v7078
    %7080 = vdwg.mxu0
    %7081 = vmatprep.subr.bf16.mxu0 %v6464
    %7082 = vmatpush1.bf16.msra.mxu0 %v6463
    %7083 = vmatprep.subr.bf16.mxu0 %v6536
    %7084 = vmatpush1.bf16.msra.mxu0 %v6535
    %7085 = vmatprep.subr.bf16.mxu0 %v6560
    %7086 = vmatpush1.bf16.msra.mxu0 %v6559
    %7087 = vmatprep.subr.bf16.mxu0 %v6584
    %7088 = vmatpush1.bf16.msra.mxu0 %v6583
    %7089 = vmatprep.subr.bf16.mxu0 %v6608
    %7090 = vmatpush1.bf16.msra.mxu0 %v6607
    %7091 = vmatprep.subr.bf16.mxu0 %v6632
    %7092 = vmatpush1.bf16.msra.mxu0 %v6631
    %7093 = vmatprep.subr.bf16.mxu0 %v6656
    %7094 = vmatpush1.bf16.msra.mxu0 %v6655
    %7095 = vmatprep.subr.bf16.mxu0 %v6680
    %7096 = vmatpush1.bf16.msra.mxu0 %v6679
    %7097 = vmatprep.subr.bf16.mxu0 %v6704
    %7098 = vmatpush1.bf16.msra.mxu0 %v6703
    %7099 = vmatprep.subr.bf16.mxu0 %v6728
    %7100 = vmatpush1.bf16.msra.mxu0 %v6727
    %7101 = vmatprep.subr.bf16.mxu0 %v6752
    %7102 = vmatpush1.bf16.msra.mxu0 %v6751
    %7103 = vmatprep.subr.bf16.mxu0 0
    %7104 = vmatpush1.bf16.msra.mxu0 0
    %7105 = vmatprep.subr.bf16.mxu0 0
    %7106 = vmatpush1.bf16.msra.mxu0 0
    %7107 = vmatprep.subr.bf16.mxu0 0
    %7108 = vmatpush1.bf16.msra.mxu0 0
    %7109 = vmatprep.subr.bf16.mxu0 0
    %7110 = vmatpush1.bf16.msra.mxu0 0
    %7111 = vmatprep.subr.bf16.mxu0 0
    %7112 = vmatpush1.bf16.msra.mxu0 0
    %7113 = vmatprep.mubr.bf16.mxu0 %v6778
    %7114 = vmatmul.mubr.bf16.gmra.mrb[0].mxu0 %v6772
    %v7115 = vpop.f32.mrb[0].mxu0
    %v7116 = vadd.f32 %v7073, %v7115
    %v7117 = vpop.f32.mrb[0].mxu0
    %v7118 = vadd.f32 %v7075, %v7117
    %v7119 = vpop.f32.mrb[0].mxu0
    %v7120 = vadd.f32 %v7077, %v7119
    %v7121 = vpop.f32.mrb[0].mxu0
    %v7122 = vadd.f32 %v7079, %v7121
    %7123 = vdwg.mxu0
    %v7124 = vadd.f32 %v6858, %v6860
    %v7125 = vadd.f32 %v7124, %v6944
    %v7126 = vadd.f32 %v7125, %v6946
    %v7127 = vadd.f32 %v7126, %v7030
    %v7128 = vadd.f32 %v7127, %v7032
    %v7129 = vadd.f32 %v7128, %v7116
    %v7130 = vadd.f32 %v7129, %v7118
    %7131 = vadd.xlane.f32.xlu0 %v7130
    %v7132 = vpop.xlane.xlu0 %7131
    %v7133 = vadd.f32 %v6862, %v6864
    %v7134 = vadd.f32 %v7133, %v6948
    %v7135 = vadd.f32 %v7134, %v6950
    %v7136 = vadd.f32 %v7135, %v7034
    %v7137 = vadd.f32 %v7136, %v7036
    %v7138 = vadd.f32 %v7137, %v7120
    %v7139 = vadd.f32 %v7138, %v7122
    %7140 = vadd.xlane.f32.xlu0 %v7139
    %v7141 = vpop.xlane.xlu0 %7140
    %v7142 = vmul.f32 %v7132, %v3193
    %v7143 = vmul.f32 %v7141, %v3193
    %v7144 = vsub.f32 %v6858, %v7142
    %v7145 = vsub.f32 %v6860, %v7142
    %v7146 = vsub.f32 %v6944, %v7142
    %v7147 = vsub.f32 %v6946, %v7142
    %v7148 = vsub.f32 %v7030, %v7142
    %v7149 = vsub.f32 %v7032, %v7142
    %v7150 = vsub.f32 %v7116, %v7142
    %v7151 = vsub.f32 %v7118, %v7142
    %v7152 = vsub.f32 %v6862, %v7143
    %v7153 = vsub.f32 %v6864, %v7143
    %v7154 = vsub.f32 %v6948, %v7143
    %v7155 = vsub.f32 %v6950, %v7143
    %v7156 = vsub.f32 %v7034, %v7143
    %v7157 = vsub.f32 %v7036, %v7143
    %v7158 = vsub.f32 %v7120, %v7143
    %v7159 = vsub.f32 %v7122, %v7143
    %v7160 = vmul.f32 %v7144, %v7144
    %v7161 = vmul.f32 %v7145, %v7145
    %v7162 = vmul.f32 %v7146, %v7146
    %v7163 = vmul.f32 %v7147, %v7147
    %v7164 = vmul.f32 %v7148, %v7148
    %v7165 = vmul.f32 %v7149, %v7149
    %v7166 = vmul.f32 %v7150, %v7150
    %v7167 = vmul.f32 %v7151, %v7151
    %v7168 = vmul.f32 %v7152, %v7152
    %v7169 = vmul.f32 %v7153, %v7153
    %v7170 = vmul.f32 %v7154, %v7154
    %v7171 = vmul.f32 %v7155, %v7155
    %v7172 = vmul.f32 %v7156, %v7156
    %v7173 = vmul.f32 %v7157, %v7157
    %v7174 = vmul.f32 %v7158, %v7158
    %v7175 = vmul.f32 %v7159, %v7159
    %v7176 = vadd.f32 %v7160, %v7161
    %v7177 = vadd.f32 %v7176, %v7162
    %v7178 = vadd.f32 %v7177, %v7163
    %v7179 = vadd.f32 %v7178, %v7164
    %v7180 = vadd.f32 %v7179, %v7165
    %v7181 = vadd.f32 %v7180, %v7166
    %v7182 = vadd.f32 %v7181, %v7167
    %7183 = vadd.xlane.f32.xlu0 %v7182
    %v7184 = vpop.xlane.xlu0 %7183
    %v7185 = vadd.f32 %v7168, %v7169
    %v7186 = vadd.f32 %v7185, %v7170
    %v7187 = vadd.f32 %v7186, %v7171
    %v7188 = vadd.f32 %v7187, %v7172
    %v7189 = vadd.f32 %v7188, %v7173
    %v7190 = vadd.f32 %v7189, %v7174
    %v7191 = vadd.f32 %v7190, %v7175
    %7192 = vadd.xlane.f32.xlu0 %v7191
    %v7193 = vpop.xlane.xlu0 %7192
    %v7194 = vmul.f32 %v7184, %v3193
    %v7195 = vmul.f32 %v7193, %v3193
    %s7196 = scalar_lea.vmem %s3, 32
    %v7197 = vld [vmem:[%s7196] sm:$0xff]
    %v7198 = vld [vmem:[%s7196 + $0x8] sm:$0xff]
    %v7199 = vadd.f32 %v7194, 1e-05
    %v7200 = vadd.f32 %v7195, 1e-05
    %v7201 = vrsqrt.pop %v7199
    %v7202 = vrsqrt.pop %v7200
    %v7203 = vmul.f32 %v7197, %v7201
    %v7204 = vmul.f32 %v7198, %v7202
    %s7205 = scalar_lea.vmem %s4, 32
    %v7206 = vld [vmem:[%s7205] sm:$0xff]
    %v7207 = vld [vmem:[%s7205 + $0x8] sm:$0xff]
    %v7208 = vmul.f32 %v7142, %v7203
    %v7209 = vmul.f32 %v7143, %v7204
    %v7210 = vsub.f32 %v7206, %v7208
    %v7211 = vsub.f32 %v7207, %v7209
    %7213 = vset.pattern.permute.xlu0 0
    %7214 = vperm.xlu0 %7213, %v7203
    %v7215 = vpop.permute.xlu0 %7214
    %7218 = vset.pattern.permute.xlu0 0
    %7219 = vperm.xlu0 %7218, %v7204
    %v7220 = vpop.permute.xlu0 %7219
    %v7222 = vmul.f32 %v6858, %v7215
    %v7223 = vmul.f32 %v6860, %v7215
    %v7224 = vmul.f32 %v6944, %v7215
    %v7225 = vmul.f32 %v6946, %v7215
    %v7226 = vmul.f32 %v7030, %v7215
    %v7227 = vmul.f32 %v7032, %v7215
    %v7228 = vmul.f32 %v7116, %v7215
    %v7229 = vmul.f32 %v7118, %v7215
    %v7230 = vmul.f32 %v6862, %v7220
    %v7231 = vmul.f32 %v6864, %v7220
    %v7232 = vmul.f32 %v6948, %v7220
    %v7233 = vmul.f32 %v6950, %v7220
    %v7234 = vmul.f32 %v7034, %v7220
    %v7235 = vmul.f32 %v7036, %v7220
    %v7236 = vmul.f32 %v7120, %v7220
    %v7237 = vmul.f32 %v7122, %v7220
    %7239 = vset.pattern.permute.xlu0 0
    %7240 = vperm.xlu0 %7239, %v7210
    %v7241 = vpop.permute.xlu0 %7240
    %7244 = vset.pattern.permute.xlu0 0
    %7245 = vperm.xlu0 %7244, %v7211
    %v7246 = vpop.permute.xlu0 %7245
    %v7248 = vadd.f32 %v7222, %v7241
    %v7249 = vadd.f32 %v7223, %v7241
    %v7250 = vadd.f32 %v7224, %v7241
    %v7251 = vadd.f32 %v7225, %v7241
    %v7252 = vadd.f32 %v7226, %v7241
    %v7253 = vadd.f32 %v7227, %v7241
    %v7254 = vadd.f32 %v7228, %v7241
    %v7255 = vadd.f32 %v7229, %v7241
    %v7256 = vadd.f32 %v7230, %v7246
    %v7257 = vadd.f32 %v7231, %v7246
    %v7258 = vadd.f32 %v7232, %v7246
    %v7259 = vadd.f32 %v7233, %v7246
    %v7260 = vadd.f32 %v7234, %v7246
    %v7261 = vadd.f32 %v7235, %v7246
    %v7262 = vadd.f32 %v7236, %v7246
    %v7263 = vadd.f32 %v7237, %v7246
    %v7264 = vmax.f32 %v7248, 0.0
    %v7265 = vmax.f32 %v7249, 0.0
    %v7266 = vmax.f32 %v7250, 0.0
    %v7267 = vmax.f32 %v7251, 0.0
    %v7268 = vmax.f32 %v7252, 0.0
    %v7269 = vmax.f32 %v7253, 0.0
    %v7270 = vmax.f32 %v7254, 0.0
    %v7271 = vmax.f32 %v7255, 0.0
    %v7272 = vmax.f32 %v7256, 0.0
    %v7273 = vmax.f32 %v7257, 0.0
    %v7274 = vmax.f32 %v7258, 0.0
    %v7275 = vmax.f32 %v7259, 0.0
    %v7276 = vmax.f32 %v7260, 0.0
    %v7277 = vmax.f32 %v7261, 0.0
    %v7278 = vmax.f32 %v7262, 0.0
    %v7279 = vmax.f32 %v7263, 0.0
    %7280 = vrot.lane.b32.xlu0 %v7264, 127
    %v7281 = vpop.permute.xlu0 %7280
    %7282 = vrot.lane.b32.xlu0 %v7272, 127
    %v7283 = vpop.permute.xlu0 %7282
    %7284 = vrot.lane.b32.xlu0 %v7265, 127
    %v7285 = vpop.permute.xlu0 %7284
    %7286 = vrot.lane.b32.xlu0 %v7273, 127
    %v7287 = vpop.permute.xlu0 %7286
    %7288 = vrot.lane.b32.xlu0 %v7266, 127
    %v7289 = vpop.permute.xlu0 %7288
    %7290 = vrot.lane.b32.xlu0 %v7274, 127
    %v7291 = vpop.permute.xlu0 %7290
    %7292 = vrot.lane.b32.xlu0 %v7267, 127
    %v7293 = vpop.permute.xlu0 %7292
    %7294 = vrot.lane.b32.xlu0 %v7275, 127
    %v7295 = vpop.permute.xlu0 %7294
    %7296 = vrot.lane.b32.xlu0 %v7268, 127
    %v7297 = vpop.permute.xlu0 %7296
    %7298 = vrot.lane.b32.xlu0 %v7276, 127
    %v7299 = vpop.permute.xlu0 %7298
    %7300 = vrot.lane.b32.xlu0 %v7269, 127
    %v7301 = vpop.permute.xlu0 %7300
    %7302 = vrot.lane.b32.xlu0 %v7277, 127
    %v7303 = vpop.permute.xlu0 %7302
    %7304 = vrot.lane.b32.xlu0 %v7270, 127
    %v7305 = vpop.permute.xlu0 %7304
    %7306 = vrot.lane.b32.xlu0 %v7278, 127
    %v7307 = vpop.permute.xlu0 %7306
    %7308 = vrot.lane.b32.xlu0 %v7271, 127
    %v7309 = vpop.permute.xlu0 %7308
    %7310 = vrot.lane.b32.xlu0 %v7279, 127
    %v7311 = vpop.permute.xlu0 %7310
    %v7312 = vsel %vm1743, %v7305, %v7309
    %v7313 = vsel %vm1743, %v7307, %v7311
    %v7314 = vsel %vm1743, %v7301, %v7305
    %v7315 = vsel %vm1743, %v7303, %v7307
    %v7316 = vsel %vm1743, %v7297, %v7301
    %v7317 = vsel %vm1743, %v7299, %v7303
    %v7318 = vsel %vm1743, %v7293, %v7297
    %v7319 = vsel %vm1743, %v7295, %v7299
    %v7320 = vsel %vm1743, %v7289, %v7293
    %v7321 = vsel %vm1743, %v7291, %v7295
    %v7322 = vsel %vm1743, %v7285, %v7289
    %v7323 = vsel %vm1743, %v7287, %v7291
    %v7324 = vsel %vm1743, %v7281, %v7285
    %v7325 = vsel %vm1743, %v7283, %v7287
    %v7326 = vsel %vm1743, %v7309, %v7281
    %v7327 = vsel %vm1743, %v7311, %v7283
    %v7328 = vmax.f32 %v7264, %v7324
    %v7329 = vmax.f32 %v7265, %v7322
    %v7330 = vmax.f32 %v7266, %v7320
    %v7331 = vmax.f32 %v7267, %v7318
    %v7332 = vmax.f32 %v7268, %v7316
    %v7333 = vmax.f32 %v7269, %v7314
    %v7334 = vmax.f32 %v7270, %v7312
    %v7335 = vmax.f32 %v7271, %v7326
    %v7336 = vmax.f32 %v7272, %v7325
    %v7337 = vmax.f32 %v7273, %v7323
    %v7338 = vmax.f32 %v7274, %v7321
    %v7339 = vmax.f32 %v7275, %v7319
    %v7340 = vmax.f32 %v7276, %v7317
    %v7341 = vmax.f32 %v7277, %v7315
    %v7342 = vmax.f32 %v7278, %v7313
    %v7343 = vmax.f32 %v7279, %v7327
    %7344 = vrot.lane.b32.xlu0 %v7264, 126
    %v7345 = vpop.permute.xlu0 %7344
    %7346 = vrot.lane.b32.xlu0 %v7272, 126
    %v7347 = vpop.permute.xlu0 %7346
    %7348 = vrot.lane.b32.xlu0 %v7265, 126
    %v7349 = vpop.permute.xlu0 %7348
    %7350 = vrot.lane.b32.xlu0 %v7273, 126
    %v7351 = vpop.permute.xlu0 %7350
    %7352 = vrot.lane.b32.xlu0 %v7266, 126
    %v7353 = vpop.permute.xlu0 %7352
    %7354 = vrot.lane.b32.xlu0 %v7274, 126
    %v7355 = vpop.permute.xlu0 %7354
    %7356 = vrot.lane.b32.xlu0 %v7267, 126
    %v7357 = vpop.permute.xlu0 %7356
    %7358 = vrot.lane.b32.xlu0 %v7275, 126
    %v7359 = vpop.permute.xlu0 %7358
    %7360 = vrot.lane.b32.xlu0 %v7268, 126
    %v7361 = vpop.permute.xlu0 %7360
    %7362 = vrot.lane.b32.xlu0 %v7276, 126
    %v7363 = vpop.permute.xlu0 %7362
    %7364 = vrot.lane.b32.xlu0 %v7269, 126
    %v7365 = vpop.permute.xlu0 %7364
    %7366 = vrot.lane.b32.xlu0 %v7277, 126
    %v7367 = vpop.permute.xlu0 %7366
    %7368 = vrot.lane.b32.xlu0 %v7270, 126
    %v7369 = vpop.permute.xlu0 %7368
    %7370 = vrot.lane.b32.xlu0 %v7278, 126
    %v7371 = vpop.permute.xlu0 %7370
    %7372 = vrot.lane.b32.xlu0 %v7271, 126
    %v7373 = vpop.permute.xlu0 %7372
    %7374 = vrot.lane.b32.xlu0 %v7279, 126
    %v7375 = vpop.permute.xlu0 %7374
    %vm7376 = vcmp.lt.s32.totalorder %v201, 126
    %v7377 = vsel %vm7376, %v7369, %v7373
    %v7378 = vsel %vm7376, %v7371, %v7375
    %v7379 = vsel %vm7376, %v7365, %v7369
    %v7380 = vsel %vm7376, %v7367, %v7371
    %v7381 = vsel %vm7376, %v7361, %v7365
    %v7382 = vsel %vm7376, %v7363, %v7367
    %v7383 = vsel %vm7376, %v7357, %v7361
    %v7384 = vsel %vm7376, %v7359, %v7363
    %v7385 = vsel %vm7376, %v7353, %v7357
    %v7386 = vsel %vm7376, %v7355, %v7359
    %v7387 = vsel %vm7376, %v7349, %v7353
    %v7388 = vsel %vm7376, %v7351, %v7355
    %v7389 = vsel %vm7376, %v7345, %v7349
    %v7390 = vsel %vm7376, %v7347, %v7351
    %v7391 = vsel %vm7376, %v7373, %v7345
    %v7392 = vsel %vm7376, %v7375, %v7347
    %v7393 = vmax.f32 %v7328, %v7389
    %v7394 = vmax.f32 %v7329, %v7387
    %v7395 = vmax.f32 %v7330, %v7385
    %v7396 = vmax.f32 %v7331, %v7383
    %v7397 = vmax.f32 %v7332, %v7381
    %v7398 = vmax.f32 %v7333, %v7379
    %v7399 = vmax.f32 %v7334, %v7377
    %v7400 = vmax.f32 %v7335, %v7391
    %v7401 = vmax.f32 %v7336, %v7390
    %v7402 = vmax.f32 %v7337, %v7388
    %v7403 = vmax.f32 %v7338, %v7386
    %v7404 = vmax.f32 %v7339, %v7384
    %v7405 = vmax.f32 %v7340, %v7382
    %v7406 = vmax.f32 %v7341, %v7380
    %v7407 = vmax.f32 %v7342, %v7378
    %v7408 = vmax.f32 %v7343, %v7392
    %7409 = vrot.lane.b32.xlu0 %v7264, 125
    %v7410 = vpop.permute.xlu0 %7409
    %7411 = vrot.lane.b32.xlu0 %v7272, 125
    %v7412 = vpop.permute.xlu0 %7411
    %7413 = vrot.lane.b32.xlu0 %v7265, 125
    %v7414 = vpop.permute.xlu0 %7413
    %7415 = vrot.lane.b32.xlu0 %v7273, 125
    %v7416 = vpop.permute.xlu0 %7415
    %7417 = vrot.lane.b32.xlu0 %v7266, 125
    %v7418 = vpop.permute.xlu0 %7417
    %7419 = vrot.lane.b32.xlu0 %v7274, 125
    %v7420 = vpop.permute.xlu0 %7419
    %7421 = vrot.lane.b32.xlu0 %v7267, 125
    %v7422 = vpop.permute.xlu0 %7421
    %7423 = vrot.lane.b32.xlu0 %v7275, 125
    %v7424 = vpop.permute.xlu0 %7423
    %7425 = vrot.lane.b32.xlu0 %v7268, 125
    %v7426 = vpop.permute.xlu0 %7425
    %7427 = vrot.lane.b32.xlu0 %v7276, 125
    %v7428 = vpop.permute.xlu0 %7427
    %7429 = vrot.lane.b32.xlu0 %v7269, 125
    %v7430 = vpop.permute.xlu0 %7429
    %7431 = vrot.lane.b32.xlu0 %v7277, 125
    %v7432 = vpop.permute.xlu0 %7431
    %7433 = vrot.lane.b32.xlu0 %v7270, 125
    %v7434 = vpop.permute.xlu0 %7433
    %7435 = vrot.lane.b32.xlu0 %v7278, 125
    %v7436 = vpop.permute.xlu0 %7435
    %7437 = vrot.lane.b32.xlu0 %v7271, 125
    %v7438 = vpop.permute.xlu0 %7437
    %7439 = vrot.lane.b32.xlu0 %v7279, 125
    %v7440 = vpop.permute.xlu0 %7439
    %vm7441 = vcmp.lt.s32.totalorder %v201, 125
    %v7442 = vsel %vm7441, %v7434, %v7438
    %v7443 = vsel %vm7441, %v7436, %v7440
    %v7444 = vsel %vm7441, %v7430, %v7434
    %v7445 = vsel %vm7441, %v7432, %v7436
    %v7446 = vsel %vm7441, %v7426, %v7430
    %v7447 = vsel %vm7441, %v7428, %v7432
    %v7448 = vsel %vm7441, %v7422, %v7426
    %v7449 = vsel %vm7441, %v7424, %v7428
    %v7450 = vsel %vm7441, %v7418, %v7422
    %v7451 = vsel %vm7441, %v7420, %v7424
    %v7452 = vsel %vm7441, %v7414, %v7418
    %v7453 = vsel %vm7441, %v7416, %v7420
    %v7454 = vsel %vm7441, %v7410, %v7414
    %v7455 = vsel %vm7441, %v7412, %v7416
    %v7456 = vsel %vm7441, %v7438, %v7410
    %v7457 = vsel %vm7441, %v7440, %v7412
    %v7458 = vmax.f32 %v7393, %v7454
    %v7459 = vmax.f32 %v7394, %v7452
    %v7460 = vmax.f32 %v7395, %v7450
    %v7461 = vmax.f32 %v7396, %v7448
    %v7462 = vmax.f32 %v7397, %v7446
    %v7463 = vmax.f32 %v7398, %v7444
    %v7464 = vmax.f32 %v7399, %v7442
    %v7465 = vmax.f32 %v7400, %v7456
    %v7466 = vmax.f32 %v7401, %v7455
    %v7467 = vmax.f32 %v7402, %v7453
    %v7468 = vmax.f32 %v7403, %v7451
    %v7469 = vmax.f32 %v7404, %v7449
    %v7470 = vmax.f32 %v7405, %v7447
    %v7471 = vmax.f32 %v7406, %v7445
    %v7472 = vmax.f32 %v7407, %v7443
    %v7473 = vmax.f32 %v7408, %v7457
    %7474 = vrot.lane.b32.xlu0 %v7458, 120
    %v7475 = vpop.permute.xlu0 %7474
    %7476 = vrot.lane.b32.xlu0 %v7466, 120
    %v7477 = vpop.permute.xlu0 %7476
    %7478 = vrot.lane.b32.xlu0 %v7459, 120
    %v7479 = vpop.permute.xlu0 %7478
    %7480 = vrot.lane.b32.xlu0 %v7467, 120
    %v7481 = vpop.permute.xlu0 %7480
    %7482 = vrot.lane.b32.xlu0 %v7460, 120
    %v7483 = vpop.permute.xlu0 %7482
    %7484 = vrot.lane.b32.xlu0 %v7468, 120
    %v7485 = vpop.permute.xlu0 %7484
    %7486 = vrot.lane.b32.xlu0 %v7461, 120
    %v7487 = vpop.permute.xlu0 %7486
    %7488 = vrot.lane.b32.xlu0 %v7469, 120
    %v7489 = vpop.permute.xlu0 %7488
    %7490 = vrot.lane.b32.xlu0 %v7462, 120
    %v7491 = vpop.permute.xlu0 %7490
    %7492 = vrot.lane.b32.xlu0 %v7470, 120
    %v7493 = vpop.permute.xlu0 %7492
    %7494 = vrot.lane.b32.xlu0 %v7463, 120
    %v7495 = vpop.permute.xlu0 %7494
    %7496 = vrot.lane.b32.xlu0 %v7471, 120
    %v7497 = vpop.permute.xlu0 %7496
    %7498 = vrot.lane.b32.xlu0 %v7464, 120
    %v7499 = vpop.permute.xlu0 %7498
    %7500 = vrot.lane.b32.xlu0 %v7472, 120
    %v7501 = vpop.permute.xlu0 %7500
    %7502 = vrot.lane.b32.xlu0 %v7465, 120
    %v7503 = vpop.permute.xlu0 %7502
    %7504 = vrot.lane.b32.xlu0 %v7473, 120
    %v7505 = vpop.permute.xlu0 %7504
    %v7506 = vsel %vm1979, %v7499, %v7503
    %v7507 = vsel %vm1979, %v7501, %v7505
    %v7508 = vsel %vm1979, %v7495, %v7499
    %v7509 = vsel %vm1979, %v7497, %v7501
    %v7510 = vsel %vm1979, %v7491, %v7495
    %v7511 = vsel %vm1979, %v7493, %v7497
    %v7512 = vsel %vm1979, %v7487, %v7491
    %v7513 = vsel %vm1979, %v7489, %v7493
    %v7514 = vsel %vm1979, %v7483, %v7487
    %v7515 = vsel %vm1979, %v7485, %v7489
    %v7516 = vsel %vm1979, %v7479, %v7483
    %v7517 = vsel %vm1979, %v7481, %v7485
    %v7518 = vsel %vm1979, %v7475, %v7479
    %v7519 = vsel %vm1979, %v7477, %v7481
    %v7520 = vsel %vm1979, %v7503, %v7475
    %v7521 = vsel %vm1979, %v7505, %v7477
    %v7522 = vmax.f32 %v7458, %v7518
    %v7523 = vmax.f32 %v7459, %v7516
    %v7524 = vmax.f32 %v7460, %v7514
    %v7525 = vmax.f32 %v7461, %v7512
    %v7526 = vmax.f32 %v7462, %v7510
    %v7527 = vmax.f32 %v7463, %v7508
    %v7528 = vmax.f32 %v7464, %v7506
    %v7529 = vmax.f32 %v7465, %v7520
    %v7530 = vmax.f32 %v7466, %v7519
    %v7531 = vmax.f32 %v7467, %v7517
    %v7532 = vmax.f32 %v7468, %v7515
    %v7533 = vmax.f32 %v7469, %v7513
    %v7534 = vmax.f32 %v7470, %v7511
    %v7535 = vmax.f32 %v7471, %v7509
    %v7536 = vmax.f32 %v7472, %v7507
    %v7537 = vmax.f32 %v7473, %v7521
    %7538 = vrot.lane.b32.xlu0 %v7458, 112
    %v7539 = vpop.permute.xlu0 %7538
    %7540 = vrot.lane.b32.xlu0 %v7466, 112
    %v7541 = vpop.permute.xlu0 %7540
    %7542 = vrot.lane.b32.xlu0 %v7459, 112
    %v7543 = vpop.permute.xlu0 %7542
    %7544 = vrot.lane.b32.xlu0 %v7467, 112
    %v7545 = vpop.permute.xlu0 %7544
    %7546 = vrot.lane.b32.xlu0 %v7460, 112
    %v7547 = vpop.permute.xlu0 %7546
    %7548 = vrot.lane.b32.xlu0 %v7468, 112
    %v7549 = vpop.permute.xlu0 %7548
    %7550 = vrot.lane.b32.xlu0 %v7461, 112
    %v7551 = vpop.permute.xlu0 %7550
    %7552 = vrot.lane.b32.xlu0 %v7469, 112
    %v7553 = vpop.permute.xlu0 %7552
    %7554 = vrot.lane.b32.xlu0 %v7462, 112
    %v7555 = vpop.permute.xlu0 %7554
    %7556 = vrot.lane.b32.xlu0 %v7470, 112
    %v7557 = vpop.permute.xlu0 %7556
    %7558 = vrot.lane.b32.xlu0 %v7463, 112
    %v7559 = vpop.permute.xlu0 %7558
    %7560 = vrot.lane.b32.xlu0 %v7471, 112
    %v7561 = vpop.permute.xlu0 %7560
    %7562 = vrot.lane.b32.xlu0 %v7464, 112
    %v7563 = vpop.permute.xlu0 %7562
    %7564 = vrot.lane.b32.xlu0 %v7472, 112
    %v7565 = vpop.permute.xlu0 %7564
    %7566 = vrot.lane.b32.xlu0 %v7465, 112
    %v7567 = vpop.permute.xlu0 %7566
    %7568 = vrot.lane.b32.xlu0 %v7473, 112
    %v7569 = vpop.permute.xlu0 %7568
    %vm7570 = vcmp.lt.s32.totalorder %v201, 112
    %v7571 = vsel %vm7570, %v7563, %v7567
    %v7572 = vsel %vm7570, %v7565, %v7569
    %v7573 = vsel %vm7570, %v7559, %v7563
    %v7574 = vsel %vm7570, %v7561, %v7565
    %v7575 = vsel %vm7570, %v7555, %v7559
    %v7576 = vsel %vm7570, %v7557, %v7561
    %v7577 = vsel %vm7570, %v7551, %v7555
    %v7578 = vsel %vm7570, %v7553, %v7557
    %v7579 = vsel %vm7570, %v7547, %v7551
    %v7580 = vsel %vm7570, %v7549, %v7553
    %v7581 = vsel %vm7570, %v7543, %v7547
    %v7582 = vsel %vm7570, %v7545, %v7549
    %v7583 = vsel %vm7570, %v7539, %v7543
    %v7584 = vsel %vm7570, %v7541, %v7545
    %v7585 = vsel %vm7570, %v7567, %v7539
    %v7586 = vsel %vm7570, %v7569, %v7541
    %v7587 = vmax.f32 %v7522, %v7583
    %v7588 = vmax.f32 %v7523, %v7581
    %v7589 = vmax.f32 %v7524, %v7579
    %v7590 = vmax.f32 %v7525, %v7577
    %v7591 = vmax.f32 %v7526, %v7575
    %v7592 = vmax.f32 %v7527, %v7573
    %v7593 = vmax.f32 %v7528, %v7571
    %v7594 = vmax.f32 %v7529, %v7585
    %v7595 = vmax.f32 %v7530, %v7584
    %v7596 = vmax.f32 %v7531, %v7582
    %v7597 = vmax.f32 %v7532, %v7580
    %v7598 = vmax.f32 %v7533, %v7578
    %v7599 = vmax.f32 %v7534, %v7576
    %v7600 = vmax.f32 %v7535, %v7574
    %v7601 = vmax.f32 %v7536, %v7572
    %v7602 = vmax.f32 %v7537, %v7586
    %7603 = vrot.lane.b32.xlu0 %v7458, 104
    %v7604 = vpop.permute.xlu0 %7603
    %7605 = vrot.lane.b32.xlu0 %v7466, 104
    %v7606 = vpop.permute.xlu0 %7605
    %7607 = vrot.lane.b32.xlu0 %v7459, 104
    %v7608 = vpop.permute.xlu0 %7607
    %7609 = vrot.lane.b32.xlu0 %v7467, 104
    %v7610 = vpop.permute.xlu0 %7609
    %7611 = vrot.lane.b32.xlu0 %v7460, 104
    %v7612 = vpop.permute.xlu0 %7611
    %7613 = vrot.lane.b32.xlu0 %v7468, 104
    %v7614 = vpop.permute.xlu0 %7613
    %7615 = vrot.lane.b32.xlu0 %v7461, 104
    %v7616 = vpop.permute.xlu0 %7615
    %7617 = vrot.lane.b32.xlu0 %v7469, 104
    %v7618 = vpop.permute.xlu0 %7617
    %7619 = vrot.lane.b32.xlu0 %v7462, 104
    %v7620 = vpop.permute.xlu0 %7619
    %7621 = vrot.lane.b32.xlu0 %v7470, 104
    %v7622 = vpop.permute.xlu0 %7621
    %7623 = vrot.lane.b32.xlu0 %v7463, 104
    %v7624 = vpop.permute.xlu0 %7623
    %7625 = vrot.lane.b32.xlu0 %v7471, 104
    %v7626 = vpop.permute.xlu0 %7625
    %7627 = vrot.lane.b32.xlu0 %v7464, 104
    %v7628 = vpop.permute.xlu0 %7627
    %7629 = vrot.lane.b32.xlu0 %v7472, 104
    %v7630 = vpop.permute.xlu0 %7629
    %7631 = vrot.lane.b32.xlu0 %v7465, 104
    %v7632 = vpop.permute.xlu0 %7631
    %7633 = vrot.lane.b32.xlu0 %v7473, 104
    %v7634 = vpop.permute.xlu0 %7633
    %vm7635 = vcmp.lt.s32.totalorder %v201, 104
    %v7636 = vsel %vm7635, %v7628, %v7632
    %v7637 = vsel %vm7635, %v7630, %v7634
    %v7638 = vsel %vm7635, %v7624, %v7628
    %v7639 = vsel %vm7635, %v7626, %v7630
    %v7640 = vsel %vm7635, %v7620, %v7624
    %v7641 = vsel %vm7635, %v7622, %v7626
    %v7642 = vsel %vm7635, %v7616, %v7620
    %v7643 = vsel %vm7635, %v7618, %v7622
    %v7644 = vsel %vm7635, %v7612, %v7616
    %v7645 = vsel %vm7635, %v7614, %v7618
    %v7646 = vsel %vm7635, %v7608, %v7612
    %v7647 = vsel %vm7635, %v7610, %v7614
    %v7648 = vsel %vm7635, %v7604, %v7608
    %v7649 = vsel %vm7635, %v7606, %v7610
    %v7650 = vsel %vm7635, %v7632, %v7604
    %v7651 = vsel %vm7635, %v7634, %v7606
    %v7652 = vmax.f32 %v7587, %v7648
    %v7653 = vmax.f32 %v7588, %v7646
    %v7654 = vmax.f32 %v7589, %v7644
    %v7655 = vmax.f32 %v7590, %v7642
    %v7656 = vmax.f32 %v7591, %v7640
    %v7657 = vmax.f32 %v7592, %v7638
    %v7658 = vmax.f32 %v7593, %v7636
    %v7659 = vmax.f32 %v7594, %v7650
    %v7660 = vmax.f32 %v7595, %v7649
    %v7661 = vmax.f32 %v7596, %v7647
    %v7662 = vmax.f32 %v7597, %v7645
    %v7663 = vmax.f32 %v7598, %v7643
    %v7664 = vmax.f32 %v7599, %v7641
    %v7665 = vmax.f32 %v7600, %v7639
    %v7666 = vmax.f32 %v7601, %v7637
    %v7667 = vmax.f32 %v7602, %v7651
    %7668 = vrot.lane.b32.xlu0 %v7652, 64
    %v7669 = vpop.permute.xlu0 %7668
    %7670 = vrot.lane.b32.xlu0 %v7660, 64
    %v7671 = vpop.permute.xlu0 %7670
    %7672 = vrot.lane.b32.xlu0 %v7653, 64
    %v7673 = vpop.permute.xlu0 %7672
    %7674 = vrot.lane.b32.xlu0 %v7661, 64
    %v7675 = vpop.permute.xlu0 %7674
    %7676 = vrot.lane.b32.xlu0 %v7654, 64
    %v7677 = vpop.permute.xlu0 %7676
    %7678 = vrot.lane.b32.xlu0 %v7662, 64
    %v7679 = vpop.permute.xlu0 %7678
    %7680 = vrot.lane.b32.xlu0 %v7655, 64
    %v7681 = vpop.permute.xlu0 %7680
    %7682 = vrot.lane.b32.xlu0 %v7663, 64
    %v7683 = vpop.permute.xlu0 %7682
    %7684 = vrot.lane.b32.xlu0 %v7656, 64
    %v7685 = vpop.permute.xlu0 %7684
    %7686 = vrot.lane.b32.xlu0 %v7664, 64
    %v7687 = vpop.permute.xlu0 %7686
    %7688 = vrot.lane.b32.xlu0 %v7657, 64
    %v7689 = vpop.permute.xlu0 %7688
    %7690 = vrot.lane.b32.xlu0 %v7665, 64
    %v7691 = vpop.permute.xlu0 %7690
    %7692 = vrot.lane.b32.xlu0 %v7658, 64
    %v7693 = vpop.permute.xlu0 %7692
    %7694 = vrot.lane.b32.xlu0 %v7666, 64
    %v7695 = vpop.permute.xlu0 %7694
    %7696 = vrot.lane.b32.xlu0 %v7659, 64
    %v7697 = vpop.permute.xlu0 %7696
    %7698 = vrot.lane.b32.xlu0 %v7667, 64
    %v7699 = vpop.permute.xlu0 %7698
    %v7700 = vsel %vm673, %v7693, %v7697
    %v7701 = vsel %vm673, %v7695, %v7699
    %v7702 = vsel %vm673, %v7689, %v7693
    %v7703 = vsel %vm673, %v7691, %v7695
    %v7704 = vsel %vm673, %v7685, %v7689
    %v7705 = vsel %vm673, %v7687, %v7691
    %v7706 = vsel %vm673, %v7681, %v7685
    %v7707 = vsel %vm673, %v7683, %v7687
    %v7708 = vsel %vm673, %v7677, %v7681
    %v7709 = vsel %vm673, %v7679, %v7683
    %v7710 = vsel %vm673, %v7673, %v7677
    %v7711 = vsel %vm673, %v7675, %v7679
    %v7712 = vsel %vm673, %v7669, %v7673
    %v7713 = vsel %vm673, %v7671, %v7675
    %v7714 = vsel %vm673, %v7697, %v7669
    %v7715 = vsel %vm673, %v7699, %v7671
    %v7716 = vmax.f32 %v7652, %v7712
    %v7717 = vmax.f32 %v7653, %v7710
    %v7718 = vmax.f32 %v7654, %v7708
    %v7719 = vmax.f32 %v7655, %v7706
    %v7720 = vmax.f32 %v7656, %v7704
    %v7721 = vmax.f32 %v7657, %v7702
    %v7722 = vmax.f32 %v7658, %v7700
    %v7723 = vmax.f32 %v7659, %v7714
    %v7724 = vmax.f32 %v7660, %v7713
    %v7725 = vmax.f32 %v7661, %v7711
    %v7726 = vmax.f32 %v7662, %v7709
    %v7727 = vmax.f32 %v7663, %v7707
    %v7728 = vmax.f32 %v7664, %v7705
    %v7729 = vmax.f32 %v7665, %v7703
    %v7730 = vmax.f32 %v7666, %v7701
    %v7731 = vmax.f32 %v7667, %v7715
    %v7732 = vmax.f32 %v7716, %v7653
    %v7733 = vmax.f32 %v7717, %v7654
    %v7734 = vmax.f32 %v7718, %v7655
    %v7735 = vmax.f32 %v7719, %v7656
    %v7736 = vmax.f32 %v7720, %v7657
    %v7737 = vmax.f32 %v7721, %v7658
    %v7738 = vmax.f32 %v7722, %v7659
    %v7739 = vmax.f32 %v7723, %v7652
    %v7740 = vmax.f32 %v7724, %v7661
    %v7741 = vmax.f32 %v7725, %v7662
    %v7742 = vmax.f32 %v7726, %v7663
    %v7743 = vmax.f32 %v7727, %v7664
    %v7744 = vmax.f32 %v7728, %v7665
    %v7745 = vmax.f32 %v7729, %v7666
    %v7746 = vmax.f32 %v7730, %v7667
    %v7747 = vmax.f32 %v7731, %v7660
    %v7748 = vmax.f32 %v7732, %v7710
    %v7749 = vmax.f32 %v7733, %v7708
    %v7750 = vmax.f32 %v7734, %v7706
    %v7751 = vmax.f32 %v7735, %v7704
    %v7752 = vmax.f32 %v7736, %v7702
    %v7753 = vmax.f32 %v7737, %v7700
    %v7754 = vmax.f32 %v7738, %v7714
    %v7755 = vmax.f32 %v7739, %v7712
    %v7756 = vmax.f32 %v7740, %v7711
    %v7757 = vmax.f32 %v7741, %v7709
    %v7758 = vmax.f32 %v7742, %v7707
    %v7759 = vmax.f32 %v7743, %v7705
    %v7760 = vmax.f32 %v7744, %v7703
    %v7761 = vmax.f32 %v7745, %v7701
    %v7762 = vmax.f32 %v7746, %v7715
    %v7763 = vmax.f32 %v7747, %v7713
    %v7764 = vld [vmem:[#allocation7] sm:$0xff]
    %v7765 = vld [vmem:[#allocation7 + $0x8] sm:$0xff]
    %v7766 = vld [vmem:[#allocation7 + $0x10] sm:$0xff]
    %v7767 = vld [vmem:[#allocation7 + $0x18] sm:$0xff]
    %v7768 = vld [vmem:[#allocation7 + $0x20] sm:$0xff]
    %v7769 = vld [vmem:[#allocation7 + $0x28] sm:$0xff]
    %v7770 = vld [vmem:[#allocation7 + $0x30] sm:$0xff]
    %v7771 = vld [vmem:[#allocation7 + $0x38] sm:$0xff]
    %v7772 = vld [vmem:[#allocation7 + $0x40] sm:$0xff]
    %v7773 = vld [vmem:[#allocation7 + $0x48] sm:$0xff]
    %v7774 = vld [vmem:[#allocation7 + $0x50] sm:$0xff]
    %v7775 = vld [vmem:[#allocation7 + $0x58] sm:$0xff]
    %v7776 = vld [vmem:[#allocation7 + $0x60] sm:$0xff]
    %v7777 = vld [vmem:[#allocation7 + $0x68] sm:$0xff]
    %v7778 = vld [vmem:[#allocation7 + $0x70] sm:$0xff]
    %v7779 = vld [vmem:[#allocation7 + $0x78] sm:$0xff]
    %v7780 = vmul.f32 %v7748, %v7764
    %v7781 = vmul.f32 %v7749, %v7765
    %v7782 = vmul.f32 %v7750, %v7766
    %v7783 = vmul.f32 %v7751, %v7767
    %v7784 = vmul.f32 %v7752, %v7768
    %v7785 = vmul.f32 %v7753, %v7769
    %v7786 = vmul.f32 %v7754, %v7770
    %v7787 = vmul.f32 %v7755, %v7771
    %v7788 = vmul.f32 %v7756, %v7772
    %v7789 = vmul.f32 %v7757, %v7773
    %v7790 = vmul.f32 %v7758, %v7774
    %v7791 = vmul.f32 %v7759, %v7775
    %v7792 = vmul.f32 %v7760, %v7776
    %v7793 = vmul.f32 %v7761, %v7777
    %v7794 = vmul.f32 %v7762, %v7778
    %v7795 = vmul.f32 %v7763, %v7779
    %v7796 = vadd.f32 %v7780, %v7781
    %v7797 = vadd.f32 %v7796, %v7782
    %v7798 = vadd.f32 %v7797, %v7783
    %7799 = vadd.xlane.f32.xlu0 %v7798
    %v7800 = vpop.xlane.xlu0 %7799
    %v7801 = vadd.f32 %v7788, %v7789
    %v7802 = vadd.f32 %v7801, %v7790
    %v7803 = vadd.f32 %v7802, %v7791
    %7804 = vadd.xlane.f32.xlu0 %v7803
    %v7805 = vpop.xlane.xlu0 %7804
    %v7806 = vadd.f32 %v7800, %v7805
    %v7807 = vrot.slane %v7806, 4
    %v7808 = vadd.f32 %v7806, %v7807
    %v7809 = vrot.slane %v7808, 2
    %v7810 = vadd.f32 %v7808, %v7809
    %v7811 = vrot.slane %v7810, 1
    %v7812 = vadd.f32 %v7810, %v7811
    %v7813 = vadd.f32 %v7784, %v7785
    %v7814 = vadd.f32 %v7813, %v7786
    %v7815 = vadd.f32 %v7814, %v7787
    %7816 = vadd.xlane.f32.xlu0 %v7815
    %v7817 = vpop.xlane.xlu0 %7816
    %v7818 = vadd.f32 %v7792, %v7793
    %v7819 = vadd.f32 %v7818, %v7794
    %v7820 = vadd.f32 %v7819, %v7795
    %7821 = vadd.xlane.f32.xlu0 %v7820
    %v7822 = vpop.xlane.xlu0 %7821
    %v7823 = vadd.f32 %v7817, %v7822
    %v7824 = vrot.slane %v7823, 4
    %v7825 = vadd.f32 %v7823, %v7824
    %v7826 = vrot.slane %v7825, 2
    %v7827 = vadd.f32 %v7825, %v7826
    %v7828 = vrot.slane %v7827, 1
    %v7829 = vadd.f32 %v7827, %v7828
    %vm7830 = vcmask 1040384
    %v7831 = vsel %vm7830, %v7812, %v7829
    %v7832 = vld [vmem:[%s6] sm:$0x3]
    %v7833 = vld [vmem:[%s7] sm:$0x1]
    %v7835 = vlaneseq
    %v7836 = vshrl.u32 %v7835, 7
    %v7837 = vsub.s32 0, %v7836
    %v7838 = vrot.slane %v7833, %v7837
    %v7840 = vmul.f32 %v7832, %v7838
    %vm7841 = vcmask 50176
    %v7842 = vsel %vm7841, %v7840, 0.0
    %7843 = vadd.xlane.f32.xlu0 %v7842
    %v7844 = vpop.xlane.xlu0 %7843
    %v7845 = vadd.f32 %v7831, %v7844
    %s7846 = sld [smem:[#allocation2]]
    %v7847 = vstv %s7846
    %v7848 = vadd.f32 %v7845, %v7847
    %vm7849 = vcmask 1024
    %7850 = vst.msk [vmem:[%s9] sm:$0x3] %vm7849, %v7848
    // Predicated region
    $region50: #{tpu_custom_call.1} parent=1 // pred_check
      _
    $region51: #{tpu_custom_call.1} parent=1 // pred_check_branch
      %7852 = sbr.rel (0) target = $region53
    $region52: #{tpu_custom_call.1} parent=1 // pred_region
      _
    $region53: #{tpu_custom_call.1} parent=1 // pred_fallthru
      _
    // Predicated region
    $region54: #{tpu_custom_call.1} parent=1 // pred_check
      _
    $region55: #{tpu_custom_call.1} parent=1 // pred_check_branch
      %7854 = sbr.rel (0) target = $region57
    $region56: #{tpu_custom_call.1} parent=1 // pred_region
      _
    $region57: #{tpu_custom_call.1} parent=1 // pred_fallthru
      _
    %7855 = vsyncpa [#allocation4], 1
    %7856 = vsyncpa [#allocation6], 1

</llo_original>
